<compile_context>
chip_gen: v6e
topology: v6e:2x2x1
jax: 0.10.0
libtpu: 0.0.40
codegen_flags: <defaults>
</compile_context>

<pallas_src>
import math

import jax
import jax.numpy as jnp
from jax.experimental import pallas as pl
from jax.experimental.pallas import tpu as pltpu

# ---------------- config (reduced, see header) ----------------
BATCH = 2
SEQ = 8
HIDDEN = 128
N_LAYERS = 2
N_HEADS = 4
HEAD_DIM = HIDDEN // N_HEADS
FFN = 4 * HIDDEN
VOCAB = 512          # used for both input vocab and output fc (30522 in original)
MAX_POS = 64
LN_EPS = 1e-12


# ---------------- in-kernel helpers ----------------
def _gelu_tanh(x):
    # TODO(synk): HF BERT default is exact erf-GELU; tanh approximation used here.
    return 0.5 * x * (1.0 + jnp.tanh(0.7978845608028654 * (x + 0.044715 * x * x * x)))


def _layernorm(x, g, b, eps=LN_EPS):
    mu = jnp.mean(x, axis=-1, keepdims=True)
    d = x - mu
    var = jnp.mean(d * d, axis=-1, keepdims=True)
    return d * jax.lax.rsqrt(var + eps) * g + b


def _bf16(x):
    return x.astype(jnp.bfloat16)


# ---------------- the single fused kernel ----------------
def seq2seq_kernel(emb_ref, eg_ref, eb_ref,
                   wqkv_ref, bqkv_ref, wo_ref, bo_ref,
                   ln1g_ref, ln1b_ref, w1_ref, b1_ref, w2_ref, b2_ref,
                   ln2g_ref, ln2b_ref,
                   wih_ref, whh_ref, lb_ref, fcw_ref, fcb_ref,
                   o_ref):
    H, Dh, nh, B, S = HIDDEN, HEAD_DIM, N_HEADS, BATCH, SEQ

    # ---- embeddings LayerNorm (rows are batch-major: row = b*S + s) ----
    x = _layernorm(emb_ref[...], eg_ref[...], eb_ref[...])        # (B*S, H) f32

    # ---- encoder layers (static loop over stacked weights) ----
    for l in range(N_LAYERS):
        wqkv = wqkv_ref[l]                                        # (H, 3H) bf16
        wo = wo_ref[l]                                            # (H, H)  bf16

        # Fused QKV projection over all B*S rows (1/sqrt(Dh) folded into Wq/bq).
        qkv = (jnp.dot(_bf16(x), wqkv, preferred_element_type=jnp.float32)
               + bqkv_ref[l])                                     # (B*S, 3H) f32
        q = qkv[:, 0 * H:1 * H]
        k = qkv[:, 1 * H:2 * H]
        v = qkv[:, 2 * H:3 * H]

        # Attention: per-batch / per-head static loops.  Per-head contexts are
        # folded through the matching Wo row-slice and summed into a lane-dense
        # (S, H) f32 accumulator (no head concat).
        batch_rows = []
        for b in range(B):
            rsl = slice(b * S, (b + 1) * S)
            acc_b = None
            for h in range(nh):
                csl = slice(h * Dh, (h + 1) * Dh)
                qh = _bf16(q[rsl, csl])
                kh = _bf16(k[rsl, csl])
                vh = _bf16(v[rsl, csl])
                s = jax.lax.dot_general(qh, kh, (((1,), (1,)), ((), ())),
                                        preferred_element_type=jnp.float32)  # (S,S)
                s = s - jnp.max(s, axis=-1, keepdims=True)
                e = jnp.exp(s)
                p = e * pl.reciprocal(jnp.sum(e, axis=-1, keepdims=True),
                                      approx=True)
                ctx = jnp.dot(_bf16(p), vh,
                              preferred_element_type=jnp.float32)            # (S,Dh)
                part = jnp.dot(_bf16(ctx), wo[csl, :],
                               preferred_element_type=jnp.float32)           # (S,H)
                acc_b = part if acc_b is None else acc_b + part
            batch_rows.append(acc_b)
        attn = jnp.concatenate(batch_rows, axis=0) + bo_ref[l]    # (B*S, H)

        # Residual + LN1, FFN (GELU), residual + LN2.
        h1 = _layernorm(x + attn, ln1g_ref[l], ln1b_ref[l])
        inter = _gelu_tanh(jnp.dot(_bf16(h1), w1_ref[l],
                                   preferred_element_type=jnp.float32)
                           + b1_ref[l])
        ffn = (jnp.dot(_bf16(inter), w2_ref[l],
                       preferred_element_type=jnp.float32) + b2_ref[l])
        x = _layernorm(h1 + ffn, ln2g_ref[l], ln2b_ref[l])

    # ---- LSTM decoder: hoisted input projection + vreg-resident recurrence ----
    gx = (jnp.dot(_bf16(x), wih_ref[...],
                  preferred_element_type=jnp.float32) + lb_ref[...])  # (B*S, 4H)
    whh = whh_ref[...]                                                # (H, 4H) bf16

    batch_ys = []
    for b in range(B):
        hcur = jnp.zeros((1, H), jnp.float32)
        ccur = jnp.zeros((1, H), jnp.float32)
        rows = []
        for t in range(S):
            r = b * S + t
            g = gx[r:r + 1, :] + jnp.dot(_bf16(hcur), whh,
                                         preferred_element_type=jnp.float32)  # (1,4H)
            i_g = jax.nn.sigmoid(g[:, 0 * H:1 * H])   # PyTorch gate order: i, f, g, o
            f_g = jax.nn.sigmoid(g[:, 1 * H:2 * H])
            g_g = jnp.tanh(g[:, 2 * H:3 * H])
            o_g = jax.nn.sigmoid(g[:, 3 * H:4 * H])
            ccur = f_g * ccur + i_g * g_g
            hcur = o_g * jnp.tanh(ccur)
            rows.append(hcur)                          # stays in vregs
        batch_ys.append(jnp.concatenate(rows, axis=0))  # (S, H)
    y = jnp.concatenate(batch_ys, axis=0)               # (B*S, H) batch-major

    # Single lane/sublane-dense store of the vocab projection.
    o_ref[...] = (jnp.dot(_bf16(y), fcw_ref[...],
                          preferred_element_type=jnp.float32) + fcb_ref[...])


def pallas_seq2seq(emb, params):
    """emb: (B*S, H) f32, batch-major rows -> logits (B*S, VOCAB) f32."""
    BS, H = emb.shape
    L = N_LAYERS
    V = VOCAB

    def full(shape):
        nd = len(shape)
        return pl.BlockSpec(shape, lambda i, nd=nd: (0,) * nd)

    return pl.pallas_call(
        seq2seq_kernel,
        out_shape=jax.ShapeDtypeStruct((BS, V), jnp.float32),
        grid=(1,),
        in_specs=[
            full((BS, H)), full((1, H)), full((1, H)),
            full((L, H, 3 * H)), full((L, 1, 3 * H)),
            full((L, H, H)), full((L, 1, H)),
            full((L, 1, H)), full((L, 1, H)),
            full((L, H, FFN)), full((L, 1, FFN)),
            full((L, FFN, H)), full((L, 1, H)),
            full((L, 1, H)), full((L, 1, H)),
            full((H, 4 * H)), full((H, 4 * H)), full((1, 4 * H)),
            full((H, V)), full((1, V)),
        ],
        out_specs=full((BS, V)),
        compiler_params=pltpu.CompilerParams(
            dimension_semantics=("arbitrary",)),
    )(emb,
      params["emb_ln_g"], params["emb_ln_b"],
      params["wqkv"], params["bqkv"], params["wo"], params["bo"],
      params["ln1_g"], params["ln1_b"], params["w1"], params["b1"],
      params["w2"], params["b2"], params["ln2_g"], params["ln2_b"],
      params["lstm_wih"], params["lstm_whh"], params["lstm_b"],
      params["fc_w"], params["fc_b"])


# ---------------- model (glue around the kernel) ----------------
def seq2seq_forward(params, input_ids, decoder_input=None):
    # NOTE: the reference PyTorch forward() never uses decoder_input; same here.
    del decoder_input
    B, S = input_ids.shape
    H = HIDDEN

    # BERT embeddings (word + position + token-type-0) -- gather stays in XLA glue.
    emb = (jnp.take(params["word_emb"], input_ids, axis=0)
           + params["pos_emb"][:S][None, :, :]
           + params["tok_emb"][0][None, None, :])
    logits = pallas_seq2seq(emb.reshape(B * S, H), params)   # (B*S, V) batch-major
    return logits.reshape(B, S, VOCAB)


# ---------------- deterministic parameter init (stacked per-layer) ----------------
def init_params(key):
    keys = iter(jax.random.split(key, 256))

    def nrm(shape, std=0.02):
        return jax.random.normal(next(keys), shape, jnp.float32) * std

    H = HIDDEN
    scale = 1.0 / math.sqrt(HEAD_DIM)

    wqkv_l, bqkv_l, wo_l, bo_l = [], [], [], []
    ln1g_l, ln1b_l, w1_l, b1_l = [], [], [], []
    w2_l, b2_l, ln2g_l, ln2b_l = [], [], [], []
    for _ in range(N_LAYERS):
        wq, wk, wv = nrm((H, H)), nrm((H, H)), nrm((H, H))
        bq = jnp.zeros((H,), jnp.float32)
        bk = jnp.zeros((H,), jnp.float32)
        bv = jnp.zeros((H,), jnp.float32)
        # single fused QKV weight; attention 1/sqrt(Dh) folded into Q weights/bias
        wqkv_l.append(jnp.concatenate([wq * scale, wk, wv], axis=1))
        bqkv_l.append(jnp.concatenate([bq * scale, bk, bv]).reshape(1, 3 * H))
        wo_l.append(nrm((H, H)))
        bo_l.append(jnp.zeros((1, H), jnp.float32))
        ln1g_l.append(jnp.ones((1, H), jnp.float32))
        ln1b_l.append(jnp.zeros((1, H), jnp.float32))
        w1_l.append(nrm((H, FFN)))
        b1_l.append(jnp.zeros((1, FFN), jnp.float32))
        w2_l.append(nrm((FFN, H)))
        b2_l.append(jnp.zeros((1, H), jnp.float32))
        ln2g_l.append(jnp.ones((1, H), jnp.float32))
        ln2b_l.append(jnp.zeros((1, H), jnp.float32))

    params = dict(
        word_emb=nrm((VOCAB, H)),
        pos_emb=nrm((MAX_POS, H)),
        tok_emb=nrm((2, H)),
        emb_ln_g=jnp.ones((1, H), jnp.float32),
        emb_ln_b=jnp.zeros((1, H), jnp.float32),
        # stacked per-layer encoder weights (leading dim = layer)
        wqkv=jnp.stack(wqkv_l).astype(jnp.bfloat16),     # (L, H, 3H)
        bqkv=jnp.stack(bqkv_l),                          # (L, 1, 3H)
        wo=jnp.stack(wo_l).astype(jnp.bfloat16),         # (L, H, H)
        bo=jnp.stack(bo_l),
        ln1_g=jnp.stack(ln1g_l), ln1_b=jnp.stack(ln1b_l),
        w1=jnp.stack(w1_l).astype(jnp.bfloat16),         # (L, H, FFN)
        b1=jnp.stack(b1_l),
        w2=jnp.stack(w2_l).astype(jnp.bfloat16),         # (L, FFN, H)
        b2=jnp.stack(b2_l),
        ln2_g=jnp.stack(ln2g_l), ln2_b=jnp.stack(ln2b_l),
        # nn.LSTM(768, 768): weight_ih/hh are (4H, H) in torch; stored transposed.
        lstm_wih=nrm((H, 4 * H)).astype(jnp.bfloat16),
        lstm_whh=nrm((H, 4 * H)).astype(jnp.bfloat16),
        lstm_b=nrm((4 * H,)).reshape(1, 4 * H),          # b_ih + b_hh combined
        # nn.Linear(768, 30522) (reduced): weight stored transposed (H, VOCAB).
        fc_w=nrm((H, VOCAB)).astype(jnp.bfloat16),
        fc_b=jnp.zeros((1, VOCAB), jnp.float32),
    )
    return params


if __name__ == "__main__":
    root = jax.random.PRNGKey(0)
    pkey, ikey, dkey = jax.random.split(root, 3)

    params = init_params(pkey)
    input_ids = jax.random.randint(ikey, (BATCH, SEQ), 0, VOCAB, dtype=jnp.int32)
    decoder_input = jax.random.randint(dkey, (BATCH, SEQ), 0, VOCAB, dtype=jnp.int32)

    fwd = jax.jit(seq2seq_forward)
    out = fwd(params, input_ids, decoder_input)
    jax.block_until_ready(out)

    assert out.shape == (BATCH, SEQ, VOCAB), out.shape
    assert out.dtype == jnp.float32
    assert bool(jnp.all(jnp.isfinite(out)))
    print("KERNEL_OK")
</pallas_src>

<mosaic_0001>
module attributes {stable_mosaic.version = 11 : i64} {
  func.func @seq2seq_kernel(%arg0: i32, %arg1: memref<16x128xf32, #tpu.memory_space<vmem>>, %arg2: memref<1x128xf32, #tpu.memory_space<vmem>>, %arg3: memref<1x128xf32, #tpu.memory_space<vmem>>, %arg4: memref<2x128x384xbf16, #tpu.memory_space<vmem>>, %arg5: memref<2x1x384xf32, #tpu.memory_space<vmem>>, %arg6: memref<2x128x128xbf16, #tpu.memory_space<vmem>>, %arg7: memref<2x1x128xf32, #tpu.memory_space<vmem>>, %arg8: memref<2x1x128xf32, #tpu.memory_space<vmem>>, %arg9: memref<2x1x128xf32, #tpu.memory_space<vmem>>, %arg10: memref<2x128x512xbf16, #tpu.memory_space<vmem>>, %arg11: memref<2x1x512xf32, #tpu.memory_space<vmem>>, %arg12: memref<2x512x128xbf16, #tpu.memory_space<vmem>>, %arg13: memref<2x1x128xf32, #tpu.memory_space<vmem>>, %arg14: memref<2x1x128xf32, #tpu.memory_space<vmem>>, %arg15: memref<2x1x128xf32, #tpu.memory_space<vmem>>, %arg16: memref<128x512xbf16, #tpu.memory_space<vmem>>, %arg17: memref<128x512xbf16, #tpu.memory_space<vmem>>, %arg18: memref<1x512xf32, #tpu.memory_space<vmem>>, %arg19: memref<128x512xbf16, #tpu.memory_space<vmem>>, %arg20: memref<1x512xf32, #tpu.memory_space<vmem>>, %arg21: memref<16x512xf32, #tpu.memory_space<vmem>>) attributes {dimension_semantics = [#tpu.dimension_semantics<arbitrary>], iteration_bounds = array<i64: 1>, scalar_prefetch = 0 : i64, scratch_operands = 0 : i64, tpu.core_type = #tpu.core_type<tc>, window_params = [{pipeline_mode = #tpu.pipeline_mode<synchronous>, transform_indices = @transform_0, window_bounds = array<i64: 16, 128>}, {pipeline_mode = #tpu.pipeline_mode<synchronous>, transform_indices = @transform_1, window_bounds = array<i64: 1, 128>}, {pipeline_mode = #tpu.pipeline_mode<synchronous>, transform_indices = @transform_2, window_bounds = array<i64: 1, 128>}, {pipeline_mode = #tpu.pipeline_mode<synchronous>, transform_indices = @transform_3, window_bounds = array<i64: 2, 128, 384>}, {pipeline_mode = #tpu.pipeline_mode<synchronous>, transform_indices = @transform_4, window_bounds = array<i64: 2, 1, 384>}, {pipeline_mode = #tpu.pipeline_mode<synchronous>, transform_indices = @transform_5, window_bounds = array<i64: 2, 128, 128>}, {pipeline_mode = #tpu.pipeline_mode<synchronous>, transform_indices = @transform_6, window_bounds = array<i64: 2, 1, 128>}, {pipeline_mode = #tpu.pipeline_mode<synchronous>, transform_indices = @transform_7, window_bounds = array<i64: 2, 1, 128>}, {pipeline_mode = #tpu.pipeline_mode<synchronous>, transform_indices = @transform_8, window_bounds = array<i64: 2, 1, 128>}, {pipeline_mode = #tpu.pipeline_mode<synchronous>, transform_indices = @transform_9, window_bounds = array<i64: 2, 128, 512>}, {pipeline_mode = #tpu.pipeline_mode<synchronous>, transform_indices = @transform_10, window_bounds = array<i64: 2, 1, 512>}, {pipeline_mode = #tpu.pipeline_mode<synchronous>, transform_indices = @transform_11, window_bounds = array<i64: 2, 512, 128>}, {pipeline_mode = #tpu.pipeline_mode<synchronous>, transform_indices = @transform_12, window_bounds = array<i64: 2, 1, 128>}, {pipeline_mode = #tpu.pipeline_mode<synchronous>, transform_indices = @transform_13, window_bounds = array<i64: 2, 1, 128>}, {pipeline_mode = #tpu.pipeline_mode<synchronous>, transform_indices = @transform_14, window_bounds = array<i64: 2, 1, 128>}, {pipeline_mode = #tpu.pipeline_mode<synchronous>, transform_indices = @transform_15, window_bounds = array<i64: 128, 512>}, {pipeline_mode = #tpu.pipeline_mode<synchronous>, transform_indices = @transform_16, window_bounds = array<i64: 128, 512>}, {pipeline_mode = #tpu.pipeline_mode<synchronous>, transform_indices = @transform_17, window_bounds = array<i64: 1, 512>}, {pipeline_mode = #tpu.pipeline_mode<synchronous>, transform_indices = @transform_18, window_bounds = array<i64: 128, 512>}, {pipeline_mode = #tpu.pipeline_mode<synchronous>, transform_indices = @transform_19, window_bounds = array<i64: 1, 512>}, {pipeline_mode = #tpu.pipeline_mode<synchronous>, transform_indices = @transform_20, window_bounds = array<i64: 16, 512>}]} {
    %c0 = arith.constant 0 : index
    %c0_0 = arith.constant 0 : index
    %0 = vector.load %arg1[%c0, %c0_0] : memref<16x128xf32, #tpu.memory_space<vmem>>, vector<16x128xf32>
    %c0_1 = arith.constant 0 : index
    %c0_2 = arith.constant 0 : index
    %1 = vector.load %arg2[%c0_1, %c0_2] : memref<1x128xf32, #tpu.memory_space<vmem>>, vector<1x128xf32>
    %c0_3 = arith.constant 0 : index
    %c0_4 = arith.constant 0 : index
    %2 = vector.load %arg3[%c0_3, %c0_4] : memref<1x128xf32, #tpu.memory_space<vmem>>, vector<1x128xf32>
    %cst = arith.constant dense<0.000000e+00> : vector<16xf32>
    %3 = vector.multi_reduction <add>, %0, %cst [1] : vector<16x128xf32> to vector<16xf32>
    %4 = vector.shape_cast %3 : vector<16xf32> to vector<16x1xf32>
    %cst_5 = arith.constant 1.280000e+02 : f32
    %5 = vector.broadcast %cst_5 : f32 to vector<16x1xf32>
    %6 = arith.divf %4, %5 : vector<16x1xf32>
    %7 = vector.broadcast %6 : vector<16x1xf32> to vector<16x128xf32>
    %8 = arith.subf %0, %7 : vector<16x128xf32>
    %9 = arith.mulf %8, %8 : vector<16x128xf32>
    %cst_6 = arith.constant dense<0.000000e+00> : vector<16xf32>
    %10 = vector.multi_reduction <add>, %9, %cst_6 [1] : vector<16x128xf32> to vector<16xf32>
    %11 = vector.shape_cast %10 : vector<16xf32> to vector<16x1xf32>
    %cst_7 = arith.constant 1.280000e+02 : f32
    %12 = vector.broadcast %cst_7 : f32 to vector<16x1xf32>
    %13 = arith.divf %11, %12 : vector<16x1xf32>
    %cst_8 = arith.constant 9.99999996E-13 : f32
    %14 = vector.broadcast %cst_8 : f32 to vector<16x1xf32>
    %15 = arith.addf %13, %14 : vector<16x1xf32>
    %16 = math.rsqrt %15 : vector<16x1xf32>
    %17 = vector.broadcast %16 : vector<16x1xf32> to vector<16x128xf32>
    %18 = arith.mulf %8, %17 : vector<16x128xf32>
    %19 = vector.broadcast %1 : vector<1x128xf32> to vector<16x128xf32>
    %20 = arith.mulf %18, %19 : vector<16x128xf32>
    %21 = vector.broadcast %2 : vector<1x128xf32> to vector<16x128xf32>
    %22 = arith.addf %20, %21 : vector<16x128xf32>
    %c0_9 = arith.constant 0 : index
    %c0_10 = arith.constant 0 : index
    %c0_11 = arith.constant 0 : index
    %23 = vector.load %arg4[%c0_9, %c0_10, %c0_11] : memref<2x128x384xbf16, #tpu.memory_space<vmem>>, vector<1x128x384xbf16>
    %24 = vector.shape_cast %23 : vector<1x128x384xbf16> to vector<128x384xbf16>
    %c0_12 = arith.constant 0 : index
    %c0_13 = arith.constant 0 : index
    %c0_14 = arith.constant 0 : index
    %25 = vector.load %arg6[%c0_12, %c0_13, %c0_14] : memref<2x128x128xbf16, #tpu.memory_space<vmem>>, vector<1x128x128xbf16>
    %26 = vector.shape_cast %25 : vector<1x128x128xbf16> to vector<128x128xbf16>
    %27 = arith.truncf %22 : vector<16x128xf32> to vector<16x128xbf16>
    %cst_15 = arith.constant dense<0.000000e+00> : vector<16x384xf32>
    %28 = tpu.matmul %27, %24, %cst_15 {dimension_numbers = #tpu.dot_dimension_numbers<[1], [0], [0], [1], [0, 0, 1, 1], [], []>} : vector<16x128xbf16>, vector<128x384xbf16>, vector<16x384xf32> -> vector<16x384xf32>
    %c0_16 = arith.constant 0 : index
    %c0_17 = arith.constant 0 : index
    %c0_18 = arith.constant 0 : index
    %29 = vector.load %arg5[%c0_16, %c0_17, %c0_18] : memref<2x1x384xf32, #tpu.memory_space<vmem>>, vector<1x1x384xf32>
    %30 = vector.shape_cast %29 : vector<1x1x384xf32> to vector<1x384xf32>
    %31 = vector.broadcast %30 : vector<1x384xf32> to vector<16x384xf32>
    %32 = arith.addf %28, %31 : vector<16x384xf32>
    %33 = vector.extract_strided_slice %32 {offsets = [0, 0], sizes = [16, 128], strides = [1, 1]} : vector<16x384xf32> to vector<16x128xf32>
    %34 = vector.extract_strided_slice %32 {offsets = [0, 128], sizes = [16, 128], strides = [1, 1]} : vector<16x384xf32> to vector<16x128xf32>
    %35 = vector.extract_strided_slice %32 {offsets = [0, 256], sizes = [16, 128], strides = [1, 1]} : vector<16x384xf32> to vector<16x128xf32>
    %36 = vector.extract_strided_slice %33 {offsets = [0, 0], sizes = [8, 32], strides = [1, 1]} : vector<16x128xf32> to vector<8x32xf32>
    %37 = arith.truncf %36 : vector<8x32xf32> to vector<8x32xbf16>
    %38 = vector.extract_strided_slice %34 {offsets = [0, 0], sizes = [8, 32], strides = [1, 1]} : vector<16x128xf32> to vector<8x32xf32>
    %39 = arith.truncf %38 : vector<8x32xf32> to vector<8x32xbf16>
    %40 = vector.extract_strided_slice %35 {offsets = [0, 0], sizes = [8, 32], strides = [1, 1]} : vector<16x128xf32> to vector<8x32xf32>
    %41 = arith.truncf %40 : vector<8x32xf32> to vector<8x32xbf16>
    %cst_19 = arith.constant dense<0.000000e+00> : vector<8x8xf32>
    %42 = tpu.matmul %37, %39, %cst_19 {dimension_numbers = #tpu.dot_dimension_numbers<[1], [1], [0], [0], [0, 0, 1, 0], [], []>} : vector<8x32xbf16>, vector<8x32xbf16>, vector<8x8xf32> -> vector<8x8xf32>
    %cst_20 = arith.constant dense<0xFF800000> : vector<8xf32>
    %43 = vector.multi_reduction <maximumf>, %42, %cst_20 [1] : vector<8x8xf32> to vector<8xf32>
    %44 = vector.shape_cast %43 : vector<8xf32> to vector<8x1xf32>
    %45 = vector.broadcast %44 : vector<8x1xf32> to vector<8x8xf32>
    %46 = arith.subf %42, %45 : vector<8x8xf32>
    %47 = math.exp %46 : vector<8x8xf32>
    %cst_21 = arith.constant dense<0.000000e+00> : vector<8xf32>
    %48 = vector.multi_reduction <add>, %47, %cst_21 [1] : vector<8x8xf32> to vector<8xf32>
    %49 = vector.shape_cast %48 : vector<8xf32> to vector<8x1xf32>
    %50 = tpu.reciprocal %49 {approx = true} : vector<8x1xf32> -> vector<8x1xf32>
    %51 = vector.broadcast %50 : vector<8x1xf32> to vector<8x8xf32>
    %52 = arith.mulf %47, %51 : vector<8x8xf32>
    %53 = arith.truncf %52 : vector<8x8xf32> to vector<8x8xbf16>
    %cst_22 = arith.constant dense<0.000000e+00> : vector<8x32xf32>
    %54 = tpu.matmul %53, %41, %cst_22 {dimension_numbers = #tpu.dot_dimension_numbers<[1], [0], [0], [1], [0, 0, 1, 1], [], []>} : vector<8x8xbf16>, vector<8x32xbf16>, vector<8x32xf32> -> vector<8x32xf32>
    %55 = arith.truncf %54 : vector<8x32xf32> to vector<8x32xbf16>
    %56 = vector.extract_strided_slice %26 {offsets = [0, 0], sizes = [32, 128], strides = [1, 1]} : vector<128x128xbf16> to vector<32x128xbf16>
    %cst_23 = arith.constant dense<0.000000e+00> : vector<8x128xf32>
    %57 = tpu.matmul %55, %56, %cst_23 {dimension_numbers = #tpu.dot_dimension_numbers<[1], [0], [0], [1], [0, 0, 1, 1], [], []>} : vector<8x32xbf16>, vector<32x128xbf16>, vector<8x128xf32> -> vector<8x128xf32>
    %58 = vector.extract_strided_slice %33 {offsets = [0, 32], sizes = [8, 32], strides = [1, 1]} : vector<16x128xf32> to vector<8x32xf32>
    %59 = arith.truncf %58 : vector<8x32xf32> to vector<8x32xbf16>
    %60 = vector.extract_strided_slice %34 {offsets = [0, 32], sizes = [8, 32], strides = [1, 1]} : vector<16x128xf32> to vector<8x32xf32>
    %61 = arith.truncf %60 : vector<8x32xf32> to vector<8x32xbf16>
    %62 = vector.extract_strided_slice %35 {offsets = [0, 32], sizes = [8, 32], strides = [1, 1]} : vector<16x128xf32> to vector<8x32xf32>
    %63 = arith.truncf %62 : vector<8x32xf32> to vector<8x32xbf16>
    %cst_24 = arith.constant dense<0.000000e+00> : vector<8x8xf32>
    %64 = tpu.matmul %59, %61, %cst_24 {dimension_numbers = #tpu.dot_dimension_numbers<[1], [1], [0], [0], [0, 0, 1, 0], [], []>} : vector<8x32xbf16>, vector<8x32xbf16>, vector<8x8xf32> -> vector<8x8xf32>
    %cst_25 = arith.constant dense<0xFF800000> : vector<8xf32>
    %65 = vector.multi_reduction <maximumf>, %64, %cst_25 [1] : vector<8x8xf32> to vector<8xf32>
    %66 = vector.shape_cast %65 : vector<8xf32> to vector<8x1xf32>
    %67 = vector.broadcast %66 : vector<8x1xf32> to vector<8x8xf32>
    %68 = arith.subf %64, %67 : vector<8x8xf32>
    %69 = math.exp %68 : vector<8x8xf32>
    %cst_26 = arith.constant dense<0.000000e+00> : vector<8xf32>
    %70 = vector.multi_reduction <add>, %69, %cst_26 [1] : vector<8x8xf32> to vector<8xf32>
    %71 = vector.shape_cast %70 : vector<8xf32> to vector<8x1xf32>
    %72 = tpu.reciprocal %71 {approx = true} : vector<8x1xf32> -> vector<8x1xf32>
    %73 = vector.broadcast %72 : vector<8x1xf32> to vector<8x8xf32>
    %74 = arith.mulf %69, %73 : vector<8x8xf32>
    %75 = arith.truncf %74 : vector<8x8xf32> to vector<8x8xbf16>
    %cst_27 = arith.constant dense<0.000000e+00> : vector<8x32xf32>
    %76 = tpu.matmul %75, %63, %cst_27 {dimension_numbers = #tpu.dot_dimension_numbers<[1], [0], [0], [1], [0, 0, 1, 1], [], []>} : vector<8x8xbf16>, vector<8x32xbf16>, vector<8x32xf32> -> vector<8x32xf32>
    %77 = arith.truncf %76 : vector<8x32xf32> to vector<8x32xbf16>
    %78 = vector.extract_strided_slice %26 {offsets = [32, 0], sizes = [32, 128], strides = [1, 1]} : vector<128x128xbf16> to vector<32x128xbf16>
    %cst_28 = arith.constant dense<0.000000e+00> : vector<8x128xf32>
    %79 = tpu.matmul %77, %78, %cst_28 {dimension_numbers = #tpu.dot_dimension_numbers<[1], [0], [0], [1], [0, 0, 1, 1], [], []>} : vector<8x32xbf16>, vector<32x128xbf16>, vector<8x128xf32> -> vector<8x128xf32>
    %80 = arith.addf %57, %79 : vector<8x128xf32>
    %81 = vector.extract_strided_slice %33 {offsets = [0, 64], sizes = [8, 32], strides = [1, 1]} : vector<16x128xf32> to vector<8x32xf32>
    %82 = arith.truncf %81 : vector<8x32xf32> to vector<8x32xbf16>
    %83 = vector.extract_strided_slice %34 {offsets = [0, 64], sizes = [8, 32], strides = [1, 1]} : vector<16x128xf32> to vector<8x32xf32>
    %84 = arith.truncf %83 : vector<8x32xf32> to vector<8x32xbf16>
    %85 = vector.extract_strided_slice %35 {offsets = [0, 64], sizes = [8, 32], strides = [1, 1]} : vector<16x128xf32> to vector<8x32xf32>
    %86 = arith.truncf %85 : vector<8x32xf32> to vector<8x32xbf16>
    %cst_29 = arith.constant dense<0.000000e+00> : vector<8x8xf32>
    %87 = tpu.matmul %82, %84, %cst_29 {dimension_numbers = #tpu.dot_dimension_numbers<[1], [1], [0], [0], [0, 0, 1, 0], [], []>} : vector<8x32xbf16>, vector<8x32xbf16>, vector<8x8xf32> -> vector<8x8xf32>
    %cst_30 = arith.constant dense<0xFF800000> : vector<8xf32>
    %88 = vector.multi_reduction <maximumf>, %87, %cst_30 [1] : vector<8x8xf32> to vector<8xf32>
    %89 = vector.shape_cast %88 : vector<8xf32> to vector<8x1xf32>
    %90 = vector.broadcast %89 : vector<8x1xf32> to vector<8x8xf32>
    %91 = arith.subf %87, %90 : vector<8x8xf32>
    %92 = math.exp %91 : vector<8x8xf32>
    %cst_31 = arith.constant dense<0.000000e+00> : vector<8xf32>
    %93 = vector.multi_reduction <add>, %92, %cst_31 [1] : vector<8x8xf32> to vector<8xf32>
    %94 = vector.shape_cast %93 : vector<8xf32> to vector<8x1xf32>
    %95 = tpu.reciprocal %94 {approx = true} : vector<8x1xf32> -> vector<8x1xf32>
    %96 = vector.broadcast %95 : vector<8x1xf32> to vector<8x8xf32>
    %97 = arith.mulf %92, %96 : vector<8x8xf32>
    %98 = arith.truncf %97 : vector<8x8xf32> to vector<8x8xbf16>
    %cst_32 = arith.constant dense<0.000000e+00> : vector<8x32xf32>
    %99 = tpu.matmul %98, %86, %cst_32 {dimension_numbers = #tpu.dot_dimension_numbers<[1], [0], [0], [1], [0, 0, 1, 1], [], []>} : vector<8x8xbf16>, vector<8x32xbf16>, vector<8x32xf32> -> vector<8x32xf32>
    %100 = arith.truncf %99 : vector<8x32xf32> to vector<8x32xbf16>
    %101 = vector.extract_strided_slice %26 {offsets = [64, 0], sizes = [32, 128], strides = [1, 1]} : vector<128x128xbf16> to vector<32x128xbf16>
    %cst_33 = arith.constant dense<0.000000e+00> : vector<8x128xf32>
    %102 = tpu.matmul %100, %101, %cst_33 {dimension_numbers = #tpu.dot_dimension_numbers<[1], [0], [0], [1], [0, 0, 1, 1], [], []>} : vector<8x32xbf16>, vector<32x128xbf16>, vector<8x128xf32> -> vector<8x128xf32>
    %103 = arith.addf %80, %102 : vector<8x128xf32>
    %104 = vector.extract_strided_slice %33 {offsets = [0, 96], sizes = [8, 32], strides = [1, 1]} : vector<16x128xf32> to vector<8x32xf32>
    %105 = arith.truncf %104 : vector<8x32xf32> to vector<8x32xbf16>
    %106 = vector.extract_strided_slice %34 {offsets = [0, 96], sizes = [8, 32], strides = [1, 1]} : vector<16x128xf32> to vector<8x32xf32>
    %107 = arith.truncf %106 : vector<8x32xf32> to vector<8x32xbf16>
    %108 = vector.extract_strided_slice %35 {offsets = [0, 96], sizes = [8, 32], strides = [1, 1]} : vector<16x128xf32> to vector<8x32xf32>
    %109 = arith.truncf %108 : vector<8x32xf32> to vector<8x32xbf16>
    %cst_34 = arith.constant dense<0.000000e+00> : vector<8x8xf32>
    %110 = tpu.matmul %105, %107, %cst_34 {dimension_numbers = #tpu.dot_dimension_numbers<[1], [1], [0], [0], [0, 0, 1, 0], [], []>} : vector<8x32xbf16>, vector<8x32xbf16>, vector<8x8xf32> -> vector<8x8xf32>
    %cst_35 = arith.constant dense<0xFF800000> : vector<8xf32>
    %111 = vector.multi_reduction <maximumf>, %110, %cst_35 [1] : vector<8x8xf32> to vector<8xf32>
    %112 = vector.shape_cast %111 : vector<8xf32> to vector<8x1xf32>
    %113 = vector.broadcast %112 : vector<8x1xf32> to vector<8x8xf32>
    %114 = arith.subf %110, %113 : vector<8x8xf32>
    %115 = math.exp %114 : vector<8x8xf32>
    %cst_36 = arith.constant dense<0.000000e+00> : vector<8xf32>
    %116 = vector.multi_reduction <add>, %115, %cst_36 [1] : vector<8x8xf32> to vector<8xf32>
    %117 = vector.shape_cast %116 : vector<8xf32> to vector<8x1xf32>
    %118 = tpu.reciprocal %117 {approx = true} : vector<8x1xf32> -> vector<8x1xf32>
    %119 = vector.broadcast %118 : vector<8x1xf32> to vector<8x8xf32>
    %120 = arith.mulf %115, %119 : vector<8x8xf32>
    %121 = arith.truncf %120 : vector<8x8xf32> to vector<8x8xbf16>
    %cst_37 = arith.constant dense<0.000000e+00> : vector<8x32xf32>
    %122 = tpu.matmul %121, %109, %cst_37 {dimension_numbers = #tpu.dot_dimension_numbers<[1], [0], [0], [1], [0, 0, 1, 1], [], []>} : vector<8x8xbf16>, vector<8x32xbf16>, vector<8x32xf32> -> vector<8x32xf32>
    %123 = arith.truncf %122 : vector<8x32xf32> to vector<8x32xbf16>
    %124 = vector.extract_strided_slice %26 {offsets = [96, 0], sizes = [32, 128], strides = [1, 1]} : vector<128x128xbf16> to vector<32x128xbf16>
    %cst_38 = arith.constant dense<0.000000e+00> : vector<8x128xf32>
    %125 = tpu.matmul %123, %124, %cst_38 {dimension_numbers = #tpu.dot_dimension_numbers<[1], [0], [0], [1], [0, 0, 1, 1], [], []>} : vector<8x32xbf16>, vector<32x128xbf16>, vector<8x128xf32> -> vector<8x128xf32>
    %126 = arith.addf %103, %125 : vector<8x128xf32>
    %127 = vector.extract_strided_slice %33 {offsets = [8, 0], sizes = [8, 32], strides = [1, 1]} : vector<16x128xf32> to vector<8x32xf32>
    %128 = arith.truncf %127 : vector<8x32xf32> to vector<8x32xbf16>
    %129 = vector.extract_strided_slice %34 {offsets = [8, 0], sizes = [8, 32], strides = [1, 1]} : vector<16x128xf32> to vector<8x32xf32>
    %130 = arith.truncf %129 : vector<8x32xf32> to vector<8x32xbf16>
    %131 = vector.extract_strided_slice %35 {offsets = [8, 0], sizes = [8, 32], strides = [1, 1]} : vector<16x128xf32> to vector<8x32xf32>
    %132 = arith.truncf %131 : vector<8x32xf32> to vector<8x32xbf16>
    %cst_39 = arith.constant dense<0.000000e+00> : vector<8x8xf32>
    %133 = tpu.matmul %128, %130, %cst_39 {dimension_numbers = #tpu.dot_dimension_numbers<[1], [1], [0], [0], [0, 0, 1, 0], [], []>} : vector<8x32xbf16>, vector<8x32xbf16>, vector<8x8xf32> -> vector<8x8xf32>
    %cst_40 = arith.constant dense<0xFF800000> : vector<8xf32>
    %134 = vector.multi_reduction <maximumf>, %133, %cst_40 [1] : vector<8x8xf32> to vector<8xf32>
    %135 = vector.shape_cast %134 : vector<8xf32> to vector<8x1xf32>
    %136 = vector.broadcast %135 : vector<8x1xf32> to vector<8x8xf32>
    %137 = arith.subf %133, %136 : vector<8x8xf32>
    %138 = math.exp %137 : vector<8x8xf32>
    %cst_41 = arith.constant dense<0.000000e+00> : vector<8xf32>
    %139 = vector.multi_reduction <add>, %138, %cst_41 [1] : vector<8x8xf32> to vector<8xf32>
    %140 = vector.shape_cast %139 : vector<8xf32> to vector<8x1xf32>
    %141 = tpu.reciprocal %140 {approx = true} : vector<8x1xf32> -> vector<8x1xf32>
    %142 = vector.broadcast %141 : vector<8x1xf32> to vector<8x8xf32>
    %143 = arith.mulf %138, %142 : vector<8x8xf32>
    %144 = arith.truncf %143 : vector<8x8xf32> to vector<8x8xbf16>
    %cst_42 = arith.constant dense<0.000000e+00> : vector<8x32xf32>
    %145 = tpu.matmul %144, %132, %cst_42 {dimension_numbers = #tpu.dot_dimension_numbers<[1], [0], [0], [1], [0, 0, 1, 1], [], []>} : vector<8x8xbf16>, vector<8x32xbf16>, vector<8x32xf32> -> vector<8x32xf32>
    %146 = arith.truncf %145 : vector<8x32xf32> to vector<8x32xbf16>
    %147 = vector.extract_strided_slice %26 {offsets = [0, 0], sizes = [32, 128], strides = [1, 1]} : vector<128x128xbf16> to vector<32x128xbf16>
    %cst_43 = arith.constant dense<0.000000e+00> : vector<8x128xf32>
    %148 = tpu.matmul %146, %147, %cst_43 {dimension_numbers = #tpu.dot_dimension_numbers<[1], [0], [0], [1], [0, 0, 1, 1], [], []>} : vector<8x32xbf16>, vector<32x128xbf16>, vector<8x128xf32> -> vector<8x128xf32>
    %149 = vector.extract_strided_slice %33 {offsets = [8, 32], sizes = [8, 32], strides = [1, 1]} : vector<16x128xf32> to vector<8x32xf32>
    %150 = arith.truncf %149 : vector<8x32xf32> to vector<8x32xbf16>
    %151 = vector.extract_strided_slice %34 {offsets = [8, 32], sizes = [8, 32], strides = [1, 1]} : vector<16x128xf32> to vector<8x32xf32>
    %152 = arith.truncf %151 : vector<8x32xf32> to vector<8x32xbf16>
    %153 = vector.extract_strided_slice %35 {offsets = [8, 32], sizes = [8, 32], strides = [1, 1]} : vector<16x128xf32> to vector<8x32xf32>
    %154 = arith.truncf %153 : vector<8x32xf32> to vector<8x32xbf16>
    %cst_44 = arith.constant dense<0.000000e+00> : vector<8x8xf32>
    %155 = tpu.matmul %150, %152, %cst_44 {dimension_numbers = #tpu.dot_dimension_numbers<[1], [1], [0], [0], [0, 0, 1, 0], [], []>} : vector<8x32xbf16>, vector<8x32xbf16>, vector<8x8xf32> -> vector<8x8xf32>
    %cst_45 = arith.constant dense<0xFF800000> : vector<8xf32>
    %156 = vector.multi_reduction <maximumf>, %155, %cst_45 [1] : vector<8x8xf32> to vector<8xf32>
    %157 = vector.shape_cast %156 : vector<8xf32> to vector<8x1xf32>
    %158 = vector.broadcast %157 : vector<8x1xf32> to vector<8x8xf32>
    %159 = arith.subf %155, %158 : vector<8x8xf32>
    %160 = math.exp %159 : vector<8x8xf32>
    %cst_46 = arith.constant dense<0.000000e+00> : vector<8xf32>
    %161 = vector.multi_reduction <add>, %160, %cst_46 [1] : vector<8x8xf32> to vector<8xf32>
    %162 = vector.shape_cast %161 : vector<8xf32> to vector<8x1xf32>
    %163 = tpu.reciprocal %162 {approx = true} : vector<8x1xf32> -> vector<8x1xf32>
    %164 = vector.broadcast %163 : vector<8x1xf32> to vector<8x8xf32>
    %165 = arith.mulf %160, %164 : vector<8x8xf32>
    %166 = arith.truncf %165 : vector<8x8xf32> to vector<8x8xbf16>
    %cst_47 = arith.constant dense<0.000000e+00> : vector<8x32xf32>
    %167 = tpu.matmul %166, %154, %cst_47 {dimension_numbers = #tpu.dot_dimension_numbers<[1], [0], [0], [1], [0, 0, 1, 1], [], []>} : vector<8x8xbf16>, vector<8x32xbf16>, vector<8x32xf32> -> vector<8x32xf32>
    %168 = arith.truncf %167 : vector<8x32xf32> to vector<8x32xbf16>
    %169 = vector.extract_strided_slice %26 {offsets = [32, 0], sizes = [32, 128], strides = [1, 1]} : vector<128x128xbf16> to vector<32x128xbf16>
    %cst_48 = arith.constant dense<0.000000e+00> : vector<8x128xf32>
    %170 = tpu.matmul %168, %169, %cst_48 {dimension_numbers = #tpu.dot_dimension_numbers<[1], [0], [0], [1], [0, 0, 1, 1], [], []>} : vector<8x32xbf16>, vector<32x128xbf16>, vector<8x128xf32> -> vector<8x128xf32>
    %171 = arith.addf %148, %170 : vector<8x128xf32>
    %172 = vector.extract_strided_slice %33 {offsets = [8, 64], sizes = [8, 32], strides = [1, 1]} : vector<16x128xf32> to vector<8x32xf32>
    %173 = arith.truncf %172 : vector<8x32xf32> to vector<8x32xbf16>
    %174 = vector.extract_strided_slice %34 {offsets = [8, 64], sizes = [8, 32], strides = [1, 1]} : vector<16x128xf32> to vector<8x32xf32>
    %175 = arith.truncf %174 : vector<8x32xf32> to vector<8x32xbf16>
    %176 = vector.extract_strided_slice %35 {offsets = [8, 64], sizes = [8, 32], strides = [1, 1]} : vector<16x128xf32> to vector<8x32xf32>
    %177 = arith.truncf %176 : vector<8x32xf32> to vector<8x32xbf16>
    %cst_49 = arith.constant dense<0.000000e+00> : vector<8x8xf32>
    %178 = tpu.matmul %173, %175, %cst_49 {dimension_numbers = #tpu.dot_dimension_numbers<[1], [1], [0], [0], [0, 0, 1, 0], [], []>} : vector<8x32xbf16>, vector<8x32xbf16>, vector<8x8xf32> -> vector<8x8xf32>
    %cst_50 = arith.constant dense<0xFF800000> : vector<8xf32>
    %179 = vector.multi_reduction <maximumf>, %178, %cst_50 [1] : vector<8x8xf32> to vector<8xf32>
    %180 = vector.shape_cast %179 : vector<8xf32> to vector<8x1xf32>
    %181 = vector.broadcast %180 : vector<8x1xf32> to vector<8x8xf32>
    %182 = arith.subf %178, %181 : vector<8x8xf32>
    %183 = math.exp %182 : vector<8x8xf32>
    %cst_51 = arith.constant dense<0.000000e+00> : vector<8xf32>
    %184 = vector.multi_reduction <add>, %183, %cst_51 [1] : vector<8x8xf32> to vector<8xf32>
    %185 = vector.shape_cast %184 : vector<8xf32> to vector<8x1xf32>
    %186 = tpu.reciprocal %185 {approx = true} : vector<8x1xf32> -> vector<8x1xf32>
    %187 = vector.broadcast %186 : vector<8x1xf32> to vector<8x8xf32>
    %188 = arith.mulf %183, %187 : vector<8x8xf32>
    %189 = arith.truncf %188 : vector<8x8xf32> to vector<8x8xbf16>
    %cst_52 = arith.constant dense<0.000000e+00> : vector<8x32xf32>
    %190 = tpu.matmul %189, %177, %cst_52 {dimension_numbers = #tpu.dot_dimension_numbers<[1], [0], [0], [1], [0, 0, 1, 1], [], []>} : vector<8x8xbf16>, vector<8x32xbf16>, vector<8x32xf32> -> vector<8x32xf32>
    %191 = arith.truncf %190 : vector<8x32xf32> to vector<8x32xbf16>
    %192 = vector.extract_strided_slice %26 {offsets = [64, 0], sizes = [32, 128], strides = [1, 1]} : vector<128x128xbf16> to vector<32x128xbf16>
    %cst_53 = arith.constant dense<0.000000e+00> : vector<8x128xf32>
    %193 = tpu.matmul %191, %192, %cst_53 {dimension_numbers = #tpu.dot_dimension_numbers<[1], [0], [0], [1], [0, 0, 1, 1], [], []>} : vector<8x32xbf16>, vector<32x128xbf16>, vector<8x128xf32> -> vector<8x128xf32>
    %194 = arith.addf %171, %193 : vector<8x128xf32>
    %195 = vector.extract_strided_slice %33 {offsets = [8, 96], sizes = [8, 32], strides = [1, 1]} : vector<16x128xf32> to vector<8x32xf32>
    %196 = arith.truncf %195 : vector<8x32xf32> to vector<8x32xbf16>
    %197 = vector.extract_strided_slice %34 {offsets = [8, 96], sizes = [8, 32], strides = [1, 1]} : vector<16x128xf32> to vector<8x32xf32>
    %198 = arith.truncf %197 : vector<8x32xf32> to vector<8x32xbf16>
    %199 = vector.extract_strided_slice %35 {offsets = [8, 96], sizes = [8, 32], strides = [1, 1]} : vector<16x128xf32> to vector<8x32xf32>
    %200 = arith.truncf %199 : vector<8x32xf32> to vector<8x32xbf16>
    %cst_54 = arith.constant dense<0.000000e+00> : vector<8x8xf32>
    %201 = tpu.matmul %196, %198, %cst_54 {dimension_numbers = #tpu.dot_dimension_numbers<[1], [1], [0], [0], [0, 0, 1, 0], [], []>} : vector<8x32xbf16>, vector<8x32xbf16>, vector<8x8xf32> -> vector<8x8xf32>
    %cst_55 = arith.constant dense<0xFF800000> : vector<8xf32>
    %202 = vector.multi_reduction <maximumf>, %201, %cst_55 [1] : vector<8x8xf32> to vector<8xf32>
    %203 = vector.shape_cast %202 : vector<8xf32> to vector<8x1xf32>
    %204 = vector.broadcast %203 : vector<8x1xf32> to vector<8x8xf32>
    %205 = arith.subf %201, %204 : vector<8x8xf32>
    %206 = math.exp %205 : vector<8x8xf32>
    %cst_56 = arith.constant dense<0.000000e+00> : vector<8xf32>
    %207 = vector.multi_reduction <add>, %206, %cst_56 [1] : vector<8x8xf32> to vector<8xf32>
    %208 = vector.shape_cast %207 : vector<8xf32> to vector<8x1xf32>
    %209 = tpu.reciprocal %208 {approx = true} : vector<8x1xf32> -> vector<8x1xf32>
    %210 = vector.broadcast %209 : vector<8x1xf32> to vector<8x8xf32>
    %211 = arith.mulf %206, %210 : vector<8x8xf32>
    %212 = arith.truncf %211 : vector<8x8xf32> to vector<8x8xbf16>
    %cst_57 = arith.constant dense<0.000000e+00> : vector<8x32xf32>
    %213 = tpu.matmul %212, %200, %cst_57 {dimension_numbers = #tpu.dot_dimension_numbers<[1], [0], [0], [1], [0, 0, 1, 1], [], []>} : vector<8x8xbf16>, vector<8x32xbf16>, vector<8x32xf32> -> vector<8x32xf32>
    %214 = arith.truncf %213 : vector<8x32xf32> to vector<8x32xbf16>
    %215 = vector.extract_strided_slice %26 {offsets = [96, 0], sizes = [32, 128], strides = [1, 1]} : vector<128x128xbf16> to vector<32x128xbf16>
    %cst_58 = arith.constant dense<0.000000e+00> : vector<8x128xf32>
    %216 = tpu.matmul %214, %215, %cst_58 {dimension_numbers = #tpu.dot_dimension_numbers<[1], [0], [0], [1], [0, 0, 1, 1], [], []>} : vector<8x32xbf16>, vector<32x128xbf16>, vector<8x128xf32> -> vector<8x128xf32>
    %217 = arith.addf %194, %216 : vector<8x128xf32>
    %218 = tpu.concatenate %126, %217 in 0 : vector<8x128xf32>, vector<8x128xf32> -> vector<16x128xf32>
    %c0_59 = arith.constant 0 : index
    %c0_60 = arith.constant 0 : index
    %c0_61 = arith.constant 0 : index
    %219 = vector.load %arg7[%c0_59, %c0_60, %c0_61] : memref<2x1x128xf32, #tpu.memory_space<vmem>>, vector<1x1x128xf32>
    %220 = vector.shape_cast %219 : vector<1x1x128xf32> to vector<1x128xf32>
    %221 = vector.broadcast %220 : vector<1x128xf32> to vector<16x128xf32>
    %222 = arith.addf %218, %221 : vector<16x128xf32>
    %223 = arith.addf %22, %222 : vector<16x128xf32>
    %c0_62 = arith.constant 0 : index
    %c0_63 = arith.constant 0 : index
    %c0_64 = arith.constant 0 : index
    %224 = vector.load %arg8[%c0_62, %c0_63, %c0_64] : memref<2x1x128xf32, #tpu.memory_space<vmem>>, vector<1x1x128xf32>
    %225 = vector.shape_cast %224 : vector<1x1x128xf32> to vector<1x128xf32>
    %c0_65 = arith.constant 0 : index
    %c0_66 = arith.constant 0 : index
    %c0_67 = arith.constant 0 : index
    %226 = vector.load %arg9[%c0_65, %c0_66, %c0_67] : memref<2x1x128xf32, #tpu.memory_space<vmem>>, vector<1x1x128xf32>
    %227 = vector.shape_cast %226 : vector<1x1x128xf32> to vector<1x128xf32>
    %cst_68 = arith.constant dense<0.000000e+00> : vector<16xf32>
    %228 = vector.multi_reduction <add>, %223, %cst_68 [1] : vector<16x128xf32> to vector<16xf32>
    %229 = vector.shape_cast %228 : vector<16xf32> to vector<16x1xf32>
    %cst_69 = arith.constant 1.280000e+02 : f32
    %230 = vector.broadcast %cst_69 : f32 to vector<16x1xf32>
    %231 = arith.divf %229, %230 : vector<16x1xf32>
    %232 = vector.broadcast %231 : vector<16x1xf32> to vector<16x128xf32>
    %233 = arith.subf %223, %232 : vector<16x128xf32>
    %234 = arith.mulf %233, %233 : vector<16x128xf32>
    %cst_70 = arith.constant dense<0.000000e+00> : vector<16xf32>
    %235 = vector.multi_reduction <add>, %234, %cst_70 [1] : vector<16x128xf32> to vector<16xf32>
    %236 = vector.shape_cast %235 : vector<16xf32> to vector<16x1xf32>
    %cst_71 = arith.constant 1.280000e+02 : f32
    %237 = vector.broadcast %cst_71 : f32 to vector<16x1xf32>
    %238 = arith.divf %236, %237 : vector<16x1xf32>
    %cst_72 = arith.constant 9.99999996E-13 : f32
    %239 = vector.broadcast %cst_72 : f32 to vector<16x1xf32>
    %240 = arith.addf %238, %239 : vector<16x1xf32>
    %241 = math.rsqrt %240 : vector<16x1xf32>
    %242 = vector.broadcast %241 : vector<16x1xf32> to vector<16x128xf32>
    %243 = arith.mulf %233, %242 : vector<16x128xf32>
    %244 = vector.broadcast %225 : vector<1x128xf32> to vector<16x128xf32>
    %245 = arith.mulf %243, %244 : vector<16x128xf32>
    %246 = vector.broadcast %227 : vector<1x128xf32> to vector<16x128xf32>
    %247 = arith.addf %245, %246 : vector<16x128xf32>
    %248 = arith.truncf %247 : vector<16x128xf32> to vector<16x128xbf16>
    %c0_73 = arith.constant 0 : index
    %c0_74 = arith.constant 0 : index
    %c0_75 = arith.constant 0 : index
    %249 = vector.load %arg10[%c0_73, %c0_74, %c0_75] : memref<2x128x512xbf16, #tpu.memory_space<vmem>>, vector<1x128x512xbf16>
    %250 = vector.shape_cast %249 : vector<1x128x512xbf16> to vector<128x512xbf16>
    %cst_76 = arith.constant dense<0.000000e+00> : vector<16x512xf32>
    %251 = tpu.matmul %248, %250, %cst_76 {dimension_numbers = #tpu.dot_dimension_numbers<[1], [0], [0], [1], [0, 0, 1, 1], [], []>} : vector<16x128xbf16>, vector<128x512xbf16>, vector<16x512xf32> -> vector<16x512xf32>
    %c0_77 = arith.constant 0 : index
    %c0_78 = arith.constant 0 : index
    %c0_79 = arith.constant 0 : index
    %252 = vector.load %arg11[%c0_77, %c0_78, %c0_79] : memref<2x1x512xf32, #tpu.memory_space<vmem>>, vector<1x1x512xf32>
    %253 = vector.shape_cast %252 : vector<1x1x512xf32> to vector<1x512xf32>
    %254 = vector.broadcast %253 : vector<1x512xf32> to vector<16x512xf32>
    %255 = arith.addf %251, %254 : vector<16x512xf32>
    %cst_80 = arith.constant 5.000000e-01 : f32
    %256 = vector.broadcast %cst_80 : f32 to vector<16x512xf32>
    %257 = arith.mulf %256, %255 : vector<16x512xf32>
    %cst_81 = arith.constant 4.471500e-02 : f32
    %258 = vector.broadcast %cst_81 : f32 to vector<16x512xf32>
    %259 = arith.mulf %258, %255 : vector<16x512xf32>
    %260 = arith.mulf %259, %255 : vector<16x512xf32>
    %261 = arith.mulf %260, %255 : vector<16x512xf32>
    %262 = arith.addf %255, %261 : vector<16x512xf32>
    %cst_82 = arith.constant 0.797884583 : f32
    %263 = vector.broadcast %cst_82 : f32 to vector<16x512xf32>
    %264 = arith.mulf %263, %262 : vector<16x512xf32>
    %265 = math.tanh %264 : vector<16x512xf32>
    %cst_83 = arith.constant 1.000000e+00 : f32
    %266 = vector.broadcast %cst_83 : f32 to vector<16x512xf32>
    %267 = arith.addf %266, %265 : vector<16x512xf32>
    %268 = arith.mulf %257, %267 : vector<16x512xf32>
    %269 = arith.truncf %268 : vector<16x512xf32> to vector<16x512xbf16>
    %c0_84 = arith.constant 0 : index
    %c0_85 = arith.constant 0 : index
    %c0_86 = arith.constant 0 : index
    %270 = vector.load %arg12[%c0_84, %c0_85, %c0_86] : memref<2x512x128xbf16, #tpu.memory_space<vmem>>, vector<1x512x128xbf16>
    %271 = vector.shape_cast %270 : vector<1x512x128xbf16> to vector<512x128xbf16>
    %cst_87 = arith.constant dense<0.000000e+00> : vector<16x128xf32>
    %272 = tpu.matmul %269, %271, %cst_87 {dimension_numbers = #tpu.dot_dimension_numbers<[1], [0], [0], [1], [0, 0, 1, 1], [], []>} : vector<16x512xbf16>, vector<512x128xbf16>, vector<16x128xf32> -> vector<16x128xf32>
    %c0_88 = arith.constant 0 : index
    %c0_89 = arith.constant 0 : index
    %c0_90 = arith.constant 0 : index
    %273 = vector.load %arg13[%c0_88, %c0_89, %c0_90] : memref<2x1x128xf32, #tpu.memory_space<vmem>>, vector<1x1x128xf32>
    %274 = vector.shape_cast %273 : vector<1x1x128xf32> to vector<1x128xf32>
    %275 = vector.broadcast %274 : vector<1x128xf32> to vector<16x128xf32>
    %276 = arith.addf %272, %275 : vector<16x128xf32>
    %277 = arith.addf %247, %276 : vector<16x128xf32>
    %c0_91 = arith.constant 0 : index
    %c0_92 = arith.constant 0 : index
    %c0_93 = arith.constant 0 : index
    %278 = vector.load %arg14[%c0_91, %c0_92, %c0_93] : memref<2x1x128xf32, #tpu.memory_space<vmem>>, vector<1x1x128xf32>
    %279 = vector.shape_cast %278 : vector<1x1x128xf32> to vector<1x128xf32>
    %c0_94 = arith.constant 0 : index
    %c0_95 = arith.constant 0 : index
    %c0_96 = arith.constant 0 : index
    %280 = vector.load %arg15[%c0_94, %c0_95, %c0_96] : memref<2x1x128xf32, #tpu.memory_space<vmem>>, vector<1x1x128xf32>
    %281 = vector.shape_cast %280 : vector<1x1x128xf32> to vector<1x128xf32>
    %cst_97 = arith.constant dense<0.000000e+00> : vector<16xf32>
    %282 = vector.multi_reduction <add>, %277, %cst_97 [1] : vector<16x128xf32> to vector<16xf32>
    %283 = vector.shape_cast %282 : vector<16xf32> to vector<16x1xf32>
    %cst_98 = arith.constant 1.280000e+02 : f32
    %284 = vector.broadcast %cst_98 : f32 to vector<16x1xf32>
    %285 = arith.divf %283, %284 : vector<16x1xf32>
    %286 = vector.broadcast %285 : vector<16x1xf32> to vector<16x128xf32>
    %287 = arith.subf %277, %286 : vector<16x128xf32>
    %288 = arith.mulf %287, %287 : vector<16x128xf32>
    %cst_99 = arith.constant dense<0.000000e+00> : vector<16xf32>
    %289 = vector.multi_reduction <add>, %288, %cst_99 [1] : vector<16x128xf32> to vector<16xf32>
    %290 = vector.shape_cast %289 : vector<16xf32> to vector<16x1xf32>
    %cst_100 = arith.constant 1.280000e+02 : f32
    %291 = vector.broadcast %cst_100 : f32 to vector<16x1xf32>
    %292 = arith.divf %290, %291 : vector<16x1xf32>
    %cst_101 = arith.constant 9.99999996E-13 : f32
    %293 = vector.broadcast %cst_101 : f32 to vector<16x1xf32>
    %294 = arith.addf %292, %293 : vector<16x1xf32>
    %295 = math.rsqrt %294 : vector<16x1xf32>
    %296 = vector.broadcast %295 : vector<16x1xf32> to vector<16x128xf32>
    %297 = arith.mulf %287, %296 : vector<16x128xf32>
    %298 = vector.broadcast %279 : vector<1x128xf32> to vector<16x128xf32>
    %299 = arith.mulf %297, %298 : vector<16x128xf32>
    %300 = vector.broadcast %281 : vector<1x128xf32> to vector<16x128xf32>
    %301 = arith.addf %299, %300 : vector<16x128xf32>
    %c1 = arith.constant 1 : index
    %c0_102 = arith.constant 0 : index
    %c0_103 = arith.constant 0 : index
    %302 = vector.load %arg4[%c1, %c0_102, %c0_103] : memref<2x128x384xbf16, #tpu.memory_space<vmem>>, vector<1x128x384xbf16>
    %303 = vector.shape_cast %302 : vector<1x128x384xbf16> to vector<128x384xbf16>
    %c1_104 = arith.constant 1 : index
    %c0_105 = arith.constant 0 : index
    %c0_106 = arith.constant 0 : index
    %304 = vector.load %arg6[%c1_104, %c0_105, %c0_106] : memref<2x128x128xbf16, #tpu.memory_space<vmem>>, vector<1x128x128xbf16>
    %305 = vector.shape_cast %304 : vector<1x128x128xbf16> to vector<128x128xbf16>
    %306 = arith.truncf %301 : vector<16x128xf32> to vector<16x128xbf16>
    %cst_107 = arith.constant dense<0.000000e+00> : vector<16x384xf32>
    %307 = tpu.matmul %306, %303, %cst_107 {dimension_numbers = #tpu.dot_dimension_numbers<[1], [0], [0], [1], [0, 0, 1, 1], [], []>} : vector<16x128xbf16>, vector<128x384xbf16>, vector<16x384xf32> -> vector<16x384xf32>
    %c1_108 = arith.constant 1 : index
    %c0_109 = arith.constant 0 : index
    %c0_110 = arith.constant 0 : index
    %308 = vector.load %arg5[%c1_108, %c0_109, %c0_110] : memref<2x1x384xf32, #tpu.memory_space<vmem>>, vector<1x1x384xf32>
    %309 = vector.shape_cast %308 : vector<1x1x384xf32> to vector<1x384xf32>
    %310 = vector.broadcast %309 : vector<1x384xf32> to vector<16x384xf32>
    %311 = arith.addf %307, %310 : vector<16x384xf32>
    %312 = vector.extract_strided_slice %311 {offsets = [0, 0], sizes = [16, 128], strides = [1, 1]} : vector<16x384xf32> to vector<16x128xf32>
    %313 = vector.extract_strided_slice %311 {offsets = [0, 128], sizes = [16, 128], strides = [1, 1]} : vector<16x384xf32> to vector<16x128xf32>
    %314 = vector.extract_strided_slice %311 {offsets = [0, 256], sizes = [16, 128], strides = [1, 1]} : vector<16x384xf32> to vector<16x128xf32>
    %315 = vector.extract_strided_slice %312 {offsets = [0, 0], sizes = [8, 32], strides = [1, 1]} : vector<16x128xf32> to vector<8x32xf32>
    %316 = arith.truncf %315 : vector<8x32xf32> to vector<8x32xbf16>
    %317 = vector.extract_strided_slice %313 {offsets = [0, 0], sizes = [8, 32], strides = [1, 1]} : vector<16x128xf32> to vector<8x32xf32>
    %318 = arith.truncf %317 : vector<8x32xf32> to vector<8x32xbf16>
    %319 = vector.extract_strided_slice %314 {offsets = [0, 0], sizes = [8, 32], strides = [1, 1]} : vector<16x128xf32> to vector<8x32xf32>
    %320 = arith.truncf %319 : vector<8x32xf32> to vector<8x32xbf16>
    %cst_111 = arith.constant dense<0.000000e+00> : vector<8x8xf32>
    %321 = tpu.matmul %316, %318, %cst_111 {dimension_numbers = #tpu.dot_dimension_numbers<[1], [1], [0], [0], [0, 0, 1, 0], [], []>} : vector<8x32xbf16>, vector<8x32xbf16>, vector<8x8xf32> -> vector<8x8xf32>
    %cst_112 = arith.constant dense<0xFF800000> : vector<8xf32>
    %322 = vector.multi_reduction <maximumf>, %321, %cst_112 [1] : vector<8x8xf32> to vector<8xf32>
    %323 = vector.shape_cast %322 : vector<8xf32> to vector<8x1xf32>
    %324 = vector.broadcast %323 : vector<8x1xf32> to vector<8x8xf32>
    %325 = arith.subf %321, %324 : vector<8x8xf32>
    %326 = math.exp %325 : vector<8x8xf32>
    %cst_113 = arith.constant dense<0.000000e+00> : vector<8xf32>
    %327 = vector.multi_reduction <add>, %326, %cst_113 [1] : vector<8x8xf32> to vector<8xf32>
    %328 = vector.shape_cast %327 : vector<8xf32> to vector<8x1xf32>
    %329 = tpu.reciprocal %328 {approx = true} : vector<8x1xf32> -> vector<8x1xf32>
    %330 = vector.broadcast %329 : vector<8x1xf32> to vector<8x8xf32>
    %331 = arith.mulf %326, %330 : vector<8x8xf32>
    %332 = arith.truncf %331 : vector<8x8xf32> to vector<8x8xbf16>
    %cst_114 = arith.constant dense<0.000000e+00> : vector<8x32xf32>
    %333 = tpu.matmul %332, %320, %cst_114 {dimension_numbers = #tpu.dot_dimension_numbers<[1], [0], [0], [1], [0, 0, 1, 1], [], []>} : vector<8x8xbf16>, vector<8x32xbf16>, vector<8x32xf32> -> vector<8x32xf32>
    %334 = arith.truncf %333 : vector<8x32xf32> to vector<8x32xbf16>
    %335 = vector.extract_strided_slice %305 {offsets = [0, 0], sizes = [32, 128], strides = [1, 1]} : vector<128x128xbf16> to vector<32x128xbf16>
    %cst_115 = arith.constant dense<0.000000e+00> : vector<8x128xf32>
    %336 = tpu.matmul %334, %335, %cst_115 {dimension_numbers = #tpu.dot_dimension_numbers<[1], [0], [0], [1], [0, 0, 1, 1], [], []>} : vector<8x32xbf16>, vector<32x128xbf16>, vector<8x128xf32> -> vector<8x128xf32>
    %337 = vector.extract_strided_slice %312 {offsets = [0, 32], sizes = [8, 32], strides = [1, 1]} : vector<16x128xf32> to vector<8x32xf32>
    %338 = arith.truncf %337 : vector<8x32xf32> to vector<8x32xbf16>
    %339 = vector.extract_strided_slice %313 {offsets = [0, 32], sizes = [8, 32], strides = [1, 1]} : vector<16x128xf32> to vector<8x32xf32>
    %340 = arith.truncf %339 : vector<8x32xf32> to vector<8x32xbf16>
    %341 = vector.extract_strided_slice %314 {offsets = [0, 32], sizes = [8, 32], strides = [1, 1]} : vector<16x128xf32> to vector<8x32xf32>
    %342 = arith.truncf %341 : vector<8x32xf32> to vector<8x32xbf16>
    %cst_116 = arith.constant dense<0.000000e+00> : vector<8x8xf32>
    %343 = tpu.matmul %338, %340, %cst_116 {dimension_numbers = #tpu.dot_dimension_numbers<[1], [1], [0], [0], [0, 0, 1, 0], [], []>} : vector<8x32xbf16>, vector<8x32xbf16>, vector<8x8xf32> -> vector<8x8xf32>
    %cst_117 = arith.constant dense<0xFF800000> : vector<8xf32>
    %344 = vector.multi_reduction <maximumf>, %343, %cst_117 [1] : vector<8x8xf32> to vector<8xf32>
    %345 = vector.shape_cast %344 : vector<8xf32> to vector<8x1xf32>
    %346 = vector.broadcast %345 : vector<8x1xf32> to vector<8x8xf32>
    %347 = arith.subf %343, %346 : vector<8x8xf32>
    %348 = math.exp %347 : vector<8x8xf32>
    %cst_118 = arith.constant dense<0.000000e+00> : vector<8xf32>
    %349 = vector.multi_reduction <add>, %348, %cst_118 [1] : vector<8x8xf32> to vector<8xf32>
    %350 = vector.shape_cast %349 : vector<8xf32> to vector<8x1xf32>
    %351 = tpu.reciprocal %350 {approx = true} : vector<8x1xf32> -> vector<8x1xf32>
    %352 = vector.broadcast %351 : vector<8x1xf32> to vector<8x8xf32>
    %353 = arith.mulf %348, %352 : vector<8x8xf32>
    %354 = arith.truncf %353 : vector<8x8xf32> to vector<8x8xbf16>
    %cst_119 = arith.constant dense<0.000000e+00> : vector<8x32xf32>
    %355 = tpu.matmul %354, %342, %cst_119 {dimension_numbers = #tpu.dot_dimension_numbers<[1], [0], [0], [1], [0, 0, 1, 1], [], []>} : vector<8x8xbf16>, vector<8x32xbf16>, vector<8x32xf32> -> vector<8x32xf32>
    %356 = arith.truncf %355 : vector<8x32xf32> to vector<8x32xbf16>
    %357 = vector.extract_strided_slice %305 {offsets = [32, 0], sizes = [32, 128], strides = [1, 1]} : vector<128x128xbf16> to vector<32x128xbf16>
    %cst_120 = arith.constant dense<0.000000e+00> : vector<8x128xf32>
    %358 = tpu.matmul %356, %357, %cst_120 {dimension_numbers = #tpu.dot_dimension_numbers<[1], [0], [0], [1], [0, 0, 1, 1], [], []>} : vector<8x32xbf16>, vector<32x128xbf16>, vector<8x128xf32> -> vector<8x128xf32>
    %359 = arith.addf %336, %358 : vector<8x128xf32>
    %360 = vector.extract_strided_slice %312 {offsets = [0, 64], sizes = [8, 32], strides = [1, 1]} : vector<16x128xf32> to vector<8x32xf32>
    %361 = arith.truncf %360 : vector<8x32xf32> to vector<8x32xbf16>
    %362 = vector.extract_strided_slice %313 {offsets = [0, 64], sizes = [8, 32], strides = [1, 1]} : vector<16x128xf32> to vector<8x32xf32>
    %363 = arith.truncf %362 : vector<8x32xf32> to vector<8x32xbf16>
    %364 = vector.extract_strided_slice %314 {offsets = [0, 64], sizes = [8, 32], strides = [1, 1]} : vector<16x128xf32> to vector<8x32xf32>
    %365 = arith.truncf %364 : vector<8x32xf32> to vector<8x32xbf16>
    %cst_121 = arith.constant dense<0.000000e+00> : vector<8x8xf32>
    %366 = tpu.matmul %361, %363, %cst_121 {dimension_numbers = #tpu.dot_dimension_numbers<[1], [1], [0], [0], [0, 0, 1, 0], [], []>} : vector<8x32xbf16>, vector<8x32xbf16>, vector<8x8xf32> -> vector<8x8xf32>
    %cst_122 = arith.constant dense<0xFF800000> : vector<8xf32>
    %367 = vector.multi_reduction <maximumf>, %366, %cst_122 [1] : vector<8x8xf32> to vector<8xf32>
    %368 = vector.shape_cast %367 : vector<8xf32> to vector<8x1xf32>
    %369 = vector.broadcast %368 : vector<8x1xf32> to vector<8x8xf32>
    %370 = arith.subf %366, %369 : vector<8x8xf32>
    %371 = math.exp %370 : vector<8x8xf32>
    %cst_123 = arith.constant dense<0.000000e+00> : vector<8xf32>
    %372 = vector.multi_reduction <add>, %371, %cst_123 [1] : vector<8x8xf32> to vector<8xf32>
    %373 = vector.shape_cast %372 : vector<8xf32> to vector<8x1xf32>
    %374 = tpu.reciprocal %373 {approx = true} : vector<8x1xf32> -> vector<8x1xf32>
    %375 = vector.broadcast %374 : vector<8x1xf32> to vector<8x8xf32>
    %376 = arith.mulf %371, %375 : vector<8x8xf32>
    %377 = arith.truncf %376 : vector<8x8xf32> to vector<8x8xbf16>
    %cst_124 = arith.constant dense<0.000000e+00> : vector<8x32xf32>
    %378 = tpu.matmul %377, %365, %cst_124 {dimension_numbers = #tpu.dot_dimension_numbers<[1], [0], [0], [1], [0, 0, 1, 1], [], []>} : vector<8x8xbf16>, vector<8x32xbf16>, vector<8x32xf32> -> vector<8x32xf32>
    %379 = arith.truncf %378 : vector<8x32xf32> to vector<8x32xbf16>
    %380 = vector.extract_strided_slice %305 {offsets = [64, 0], sizes = [32, 128], strides = [1, 1]} : vector<128x128xbf16> to vector<32x128xbf16>
    %cst_125 = arith.constant dense<0.000000e+00> : vector<8x128xf32>
    %381 = tpu.matmul %379, %380, %cst_125 {dimension_numbers = #tpu.dot_dimension_numbers<[1], [0], [0], [1], [0, 0, 1, 1], [], []>} : vector<8x32xbf16>, vector<32x128xbf16>, vector<8x128xf32> -> vector<8x128xf32>
    %382 = arith.addf %359, %381 : vector<8x128xf32>
    %383 = vector.extract_strided_slice %312 {offsets = [0, 96], sizes = [8, 32], strides = [1, 1]} : vector<16x128xf32> to vector<8x32xf32>
    %384 = arith.truncf %383 : vector<8x32xf32> to vector<8x32xbf16>
    %385 = vector.extract_strided_slice %313 {offsets = [0, 96], sizes = [8, 32], strides = [1, 1]} : vector<16x128xf32> to vector<8x32xf32>
    %386 = arith.truncf %385 : vector<8x32xf32> to vector<8x32xbf16>
    %387 = vector.extract_strided_slice %314 {offsets = [0, 96], sizes = [8, 32], strides = [1, 1]} : vector<16x128xf32> to vector<8x32xf32>
    %388 = arith.truncf %387 : vector<8x32xf32> to vector<8x32xbf16>
    %cst_126 = arith.constant dense<0.000000e+00> : vector<8x8xf32>
    %389 = tpu.matmul %384, %386, %cst_126 {dimension_numbers = #tpu.dot_dimension_numbers<[1], [1], [0], [0], [0, 0, 1, 0], [], []>} : vector<8x32xbf16>, vector<8x32xbf16>, vector<8x8xf32> -> vector<8x8xf32>
    %cst_127 = arith.constant dense<0xFF800000> : vector<8xf32>
    %390 = vector.multi_reduction <maximumf>, %389, %cst_127 [1] : vector<8x8xf32> to vector<8xf32>
    %391 = vector.shape_cast %390 : vector<8xf32> to vector<8x1xf32>
    %392 = vector.broadcast %391 : vector<8x1xf32> to vector<8x8xf32>
    %393 = arith.subf %389, %392 : vector<8x8xf32>
    %394 = math.exp %393 : vector<8x8xf32>
    %cst_128 = arith.constant dense<0.000000e+00> : vector<8xf32>
    %395 = vector.multi_reduction <add>, %394, %cst_128 [1] : vector<8x8xf32> to vector<8xf32>
    %396 = vector.shape_cast %395 : vector<8xf32> to vector<8x1xf32>
    %397 = tpu.reciprocal %396 {approx = true} : vector<8x1xf32> -> vector<8x1xf32>
    %398 = vector.broadcast %397 : vector<8x1xf32> to vector<8x8xf32>
    %399 = arith.mulf %394, %398 : vector<8x8xf32>
    %400 = arith.truncf %399 : vector<8x8xf32> to vector<8x8xbf16>
    %cst_129 = arith.constant dense<0.000000e+00> : vector<8x32xf32>
    %401 = tpu.matmul %400, %388, %cst_129 {dimension_numbers = #tpu.dot_dimension_numbers<[1], [0], [0], [1], [0, 0, 1, 1], [], []>} : vector<8x8xbf16>, vector<8x32xbf16>, vector<8x32xf32> -> vector<8x32xf32>
    %402 = arith.truncf %401 : vector<8x32xf32> to vector<8x32xbf16>
    %403 = vector.extract_strided_slice %305 {offsets = [96, 0], sizes = [32, 128], strides = [1, 1]} : vector<128x128xbf16> to vector<32x128xbf16>
    %cst_130 = arith.constant dense<0.000000e+00> : vector<8x128xf32>
    %404 = tpu.matmul %402, %403, %cst_130 {dimension_numbers = #tpu.dot_dimension_numbers<[1], [0], [0], [1], [0, 0, 1, 1], [], []>} : vector<8x32xbf16>, vector<32x128xbf16>, vector<8x128xf32> -> vector<8x128xf32>
    %405 = arith.addf %382, %404 : vector<8x128xf32>
    %406 = vector.extract_strided_slice %312 {offsets = [8, 0], sizes = [8, 32], strides = [1, 1]} : vector<16x128xf32> to vector<8x32xf32>
    %407 = arith.truncf %406 : vector<8x32xf32> to vector<8x32xbf16>
    %408 = vector.extract_strided_slice %313 {offsets = [8, 0], sizes = [8, 32], strides = [1, 1]} : vector<16x128xf32> to vector<8x32xf32>
    %409 = arith.truncf %408 : vector<8x32xf32> to vector<8x32xbf16>
    %410 = vector.extract_strided_slice %314 {offsets = [8, 0], sizes = [8, 32], strides = [1, 1]} : vector<16x128xf32> to vector<8x32xf32>
    %411 = arith.truncf %410 : vector<8x32xf32> to vector<8x32xbf16>
    %cst_131 = arith.constant dense<0.000000e+00> : vector<8x8xf32>
    %412 = tpu.matmul %407, %409, %cst_131 {dimension_numbers = #tpu.dot_dimension_numbers<[1], [1], [0], [0], [0, 0, 1, 0], [], []>} : vector<8x32xbf16>, vector<8x32xbf16>, vector<8x8xf32> -> vector<8x8xf32>
    %cst_132 = arith.constant dense<0xFF800000> : vector<8xf32>
    %413 = vector.multi_reduction <maximumf>, %412, %cst_132 [1] : vector<8x8xf32> to vector<8xf32>
    %414 = vector.shape_cast %413 : vector<8xf32> to vector<8x1xf32>
    %415 = vector.broadcast %414 : vector<8x1xf32> to vector<8x8xf32>
    %416 = arith.subf %412, %415 : vector<8x8xf32>
    %417 = math.exp %416 : vector<8x8xf32>
    %cst_133 = arith.constant dense<0.000000e+00> : vector<8xf32>
    %418 = vector.multi_reduction <add>, %417, %cst_133 [1] : vector<8x8xf32> to vector<8xf32>
    %419 = vector.shape_cast %418 : vector<8xf32> to vector<8x1xf32>
    %420 = tpu.reciprocal %419 {approx = true} : vector<8x1xf32> -> vector<8x1xf32>
    %421 = vector.broadcast %420 : vector<8x1xf32> to vector<8x8xf32>
    %422 = arith.mulf %417, %421 : vector<8x8xf32>
    %423 = arith.truncf %422 : vector<8x8xf32> to vector<8x8xbf16>
    %cst_134 = arith.constant dense<0.000000e+00> : vector<8x32xf32>
    %424 = tpu.matmul %423, %411, %cst_134 {dimension_numbers = #tpu.dot_dimension_numbers<[1], [0], [0], [1], [0, 0, 1, 1], [], []>} : vector<8x8xbf16>, vector<8x32xbf16>, vector<8x32xf32> -> vector<8x32xf32>
    %425 = arith.truncf %424 : vector<8x32xf32> to vector<8x32xbf16>
    %426 = vector.extract_strided_slice %305 {offsets = [0, 0], sizes = [32, 128], strides = [1, 1]} : vector<128x128xbf16> to vector<32x128xbf16>
    %cst_135 = arith.constant dense<0.000000e+00> : vector<8x128xf32>
    %427 = tpu.matmul %425, %426, %cst_135 {dimension_numbers = #tpu.dot_dimension_numbers<[1], [0], [0], [1], [0, 0, 1, 1], [], []>} : vector<8x32xbf16>, vector<32x128xbf16>, vector<8x128xf32> -> vector<8x128xf32>
    %428 = vector.extract_strided_slice %312 {offsets = [8, 32], sizes = [8, 32], strides = [1, 1]} : vector<16x128xf32> to vector<8x32xf32>
    %429 = arith.truncf %428 : vector<8x32xf32> to vector<8x32xbf16>
    %430 = vector.extract_strided_slice %313 {offsets = [8, 32], sizes = [8, 32], strides = [1, 1]} : vector<16x128xf32> to vector<8x32xf32>
    %431 = arith.truncf %430 : vector<8x32xf32> to vector<8x32xbf16>
    %432 = vector.extract_strided_slice %314 {offsets = [8, 32], sizes = [8, 32], strides = [1, 1]} : vector<16x128xf32> to vector<8x32xf32>
    %433 = arith.truncf %432 : vector<8x32xf32> to vector<8x32xbf16>
    %cst_136 = arith.constant dense<0.000000e+00> : vector<8x8xf32>
    %434 = tpu.matmul %429, %431, %cst_136 {dimension_numbers = #tpu.dot_dimension_numbers<[1], [1], [0], [0], [0, 0, 1, 0], [], []>} : vector<8x32xbf16>, vector<8x32xbf16>, vector<8x8xf32> -> vector<8x8xf32>
    %cst_137 = arith.constant dense<0xFF800000> : vector<8xf32>
    %435 = vector.multi_reduction <maximumf>, %434, %cst_137 [1] : vector<8x8xf32> to vector<8xf32>
    %436 = vector.shape_cast %435 : vector<8xf32> to vector<8x1xf32>
    %437 = vector.broadcast %436 : vector<8x1xf32> to vector<8x8xf32>
    %438 = arith.subf %434, %437 : vector<8x8xf32>
    %439 = math.exp %438 : vector<8x8xf32>
    %cst_138 = arith.constant dense<0.000000e+00> : vector<8xf32>
    %440 = vector.multi_reduction <add>, %439, %cst_138 [1] : vector<8x8xf32> to vector<8xf32>
    %441 = vector.shape_cast %440 : vector<8xf32> to vector<8x1xf32>
    %442 = tpu.reciprocal %441 {approx = true} : vector<8x1xf32> -> vector<8x1xf32>
    %443 = vector.broadcast %442 : vector<8x1xf32> to vector<8x8xf32>
    %444 = arith.mulf %439, %443 : vector<8x8xf32>
    %445 = arith.truncf %444 : vector<8x8xf32> to vector<8x8xbf16>
    %cst_139 = arith.constant dense<0.000000e+00> : vector<8x32xf32>
    %446 = tpu.matmul %445, %433, %cst_139 {dimension_numbers = #tpu.dot_dimension_numbers<[1], [0], [0], [1], [0, 0, 1, 1], [], []>} : vector<8x8xbf16>, vector<8x32xbf16>, vector<8x32xf32> -> vector<8x32xf32>
    %447 = arith.truncf %446 : vector<8x32xf32> to vector<8x32xbf16>
    %448 = vector.extract_strided_slice %305 {offsets = [32, 0], sizes = [32, 128], strides = [1, 1]} : vector<128x128xbf16> to vector<32x128xbf16>
    %cst_140 = arith.constant dense<0.000000e+00> : vector<8x128xf32>
    %449 = tpu.matmul %447, %448, %cst_140 {dimension_numbers = #tpu.dot_dimension_numbers<[1], [0], [0], [1], [0, 0, 1, 1], [], []>} : vector<8x32xbf16>, vector<32x128xbf16>, vector<8x128xf32> -> vector<8x128xf32>
    %450 = arith.addf %427, %449 : vector<8x128xf32>
    %451 = vector.extract_strided_slice %312 {offsets = [8, 64], sizes = [8, 32], strides = [1, 1]} : vector<16x128xf32> to vector<8x32xf32>
    %452 = arith.truncf %451 : vector<8x32xf32> to vector<8x32xbf16>
    %453 = vector.extract_strided_slice %313 {offsets = [8, 64], sizes = [8, 32], strides = [1, 1]} : vector<16x128xf32> to vector<8x32xf32>
    %454 = arith.truncf %453 : vector<8x32xf32> to vector<8x32xbf16>
    %455 = vector.extract_strided_slice %314 {offsets = [8, 64], sizes = [8, 32], strides = [1, 1]} : vector<16x128xf32> to vector<8x32xf32>
    %456 = arith.truncf %455 : vector<8x32xf32> to vector<8x32xbf16>
    %cst_141 = arith.constant dense<0.000000e+00> : vector<8x8xf32>
    %457 = tpu.matmul %452, %454, %cst_141 {dimension_numbers = #tpu.dot_dimension_numbers<[1], [1], [0], [0], [0, 0, 1, 0], [], []>} : vector<8x32xbf16>, vector<8x32xbf16>, vector<8x8xf32> -> vector<8x8xf32>
    %cst_142 = arith.constant dense<0xFF800000> : vector<8xf32>
    %458 = vector.multi_reduction <maximumf>, %457, %cst_142 [1] : vector<8x8xf32> to vector<8xf32>
    %459 = vector.shape_cast %458 : vector<8xf32> to vector<8x1xf32>
    %460 = vector.broadcast %459 : vector<8x1xf32> to vector<8x8xf32>
    %461 = arith.subf %457, %460 : vector<8x8xf32>
    %462 = math.exp %461 : vector<8x8xf32>
    %cst_143 = arith.constant dense<0.000000e+00> : vector<8xf32>
    %463 = vector.multi_reduction <add>, %462, %cst_143 [1] : vector<8x8xf32> to vector<8xf32>
    %464 = vector.shape_cast %463 : vector<8xf32> to vector<8x1xf32>
    %465 = tpu.reciprocal %464 {approx = true} : vector<8x1xf32> -> vector<8x1xf32>
    %466 = vector.broadcast %465 : vector<8x1xf32> to vector<8x8xf32>
    %467 = arith.mulf %462, %466 : vector<8x8xf32>
    %468 = arith.truncf %467 : vector<8x8xf32> to vector<8x8xbf16>
    %cst_144 = arith.constant dense<0.000000e+00> : vector<8x32xf32>
    %469 = tpu.matmul %468, %456, %cst_144 {dimension_numbers = #tpu.dot_dimension_numbers<[1], [0], [0], [1], [0, 0, 1, 1], [], []>} : vector<8x8xbf16>, vector<8x32xbf16>, vector<8x32xf32> -> vector<8x32xf32>
    %470 = arith.truncf %469 : vector<8x32xf32> to vector<8x32xbf16>
    %471 = vector.extract_strided_slice %305 {offsets = [64, 0], sizes = [32, 128], strides = [1, 1]} : vector<128x128xbf16> to vector<32x128xbf16>
    %cst_145 = arith.constant dense<0.000000e+00> : vector<8x128xf32>
    %472 = tpu.matmul %470, %471, %cst_145 {dimension_numbers = #tpu.dot_dimension_numbers<[1], [0], [0], [1], [0, 0, 1, 1], [], []>} : vector<8x32xbf16>, vector<32x128xbf16>, vector<8x128xf32> -> vector<8x128xf32>
    %473 = arith.addf %450, %472 : vector<8x128xf32>
    %474 = vector.extract_strided_slice %312 {offsets = [8, 96], sizes = [8, 32], strides = [1, 1]} : vector<16x128xf32> to vector<8x32xf32>
    %475 = arith.truncf %474 : vector<8x32xf32> to vector<8x32xbf16>
    %476 = vector.extract_strided_slice %313 {offsets = [8, 96], sizes = [8, 32], strides = [1, 1]} : vector<16x128xf32> to vector<8x32xf32>
    %477 = arith.truncf %476 : vector<8x32xf32> to vector<8x32xbf16>
    %478 = vector.extract_strided_slice %314 {offsets = [8, 96], sizes = [8, 32], strides = [1, 1]} : vector<16x128xf32> to vector<8x32xf32>
    %479 = arith.truncf %478 : vector<8x32xf32> to vector<8x32xbf16>
    %cst_146 = arith.constant dense<0.000000e+00> : vector<8x8xf32>
    %480 = tpu.matmul %475, %477, %cst_146 {dimension_numbers = #tpu.dot_dimension_numbers<[1], [1], [0], [0], [0, 0, 1, 0], [], []>} : vector<8x32xbf16>, vector<8x32xbf16>, vector<8x8xf32> -> vector<8x8xf32>
    %cst_147 = arith.constant dense<0xFF800000> : vector<8xf32>
    %481 = vector.multi_reduction <maximumf>, %480, %cst_147 [1] : vector<8x8xf32> to vector<8xf32>
    %482 = vector.shape_cast %481 : vector<8xf32> to vector<8x1xf32>
    %483 = vector.broadcast %482 : vector<8x1xf32> to vector<8x8xf32>
    %484 = arith.subf %480, %483 : vector<8x8xf32>
    %485 = math.exp %484 : vector<8x8xf32>
    %cst_148 = arith.constant dense<0.000000e+00> : vector<8xf32>
    %486 = vector.multi_reduction <add>, %485, %cst_148 [1] : vector<8x8xf32> to vector<8xf32>
    %487 = vector.shape_cast %486 : vector<8xf32> to vector<8x1xf32>
    %488 = tpu.reciprocal %487 {approx = true} : vector<8x1xf32> -> vector<8x1xf32>
    %489 = vector.broadcast %488 : vector<8x1xf32> to vector<8x8xf32>
    %490 = arith.mulf %485, %489 : vector<8x8xf32>
    %491 = arith.truncf %490 : vector<8x8xf32> to vector<8x8xbf16>
    %cst_149 = arith.constant dense<0.000000e+00> : vector<8x32xf32>
    %492 = tpu.matmul %491, %479, %cst_149 {dimension_numbers = #tpu.dot_dimension_numbers<[1], [0], [0], [1], [0, 0, 1, 1], [], []>} : vector<8x8xbf16>, vector<8x32xbf16>, vector<8x32xf32> -> vector<8x32xf32>
    %493 = arith.truncf %492 : vector<8x32xf32> to vector<8x32xbf16>
    %494 = vector.extract_strided_slice %305 {offsets = [96, 0], sizes = [32, 128], strides = [1, 1]} : vector<128x128xbf16> to vector<32x128xbf16>
    %cst_150 = arith.constant dense<0.000000e+00> : vector<8x128xf32>
    %495 = tpu.matmul %493, %494, %cst_150 {dimension_numbers = #tpu.dot_dimension_numbers<[1], [0], [0], [1], [0, 0, 1, 1], [], []>} : vector<8x32xbf16>, vector<32x128xbf16>, vector<8x128xf32> -> vector<8x128xf32>
    %496 = arith.addf %473, %495 : vector<8x128xf32>
    %497 = tpu.concatenate %405, %496 in 0 : vector<8x128xf32>, vector<8x128xf32> -> vector<16x128xf32>
    %c1_151 = arith.constant 1 : index
    %c0_152 = arith.constant 0 : index
    %c0_153 = arith.constant 0 : index
    %498 = vector.load %arg7[%c1_151, %c0_152, %c0_153] : memref<2x1x128xf32, #tpu.memory_space<vmem>>, vector<1x1x128xf32>
    %499 = vector.shape_cast %498 : vector<1x1x128xf32> to vector<1x128xf32>
    %500 = vector.broadcast %499 : vector<1x128xf32> to vector<16x128xf32>
    %501 = arith.addf %497, %500 : vector<16x128xf32>
    %502 = arith.addf %301, %501 : vector<16x128xf32>
    %c1_154 = arith.constant 1 : index
    %c0_155 = arith.constant 0 : index
    %c0_156 = arith.constant 0 : index
    %503 = vector.load %arg8[%c1_154, %c0_155, %c0_156] : memref<2x1x128xf32, #tpu.memory_space<vmem>>, vector<1x1x128xf32>
    %504 = vector.shape_cast %503 : vector<1x1x128xf32> to vector<1x128xf32>
    %c1_157 = arith.constant 1 : index
    %c0_158 = arith.constant 0 : index
    %c0_159 = arith.constant 0 : index
    %505 = vector.load %arg9[%c1_157, %c0_158, %c0_159] : memref<2x1x128xf32, #tpu.memory_space<vmem>>, vector<1x1x128xf32>
    %506 = vector.shape_cast %505 : vector<1x1x128xf32> to vector<1x128xf32>
    %cst_160 = arith.constant dense<0.000000e+00> : vector<16xf32>
    %507 = vector.multi_reduction <add>, %502, %cst_160 [1] : vector<16x128xf32> to vector<16xf32>
    %508 = vector.shape_cast %507 : vector<16xf32> to vector<16x1xf32>
    %cst_161 = arith.constant 1.280000e+02 : f32
    %509 = vector.broadcast %cst_161 : f32 to vector<16x1xf32>
    %510 = arith.divf %508, %509 : vector<16x1xf32>
    %511 = vector.broadcast %510 : vector<16x1xf32> to vector<16x128xf32>
    %512 = arith.subf %502, %511 : vector<16x128xf32>
    %513 = arith.mulf %512, %512 : vector<16x128xf32>
    %cst_162 = arith.constant dense<0.000000e+00> : vector<16xf32>
    %514 = vector.multi_reduction <add>, %513, %cst_162 [1] : vector<16x128xf32> to vector<16xf32>
    %515 = vector.shape_cast %514 : vector<16xf32> to vector<16x1xf32>
    %cst_163 = arith.constant 1.280000e+02 : f32
    %516 = vector.broadcast %cst_163 : f32 to vector<16x1xf32>
    %517 = arith.divf %515, %516 : vector<16x1xf32>
    %cst_164 = arith.constant 9.99999996E-13 : f32
    %518 = vector.broadcast %cst_164 : f32 to vector<16x1xf32>
    %519 = arith.addf %517, %518 : vector<16x1xf32>
    %520 = math.rsqrt %519 : vector<16x1xf32>
    %521 = vector.broadcast %520 : vector<16x1xf32> to vector<16x128xf32>
    %522 = arith.mulf %512, %521 : vector<16x128xf32>
    %523 = vector.broadcast %504 : vector<1x128xf32> to vector<16x128xf32>
    %524 = arith.mulf %522, %523 : vector<16x128xf32>
    %525 = vector.broadcast %506 : vector<1x128xf32> to vector<16x128xf32>
    %526 = arith.addf %524, %525 : vector<16x128xf32>
    %527 = arith.truncf %526 : vector<16x128xf32> to vector<16x128xbf16>
    %c1_165 = arith.constant 1 : index
    %c0_166 = arith.constant 0 : index
    %c0_167 = arith.constant 0 : index
    %528 = vector.load %arg10[%c1_165, %c0_166, %c0_167] : memref<2x128x512xbf16, #tpu.memory_space<vmem>>, vector<1x128x512xbf16>
    %529 = vector.shape_cast %528 : vector<1x128x512xbf16> to vector<128x512xbf16>
    %cst_168 = arith.constant dense<0.000000e+00> : vector<16x512xf32>
    %530 = tpu.matmul %527, %529, %cst_168 {dimension_numbers = #tpu.dot_dimension_numbers<[1], [0], [0], [1], [0, 0, 1, 1], [], []>} : vector<16x128xbf16>, vector<128x512xbf16>, vector<16x512xf32> -> vector<16x512xf32>
    %c1_169 = arith.constant 1 : index
    %c0_170 = arith.constant 0 : index
    %c0_171 = arith.constant 0 : index
    %531 = vector.load %arg11[%c1_169, %c0_170, %c0_171] : memref<2x1x512xf32, #tpu.memory_space<vmem>>, vector<1x1x512xf32>
    %532 = vector.shape_cast %531 : vector<1x1x512xf32> to vector<1x512xf32>
    %533 = vector.broadcast %532 : vector<1x512xf32> to vector<16x512xf32>
    %534 = arith.addf %530, %533 : vector<16x512xf32>
    %cst_172 = arith.constant 5.000000e-01 : f32
    %535 = vector.broadcast %cst_172 : f32 to vector<16x512xf32>
    %536 = arith.mulf %535, %534 : vector<16x512xf32>
    %cst_173 = arith.constant 4.471500e-02 : f32
    %537 = vector.broadcast %cst_173 : f32 to vector<16x512xf32>
    %538 = arith.mulf %537, %534 : vector<16x512xf32>
    %539 = arith.mulf %538, %534 : vector<16x512xf32>
    %540 = arith.mulf %539, %534 : vector<16x512xf32>
    %541 = arith.addf %534, %540 : vector<16x512xf32>
    %cst_174 = arith.constant 0.797884583 : f32
    %542 = vector.broadcast %cst_174 : f32 to vector<16x512xf32>
    %543 = arith.mulf %542, %541 : vector<16x512xf32>
    %544 = math.tanh %543 : vector<16x512xf32>
    %cst_175 = arith.constant 1.000000e+00 : f32
    %545 = vector.broadcast %cst_175 : f32 to vector<16x512xf32>
    %546 = arith.addf %545, %544 : vector<16x512xf32>
    %547 = arith.mulf %536, %546 : vector<16x512xf32>
    %548 = arith.truncf %547 : vector<16x512xf32> to vector<16x512xbf16>
    %c1_176 = arith.constant 1 : index
    %c0_177 = arith.constant 0 : index
    %c0_178 = arith.constant 0 : index
    %549 = vector.load %arg12[%c1_176, %c0_177, %c0_178] : memref<2x512x128xbf16, #tpu.memory_space<vmem>>, vector<1x512x128xbf16>
    %550 = vector.shape_cast %549 : vector<1x512x128xbf16> to vector<512x128xbf16>
    %cst_179 = arith.constant dense<0.000000e+00> : vector<16x128xf32>
    %551 = tpu.matmul %548, %550, %cst_179 {dimension_numbers = #tpu.dot_dimension_numbers<[1], [0], [0], [1], [0, 0, 1, 1], [], []>} : vector<16x512xbf16>, vector<512x128xbf16>, vector<16x128xf32> -> vector<16x128xf32>
    %c1_180 = arith.constant 1 : index
    %c0_181 = arith.constant 0 : index
    %c0_182 = arith.constant 0 : index
    %552 = vector.load %arg13[%c1_180, %c0_181, %c0_182] : memref<2x1x128xf32, #tpu.memory_space<vmem>>, vector<1x1x128xf32>
    %553 = vector.shape_cast %552 : vector<1x1x128xf32> to vector<1x128xf32>
    %554 = vector.broadcast %553 : vector<1x128xf32> to vector<16x128xf32>
    %555 = arith.addf %551, %554 : vector<16x128xf32>
    %556 = arith.addf %526, %555 : vector<16x128xf32>
    %c1_183 = arith.constant 1 : index
    %c0_184 = arith.constant 0 : index
    %c0_185 = arith.constant 0 : index
    %557 = vector.load %arg14[%c1_183, %c0_184, %c0_185] : memref<2x1x128xf32, #tpu.memory_space<vmem>>, vector<1x1x128xf32>
    %558 = vector.shape_cast %557 : vector<1x1x128xf32> to vector<1x128xf32>
    %c1_186 = arith.constant 1 : index
    %c0_187 = arith.constant 0 : index
    %c0_188 = arith.constant 0 : index
    %559 = vector.load %arg15[%c1_186, %c0_187, %c0_188] : memref<2x1x128xf32, #tpu.memory_space<vmem>>, vector<1x1x128xf32>
    %560 = vector.shape_cast %559 : vector<1x1x128xf32> to vector<1x128xf32>
    %cst_189 = arith.constant dense<0.000000e+00> : vector<16xf32>
    %561 = vector.multi_reduction <add>, %556, %cst_189 [1] : vector<16x128xf32> to vector<16xf32>
    %562 = vector.shape_cast %561 : vector<16xf32> to vector<16x1xf32>
    %cst_190 = arith.constant 1.280000e+02 : f32
    %563 = vector.broadcast %cst_190 : f32 to vector<16x1xf32>
    %564 = arith.divf %562, %563 : vector<16x1xf32>
    %565 = vector.broadcast %564 : vector<16x1xf32> to vector<16x128xf32>
    %566 = arith.subf %556, %565 : vector<16x128xf32>
    %567 = arith.mulf %566, %566 : vector<16x128xf32>
    %cst_191 = arith.constant dense<0.000000e+00> : vector<16xf32>
    %568 = vector.multi_reduction <add>, %567, %cst_191 [1] : vector<16x128xf32> to vector<16xf32>
    %569 = vector.shape_cast %568 : vector<16xf32> to vector<16x1xf32>
    %cst_192 = arith.constant 1.280000e+02 : f32
    %570 = vector.broadcast %cst_192 : f32 to vector<16x1xf32>
    %571 = arith.divf %569, %570 : vector<16x1xf32>
    %cst_193 = arith.constant 9.99999996E-13 : f32
    %572 = vector.broadcast %cst_193 : f32 to vector<16x1xf32>
    %573 = arith.addf %571, %572 : vector<16x1xf32>
    %574 = math.rsqrt %573 : vector<16x1xf32>
    %575 = vector.broadcast %574 : vector<16x1xf32> to vector<16x128xf32>
    %576 = arith.mulf %566, %575 : vector<16x128xf32>
    %577 = vector.broadcast %558 : vector<1x128xf32> to vector<16x128xf32>
    %578 = arith.mulf %576, %577 : vector<16x128xf32>
    %579 = vector.broadcast %560 : vector<1x128xf32> to vector<16x128xf32>
    %580 = arith.addf %578, %579 : vector<16x128xf32>
    %581 = arith.truncf %580 : vector<16x128xf32> to vector<16x128xbf16>
    %c0_194 = arith.constant 0 : index
    %c0_195 = arith.constant 0 : index
    %582 = vector.load %arg16[%c0_194, %c0_195] : memref<128x512xbf16, #tpu.memory_space<vmem>>, vector<128x512xbf16>
    %cst_196 = arith.constant dense<0.000000e+00> : vector<16x512xf32>
    %583 = tpu.matmul %581, %582, %cst_196 {dimension_numbers = #tpu.dot_dimension_numbers<[1], [0], [0], [1], [0, 0, 1, 1], [], []>} : vector<16x128xbf16>, vector<128x512xbf16>, vector<16x512xf32> -> vector<16x512xf32>
    %c0_197 = arith.constant 0 : index
    %c0_198 = arith.constant 0 : index
    %584 = vector.load %arg18[%c0_197, %c0_198] : memref<1x512xf32, #tpu.memory_space<vmem>>, vector<1x512xf32>
    %585 = vector.broadcast %584 : vector<1x512xf32> to vector<16x512xf32>
    %586 = arith.addf %583, %585 : vector<16x512xf32>
    %c0_199 = arith.constant 0 : index
    %c0_200 = arith.constant 0 : index
    %587 = vector.load %arg17[%c0_199, %c0_200] : memref<128x512xbf16, #tpu.memory_space<vmem>>, vector<128x512xbf16>
    %cst_201 = arith.constant 0.000000e+00 : f32
    %588 = vector.broadcast %cst_201 : f32 to vector<1x128xf32>
    %cst_202 = arith.constant 0.000000e+00 : f32
    %589 = vector.broadcast %cst_202 : f32 to vector<1x128xf32>
    %590 = vector.extract_strided_slice %586 {offsets = [0, 0], sizes = [1, 512], strides = [1, 1]} : vector<16x512xf32> to vector<1x512xf32>
    %591 = arith.truncf %588 : vector<1x128xf32> to vector<1x128xbf16>
    %cst_203 = arith.constant dense<0.000000e+00> : vector<1x512xf32>
    %592 = tpu.matmul %591, %587, %cst_203 {dimension_numbers = #tpu.dot_dimension_numbers<[1], [0], [0], [1], [0, 0, 1, 1], [], []>} : vector<1x128xbf16>, vector<128x512xbf16>, vector<1x512xf32> -> vector<1x512xf32>
    %593 = arith.addf %590, %592 : vector<1x512xf32>
    %594 = vector.extract_strided_slice %593 {offsets = [0, 0], sizes = [1, 128], strides = [1, 1]} : vector<1x512xf32> to vector<1x128xf32>
    %595 = arith.negf %594 : vector<1x128xf32>
    %596 = math.exp %595 : vector<1x128xf32>
    %cst_204 = arith.constant 1.000000e+00 : f32
    %597 = vector.broadcast %cst_204 : f32 to vector<1x128xf32>
    %598 = arith.addf %597, %596 : vector<1x128xf32>
    %599 = arith.divf %597, %598 : vector<1x128xf32>
    %600 = vector.extract_strided_slice %593 {offsets = [0, 128], sizes = [1, 128], strides = [1, 1]} : vector<1x512xf32> to vector<1x128xf32>
    %601 = arith.negf %600 : vector<1x128xf32>
    %602 = math.exp %601 : vector<1x128xf32>
    %cst_205 = arith.constant 1.000000e+00 : f32
    %603 = vector.broadcast %cst_205 : f32 to vector<1x128xf32>
    %604 = arith.addf %603, %602 : vector<1x128xf32>
    %605 = arith.divf %603, %604 : vector<1x128xf32>
    %606 = vector.extract_strided_slice %593 {offsets = [0, 256], sizes = [1, 128], strides = [1, 1]} : vector<1x512xf32> to vector<1x128xf32>
    %607 = math.tanh %606 : vector<1x128xf32>
    %608 = vector.extract_strided_slice %593 {offsets = [0, 384], sizes = [1, 128], strides = [1, 1]} : vector<1x512xf32> to vector<1x128xf32>
    %609 = arith.negf %608 : vector<1x128xf32>
    %610 = math.exp %609 : vector<1x128xf32>
    %cst_206 = arith.constant 1.000000e+00 : f32
    %611 = vector.broadcast %cst_206 : f32 to vector<1x128xf32>
    %612 = arith.addf %611, %610 : vector<1x128xf32>
    %613 = arith.divf %611, %612 : vector<1x128xf32>
    %614 = arith.mulf %605, %589 : vector<1x128xf32>
    %615 = arith.mulf %599, %607 : vector<1x128xf32>
    %616 = arith.addf %614, %615 : vector<1x128xf32>
    %617 = math.tanh %616 : vector<1x128xf32>
    %618 = arith.mulf %613, %617 : vector<1x128xf32>
    %619 = vector.extract_strided_slice %586 {offsets = [1, 0], sizes = [1, 512], strides = [1, 1]} : vector<16x512xf32> to vector<1x512xf32>
    %620 = arith.truncf %618 : vector<1x128xf32> to vector<1x128xbf16>
    %cst_207 = arith.constant dense<0.000000e+00> : vector<1x512xf32>
    %621 = tpu.matmul %620, %587, %cst_207 {dimension_numbers = #tpu.dot_dimension_numbers<[1], [0], [0], [1], [0, 0, 1, 1], [], []>} : vector<1x128xbf16>, vector<128x512xbf16>, vector<1x512xf32> -> vector<1x512xf32>
    %622 = arith.addf %619, %621 : vector<1x512xf32>
    %623 = vector.extract_strided_slice %622 {offsets = [0, 0], sizes = [1, 128], strides = [1, 1]} : vector<1x512xf32> to vector<1x128xf32>
    %624 = arith.negf %623 : vector<1x128xf32>
    %625 = math.exp %624 : vector<1x128xf32>
    %cst_208 = arith.constant 1.000000e+00 : f32
    %626 = vector.broadcast %cst_208 : f32 to vector<1x128xf32>
    %627 = arith.addf %626, %625 : vector<1x128xf32>
    %628 = arith.divf %626, %627 : vector<1x128xf32>
    %629 = vector.extract_strided_slice %622 {offsets = [0, 128], sizes = [1, 128], strides = [1, 1]} : vector<1x512xf32> to vector<1x128xf32>
    %630 = arith.negf %629 : vector<1x128xf32>
    %631 = math.exp %630 : vector<1x128xf32>
    %cst_209 = arith.constant 1.000000e+00 : f32
    %632 = vector.broadcast %cst_209 : f32 to vector<1x128xf32>
    %633 = arith.addf %632, %631 : vector<1x128xf32>
    %634 = arith.divf %632, %633 : vector<1x128xf32>
    %635 = vector.extract_strided_slice %622 {offsets = [0, 256], sizes = [1, 128], strides = [1, 1]} : vector<1x512xf32> to vector<1x128xf32>
    %636 = math.tanh %635 : vector<1x128xf32>
    %637 = vector.extract_strided_slice %622 {offsets = [0, 384], sizes = [1, 128], strides = [1, 1]} : vector<1x512xf32> to vector<1x128xf32>
    %638 = arith.negf %637 : vector<1x128xf32>
    %639 = math.exp %638 : vector<1x128xf32>
    %cst_210 = arith.constant 1.000000e+00 : f32
    %640 = vector.broadcast %cst_210 : f32 to vector<1x128xf32>
    %641 = arith.addf %640, %639 : vector<1x128xf32>
    %642 = arith.divf %640, %641 : vector<1x128xf32>
    %643 = arith.mulf %634, %616 : vector<1x128xf32>
    %644 = arith.mulf %628, %636 : vector<1x128xf32>
    %645 = arith.addf %643, %644 : vector<1x128xf32>
    %646 = math.tanh %645 : vector<1x128xf32>
    %647 = arith.mulf %642, %646 : vector<1x128xf32>
    %648 = vector.extract_strided_slice %586 {offsets = [2, 0], sizes = [1, 512], strides = [1, 1]} : vector<16x512xf32> to vector<1x512xf32>
    %649 = arith.truncf %647 : vector<1x128xf32> to vector<1x128xbf16>
    %cst_211 = arith.constant dense<0.000000e+00> : vector<1x512xf32>
    %650 = tpu.matmul %649, %587, %cst_211 {dimension_numbers = #tpu.dot_dimension_numbers<[1], [0], [0], [1], [0, 0, 1, 1], [], []>} : vector<1x128xbf16>, vector<128x512xbf16>, vector<1x512xf32> -> vector<1x512xf32>
    %651 = arith.addf %648, %650 : vector<1x512xf32>
    %652 = vector.extract_strided_slice %651 {offsets = [0, 0], sizes = [1, 128], strides = [1, 1]} : vector<1x512xf32> to vector<1x128xf32>
    %653 = arith.negf %652 : vector<1x128xf32>
    %654 = math.exp %653 : vector<1x128xf32>
    %cst_212 = arith.constant 1.000000e+00 : f32
    %655 = vector.broadcast %cst_212 : f32 to vector<1x128xf32>
    %656 = arith.addf %655, %654 : vector<1x128xf32>
    %657 = arith.divf %655, %656 : vector<1x128xf32>
    %658 = vector.extract_strided_slice %651 {offsets = [0, 128], sizes = [1, 128], strides = [1, 1]} : vector<1x512xf32> to vector<1x128xf32>
    %659 = arith.negf %658 : vector<1x128xf32>
    %660 = math.exp %659 : vector<1x128xf32>
    %cst_213 = arith.constant 1.000000e+00 : f32
    %661 = vector.broadcast %cst_213 : f32 to vector<1x128xf32>
    %662 = arith.addf %661, %660 : vector<1x128xf32>
    %663 = arith.divf %661, %662 : vector<1x128xf32>
    %664 = vector.extract_strided_slice %651 {offsets = [0, 256], sizes = [1, 128], strides = [1, 1]} : vector<1x512xf32> to vector<1x128xf32>
    %665 = math.tanh %664 : vector<1x128xf32>
    %666 = vector.extract_strided_slice %651 {offsets = [0, 384], sizes = [1, 128], strides = [1, 1]} : vector<1x512xf32> to vector<1x128xf32>
    %667 = arith.negf %666 : vector<1x128xf32>
    %668 = math.exp %667 : vector<1x128xf32>
    %cst_214 = arith.constant 1.000000e+00 : f32
    %669 = vector.broadcast %cst_214 : f32 to vector<1x128xf32>
    %670 = arith.addf %669, %668 : vector<1x128xf32>
    %671 = arith.divf %669, %670 : vector<1x128xf32>
    %672 = arith.mulf %663, %645 : vector<1x128xf32>
    %673 = arith.mulf %657, %665 : vector<1x128xf32>
    %674 = arith.addf %672, %673 : vector<1x128xf32>
    %675 = math.tanh %674 : vector<1x128xf32>
    %676 = arith.mulf %671, %675 : vector<1x128xf32>
    %677 = vector.extract_strided_slice %586 {offsets = [3, 0], sizes = [1, 512], strides = [1, 1]} : vector<16x512xf32> to vector<1x512xf32>
    %678 = arith.truncf %676 : vector<1x128xf32> to vector<1x128xbf16>
    %cst_215 = arith.constant dense<0.000000e+00> : vector<1x512xf32>
    %679 = tpu.matmul %678, %587, %cst_215 {dimension_numbers = #tpu.dot_dimension_numbers<[1], [0], [0], [1], [0, 0, 1, 1], [], []>} : vector<1x128xbf16>, vector<128x512xbf16>, vector<1x512xf32> -> vector<1x512xf32>
    %680 = arith.addf %677, %679 : vector<1x512xf32>
    %681 = vector.extract_strided_slice %680 {offsets = [0, 0], sizes = [1, 128], strides = [1, 1]} : vector<1x512xf32> to vector<1x128xf32>
    %682 = arith.negf %681 : vector<1x128xf32>
    %683 = math.exp %682 : vector<1x128xf32>
    %cst_216 = arith.constant 1.000000e+00 : f32
    %684 = vector.broadcast %cst_216 : f32 to vector<1x128xf32>
    %685 = arith.addf %684, %683 : vector<1x128xf32>
    %686 = arith.divf %684, %685 : vector<1x128xf32>
    %687 = vector.extract_strided_slice %680 {offsets = [0, 128], sizes = [1, 128], strides = [1, 1]} : vector<1x512xf32> to vector<1x128xf32>
    %688 = arith.negf %687 : vector<1x128xf32>
    %689 = math.exp %688 : vector<1x128xf32>
    %cst_217 = arith.constant 1.000000e+00 : f32
    %690 = vector.broadcast %cst_217 : f32 to vector<1x128xf32>
    %691 = arith.addf %690, %689 : vector<1x128xf32>
    %692 = arith.divf %690, %691 : vector<1x128xf32>
    %693 = vector.extract_strided_slice %680 {offsets = [0, 256], sizes = [1, 128], strides = [1, 1]} : vector<1x512xf32> to vector<1x128xf32>
    %694 = math.tanh %693 : vector<1x128xf32>
    %695 = vector.extract_strided_slice %680 {offsets = [0, 384], sizes = [1, 128], strides = [1, 1]} : vector<1x512xf32> to vector<1x128xf32>
    %696 = arith.negf %695 : vector<1x128xf32>
    %697 = math.exp %696 : vector<1x128xf32>
    %cst_218 = arith.constant 1.000000e+00 : f32
    %698 = vector.broadcast %cst_218 : f32 to vector<1x128xf32>
    %699 = arith.addf %698, %697 : vector<1x128xf32>
    %700 = arith.divf %698, %699 : vector<1x128xf32>
    %701 = arith.mulf %692, %674 : vector<1x128xf32>
    %702 = arith.mulf %686, %694 : vector<1x128xf32>
    %703 = arith.addf %701, %702 : vector<1x128xf32>
    %704 = math.tanh %703 : vector<1x128xf32>
    %705 = arith.mulf %700, %704 : vector<1x128xf32>
    %706 = vector.extract_strided_slice %586 {offsets = [4, 0], sizes = [1, 512], strides = [1, 1]} : vector<16x512xf32> to vector<1x512xf32>
    %707 = arith.truncf %705 : vector<1x128xf32> to vector<1x128xbf16>
    %cst_219 = arith.constant dense<0.000000e+00> : vector<1x512xf32>
    %708 = tpu.matmul %707, %587, %cst_219 {dimension_numbers = #tpu.dot_dimension_numbers<[1], [0], [0], [1], [0, 0, 1, 1], [], []>} : vector<1x128xbf16>, vector<128x512xbf16>, vector<1x512xf32> -> vector<1x512xf32>
    %709 = arith.addf %706, %708 : vector<1x512xf32>
    %710 = vector.extract_strided_slice %709 {offsets = [0, 0], sizes = [1, 128], strides = [1, 1]} : vector<1x512xf32> to vector<1x128xf32>
    %711 = arith.negf %710 : vector<1x128xf32>
    %712 = math.exp %711 : vector<1x128xf32>
    %cst_220 = arith.constant 1.000000e+00 : f32
    %713 = vector.broadcast %cst_220 : f32 to vector<1x128xf32>
    %714 = arith.addf %713, %712 : vector<1x128xf32>
    %715 = arith.divf %713, %714 : vector<1x128xf32>
    %716 = vector.extract_strided_slice %709 {offsets = [0, 128], sizes = [1, 128], strides = [1, 1]} : vector<1x512xf32> to vector<1x128xf32>
    %717 = arith.negf %716 : vector<1x128xf32>
    %718 = math.exp %717 : vector<1x128xf32>
    %cst_221 = arith.constant 1.000000e+00 : f32
    %719 = vector.broadcast %cst_221 : f32 to vector<1x128xf32>
    %720 = arith.addf %719, %718 : vector<1x128xf32>
    %721 = arith.divf %719, %720 : vector<1x128xf32>
    %722 = vector.extract_strided_slice %709 {offsets = [0, 256], sizes = [1, 128], strides = [1, 1]} : vector<1x512xf32> to vector<1x128xf32>
    %723 = math.tanh %722 : vector<1x128xf32>
    %724 = vector.extract_strided_slice %709 {offsets = [0, 384], sizes = [1, 128], strides = [1, 1]} : vector<1x512xf32> to vector<1x128xf32>
    %725 = arith.negf %724 : vector<1x128xf32>
    %726 = math.exp %725 : vector<1x128xf32>
    %cst_222 = arith.constant 1.000000e+00 : f32
    %727 = vector.broadcast %cst_222 : f32 to vector<1x128xf32>
    %728 = arith.addf %727, %726 : vector<1x128xf32>
    %729 = arith.divf %727, %728 : vector<1x128xf32>
    %730 = arith.mulf %721, %703 : vector<1x128xf32>
    %731 = arith.mulf %715, %723 : vector<1x128xf32>
    %732 = arith.addf %730, %731 : vector<1x128xf32>
    %733 = math.tanh %732 : vector<1x128xf32>
    %734 = arith.mulf %729, %733 : vector<1x128xf32>
    %735 = vector.extract_strided_slice %586 {offsets = [5, 0], sizes = [1, 512], strides = [1, 1]} : vector<16x512xf32> to vector<1x512xf32>
    %736 = arith.truncf %734 : vector<1x128xf32> to vector<1x128xbf16>
    %cst_223 = arith.constant dense<0.000000e+00> : vector<1x512xf32>
    %737 = tpu.matmul %736, %587, %cst_223 {dimension_numbers = #tpu.dot_dimension_numbers<[1], [0], [0], [1], [0, 0, 1, 1], [], []>} : vector<1x128xbf16>, vector<128x512xbf16>, vector<1x512xf32> -> vector<1x512xf32>
    %738 = arith.addf %735, %737 : vector<1x512xf32>
    %739 = vector.extract_strided_slice %738 {offsets = [0, 0], sizes = [1, 128], strides = [1, 1]} : vector<1x512xf32> to vector<1x128xf32>
    %740 = arith.negf %739 : vector<1x128xf32>
    %741 = math.exp %740 : vector<1x128xf32>
    %cst_224 = arith.constant 1.000000e+00 : f32
    %742 = vector.broadcast %cst_224 : f32 to vector<1x128xf32>
    %743 = arith.addf %742, %741 : vector<1x128xf32>
    %744 = arith.divf %742, %743 : vector<1x128xf32>
    %745 = vector.extract_strided_slice %738 {offsets = [0, 128], sizes = [1, 128], strides = [1, 1]} : vector<1x512xf32> to vector<1x128xf32>
    %746 = arith.negf %745 : vector<1x128xf32>
    %747 = math.exp %746 : vector<1x128xf32>
    %cst_225 = arith.constant 1.000000e+00 : f32
    %748 = vector.broadcast %cst_225 : f32 to vector<1x128xf32>
    %749 = arith.addf %748, %747 : vector<1x128xf32>
    %750 = arith.divf %748, %749 : vector<1x128xf32>
    %751 = vector.extract_strided_slice %738 {offsets = [0, 256], sizes = [1, 128], strides = [1, 1]} : vector<1x512xf32> to vector<1x128xf32>
    %752 = math.tanh %751 : vector<1x128xf32>
    %753 = vector.extract_strided_slice %738 {offsets = [0, 384], sizes = [1, 128], strides = [1, 1]} : vector<1x512xf32> to vector<1x128xf32>
    %754 = arith.negf %753 : vector<1x128xf32>
    %755 = math.exp %754 : vector<1x128xf32>
    %cst_226 = arith.constant 1.000000e+00 : f32
    %756 = vector.broadcast %cst_226 : f32 to vector<1x128xf32>
    %757 = arith.addf %756, %755 : vector<1x128xf32>
    %758 = arith.divf %756, %757 : vector<1x128xf32>
    %759 = arith.mulf %750, %732 : vector<1x128xf32>
    %760 = arith.mulf %744, %752 : vector<1x128xf32>
    %761 = arith.addf %759, %760 : vector<1x128xf32>
    %762 = math.tanh %761 : vector<1x128xf32>
    %763 = arith.mulf %758, %762 : vector<1x128xf32>
    %764 = vector.extract_strided_slice %586 {offsets = [6, 0], sizes = [1, 512], strides = [1, 1]} : vector<16x512xf32> to vector<1x512xf32>
    %765 = arith.truncf %763 : vector<1x128xf32> to vector<1x128xbf16>
    %cst_227 = arith.constant dense<0.000000e+00> : vector<1x512xf32>
    %766 = tpu.matmul %765, %587, %cst_227 {dimension_numbers = #tpu.dot_dimension_numbers<[1], [0], [0], [1], [0, 0, 1, 1], [], []>} : vector<1x128xbf16>, vector<128x512xbf16>, vector<1x512xf32> -> vector<1x512xf32>
    %767 = arith.addf %764, %766 : vector<1x512xf32>
    %768 = vector.extract_strided_slice %767 {offsets = [0, 0], sizes = [1, 128], strides = [1, 1]} : vector<1x512xf32> to vector<1x128xf32>
    %769 = arith.negf %768 : vector<1x128xf32>
    %770 = math.exp %769 : vector<1x128xf32>
    %cst_228 = arith.constant 1.000000e+00 : f32
    %771 = vector.broadcast %cst_228 : f32 to vector<1x128xf32>
    %772 = arith.addf %771, %770 : vector<1x128xf32>
    %773 = arith.divf %771, %772 : vector<1x128xf32>
    %774 = vector.extract_strided_slice %767 {offsets = [0, 128], sizes = [1, 128], strides = [1, 1]} : vector<1x512xf32> to vector<1x128xf32>
    %775 = arith.negf %774 : vector<1x128xf32>
    %776 = math.exp %775 : vector<1x128xf32>
    %cst_229 = arith.constant 1.000000e+00 : f32
    %777 = vector.broadcast %cst_229 : f32 to vector<1x128xf32>
    %778 = arith.addf %777, %776 : vector<1x128xf32>
    %779 = arith.divf %777, %778 : vector<1x128xf32>
    %780 = vector.extract_strided_slice %767 {offsets = [0, 256], sizes = [1, 128], strides = [1, 1]} : vector<1x512xf32> to vector<1x128xf32>
    %781 = math.tanh %780 : vector<1x128xf32>
    %782 = vector.extract_strided_slice %767 {offsets = [0, 384], sizes = [1, 128], strides = [1, 1]} : vector<1x512xf32> to vector<1x128xf32>
    %783 = arith.negf %782 : vector<1x128xf32>
    %784 = math.exp %783 : vector<1x128xf32>
    %cst_230 = arith.constant 1.000000e+00 : f32
    %785 = vector.broadcast %cst_230 : f32 to vector<1x128xf32>
    %786 = arith.addf %785, %784 : vector<1x128xf32>
    %787 = arith.divf %785, %786 : vector<1x128xf32>
    %788 = arith.mulf %779, %761 : vector<1x128xf32>
    %789 = arith.mulf %773, %781 : vector<1x128xf32>
    %790 = arith.addf %788, %789 : vector<1x128xf32>
    %791 = math.tanh %790 : vector<1x128xf32>
    %792 = arith.mulf %787, %791 : vector<1x128xf32>
    %793 = vector.extract_strided_slice %586 {offsets = [7, 0], sizes = [1, 512], strides = [1, 1]} : vector<16x512xf32> to vector<1x512xf32>
    %794 = arith.truncf %792 : vector<1x128xf32> to vector<1x128xbf16>
    %cst_231 = arith.constant dense<0.000000e+00> : vector<1x512xf32>
    %795 = tpu.matmul %794, %587, %cst_231 {dimension_numbers = #tpu.dot_dimension_numbers<[1], [0], [0], [1], [0, 0, 1, 1], [], []>} : vector<1x128xbf16>, vector<128x512xbf16>, vector<1x512xf32> -> vector<1x512xf32>
    %796 = arith.addf %793, %795 : vector<1x512xf32>
    %797 = vector.extract_strided_slice %796 {offsets = [0, 0], sizes = [1, 128], strides = [1, 1]} : vector<1x512xf32> to vector<1x128xf32>
    %798 = arith.negf %797 : vector<1x128xf32>
    %799 = math.exp %798 : vector<1x128xf32>
    %cst_232 = arith.constant 1.000000e+00 : f32
    %800 = vector.broadcast %cst_232 : f32 to vector<1x128xf32>
    %801 = arith.addf %800, %799 : vector<1x128xf32>
    %802 = arith.divf %800, %801 : vector<1x128xf32>
    %803 = vector.extract_strided_slice %796 {offsets = [0, 128], sizes = [1, 128], strides = [1, 1]} : vector<1x512xf32> to vector<1x128xf32>
    %804 = arith.negf %803 : vector<1x128xf32>
    %805 = math.exp %804 : vector<1x128xf32>
    %cst_233 = arith.constant 1.000000e+00 : f32
    %806 = vector.broadcast %cst_233 : f32 to vector<1x128xf32>
    %807 = arith.addf %806, %805 : vector<1x128xf32>
    %808 = arith.divf %806, %807 : vector<1x128xf32>
    %809 = vector.extract_strided_slice %796 {offsets = [0, 256], sizes = [1, 128], strides = [1, 1]} : vector<1x512xf32> to vector<1x128xf32>
    %810 = math.tanh %809 : vector<1x128xf32>
    %811 = vector.extract_strided_slice %796 {offsets = [0, 384], sizes = [1, 128], strides = [1, 1]} : vector<1x512xf32> to vector<1x128xf32>
    %812 = arith.negf %811 : vector<1x128xf32>
    %813 = math.exp %812 : vector<1x128xf32>
    %cst_234 = arith.constant 1.000000e+00 : f32
    %814 = vector.broadcast %cst_234 : f32 to vector<1x128xf32>
    %815 = arith.addf %814, %813 : vector<1x128xf32>
    %816 = arith.divf %814, %815 : vector<1x128xf32>
    %817 = arith.mulf %808, %790 : vector<1x128xf32>
    %818 = arith.mulf %802, %810 : vector<1x128xf32>
    %819 = arith.addf %817, %818 : vector<1x128xf32>
    %820 = math.tanh %819 : vector<1x128xf32>
    %821 = arith.mulf %816, %820 : vector<1x128xf32>
    %822 = tpu.concatenate %618, %647, %676, %705, %734, %763, %792, %821 in 0 : vector<1x128xf32>, vector<1x128xf32>, vector<1x128xf32>, vector<1x128xf32>, vector<1x128xf32>, vector<1x128xf32>, vector<1x128xf32>, vector<1x128xf32> -> vector<8x128xf32>
    %cst_235 = arith.constant 0.000000e+00 : f32
    %823 = vector.broadcast %cst_235 : f32 to vector<1x128xf32>
    %cst_236 = arith.constant 0.000000e+00 : f32
    %824 = vector.broadcast %cst_236 : f32 to vector<1x128xf32>
    %825 = vector.extract_strided_slice %586 {offsets = [8, 0], sizes = [1, 512], strides = [1, 1]} : vector<16x512xf32> to vector<1x512xf32>
    %826 = arith.truncf %823 : vector<1x128xf32> to vector<1x128xbf16>
    %cst_237 = arith.constant dense<0.000000e+00> : vector<1x512xf32>
    %827 = tpu.matmul %826, %587, %cst_237 {dimension_numbers = #tpu.dot_dimension_numbers<[1], [0], [0], [1], [0, 0, 1, 1], [], []>} : vector<1x128xbf16>, vector<128x512xbf16>, vector<1x512xf32> -> vector<1x512xf32>
    %828 = arith.addf %825, %827 : vector<1x512xf32>
    %829 = vector.extract_strided_slice %828 {offsets = [0, 0], sizes = [1, 128], strides = [1, 1]} : vector<1x512xf32> to vector<1x128xf32>
    %830 = arith.negf %829 : vector<1x128xf32>
    %831 = math.exp %830 : vector<1x128xf32>
    %cst_238 = arith.constant 1.000000e+00 : f32
    %832 = vector.broadcast %cst_238 : f32 to vector<1x128xf32>
    %833 = arith.addf %832, %831 : vector<1x128xf32>
    %834 = arith.divf %832, %833 : vector<1x128xf32>
    %835 = vector.extract_strided_slice %828 {offsets = [0, 128], sizes = [1, 128], strides = [1, 1]} : vector<1x512xf32> to vector<1x128xf32>
    %836 = arith.negf %835 : vector<1x128xf32>
    %837 = math.exp %836 : vector<1x128xf32>
    %cst_239 = arith.constant 1.000000e+00 : f32
    %838 = vector.broadcast %cst_239 : f32 to vector<1x128xf32>
    %839 = arith.addf %838, %837 : vector<1x128xf32>
    %840 = arith.divf %838, %839 : vector<1x128xf32>
    %841 = vector.extract_strided_slice %828 {offsets = [0, 256], sizes = [1, 128], strides = [1, 1]} : vector<1x512xf32> to vector<1x128xf32>
    %842 = math.tanh %841 : vector<1x128xf32>
    %843 = vector.extract_strided_slice %828 {offsets = [0, 384], sizes = [1, 128], strides = [1, 1]} : vector<1x512xf32> to vector<1x128xf32>
    %844 = arith.negf %843 : vector<1x128xf32>
    %845 = math.exp %844 : vector<1x128xf32>
    %cst_240 = arith.constant 1.000000e+00 : f32
    %846 = vector.broadcast %cst_240 : f32 to vector<1x128xf32>
    %847 = arith.addf %846, %845 : vector<1x128xf32>
    %848 = arith.divf %846, %847 : vector<1x128xf32>
    %849 = arith.mulf %840, %824 : vector<1x128xf32>
    %850 = arith.mulf %834, %842 : vector<1x128xf32>
    %851 = arith.addf %849, %850 : vector<1x128xf32>
    %852 = math.tanh %851 : vector<1x128xf32>
    %853 = arith.mulf %848, %852 : vector<1x128xf32>
    %854 = vector.extract_strided_slice %586 {offsets = [9, 0], sizes = [1, 512], strides = [1, 1]} : vector<16x512xf32> to vector<1x512xf32>
    %855 = arith.truncf %853 : vector<1x128xf32> to vector<1x128xbf16>
    %cst_241 = arith.constant dense<0.000000e+00> : vector<1x512xf32>
    %856 = tpu.matmul %855, %587, %cst_241 {dimension_numbers = #tpu.dot_dimension_numbers<[1], [0], [0], [1], [0, 0, 1, 1], [], []>} : vector<1x128xbf16>, vector<128x512xbf16>, vector<1x512xf32> -> vector<1x512xf32>
    %857 = arith.addf %854, %856 : vector<1x512xf32>
    %858 = vector.extract_strided_slice %857 {offsets = [0, 0], sizes = [1, 128], strides = [1, 1]} : vector<1x512xf32> to vector<1x128xf32>
    %859 = arith.negf %858 : vector<1x128xf32>
    %860 = math.exp %859 : vector<1x128xf32>
    %cst_242 = arith.constant 1.000000e+00 : f32
    %861 = vector.broadcast %cst_242 : f32 to vector<1x128xf32>
    %862 = arith.addf %861, %860 : vector<1x128xf32>
    %863 = arith.divf %861, %862 : vector<1x128xf32>
    %864 = vector.extract_strided_slice %857 {offsets = [0, 128], sizes = [1, 128], strides = [1, 1]} : vector<1x512xf32> to vector<1x128xf32>
    %865 = arith.negf %864 : vector<1x128xf32>
    %866 = math.exp %865 : vector<1x128xf32>
    %cst_243 = arith.constant 1.000000e+00 : f32
    %867 = vector.broadcast %cst_243 : f32 to vector<1x128xf32>
    %868 = arith.addf %867, %866 : vector<1x128xf32>
    %869 = arith.divf %867, %868 : vector<1x128xf32>
    %870 = vector.extract_strided_slice %857 {offsets = [0, 256], sizes = [1, 128], strides = [1, 1]} : vector<1x512xf32> to vector<1x128xf32>
    %871 = math.tanh %870 : vector<1x128xf32>
    %872 = vector.extract_strided_slice %857 {offsets = [0, 384], sizes = [1, 128], strides = [1, 1]} : vector<1x512xf32> to vector<1x128xf32>
    %873 = arith.negf %872 : vector<1x128xf32>
    %874 = math.exp %873 : vector<1x128xf32>
    %cst_244 = arith.constant 1.000000e+00 : f32
    %875 = vector.broadcast %cst_244 : f32 to vector<1x128xf32>
    %876 = arith.addf %875, %874 : vector<1x128xf32>
    %877 = arith.divf %875, %876 : vector<1x128xf32>
    %878 = arith.mulf %869, %851 : vector<1x128xf32>
    %879 = arith.mulf %863, %871 : vector<1x128xf32>
    %880 = arith.addf %878, %879 : vector<1x128xf32>
    %881 = math.tanh %880 : vector<1x128xf32>
    %882 = arith.mulf %877, %881 : vector<1x128xf32>
    %883 = vector.extract_strided_slice %586 {offsets = [10, 0], sizes = [1, 512], strides = [1, 1]} : vector<16x512xf32> to vector<1x512xf32>
    %884 = arith.truncf %882 : vector<1x128xf32> to vector<1x128xbf16>
    %cst_245 = arith.constant dense<0.000000e+00> : vector<1x512xf32>
    %885 = tpu.matmul %884, %587, %cst_245 {dimension_numbers = #tpu.dot_dimension_numbers<[1], [0], [0], [1], [0, 0, 1, 1], [], []>} : vector<1x128xbf16>, vector<128x512xbf16>, vector<1x512xf32> -> vector<1x512xf32>
    %886 = arith.addf %883, %885 : vector<1x512xf32>
    %887 = vector.extract_strided_slice %886 {offsets = [0, 0], sizes = [1, 128], strides = [1, 1]} : vector<1x512xf32> to vector<1x128xf32>
    %888 = arith.negf %887 : vector<1x128xf32>
    %889 = math.exp %888 : vector<1x128xf32>
    %cst_246 = arith.constant 1.000000e+00 : f32
    %890 = vector.broadcast %cst_246 : f32 to vector<1x128xf32>
    %891 = arith.addf %890, %889 : vector<1x128xf32>
    %892 = arith.divf %890, %891 : vector<1x128xf32>
    %893 = vector.extract_strided_slice %886 {offsets = [0, 128], sizes = [1, 128], strides = [1, 1]} : vector<1x512xf32> to vector<1x128xf32>
    %894 = arith.negf %893 : vector<1x128xf32>
    %895 = math.exp %894 : vector<1x128xf32>
    %cst_247 = arith.constant 1.000000e+00 : f32
    %896 = vector.broadcast %cst_247 : f32 to vector<1x128xf32>
    %897 = arith.addf %896, %895 : vector<1x128xf32>
    %898 = arith.divf %896, %897 : vector<1x128xf32>
    %899 = vector.extract_strided_slice %886 {offsets = [0, 256], sizes = [1, 128], strides = [1, 1]} : vector<1x512xf32> to vector<1x128xf32>
    %900 = math.tanh %899 : vector<1x128xf32>
    %901 = vector.extract_strided_slice %886 {offsets = [0, 384], sizes = [1, 128], strides = [1, 1]} : vector<1x512xf32> to vector<1x128xf32>
    %902 = arith.negf %901 : vector<1x128xf32>
    %903 = math.exp %902 : vector<1x128xf32>
    %cst_248 = arith.constant 1.000000e+00 : f32
    %904 = vector.broadcast %cst_248 : f32 to vector<1x128xf32>
    %905 = arith.addf %904, %903 : vector<1x128xf32>
    %906 = arith.divf %904, %905 : vector<1x128xf32>
    %907 = arith.mulf %898, %880 : vector<1x128xf32>
    %908 = arith.mulf %892, %900 : vector<1x128xf32>
    %909 = arith.addf %907, %908 : vector<1x128xf32>
    %910 = math.tanh %909 : vector<1x128xf32>
    %911 = arith.mulf %906, %910 : vector<1x128xf32>
    %912 = vector.extract_strided_slice %586 {offsets = [11, 0], sizes = [1, 512], strides = [1, 1]} : vector<16x512xf32> to vector<1x512xf32>
    %913 = arith.truncf %911 : vector<1x128xf32> to vector<1x128xbf16>
    %cst_249 = arith.constant dense<0.000000e+00> : vector<1x512xf32>
    %914 = tpu.matmul %913, %587, %cst_249 {dimension_numbers = #tpu.dot_dimension_numbers<[1], [0], [0], [1], [0, 0, 1, 1], [], []>} : vector<1x128xbf16>, vector<128x512xbf16>, vector<1x512xf32> -> vector<1x512xf32>
    %915 = arith.addf %912, %914 : vector<1x512xf32>
    %916 = vector.extract_strided_slice %915 {offsets = [0, 0], sizes = [1, 128], strides = [1, 1]} : vector<1x512xf32> to vector<1x128xf32>
    %917 = arith.negf %916 : vector<1x128xf32>
    %918 = math.exp %917 : vector<1x128xf32>
    %cst_250 = arith.constant 1.000000e+00 : f32
    %919 = vector.broadcast %cst_250 : f32 to vector<1x128xf32>
    %920 = arith.addf %919, %918 : vector<1x128xf32>
    %921 = arith.divf %919, %920 : vector<1x128xf32>
    %922 = vector.extract_strided_slice %915 {offsets = [0, 128], sizes = [1, 128], strides = [1, 1]} : vector<1x512xf32> to vector<1x128xf32>
    %923 = arith.negf %922 : vector<1x128xf32>
    %924 = math.exp %923 : vector<1x128xf32>
    %cst_251 = arith.constant 1.000000e+00 : f32
    %925 = vector.broadcast %cst_251 : f32 to vector<1x128xf32>
    %926 = arith.addf %925, %924 : vector<1x128xf32>
    %927 = arith.divf %925, %926 : vector<1x128xf32>
    %928 = vector.extract_strided_slice %915 {offsets = [0, 256], sizes = [1, 128], strides = [1, 1]} : vector<1x512xf32> to vector<1x128xf32>
    %929 = math.tanh %928 : vector<1x128xf32>
    %930 = vector.extract_strided_slice %915 {offsets = [0, 384], sizes = [1, 128], strides = [1, 1]} : vector<1x512xf32> to vector<1x128xf32>
    %931 = arith.negf %930 : vector<1x128xf32>
    %932 = math.exp %931 : vector<1x128xf32>
    %cst_252 = arith.constant 1.000000e+00 : f32
    %933 = vector.broadcast %cst_252 : f32 to vector<1x128xf32>
    %934 = arith.addf %933, %932 : vector<1x128xf32>
    %935 = arith.divf %933, %934 : vector<1x128xf32>
    %936 = arith.mulf %927, %909 : vector<1x128xf32>
    %937 = arith.mulf %921, %929 : vector<1x128xf32>
    %938 = arith.addf %936, %937 : vector<1x128xf32>
    %939 = math.tanh %938 : vector<1x128xf32>
    %940 = arith.mulf %935, %939 : vector<1x128xf32>
    %941 = vector.extract_strided_slice %586 {offsets = [12, 0], sizes = [1, 512], strides = [1, 1]} : vector<16x512xf32> to vector<1x512xf32>
    %942 = arith.truncf %940 : vector<1x128xf32> to vector<1x128xbf16>
    %cst_253 = arith.constant dense<0.000000e+00> : vector<1x512xf32>
    %943 = tpu.matmul %942, %587, %cst_253 {dimension_numbers = #tpu.dot_dimension_numbers<[1], [0], [0], [1], [0, 0, 1, 1], [], []>} : vector<1x128xbf16>, vector<128x512xbf16>, vector<1x512xf32> -> vector<1x512xf32>
    %944 = arith.addf %941, %943 : vector<1x512xf32>
    %945 = vector.extract_strided_slice %944 {offsets = [0, 0], sizes = [1, 128], strides = [1, 1]} : vector<1x512xf32> to vector<1x128xf32>
    %946 = arith.negf %945 : vector<1x128xf32>
    %947 = math.exp %946 : vector<1x128xf32>
    %cst_254 = arith.constant 1.000000e+00 : f32
    %948 = vector.broadcast %cst_254 : f32 to vector<1x128xf32>
    %949 = arith.addf %948, %947 : vector<1x128xf32>
    %950 = arith.divf %948, %949 : vector<1x128xf32>
    %951 = vector.extract_strided_slice %944 {offsets = [0, 128], sizes = [1, 128], strides = [1, 1]} : vector<1x512xf32> to vector<1x128xf32>
    %952 = arith.negf %951 : vector<1x128xf32>
    %953 = math.exp %952 : vector<1x128xf32>
    %cst_255 = arith.constant 1.000000e+00 : f32
    %954 = vector.broadcast %cst_255 : f32 to vector<1x128xf32>
    %955 = arith.addf %954, %953 : vector<1x128xf32>
    %956 = arith.divf %954, %955 : vector<1x128xf32>
    %957 = vector.extract_strided_slice %944 {offsets = [0, 256], sizes = [1, 128], strides = [1, 1]} : vector<1x512xf32> to vector<1x128xf32>
    %958 = math.tanh %957 : vector<1x128xf32>
    %959 = vector.extract_strided_slice %944 {offsets = [0, 384], sizes = [1, 128], strides = [1, 1]} : vector<1x512xf32> to vector<1x128xf32>
    %960 = arith.negf %959 : vector<1x128xf32>
    %961 = math.exp %960 : vector<1x128xf32>
    %cst_256 = arith.constant 1.000000e+00 : f32
    %962 = vector.broadcast %cst_256 : f32 to vector<1x128xf32>
    %963 = arith.addf %962, %961 : vector<1x128xf32>
    %964 = arith.divf %962, %963 : vector<1x128xf32>
    %965 = arith.mulf %956, %938 : vector<1x128xf32>
    %966 = arith.mulf %950, %958 : vector<1x128xf32>
    %967 = arith.addf %965, %966 : vector<1x128xf32>
    %968 = math.tanh %967 : vector<1x128xf32>
    %969 = arith.mulf %964, %968 : vector<1x128xf32>
    %970 = vector.extract_strided_slice %586 {offsets = [13, 0], sizes = [1, 512], strides = [1, 1]} : vector<16x512xf32> to vector<1x512xf32>
    %971 = arith.truncf %969 : vector<1x128xf32> to vector<1x128xbf16>
    %cst_257 = arith.constant dense<0.000000e+00> : vector<1x512xf32>
    %972 = tpu.matmul %971, %587, %cst_257 {dimension_numbers = #tpu.dot_dimension_numbers<[1], [0], [0], [1], [0, 0, 1, 1], [], []>} : vector<1x128xbf16>, vector<128x512xbf16>, vector<1x512xf32> -> vector<1x512xf32>
    %973 = arith.addf %970, %972 : vector<1x512xf32>
    %974 = vector.extract_strided_slice %973 {offsets = [0, 0], sizes = [1, 128], strides = [1, 1]} : vector<1x512xf32> to vector<1x128xf32>
    %975 = arith.negf %974 : vector<1x128xf32>
    %976 = math.exp %975 : vector<1x128xf32>
    %cst_258 = arith.constant 1.000000e+00 : f32
    %977 = vector.broadcast %cst_258 : f32 to vector<1x128xf32>
    %978 = arith.addf %977, %976 : vector<1x128xf32>
    %979 = arith.divf %977, %978 : vector<1x128xf32>
    %980 = vector.extract_strided_slice %973 {offsets = [0, 128], sizes = [1, 128], strides = [1, 1]} : vector<1x512xf32> to vector<1x128xf32>
    %981 = arith.negf %980 : vector<1x128xf32>
    %982 = math.exp %981 : vector<1x128xf32>
    %cst_259 = arith.constant 1.000000e+00 : f32
    %983 = vector.broadcast %cst_259 : f32 to vector<1x128xf32>
    %984 = arith.addf %983, %982 : vector<1x128xf32>
    %985 = arith.divf %983, %984 : vector<1x128xf32>
    %986 = vector.extract_strided_slice %973 {offsets = [0, 256], sizes = [1, 128], strides = [1, 1]} : vector<1x512xf32> to vector<1x128xf32>
    %987 = math.tanh %986 : vector<1x128xf32>
    %988 = vector.extract_strided_slice %973 {offsets = [0, 384], sizes = [1, 128], strides = [1, 1]} : vector<1x512xf32> to vector<1x128xf32>
    %989 = arith.negf %988 : vector<1x128xf32>
    %990 = math.exp %989 : vector<1x128xf32>
    %cst_260 = arith.constant 1.000000e+00 : f32
    %991 = vector.broadcast %cst_260 : f32 to vector<1x128xf32>
    %992 = arith.addf %991, %990 : vector<1x128xf32>
    %993 = arith.divf %991, %992 : vector<1x128xf32>
    %994 = arith.mulf %985, %967 : vector<1x128xf32>
    %995 = arith.mulf %979, %987 : vector<1x128xf32>
    %996 = arith.addf %994, %995 : vector<1x128xf32>
    %997 = math.tanh %996 : vector<1x128xf32>
    %998 = arith.mulf %993, %997 : vector<1x128xf32>
    %999 = vector.extract_strided_slice %586 {offsets = [14, 0], sizes = [1, 512], strides = [1, 1]} : vector<16x512xf32> to vector<1x512xf32>
    %1000 = arith.truncf %998 : vector<1x128xf32> to vector<1x128xbf16>
    %cst_261 = arith.constant dense<0.000000e+00> : vector<1x512xf32>
    %1001 = tpu.matmul %1000, %587, %cst_261 {dimension_numbers = #tpu.dot_dimension_numbers<[1], [0], [0], [1], [0, 0, 1, 1], [], []>} : vector<1x128xbf16>, vector<128x512xbf16>, vector<1x512xf32> -> vector<1x512xf32>
    %1002 = arith.addf %999, %1001 : vector<1x512xf32>
    %1003 = vector.extract_strided_slice %1002 {offsets = [0, 0], sizes = [1, 128], strides = [1, 1]} : vector<1x512xf32> to vector<1x128xf32>
    %1004 = arith.negf %1003 : vector<1x128xf32>
    %1005 = math.exp %1004 : vector<1x128xf32>
    %cst_262 = arith.constant 1.000000e+00 : f32
    %1006 = vector.broadcast %cst_262 : f32 to vector<1x128xf32>
    %1007 = arith.addf %1006, %1005 : vector<1x128xf32>
    %1008 = arith.divf %1006, %1007 : vector<1x128xf32>
    %1009 = vector.extract_strided_slice %1002 {offsets = [0, 128], sizes = [1, 128], strides = [1, 1]} : vector<1x512xf32> to vector<1x128xf32>
    %1010 = arith.negf %1009 : vector<1x128xf32>
    %1011 = math.exp %1010 : vector<1x128xf32>
    %cst_263 = arith.constant 1.000000e+00 : f32
    %1012 = vector.broadcast %cst_263 : f32 to vector<1x128xf32>
    %1013 = arith.addf %1012, %1011 : vector<1x128xf32>
    %1014 = arith.divf %1012, %1013 : vector<1x128xf32>
    %1015 = vector.extract_strided_slice %1002 {offsets = [0, 256], sizes = [1, 128], strides = [1, 1]} : vector<1x512xf32> to vector<1x128xf32>
    %1016 = math.tanh %1015 : vector<1x128xf32>
    %1017 = vector.extract_strided_slice %1002 {offsets = [0, 384], sizes = [1, 128], strides = [1, 1]} : vector<1x512xf32> to vector<1x128xf32>
    %1018 = arith.negf %1017 : vector<1x128xf32>
    %1019 = math.exp %1018 : vector<1x128xf32>
    %cst_264 = arith.constant 1.000000e+00 : f32
    %1020 = vector.broadcast %cst_264 : f32 to vector<1x128xf32>
    %1021 = arith.addf %1020, %1019 : vector<1x128xf32>
    %1022 = arith.divf %1020, %1021 : vector<1x128xf32>
    %1023 = arith.mulf %1014, %996 : vector<1x128xf32>
    %1024 = arith.mulf %1008, %1016 : vector<1x128xf32>
    %1025 = arith.addf %1023, %1024 : vector<1x128xf32>
    %1026 = math.tanh %1025 : vector<1x128xf32>
    %1027 = arith.mulf %1022, %1026 : vector<1x128xf32>
    %1028 = vector.extract_strided_slice %586 {offsets = [15, 0], sizes = [1, 512], strides = [1, 1]} : vector<16x512xf32> to vector<1x512xf32>
    %1029 = arith.truncf %1027 : vector<1x128xf32> to vector<1x128xbf16>
    %cst_265 = arith.constant dense<0.000000e+00> : vector<1x512xf32>
    %1030 = tpu.matmul %1029, %587, %cst_265 {dimension_numbers = #tpu.dot_dimension_numbers<[1], [0], [0], [1], [0, 0, 1, 1], [], []>} : vector<1x128xbf16>, vector<128x512xbf16>, vector<1x512xf32> -> vector<1x512xf32>
    %1031 = arith.addf %1028, %1030 : vector<1x512xf32>
    %1032 = vector.extract_strided_slice %1031 {offsets = [0, 0], sizes = [1, 128], strides = [1, 1]} : vector<1x512xf32> to vector<1x128xf32>
    %1033 = arith.negf %1032 : vector<1x128xf32>
    %1034 = math.exp %1033 : vector<1x128xf32>
    %cst_266 = arith.constant 1.000000e+00 : f32
    %1035 = vector.broadcast %cst_266 : f32 to vector<1x128xf32>
    %1036 = arith.addf %1035, %1034 : vector<1x128xf32>
    %1037 = arith.divf %1035, %1036 : vector<1x128xf32>
    %1038 = vector.extract_strided_slice %1031 {offsets = [0, 128], sizes = [1, 128], strides = [1, 1]} : vector<1x512xf32> to vector<1x128xf32>
    %1039 = arith.negf %1038 : vector<1x128xf32>
    %1040 = math.exp %1039 : vector<1x128xf32>
    %cst_267 = arith.constant 1.000000e+00 : f32
    %1041 = vector.broadcast %cst_267 : f32 to vector<1x128xf32>
    %1042 = arith.addf %1041, %1040 : vector<1x128xf32>
    %1043 = arith.divf %1041, %1042 : vector<1x128xf32>
    %1044 = vector.extract_strided_slice %1031 {offsets = [0, 256], sizes = [1, 128], strides = [1, 1]} : vector<1x512xf32> to vector<1x128xf32>
    %1045 = math.tanh %1044 : vector<1x128xf32>
    %1046 = vector.extract_strided_slice %1031 {offsets = [0, 384], sizes = [1, 128], strides = [1, 1]} : vector<1x512xf32> to vector<1x128xf32>
    %1047 = arith.negf %1046 : vector<1x128xf32>
    %1048 = math.exp %1047 : vector<1x128xf32>
    %cst_268 = arith.constant 1.000000e+00 : f32
    %1049 = vector.broadcast %cst_268 : f32 to vector<1x128xf32>
    %1050 = arith.addf %1049, %1048 : vector<1x128xf32>
    %1051 = arith.divf %1049, %1050 : vector<1x128xf32>
    %1052 = arith.mulf %1043, %1025 : vector<1x128xf32>
    %1053 = arith.mulf %1037, %1045 : vector<1x128xf32>
    %1054 = arith.addf %1052, %1053 : vector<1x128xf32>
    %1055 = math.tanh %1054 : vector<1x128xf32>
    %1056 = arith.mulf %1051, %1055 : vector<1x128xf32>
    %1057 = tpu.concatenate %853, %882, %911, %940, %969, %998, %1027, %1056 in 0 : vector<1x128xf32>, vector<1x128xf32>, vector<1x128xf32>, vector<1x128xf32>, vector<1x128xf32>, vector<1x128xf32>, vector<1x128xf32>, vector<1x128xf32> -> vector<8x128xf32>
    %1058 = tpu.concatenate %822, %1057 in 0 : vector<8x128xf32>, vector<8x128xf32> -> vector<16x128xf32>
    %1059 = arith.truncf %1058 : vector<16x128xf32> to vector<16x128xbf16>
    %c0_269 = arith.constant 0 : index
    %c0_270 = arith.constant 0 : index
    %1060 = vector.load %arg19[%c0_269, %c0_270] : memref<128x512xbf16, #tpu.memory_space<vmem>>, vector<128x512xbf16>
    %cst_271 = arith.constant dense<0.000000e+00> : vector<16x512xf32>
    %1061 = tpu.matmul %1059, %1060, %cst_271 {dimension_numbers = #tpu.dot_dimension_numbers<[1], [0], [0], [1], [0, 0, 1, 1], [], []>} : vector<16x128xbf16>, vector<128x512xbf16>, vector<16x512xf32> -> vector<16x512xf32>
    %c0_272 = arith.constant 0 : index
    %c0_273 = arith.constant 0 : index
    %1062 = vector.load %arg20[%c0_272, %c0_273] : memref<1x512xf32, #tpu.memory_space<vmem>>, vector<1x512xf32>
    %1063 = vector.broadcast %1062 : vector<1x512xf32> to vector<16x512xf32>
    %1064 = arith.addf %1061, %1063 : vector<16x512xf32>
    %c0_274 = arith.constant 0 : index
    %c0_275 = arith.constant 0 : index
    %1065 = vector.load %arg21[%c0_274, %c0_275] : memref<16x512xf32, #tpu.memory_space<vmem>>, vector<16x512xf32>
    tpu.vector_store %arg21[%c0_274, %c0_275], %1064 {strides = array<i32>} : memref<16x512xf32, #tpu.memory_space<vmem>>, vector<16x512xf32>,
    return
  }
  func.func @transform_0(%arg0: i32) -> (i32, i32) {
    %c0_i32 = arith.constant 0 : i32
    %c0_i32_0 = arith.constant 0 : i32
    %c0_i32_1 = arith.constant 0 : i32
    return %c0_i32, %c0_i32_0 : i32, i32
  }
  func.func @transform_1(%arg0: i32) -> (i32, i32) {
    %c0_i32 = arith.constant 0 : i32
    %c0_i32_0 = arith.constant 0 : i32
    %c0_i32_1 = arith.constant 0 : i32
    return %c0_i32, %c0_i32_0 : i32, i32
  }
  func.func @transform_2(%arg0: i32) -> (i32, i32) {
    %c0_i32 = arith.constant 0 : i32
    %c0_i32_0 = arith.constant 0 : i32
    %c0_i32_1 = arith.constant 0 : i32
    return %c0_i32, %c0_i32_0 : i32, i32
  }
  func.func @transform_3(%arg0: i32) -> (i32, i32, i32) {
    %c0_i32 = arith.constant 0 : i32
    %c0_i32_0 = arith.constant 0 : i32
    %c0_i32_1 = arith.constant 0 : i32
    %c0_i32_2 = arith.constant 0 : i32
    return %c0_i32, %c0_i32_0, %c0_i32_1 : i32, i32, i32
  }
  func.func @transform_4(%arg0: i32) -> (i32, i32, i32) {
    %c0_i32 = arith.constant 0 : i32
    %c0_i32_0 = arith.constant 0 : i32
    %c0_i32_1 = arith.constant 0 : i32
    %c0_i32_2 = arith.constant 0 : i32
    return %c0_i32, %c0_i32_0, %c0_i32_1 : i32, i32, i32
  }
  func.func @transform_5(%arg0: i32) -> (i32, i32, i32) {
    %c0_i32 = arith.constant 0 : i32
    %c0_i32_0 = arith.constant 0 : i32
    %c0_i32_1 = arith.constant 0 : i32
    %c0_i32_2 = arith.constant 0 : i32
    return %c0_i32, %c0_i32_0, %c0_i32_1 : i32, i32, i32
  }
  func.func @transform_6(%arg0: i32) -> (i32, i32, i32) {
    %c0_i32 = arith.constant 0 : i32
    %c0_i32_0 = arith.constant 0 : i32
    %c0_i32_1 = arith.constant 0 : i32
    %c0_i32_2 = arith.constant 0 : i32
    return %c0_i32, %c0_i32_0, %c0_i32_1 : i32, i32, i32
  }
  func.func @transform_7(%arg0: i32) -> (i32, i32, i32) {
    %c0_i32 = arith.constant 0 : i32
    %c0_i32_0 = arith.constant 0 : i32
    %c0_i32_1 = arith.constant 0 : i32
    %c0_i32_2 = arith.constant 0 : i32
    return %c0_i32, %c0_i32_0, %c0_i32_1 : i32, i32, i32
  }
  func.func @transform_8(%arg0: i32) -> (i32, i32, i32) {
    %c0_i32 = arith.constant 0 : i32
    %c0_i32_0 = arith.constant 0 : i32
    %c0_i32_1 = arith.constant 0 : i32
    %c0_i32_2 = arith.constant 0 : i32
    return %c0_i32, %c0_i32_0, %c0_i32_1 : i32, i32, i32
  }
  func.func @transform_9(%arg0: i32) -> (i32, i32, i32) {
    %c0_i32 = arith.constant 0 : i32
    %c0_i32_0 = arith.constant 0 : i32
    %c0_i32_1 = arith.constant 0 : i32
    %c0_i32_2 = arith.constant 0 : i32
    return %c0_i32, %c0_i32_0, %c0_i32_1 : i32, i32, i32
  }
  func.func @transform_10(%arg0: i32) -> (i32, i32, i32) {
    %c0_i32 = arith.constant 0 : i32
    %c0_i32_0 = arith.constant 0 : i32
    %c0_i32_1 = arith.constant 0 : i32
    %c0_i32_2 = arith.constant 0 : i32
    return %c0_i32, %c0_i32_0, %c0_i32_1 : i32, i32, i32
  }
  func.func @transform_11(%arg0: i32) -> (i32, i32, i32) {
    %c0_i32 = arith.constant 0 : i32
    %c0_i32_0 = arith.constant 0 : i32
    %c0_i32_1 = arith.constant 0 : i32
    %c0_i32_2 = arith.constant 0 : i32
    return %c0_i32, %c0_i32_0, %c0_i32_1 : i32, i32, i32
  }
  func.func @transform_12(%arg0: i32) -> (i32, i32, i32) {
    %c0_i32 = arith.constant 0 : i32
    %c0_i32_0 = arith.constant 0 : i32
    %c0_i32_1 = arith.constant 0 : i32
    %c0_i32_2 = arith.constant 0 : i32
    return %c0_i32, %c0_i32_0, %c0_i32_1 : i32, i32, i32
  }
  func.func @transform_13(%arg0: i32) -> (i32, i32, i32) {
    %c0_i32 = arith.constant 0 : i32
    %c0_i32_0 = arith.constant 0 : i32
    %c0_i32_1 = arith.constant 0 : i32
    %c0_i32_2 = arith.constant 0 : i32
    return %c0_i32, %c0_i32_0, %c0_i32_1 : i32, i32, i32
  }
  func.func @transform_14(%arg0: i32) -> (i32, i32, i32) {
    %c0_i32 = arith.constant 0 : i32
    %c0_i32_0 = arith.constant 0 : i32
    %c0_i32_1 = arith.constant 0 : i32
    %c0_i32_2 = arith.constant 0 : i32
    return %c0_i32, %c0_i32_0, %c0_i32_1 : i32, i32, i32
  }
  func.func @transform_15(%arg0: i32) -> (i32, i32) {
    %c0_i32 = arith.constant 0 : i32
    %c0_i32_0 = arith.constant 0 : i32
    %c0_i32_1 = arith.constant 0 : i32
    return %c0_i32, %c0_i32_0 : i32, i32
  }
  func.func @transform_16(%arg0: i32) -> (i32, i32) {
    %c0_i32 = arith.constant 0 : i32
    %c0_i32_0 = arith.constant 0 : i32
    %c0_i32_1 = arith.constant 0 : i32
    return %c0_i32, %c0_i32_0 : i32, i32
  }
  func.func @transform_17(%arg0: i32) -> (i32, i32) {
    %c0_i32 = arith.constant 0 : i32
    %c0_i32_0 = arith.constant 0 : i32
    %c0_i32_1 = arith.constant 0 : i32
    return %c0_i32, %c0_i32_0 : i32, i32
  }
  func.func @transform_18(%arg0: i32) -> (i32, i32) {
    %c0_i32 = arith.constant 0 : i32
    %c0_i32_0 = arith.constant 0 : i32
    %c0_i32_1 = arith.constant 0 : i32
    return %c0_i32, %c0_i32_0 : i32, i32
  }
  func.func @transform_19(%arg0: i32) -> (i32, i32) {
    %c0_i32 = arith.constant 0 : i32
    %c0_i32_0 = arith.constant 0 : i32
    %c0_i32_1 = arith.constant 0 : i32
    return %c0_i32, %c0_i32_0 : i32, i32
  }
  func.func @transform_20(%arg0: i32) -> (i32, i32) {
    %c0_i32 = arith.constant 0 : i32
    %c0_i32_0 = arith.constant 0 : i32
    %c0_i32_1 = arith.constant 0 : i32
    return %c0_i32, %c0_i32_0 : i32, i32
  }
}

</mosaic_0001>

<llo_original>
// kernel: seq2seq_forward.1
$region0: #{seq2seq_forward.1}
  #allocation0 [shape = 'u32[]', space=smem, size = 0x4, offset = 0x4, fixed_abs, tag = 'smem constant byte address 0x4 - core index']
  #allocation1 [shape = 'u32[144,128]{1,0:T(1,128)}', space=vmem, size = 0x12000, scoped, tag = 'internal scratch']
  %s0 = inlined_call_operand.vmem [shape: f32[16,128], index: 0, kind: input, shape index: {}]
  %s1 = inlined_call_operand.vmem [shape: f32[1,128], index: 1, kind: input, shape index: {}]
  %s2 = inlined_call_operand.vmem [shape: f32[1,128], index: 2, kind: input, shape index: {}]
  %s3 = inlined_call_operand.hbm [shape: bf16[2,128,384], index: 3, kind: input, shape index: {}]
  %s4 = inlined_call_operand.vmem [shape: f32[2,1,384], index: 4, kind: input, shape index: {}]
  %s5 = inlined_call_operand.vmem [shape: bf16[2,128,128], index: 5, kind: input, shape index: {}]
  %s6 = inlined_call_operand.vmem [shape: f32[2,1,128], index: 6, kind: input, shape index: {}]
  %s7 = inlined_call_operand.vmem [shape: f32[2,1,128], index: 7, kind: input, shape index: {}]
  %s8 = inlined_call_operand.vmem [shape: f32[2,1,128], index: 8, kind: input, shape index: {}]
  %s9 = inlined_call_operand.hbm [shape: bf16[2,128,512], index: 9, kind: input, shape index: {}]
  %s10 = inlined_call_operand.vmem [shape: f32[2,1,512], index: 10, kind: input, shape index: {}]
  %s11 = inlined_call_operand.hbm [shape: bf16[2,512,128], index: 11, kind: input, shape index: {}]
  %s12 = inlined_call_operand.vmem [shape: f32[2,1,128], index: 12, kind: input, shape index: {}]
  %s13 = inlined_call_operand.vmem [shape: f32[2,1,128], index: 13, kind: input, shape index: {}]
  %s14 = inlined_call_operand.vmem [shape: f32[2,1,128], index: 14, kind: input, shape index: {}]
  %s15 = inlined_call_operand.hbm [shape: bf16[128,512], index: 15, kind: input, shape index: {}]
  %s16 = inlined_call_operand.hbm [shape: bf16[128,512], index: 16, kind: input, shape index: {}]
  %s17 = inlined_call_operand.vmem [shape: f32[1,512], index: 17, kind: input, shape index: {}]
  %s18 = inlined_call_operand.hbm [shape: bf16[128,512], index: 18, kind: input, shape index: {}]
  %s19 = inlined_call_operand.vmem [shape: f32[1,512], index: 19, kind: input, shape index: {}]
  %s20 = inlined_call_operand.hbm [shape: f32[16,512], index: 20, kind: output, shape index: {}]
  %s21 = sld [smem:[#allocation0]]
  $region114: #{seq2seq_forward.1} parent=0
    _
  %s23 = ssub.s32 1, %s21
  %s24 = scalar_select 0, %s23, %s21
  $region1: #{seq2seq_forward.1} parent=0
    #allocation2 [shape = 'u8[196608]{0}', space=vmem, size = 0x30000, scoped, tag = 'input window, operand 3, single buffered']
    #allocation3 [shape = 's32[1]{0}', space=sflag, size = 0x4, scoped, tag = 'scoped memory for seq2seq_forward.1']
    #allocation4 [shape = 's32[1]{0}', space=sflag, size = 0x4, scoped, tag = 'scoped memory for seq2seq_forward.1']
    #allocation5 [shape = 'u8[262144]{0}', space=vmem, size = 0x40000, scoped, tag = 'input window, operand 9, single buffered']
    #allocation6 [shape = 's32[1]{0}', space=sflag, size = 0x4, scoped, tag = 'scoped memory for seq2seq_forward.1']
    #allocation7 [shape = 'u8[262144]{0}', space=vmem, size = 0x40000, scoped, tag = 'input window, operand 11, single buffered']
    #allocation8 [shape = 'u8[131072]{0}', space=vmem, size = 0x20000, scoped, tag = 'input window, operand 15, single buffered']
    #allocation9 [shape = 's32[1]{0}', space=sflag, size = 0x4, scoped, tag = 'scoped memory for seq2seq_forward.1']
    #allocation10 [shape = 'u8[131072]{0}', space=vmem, size = 0x20000, scoped, tag = 'input window, operand 16, single buffered']
    #allocation11 [shape = 'u8[131072]{0}', space=vmem, size = 0x20000, scoped, tag = 'input window, operand 18, single buffered']
    #allocation12 [shape = 's32[1]{0}', space=sflag, size = 0x4, scoped, tag = 'scoped memory for seq2seq_forward.1']
    #allocation13 [shape = 'u8[32768]{0}', space=vmem, size = 0x8000, scoped, tag = 'output window, operand 0, single buffered']
    %25 = vsyncpa [#allocation3], 0
    %26 = vsyncpa [#allocation6], 0
    %27 = vsyncpa [#allocation9], 0
    %28 = vsyncpa [#allocation12], 0
    %29 = vsyncpa [#allocation4], 0
    // Predicated region
    $region2: #{seq2seq_forward.1} parent=1 // pred_check
      _
    $region3: #{seq2seq_forward.1} parent=1 // pred_check_branch
      %31 = sbr.rel (0) target = $region5
    $region4: #{seq2seq_forward.1} parent=1 // pred_region
      _
    $region5: #{seq2seq_forward.1} parent=1 // pred_fallthru
      _
    // Predicated region
    $region6: #{seq2seq_forward.1} parent=1 // pred_check
      _
    $region7: #{seq2seq_forward.1} parent=1 // pred_check_branch
      %33 = sbr.rel (0) target = $region9
    $region8: #{seq2seq_forward.1} parent=1 // pred_region
      _
    $region9: #{seq2seq_forward.1} parent=1 // pred_fallthru
      _
    // Predicated region
    $region10: #{seq2seq_forward.1} parent=1 // pred_check
      _
    $region11: #{seq2seq_forward.1} parent=1 // pred_check_branch
      %35 = sbr.rel (0) target = $region13
    $region12: #{seq2seq_forward.1} parent=1 // pred_region
      _
    $region13: #{seq2seq_forward.1} parent=1 // pred_fallthru
      _
    // Predicated region
    $region14: #{seq2seq_forward.1} parent=1 // pred_check
      _
    $region15: #{seq2seq_forward.1} parent=1 // pred_check_branch
      %37 = sbr.rel (0) target = $region17
    $region16: #{seq2seq_forward.1} parent=1 // pred_region
      %s39 = ssub.s32 6144, 6144
      %40 = vsyncadd [#allocation3], %s39
      %s41 = sshll.u32 [#allocation2], 4
      %s42 = int_to_ptr.vmem [resolvable:$true] %s41
      %47 = dma.hbm_to_vmem [thread:$0]  %s3, 6144, %s42, [#allocation3], 192, 192, 12
    $region17: #{seq2seq_forward.1} parent=1 // pred_fallthru
      _
    // Predicated region
    $region18: #{seq2seq_forward.1} parent=1 // pred_check
      _
    $region19: #{seq2seq_forward.1} parent=1 // pred_check_branch
      %49 = sbr.rel (0) target = $region21
    $region20: #{seq2seq_forward.1} parent=1 // pred_region
      _
    $region21: #{seq2seq_forward.1} parent=1 // pred_fallthru
      _
    // Predicated region
    $region22: #{seq2seq_forward.1} parent=1 // pred_check
      _
    $region23: #{seq2seq_forward.1} parent=1 // pred_check_branch
      %51 = sbr.rel (0) target = $region25
    $region24: #{seq2seq_forward.1} parent=1 // pred_region
      _
    $region25: #{seq2seq_forward.1} parent=1 // pred_fallthru
      _
    // Predicated region
    $region26: #{seq2seq_forward.1} parent=1 // pred_check
      _
    $region27: #{seq2seq_forward.1} parent=1 // pred_check_branch
      %53 = sbr.rel (0) target = $region29
    $region28: #{seq2seq_forward.1} parent=1 // pred_region
      _
    $region29: #{seq2seq_forward.1} parent=1 // pred_fallthru
      _
    // Predicated region
    $region30: #{seq2seq_forward.1} parent=1 // pred_check
      _
    $region31: #{seq2seq_forward.1} parent=1 // pred_check_branch
      %55 = sbr.rel (0) target = $region33
    $region32: #{seq2seq_forward.1} parent=1 // pred_region
      _
    $region33: #{seq2seq_forward.1} parent=1 // pred_fallthru
      _
    // Predicated region
    $region34: #{seq2seq_forward.1} parent=1 // pred_check
      _
    $region35: #{seq2seq_forward.1} parent=1 // pred_check_branch
      %57 = sbr.rel (0) target = $region37
    $region36: #{seq2seq_forward.1} parent=1 // pred_region
      _
    $region37: #{seq2seq_forward.1} parent=1 // pred_fallthru
      _
    // Predicated region
    $region38: #{seq2seq_forward.1} parent=1 // pred_check
      _
    $region39: #{seq2seq_forward.1} parent=1 // pred_check_branch
      %59 = sbr.rel (0) target = $region41
    $region40: #{seq2seq_forward.1} parent=1 // pred_region
      %s61 = ssub.s32 8192, 8192
      %62 = vsyncadd [#allocation6], %s61
      %s63 = sshll.u32 [#allocation5], 4
      %s64 = int_to_ptr.vmem [resolvable:$true] %s63
      %69 = dma.hbm_to_vmem [thread:$0]  %s9, 8192, %s64, [#allocation6], 256, 256, 16
    $region41: #{seq2seq_forward.1} parent=1 // pred_fallthru
      _
    // Predicated region
    $region42: #{seq2seq_forward.1} parent=1 // pred_check
      _
    $region43: #{seq2seq_forward.1} parent=1 // pred_check_branch
      %71 = sbr.rel (0) target = $region45
    $region44: #{seq2seq_forward.1} parent=1 // pred_region
      _
    $region45: #{seq2seq_forward.1} parent=1 // pred_fallthru
      _
    // Predicated region
    $region46: #{seq2seq_forward.1} parent=1 // pred_check
      _
    $region47: #{seq2seq_forward.1} parent=1 // pred_check_branch
      %73 = sbr.rel (0) target = $region49
    $region48: #{seq2seq_forward.1} parent=1 // pred_region
      %s75 = ssub.s32 8192, 8192
      %76 = vsyncadd [#allocation6], %s75
      %s77 = sshll.u32 [#allocation7], 4
      %s78 = int_to_ptr.vmem [resolvable:$true] %s77
      %83 = dma.hbm_to_vmem [thread:$0]  %s11, 8192, %s78, [#allocation6], 64, 64, 4
    $region49: #{seq2seq_forward.1} parent=1 // pred_fallthru
      _
    // Predicated region
    $region50: #{seq2seq_forward.1} parent=1 // pred_check
      _
    $region51: #{seq2seq_forward.1} parent=1 // pred_check_branch
      %85 = sbr.rel (0) target = $region53
    $region52: #{seq2seq_forward.1} parent=1 // pred_region
      _
    $region53: #{seq2seq_forward.1} parent=1 // pred_fallthru
      _
    // Predicated region
    $region54: #{seq2seq_forward.1} parent=1 // pred_check
      _
    $region55: #{seq2seq_forward.1} parent=1 // pred_check_branch
      %87 = sbr.rel (0) target = $region57
    $region56: #{seq2seq_forward.1} parent=1 // pred_region
      _
    $region57: #{seq2seq_forward.1} parent=1 // pred_fallthru
      _
    // Predicated region
    $region58: #{seq2seq_forward.1} parent=1 // pred_check
      _
    $region59: #{seq2seq_forward.1} parent=1 // pred_check_branch
      %89 = sbr.rel (0) target = $region61
    $region60: #{seq2seq_forward.1} parent=1 // pred_region
      _
    $region61: #{seq2seq_forward.1} parent=1 // pred_fallthru
      _
    // Predicated region
    $region62: #{seq2seq_forward.1} parent=1 // pred_check
      _
    $region63: #{seq2seq_forward.1} parent=1 // pred_check_branch
      %91 = sbr.rel (0) target = $region65
    $region64: #{seq2seq_forward.1} parent=1 // pred_region
      %s93 = ssub.s32 4096, 4096
      %94 = vsyncadd [#allocation9], %s93
      %s95 = sshll.u32 [#allocation8], 4
      %s96 = int_to_ptr.vmem [resolvable:$true] %s95
      %101 = dma.hbm_to_vmem [thread:$0]  %s15, 4096, %s96, [#allocation9], 256, 256, 16
    $region65: #{seq2seq_forward.1} parent=1 // pred_fallthru
      _
    // Predicated region
    $region66: #{seq2seq_forward.1} parent=1 // pred_check
      _
    $region67: #{seq2seq_forward.1} parent=1 // pred_check_branch
      %103 = sbr.rel (0) target = $region69
    $region68: #{seq2seq_forward.1} parent=1 // pred_region
      %s105 = ssub.s32 4096, 4096
      %106 = vsyncadd [#allocation9], %s105
      %s107 = sshll.u32 [#allocation10], 4
      %s108 = int_to_ptr.vmem [resolvable:$true] %s107
      %113 = dma.hbm_to_vmem [thread:$0]  %s16, 4096, %s108, [#allocation9], 256, 256, 16
    $region69: #{seq2seq_forward.1} parent=1 // pred_fallthru
      _
    // Predicated region
    $region70: #{seq2seq_forward.1} parent=1 // pred_check
      _
    $region71: #{seq2seq_forward.1} parent=1 // pred_check_branch
      %115 = sbr.rel (0) target = $region73
    $region72: #{seq2seq_forward.1} parent=1 // pred_region
      _
    $region73: #{seq2seq_forward.1} parent=1 // pred_fallthru
      _
    // Predicated region
    $region74: #{seq2seq_forward.1} parent=1 // pred_check
      _
    $region75: #{seq2seq_forward.1} parent=1 // pred_check_branch
      %117 = sbr.rel (0) target = $region77
    $region76: #{seq2seq_forward.1} parent=1 // pred_region
      %s119 = ssub.s32 4096, 4096
      %120 = vsyncadd [#allocation12], %s119
      %s121 = sshll.u32 [#allocation11], 4
      %s122 = int_to_ptr.vmem [resolvable:$true] %s121
      %127 = dma.hbm_to_vmem [thread:$0]  %s18, 4096, %s122, [#allocation12], 256, 256, 16
    $region77: #{seq2seq_forward.1} parent=1 // pred_fallthru
      _
    // Predicated region
    $region78: #{seq2seq_forward.1} parent=1 // pred_check
      _
    $region79: #{seq2seq_forward.1} parent=1 // pred_check_branch
      %129 = sbr.rel (0) target = $region81
    $region80: #{seq2seq_forward.1} parent=1 // pred_region
      _
    $region81: #{seq2seq_forward.1} parent=1 // pred_fallthru
      _
    // Predicated region
    $region82: #{seq2seq_forward.1} parent=1 // pred_check
      _
    $region83: #{seq2seq_forward.1} parent=1 // pred_check_branch
      %131 = sbr.rel (0) target = $region85
    $region84: #{seq2seq_forward.1} parent=1 // pred_region
      %132 = dma.done [#allocation3], 6144
    $region85: #{seq2seq_forward.1} parent=1 // pred_fallthru
      _
    // Predicated region
    $region86: #{seq2seq_forward.1} parent=1 // pred_check
      _
    $region87: #{seq2seq_forward.1} parent=1 // pred_check_branch
      %134 = sbr.rel (0) target = $region89
    $region88: #{seq2seq_forward.1} parent=1 // pred_region
      %135 = dma.done [#allocation6], 8192
    $region89: #{seq2seq_forward.1} parent=1 // pred_fallthru
      _
    // Predicated region
    $region90: #{seq2seq_forward.1} parent=1 // pred_check
      _
    $region91: #{seq2seq_forward.1} parent=1 // pred_check_branch
      %137 = sbr.rel (0) target = $region93
    $region92: #{seq2seq_forward.1} parent=1 // pred_region
      %138 = dma.done [#allocation6], 8192
    $region93: #{seq2seq_forward.1} parent=1 // pred_fallthru
      _
    // Predicated region
    $region94: #{seq2seq_forward.1} parent=1 // pred_check
      _
    $region95: #{seq2seq_forward.1} parent=1 // pred_check_branch
      %140 = sbr.rel (0) target = $region97
    $region96: #{seq2seq_forward.1} parent=1 // pred_region
      %141 = dma.done [#allocation9], 4096
    $region97: #{seq2seq_forward.1} parent=1 // pred_fallthru
      _
    // Predicated region
    $region98: #{seq2seq_forward.1} parent=1 // pred_check
      _
    $region99: #{seq2seq_forward.1} parent=1 // pred_check_branch
      %143 = sbr.rel (0) target = $region101
    $region100: #{seq2seq_forward.1} parent=1 // pred_region
      %144 = dma.done [#allocation9], 4096
    $region101: #{seq2seq_forward.1} parent=1 // pred_fallthru
      _
    // Predicated region
    $region102: #{seq2seq_forward.1} parent=1 // pred_check
      _
    $region103: #{seq2seq_forward.1} parent=1 // pred_check_branch
      %146 = sbr.rel (0) target = $region105
    $region104: #{seq2seq_forward.1} parent=1 // pred_region
      %147 = dma.done [#allocation12], 4096
    $region105: #{seq2seq_forward.1} parent=1 // pred_fallthru
      _
    %v149 = vld [vmem:[%s0] sm:$0xff]
    %v150 = vld [vmem:[%s0 + $0x8] sm:$0xff]
    %v151 = vld [vmem:[%s1] sm:$0x1]
    %v152 = vld [vmem:[%s2] sm:$0x1]
    %153 = vadd.xlane.f32.xlu0 %v149
    %v154 = vpop.xlane.xlu0 %153
    %155 = vadd.xlane.f32.xlu0 %v150
    %v156 = vpop.xlane.xlu0 %155
    %v157 = vrcp.pop 128.0
    %v158 = vmul.f32 %v154, %v157
    %v159 = vmul.f32 %v156, %v157
    %v160 = vsub.f32 %v149, %v158
    %v161 = vsub.f32 %v150, %v159
    %v162 = vmul.f32 %v160, %v160
    %v163 = vmul.f32 %v161, %v161
    %164 = vadd.xlane.f32.xlu0 %v162
    %v165 = vpop.xlane.xlu0 %164
    %166 = vadd.xlane.f32.xlu0 %v163
    %v167 = vpop.xlane.xlu0 %166
    %v168 = vmul.f32 %v165, %v157
    %v169 = vmul.f32 %v167, %v157
    %v170 = vadd.f32 %v168, 1e-12
    %v171 = vadd.f32 %v169, 1e-12
    %v172 = vrsqrt.pop %v170
    %v173 = vrsqrt.pop %v171
    %v174 = vmul.f32 %v160, %v172
    %v175 = vmul.f32 %v161, %v173
    %v177 = vlaneseq
    %v178 = vshrl.u32 %v177, 7
    %v179 = vsub.s32 0, %v178
    %v180 = vrot.slane %v151, %v179
    %v182 = vmul.f32 %v174, %v180
    %v183 = vmul.f32 %v175, %v180
    %v185 = vlaneseq
    %v186 = vshrl.u32 %v185, 7
    %v187 = vsub.s32 0, %v186
    %v188 = vrot.slane %v152, %v187
    %v190 = vadd.f32 %v182, %v188
    %v191 = vadd.f32 %v183, %v188
    %v192 = vld [vmem:[#allocation2] sm:$0xff]
    %v193 = vld [vmem:[#allocation2 + $0x8] sm:$0xf]
    %v194 = vld [vmem:[#allocation2 + $0xc] sm:$0xff]
    %v195 = vld [vmem:[#allocation2 + $0x14] sm:$0xf]
    %v196 = vld [vmem:[#allocation2 + $0x18] sm:$0xff]
    %v197 = vld [vmem:[#allocation2 + $0x20] sm:$0xf]
    %v198 = vld [vmem:[#allocation2 + $0x24] sm:$0xff]
    %v199 = vld [vmem:[#allocation2 + $0x2c] sm:$0xf]
    %v200 = vld [vmem:[#allocation2 + $0x30] sm:$0xff]
    %v201 = vld [vmem:[#allocation2 + $0x38] sm:$0xf]
    %v202 = vld [vmem:[#allocation2 + $0x3c] sm:$0xff]
    %v203 = vld [vmem:[#allocation2 + $0x44] sm:$0xf]
    %v204 = vld [vmem:[#allocation2 + $0x48] sm:$0xff]
    %v205 = vld [vmem:[#allocation2 + $0x50] sm:$0xf]
    %v206 = vld [vmem:[#allocation2 + $0x54] sm:$0xff]
    %v207 = vld [vmem:[#allocation2 + $0x5c] sm:$0xf]
    %v208 = vld [vmem:[#allocation2 + $0x60] sm:$0xff]
    %v209 = vld [vmem:[#allocation2 + $0x68] sm:$0xf]
    %v210 = vld [vmem:[#allocation2 + $0x6c] sm:$0xff]
    %v211 = vld [vmem:[#allocation2 + $0x74] sm:$0xf]
    %v212 = vld [vmem:[#allocation2 + $0x78] sm:$0xff]
    %v213 = vld [vmem:[#allocation2 + $0x80] sm:$0xf]
    %v214 = vld [vmem:[#allocation2 + $0x84] sm:$0xff]
    %v215 = vld [vmem:[#allocation2 + $0x8c] sm:$0xf]
    %v216 = vld [vmem:[#allocation2 + $0x90] sm:$0xff]
    %v217 = vld [vmem:[#allocation2 + $0x98] sm:$0xf]
    %v218 = vld [vmem:[#allocation2 + $0x9c] sm:$0xff]
    %v219 = vld [vmem:[#allocation2 + $0xa4] sm:$0xf]
    %v220 = vld [vmem:[#allocation2 + $0xa8] sm:$0xff]
    %v221 = vld [vmem:[#allocation2 + $0xb0] sm:$0xf]
    %v222 = vld [vmem:[#allocation2 + $0xb4] sm:$0xff]
    %v223 = vld [vmem:[#allocation2 + $0xbc] sm:$0xf]
    %v224 = vld [vmem:[%s5] sm:$0xf]
    %v225 = vld [vmem:[%s5 + $0x4] sm:$0xf]
    %v226 = vld [vmem:[%s5 + $0x8] sm:$0xf]
    %v227 = vld [vmem:[%s5 + $0xc] sm:$0xf]
    %v228 = vld [vmem:[%s5 + $0x10] sm:$0xf]
    %v229 = vld [vmem:[%s5 + $0x14] sm:$0xf]
    %v230 = vld [vmem:[%s5 + $0x18] sm:$0xf]
    %v231 = vld [vmem:[%s5 + $0x1c] sm:$0xf]
    %v232 = vld [vmem:[%s5 + $0x20] sm:$0xf]
    %v233 = vld [vmem:[%s5 + $0x24] sm:$0xf]
    %v234 = vld [vmem:[%s5 + $0x28] sm:$0xf]
    %v235 = vld [vmem:[%s5 + $0x2c] sm:$0xf]
    %v236 = vld [vmem:[%s5 + $0x30] sm:$0xf]
    %v237 = vld [vmem:[%s5 + $0x34] sm:$0xf]
    %v238 = vld [vmem:[%s5 + $0x38] sm:$0xf]
    %v239 = vld [vmem:[%s5 + $0x3c] sm:$0xf]
    %v240 = vpack.c.bf16 %v191, %v190
    %v241 = vld [vmem:[%s4] sm:$0x7]
    %v243 = vlaneseq
    %v244 = vshrl.u32 %v243, 7
    %v245 = vsub.s32 0, %v244
    %v246 = vrot.slane %v241, %v245
    %v247 = vlaneseq
    %v248 = vshrl.u32 %v247, 7
    %v249 = vsub.s32 1, %v248
    %v250 = vrot.slane %v241, %v249
    %v251 = vlaneseq
    %v252 = vshrl.u32 %v251, 7
    %v253 = vsub.s32 2, %v252
    %v254 = vrot.slane %v241, %v253
    %v290 = vunpack.c.l.b16 %v192
    %v291 = vunpack.c.h.b16 %v192
    %v292 = vunpack.c.l.b16 %v193
    %v293 = vunpack.c.l.b16 %v194
    %v294 = vunpack.c.h.b16 %v194
    %v295 = vunpack.c.l.b16 %v195
    %v296 = vunpack.c.l.b16 %v196
    %v297 = vunpack.c.h.b16 %v196
    %v298 = vunpack.c.l.b16 %v197
    %v299 = vunpack.c.l.b16 %v198
    %v300 = vunpack.c.h.b16 %v198
    %v301 = vunpack.c.l.b16 %v199
    %v302 = vunpack.c.l.b16 %v200
    %v303 = vunpack.c.h.b16 %v200
    %v304 = vunpack.c.l.b16 %v201
    %v305 = vunpack.c.l.b16 %v202
    %v306 = vunpack.c.h.b16 %v202
    %v307 = vunpack.c.l.b16 %v203
    %v308 = vunpack.c.l.b16 %v204
    %v309 = vunpack.c.h.b16 %v204
    %v310 = vunpack.c.l.b16 %v205
    %v311 = vunpack.c.l.b16 %v206
    %v312 = vunpack.c.h.b16 %v206
    %v313 = vunpack.c.l.b16 %v207
    %v314 = vunpack.c.l.b16 %v208
    %v315 = vunpack.c.h.b16 %v208
    %v316 = vunpack.c.l.b16 %v209
    %v317 = vunpack.c.l.b16 %v210
    %v318 = vunpack.c.h.b16 %v210
    %v319 = vunpack.c.l.b16 %v211
    %v320 = vunpack.c.l.b16 %v212
    %v321 = vunpack.c.h.b16 %v212
    %v322 = vunpack.c.l.b16 %v213
    %v323 = vunpack.c.l.b16 %v214
    %v324 = vunpack.c.h.b16 %v214
    %v325 = vunpack.c.l.b16 %v215
    %v326 = vunpack.c.l.b16 %v216
    %v327 = vunpack.c.h.b16 %v216
    %v328 = vunpack.c.l.b16 %v217
    %v329 = vunpack.c.l.b16 %v218
    %v330 = vunpack.c.h.b16 %v218
    %v331 = vunpack.c.l.b16 %v219
    %v332 = vunpack.c.l.b16 %v220
    %v333 = vunpack.c.h.b16 %v220
    %v334 = vunpack.c.l.b16 %v221
    %v335 = vunpack.c.l.b16 %v222
    %v336 = vunpack.c.h.b16 %v222
    %v337 = vunpack.c.l.b16 %v223
    %v338 = vpack.c.b16 %v293, %v290
    %v339 = vpack.c.b16 %v294, %v291
    %v340 = vpack.c.b16 %v295, %v292
    %v341 = vpack.c.b16 %v299, %v296
    %v342 = vpack.c.b16 %v300, %v297
    %v343 = vpack.c.b16 %v301, %v298
    %v344 = vpack.c.b16 %v305, %v302
    %v345 = vpack.c.b16 %v306, %v303
    %v346 = vpack.c.b16 %v307, %v304
    %v347 = vpack.c.b16 %v311, %v308
    %v348 = vpack.c.b16 %v312, %v309
    %v349 = vpack.c.b16 %v313, %v310
    %v350 = vpack.c.b16 %v317, %v314
    %v351 = vpack.c.b16 %v318, %v315
    %v352 = vpack.c.b16 %v319, %v316
    %v353 = vpack.c.b16 %v323, %v320
    %v354 = vpack.c.b16 %v324, %v321
    %v355 = vpack.c.b16 %v325, %v322
    %v356 = vpack.c.b16 %v329, %v326
    %v357 = vpack.c.b16 %v330, %v327
    %v358 = vpack.c.b16 %v331, %v328
    %v359 = vpack.c.b16 %v335, %v332
    %v360 = vpack.c.b16 %v336, %v333
    %v361 = vpack.c.b16 %v337, %v334
    %386 = vmatprep.subr.bf16.mxu0 %v360
    %387 = vmatpush1.bf16.msra.mxu0 %v359
    %388 = vmatprep.subr.bf16.mxu0 %v357
    %389 = vmatpush1.bf16.msra.mxu0 %v356
    %390 = vmatprep.subr.bf16.mxu0 %v354
    %391 = vmatpush1.bf16.msra.mxu0 %v353
    %392 = vmatprep.subr.bf16.mxu0 %v351
    %393 = vmatpush1.bf16.msra.mxu0 %v350
    %394 = vmatprep.subr.bf16.mxu0 %v348
    %395 = vmatpush1.bf16.msra.mxu0 %v347
    %396 = vmatprep.subr.bf16.mxu0 %v345
    %397 = vmatpush1.bf16.msra.mxu0 %v344
    %398 = vmatprep.subr.bf16.mxu0 %v342
    %399 = vmatpush1.bf16.msra.mxu0 %v341
    %400 = vmatprep.subr.bf16.mxu0 %v339
    %401 = vmatpush1.bf16.msra.mxu0 %v338
    %402 = vmatprep.subr.bf16.mxu0 0
    %403 = vmatpush2.bf16.msra.mxu0 0
    %404 = vmatprep.subr.bf16.mxu0 0
    %405 = vmatpush2.bf16.msra.mxu0 0
    %406 = vmatprep.subr.bf16.mxu0 0
    %407 = vmatpush2.bf16.msra.mxu0 0
    %408 = vmatprep.subr.bf16.mxu0 0
    %409 = vmatpush2.bf16.msra.mxu0 0
    %410 = vmatprep.subr.bf16.mxu0 0
    %411 = vmatpush2.bf16.msra.mxu0 0
    %412 = vmatprep.subr.bf16.mxu0 0
    %413 = vmatpush2.bf16.msra.mxu0 0
    %414 = vmatprep.subr.bf16.mxu0 0
    %415 = vmatpush2.bf16.msra.mxu0 0
    %416 = vmatprep.subr.bf16.mxu0 0
    %417 = vmatpush2.bf16.msra.mxu0 0
    %418 = vmatprep.mubr.bf16.mxu0 0
    %419 = vmatmul.mubr.bf16.gmra.mxu0 %v240
    %v420 = vpop.f32.mrf.mxu0
    %v421 = vadd.f32 %v246, %v420
    %v422 = vpop.f32.mrf.mxu0
    %v423 = vadd.f32 %v250, %v422
    %v424 = vpop.f32.mrf.mxu0
    %v425 = vadd.f32 %v246, %v424
    %v426 = vpop.f32.mrf.mxu0
    %v427 = vadd.f32 %v250, %v426
    %428 = vdwg.mxu0
    %429 = vmatprep.subr.bf16.mxu0 0
    %430 = vmatpush1.bf16.msra.mxu0 %v361
    %431 = vmatprep.subr.bf16.mxu0 0
    %432 = vmatpush1.bf16.msra.mxu0 %v358
    %433 = vmatprep.subr.bf16.mxu0 0
    %434 = vmatpush1.bf16.msra.mxu0 %v355
    %435 = vmatprep.subr.bf16.mxu0 0
    %436 = vmatpush1.bf16.msra.mxu0 %v352
    %437 = vmatprep.subr.bf16.mxu0 0
    %438 = vmatpush1.bf16.msra.mxu0 %v349
    %439 = vmatprep.subr.bf16.mxu0 0
    %440 = vmatpush1.bf16.msra.mxu0 %v346
    %441 = vmatprep.subr.bf16.mxu0 0
    %442 = vmatpush1.bf16.msra.mxu0 %v343
    %443 = vmatprep.subr.bf16.mxu0 0
    %444 = vmatpush1.bf16.msra.mxu0 %v340
    %445 = vmatprep.subr.bf16.mxu0 0
    %446 = vmatpush2.bf16.msra.mxu0 0
    %447 = vmatprep.subr.bf16.mxu0 0
    %448 = vmatpush2.bf16.msra.mxu0 0
    %449 = vmatprep.subr.bf16.mxu0 0
    %450 = vmatpush2.bf16.msra.mxu0 0
    %451 = vmatprep.subr.bf16.mxu0 0
    %452 = vmatpush2.bf16.msra.mxu0 0
    %453 = vmatprep.subr.bf16.mxu0 0
    %454 = vmatpush2.bf16.msra.mxu0 0
    %455 = vmatprep.subr.bf16.mxu0 0
    %456 = vmatpush2.bf16.msra.mxu0 0
    %457 = vmatprep.subr.bf16.mxu0 0
    %458 = vmatpush2.bf16.msra.mxu0 0
    %459 = vmatprep.subr.bf16.mxu0 0
    %460 = vmatpush2.bf16.msra.mxu0 0
    %461 = vmatprep.mubr.bf16.mxu0 0
    %462 = vmatmul.mubr.bf16.gmra.mxu0 %v240
    %v463 = vpop.f32.mrf.mxu0
    %v464 = vadd.f32 %v254, %v463
    %v465 = vpop.f32.mrf.mxu0
    %v466 = vpop.f32.mrf.mxu0
    %v467 = vadd.f32 %v254, %v466
    %v468 = vpop.f32.mrf.mxu0
    %469 = vdwg.mxu0
    %v470 = vpack.c.bf16 %v421, %v421
    %v471 = vpack.c.bf16 %v423, %v423
    %v472 = vpack.c.bf16 %v464, %v464
    %vm473 = vcmask 261120
    %v475 = vsel %vm473, %v470, 0
    %v478 = vsel %vm473, %v471, 0
    %480 = vmatprep.subr.bf16.mxu0 0
    %481 = vmatpush1.bf16.xpose.msra.mxu0 0
    %482 = vmatprep.subr.bf16.mxu0 0
    %483 = vmatpush1.bf16.xpose.msra.mxu0 0
    %484 = vmatprep.subr.bf16.mxu0 0
    %485 = vmatpush1.bf16.xpose.msra.mxu0 0
    %486 = vmatprep.subr.bf16.mxu0 0
    %487 = vmatpush1.bf16.xpose.msra.mxu0 0
    %488 = vmatprep.subr.bf16.mxu0 0
    %489 = vmatpush1.bf16.xpose.msra.mxu0 0
    %490 = vmatprep.subr.bf16.mxu0 0
    %491 = vmatpush1.bf16.xpose.msra.mxu0 0
    %492 = vmatprep.subr.bf16.mxu0 0
    %493 = vmatpush1.bf16.xpose.msra.mxu0 0
    %494 = vmatprep.subr.bf16.mxu0 0
    %495 = vmatpush1.bf16.xpose.msra.mxu0 %v478
    %496 = vmatprep.subr.bf16.mxu0 0
    %497 = vmatpush2.bf16.xpose.msra.mxu0 0
    %498 = vmatprep.subr.bf16.mxu0 0
    %499 = vmatpush2.bf16.xpose.msra.mxu0 0
    %500 = vmatprep.subr.bf16.mxu0 0
    %501 = vmatpush2.bf16.xpose.msra.mxu0 0
    %502 = vmatprep.subr.bf16.mxu0 0
    %503 = vmatpush2.bf16.xpose.msra.mxu0 0
    %504 = vmatprep.subr.bf16.mxu0 0
    %505 = vmatpush2.bf16.xpose.msra.mxu0 0
    %506 = vmatprep.subr.bf16.mxu0 0
    %507 = vmatpush2.bf16.xpose.msra.mxu0 0
    %508 = vmatprep.subr.bf16.mxu0 0
    %509 = vmatpush2.bf16.xpose.msra.mxu0 0
    %510 = vmatprep.subr.bf16.mxu0 0
    %511 = vmatpush2.bf16.xpose.msra.mxu0 0
    %512 = vmatprep.mubr.bf16.mxu0 0
    %513 = vmatmul.mubr.bf16.gmra.mxu0 %v475
    %v514 = vpop.f32.mrf.mxu0
    %v515 = vadd.f32 0.0, %v514
    %v516 = vpop.f32.mrf.mxu0
    %v517 = vpop.f32.mrf.mxu0
    %v518 = vpop.f32.mrf.mxu0
    %519 = vdwg.mxu0
    %vm520 = vcmask 64512
    %v521 = vsel %vm520, %v515, -inf
    %522 = vmax.xlane.f32.xlu0 %v521
    %v523 = vpop.xlane.xlu0 %522
    %v524 = vsub.f32 %v515, %v523
    %v525 = vmul.f32 %v524, 1.442695
    %v526 = vpow.pop %v525
    %v527 = vsel %vm520, %v526, 0.0
    %528 = vadd.xlane.f32.xlu0 %v527
    %v529 = vpop.xlane.xlu0 %528
    %v530 = vrcp.pop %v529
    %v531 = vmul.f32 %v526, %v530
    %v532 = vpack.c.bf16 %v531, %v531
    %v534 = vsel %vm520, %v532, 0
    %vm536 = vcmask 1043456
    %v538 = vsel %vm536, %v472, 0
    %540 = vmatprep.subr.bf16.mxu0 0
    %541 = vmatpush1.bf16.msra.mxu0 0
    %542 = vmatprep.subr.bf16.mxu0 0
    %543 = vmatpush1.bf16.msra.mxu0 0
    %544 = vmatprep.subr.bf16.mxu0 0
    %545 = vmatpush1.bf16.msra.mxu0 0
    %546 = vmatprep.subr.bf16.mxu0 0
    %547 = vmatpush1.bf16.msra.mxu0 0
    %548 = vmatprep.subr.bf16.mxu0 0
    %549 = vmatpush1.bf16.msra.mxu0 0
    %550 = vmatprep.subr.bf16.mxu0 0
    %551 = vmatpush1.bf16.msra.mxu0 0
    %552 = vmatprep.subr.bf16.mxu0 0
    %553 = vmatpush1.bf16.msra.mxu0 0
    %554 = vmatprep.subr.bf16.mxu0 0
    %555 = vmatpush1.bf16.msra.mxu0 %v538
    %556 = vmatprep.subr.bf16.mxu0 0
    %557 = vmatpush2.bf16.msra.mxu0 0
    %558 = vmatprep.subr.bf16.mxu0 0
    %559 = vmatpush2.bf16.msra.mxu0 0
    %560 = vmatprep.subr.bf16.mxu0 0
    %561 = vmatpush2.bf16.msra.mxu0 0
    %562 = vmatprep.subr.bf16.mxu0 0
    %563 = vmatpush2.bf16.msra.mxu0 0
    %564 = vmatprep.subr.bf16.mxu0 0
    %565 = vmatpush2.bf16.msra.mxu0 0
    %566 = vmatprep.subr.bf16.mxu0 0
    %567 = vmatpush2.bf16.msra.mxu0 0
    %568 = vmatprep.subr.bf16.mxu0 0
    %569 = vmatpush2.bf16.msra.mxu0 0
    %570 = vmatprep.subr.bf16.mxu0 0
    %571 = vmatpush2.bf16.msra.mxu0 0
    %572 = vmatprep.mubr.bf16.mxu0 0
    %573 = vmatmul.mubr.bf16.gmra.mxu0 %v534
    %v574 = vpop.f32.mrf.mxu0
    %v575 = vadd.f32 0.0, %v574
    %v576 = vpop.f32.mrf.mxu0
    %v577 = vpop.f32.mrf.mxu0
    %v578 = vpop.f32.mrf.mxu0
    %579 = vdwg.mxu0
    %v580 = vpack.c.bf16 %v575, %v575
    %582 = vrot.lane.b32.xlu0 %v470, 96
    %v583 = vpop.permute.xlu0 %582
    %585 = vrot.lane.b32.xlu0 %v471, 96
    %v586 = vpop.permute.xlu0 %585
    %v588 = vsel %vm473, %v583, 0
    %v591 = vsel %vm473, %v586, 0
    %593 = vmatprep.subr.bf16.mxu0 0
    %594 = vmatpush1.bf16.xpose.msra.mxu0 0
    %595 = vmatprep.subr.bf16.mxu0 0
    %596 = vmatpush1.bf16.xpose.msra.mxu0 0
    %597 = vmatprep.subr.bf16.mxu0 0
    %598 = vmatpush1.bf16.xpose.msra.mxu0 0
    %599 = vmatprep.subr.bf16.mxu0 0
    %600 = vmatpush1.bf16.xpose.msra.mxu0 0
    %601 = vmatprep.subr.bf16.mxu0 0
    %602 = vmatpush1.bf16.xpose.msra.mxu0 0
    %603 = vmatprep.subr.bf16.mxu0 0
    %604 = vmatpush1.bf16.xpose.msra.mxu0 0
    %605 = vmatprep.subr.bf16.mxu0 0
    %606 = vmatpush1.bf16.xpose.msra.mxu0 0
    %607 = vmatprep.subr.bf16.mxu0 0
    %608 = vmatpush1.bf16.xpose.msra.mxu0 %v591
    %609 = vmatprep.subr.bf16.mxu0 0
    %610 = vmatpush2.bf16.xpose.msra.mxu0 0
    %611 = vmatprep.subr.bf16.mxu0 0
    %612 = vmatpush2.bf16.xpose.msra.mxu0 0
    %613 = vmatprep.subr.bf16.mxu0 0
    %614 = vmatpush2.bf16.xpose.msra.mxu0 0
    %615 = vmatprep.subr.bf16.mxu0 0
    %616 = vmatpush2.bf16.xpose.msra.mxu0 0
    %617 = vmatprep.subr.bf16.mxu0 0
    %618 = vmatpush2.bf16.xpose.msra.mxu0 0
    %619 = vmatprep.subr.bf16.mxu0 0
    %620 = vmatpush2.bf16.xpose.msra.mxu0 0
    %621 = vmatprep.subr.bf16.mxu0 0
    %622 = vmatpush2.bf16.xpose.msra.mxu0 0
    %623 = vmatprep.subr.bf16.mxu0 0
    %624 = vmatpush2.bf16.xpose.msra.mxu0 0
    %625 = vmatprep.mubr.bf16.mxu0 0
    %626 = vmatmul.mubr.bf16.gmra.mxu0 %v588
    %v627 = vpop.f32.mrf.mxu0
    %v628 = vadd.f32 0.0, %v627
    %v629 = vpop.f32.mrf.mxu0
    %v630 = vpop.f32.mrf.mxu0
    %v631 = vpop.f32.mrf.mxu0
    %632 = vdwg.mxu0
    %v633 = vsel %vm520, %v628, -inf
    %634 = vmax.xlane.f32.xlu0 %v633
    %v635 = vpop.xlane.xlu0 %634
    %v636 = vsub.f32 %v628, %v635
    %v637 = vmul.f32 %v636, 1.442695
    %v638 = vpow.pop %v637
    %v639 = vsel %vm520, %v638, 0.0
    %640 = vadd.xlane.f32.xlu0 %v639
    %v641 = vpop.xlane.xlu0 %640
    %v642 = vrcp.pop %v641
    %v643 = vmul.f32 %v638, %v642
    %v644 = vpack.c.bf16 %v643, %v643
    %646 = vrot.lane.b32.xlu0 %v472, 96
    %v647 = vpop.permute.xlu0 %646
    %v649 = vsel %vm520, %v644, 0
    %v652 = vsel %vm536, %v647, 0
    %654 = vmatprep.subr.bf16.mxu0 0
    %655 = vmatpush1.bf16.msra.mxu0 0
    %656 = vmatprep.subr.bf16.mxu0 0
    %657 = vmatpush1.bf16.msra.mxu0 0
    %658 = vmatprep.subr.bf16.mxu0 0
    %659 = vmatpush1.bf16.msra.mxu0 0
    %660 = vmatprep.subr.bf16.mxu0 0
    %661 = vmatpush1.bf16.msra.mxu0 0
    %662 = vmatprep.subr.bf16.mxu0 0
    %663 = vmatpush1.bf16.msra.mxu0 0
    %664 = vmatprep.subr.bf16.mxu0 0
    %665 = vmatpush1.bf16.msra.mxu0 0
    %666 = vmatprep.subr.bf16.mxu0 0
    %667 = vmatpush1.bf16.msra.mxu0 0
    %668 = vmatprep.subr.bf16.mxu0 0
    %669 = vmatpush1.bf16.msra.mxu0 %v652
    %670 = vmatprep.subr.bf16.mxu0 0
    %671 = vmatpush2.bf16.msra.mxu0 0
    %672 = vmatprep.subr.bf16.mxu0 0
    %673 = vmatpush2.bf16.msra.mxu0 0
    %674 = vmatprep.subr.bf16.mxu0 0
    %675 = vmatpush2.bf16.msra.mxu0 0
    %676 = vmatprep.subr.bf16.mxu0 0
    %677 = vmatpush2.bf16.msra.mxu0 0
    %678 = vmatprep.subr.bf16.mxu0 0
    %679 = vmatpush2.bf16.msra.mxu0 0
    %680 = vmatprep.subr.bf16.mxu0 0
    %681 = vmatpush2.bf16.msra.mxu0 0
    %682 = vmatprep.subr.bf16.mxu0 0
    %683 = vmatpush2.bf16.msra.mxu0 0
    %684 = vmatprep.subr.bf16.mxu0 0
    %685 = vmatpush2.bf16.msra.mxu0 0
    %686 = vmatprep.mubr.bf16.mxu0 0
    %687 = vmatmul.mubr.bf16.gmra.mxu0 %v649
    %v688 = vpop.f32.mrf.mxu0
    %v689 = vadd.f32 0.0, %v688
    %v690 = vpop.f32.mrf.mxu0
    %v691 = vpop.f32.mrf.mxu0
    %v692 = vpop.f32.mrf.mxu0
    %693 = vdwg.mxu0
    %v694 = vpack.c.bf16 %v689, %v689
    %v699 = vunpack.c.l.b16 %v228
    %v700 = vunpack.c.l.b16 %v229
    %v701 = vunpack.c.l.b16 %v230
    %v702 = vunpack.c.l.b16 %v231
    %v703 = vpack.c.b16 %v700, %v699
    %v704 = vpack.c.b16 %v702, %v701
    %v708 = vsel %vm473, %v694, 0
    %710 = vmatprep.subr.bf16.mxu0 0
    %711 = vmatpush1.bf16.msra.mxu0 0
    %712 = vmatprep.subr.bf16.mxu0 0
    %713 = vmatpush1.bf16.msra.mxu0 0
    %714 = vmatprep.subr.bf16.mxu0 0
    %715 = vmatpush1.bf16.msra.mxu0 0
    %716 = vmatprep.subr.bf16.mxu0 0
    %717 = vmatpush1.bf16.msra.mxu0 0
    %718 = vmatprep.subr.bf16.mxu0 0
    %719 = vmatpush1.bf16.msra.mxu0 0
    %720 = vmatprep.subr.bf16.mxu0 0
    %721 = vmatpush1.bf16.msra.mxu0 0
    %722 = vmatprep.subr.bf16.mxu0 0
    %723 = vmatpush1.bf16.msra.mxu0 %v704
    %724 = vmatprep.subr.bf16.mxu0 0
    %725 = vmatpush1.bf16.msra.mxu0 %v703
    %726 = vmatprep.subr.bf16.mxu0 0
    %727 = vmatpush2.bf16.msra.mxu0 0
    %728 = vmatprep.subr.bf16.mxu0 0
    %729 = vmatpush2.bf16.msra.mxu0 0
    %730 = vmatprep.subr.bf16.mxu0 0
    %731 = vmatpush2.bf16.msra.mxu0 0
    %732 = vmatprep.subr.bf16.mxu0 0
    %733 = vmatpush2.bf16.msra.mxu0 0
    %734 = vmatprep.subr.bf16.mxu0 0
    %735 = vmatpush2.bf16.msra.mxu0 0
    %736 = vmatprep.subr.bf16.mxu0 0
    %737 = vmatpush2.bf16.msra.mxu0 0
    %738 = vmatprep.subr.bf16.mxu0 0
    %739 = vmatpush2.bf16.msra.mxu0 0
    %740 = vmatprep.subr.bf16.mxu0 0
    %741 = vmatpush2.bf16.msra.mxu0 0
    %742 = vmatprep.mubr.bf16.mxu0 0
    %743 = vmatmul.mubr.bf16.gmra.mxu0 %v708
    %v744 = vpop.f32.mrf.mxu0
    %v745 = vadd.f32 0.0, %v744
    %v746 = vpop.f32.mrf.mxu0
    %v747 = vpop.f32.mrf.mxu0
    %v748 = vpop.f32.mrf.mxu0
    %749 = vdwg.mxu0
    %v754 = vunpack.c.l.b16 %v224
    %v755 = vunpack.c.l.b16 %v225
    %v756 = vunpack.c.l.b16 %v226
    %v757 = vunpack.c.l.b16 %v227
    %v758 = vpack.c.b16 %v755, %v754
    %v759 = vpack.c.b16 %v757, %v756
    %v763 = vsel %vm473, %v580, 0
    %765 = vmatprep.subr.bf16.mxu0 0
    %766 = vmatpush1.bf16.msra.mxu0 0
    %767 = vmatprep.subr.bf16.mxu0 0
    %768 = vmatpush1.bf16.msra.mxu0 0
    %769 = vmatprep.subr.bf16.mxu0 0
    %770 = vmatpush1.bf16.msra.mxu0 0
    %771 = vmatprep.subr.bf16.mxu0 0
    %772 = vmatpush1.bf16.msra.mxu0 0
    %773 = vmatprep.subr.bf16.mxu0 0
    %774 = vmatpush1.bf16.msra.mxu0 0
    %775 = vmatprep.subr.bf16.mxu0 0
    %776 = vmatpush1.bf16.msra.mxu0 0
    %777 = vmatprep.subr.bf16.mxu0 0
    %778 = vmatpush1.bf16.msra.mxu0 %v759
    %779 = vmatprep.subr.bf16.mxu0 0
    %780 = vmatpush1.bf16.msra.mxu0 %v758
    %781 = vmatprep.subr.bf16.mxu0 0
    %782 = vmatpush2.bf16.msra.mxu0 0
    %783 = vmatprep.subr.bf16.mxu0 0
    %784 = vmatpush2.bf16.msra.mxu0 0
    %785 = vmatprep.subr.bf16.mxu0 0
    %786 = vmatpush2.bf16.msra.mxu0 0
    %787 = vmatprep.subr.bf16.mxu0 0
    %788 = vmatpush2.bf16.msra.mxu0 0
    %789 = vmatprep.subr.bf16.mxu0 0
    %790 = vmatpush2.bf16.msra.mxu0 0
    %791 = vmatprep.subr.bf16.mxu0 0
    %792 = vmatpush2.bf16.msra.mxu0 0
    %793 = vmatprep.subr.bf16.mxu0 0
    %794 = vmatpush2.bf16.msra.mxu0 0
    %795 = vmatprep.subr.bf16.mxu0 0
    %796 = vmatpush2.bf16.msra.mxu0 0
    %797 = vmatprep.mubr.bf16.mxu0 0
    %798 = vmatmul.mubr.bf16.gmra.mxu0 %v763
    %v799 = vpop.f32.mrf.mxu0
    %v800 = vadd.f32 %v745, %v799
    %v801 = vpop.f32.mrf.mxu0
    %v802 = vpop.f32.mrf.mxu0
    %v803 = vpop.f32.mrf.mxu0
    %804 = vdwg.mxu0
    %805 = vrot.lane.b32.xlu0 %v470, 64
    %v806 = vpop.permute.xlu0 %805
    %807 = vrot.lane.b32.xlu0 %v471, 64
    %v808 = vpop.permute.xlu0 %807
    %v810 = vsel %vm473, %v806, 0
    %v813 = vsel %vm473, %v808, 0
    %815 = vmatprep.subr.bf16.mxu0 0
    %816 = vmatpush1.bf16.xpose.msra.mxu0 0
    %817 = vmatprep.subr.bf16.mxu0 0
    %818 = vmatpush1.bf16.xpose.msra.mxu0 0
    %819 = vmatprep.subr.bf16.mxu0 0
    %820 = vmatpush1.bf16.xpose.msra.mxu0 0
    %821 = vmatprep.subr.bf16.mxu0 0
    %822 = vmatpush1.bf16.xpose.msra.mxu0 0
    %823 = vmatprep.subr.bf16.mxu0 0
    %824 = vmatpush1.bf16.xpose.msra.mxu0 0
    %825 = vmatprep.subr.bf16.mxu0 0
    %826 = vmatpush1.bf16.xpose.msra.mxu0 0
    %827 = vmatprep.subr.bf16.mxu0 0
    %828 = vmatpush1.bf16.xpose.msra.mxu0 0
    %829 = vmatprep.subr.bf16.mxu0 0
    %830 = vmatpush1.bf16.xpose.msra.mxu0 %v813
    %831 = vmatprep.subr.bf16.mxu0 0
    %832 = vmatpush2.bf16.xpose.msra.mxu0 0
    %833 = vmatprep.subr.bf16.mxu0 0
    %834 = vmatpush2.bf16.xpose.msra.mxu0 0
    %835 = vmatprep.subr.bf16.mxu0 0
    %836 = vmatpush2.bf16.xpose.msra.mxu0 0
    %837 = vmatprep.subr.bf16.mxu0 0
    %838 = vmatpush2.bf16.xpose.msra.mxu0 0
    %839 = vmatprep.subr.bf16.mxu0 0
    %840 = vmatpush2.bf16.xpose.msra.mxu0 0
    %841 = vmatprep.subr.bf16.mxu0 0
    %842 = vmatpush2.bf16.xpose.msra.mxu0 0
    %843 = vmatprep.subr.bf16.mxu0 0
    %844 = vmatpush2.bf16.xpose.msra.mxu0 0
    %845 = vmatprep.subr.bf16.mxu0 0
    %846 = vmatpush2.bf16.xpose.msra.mxu0 0
    %847 = vmatprep.mubr.bf16.mxu0 0
    %848 = vmatmul.mubr.bf16.gmra.mxu0 %v810
    %v849 = vpop.f32.mrf.mxu0
    %v850 = vadd.f32 0.0, %v849
    %v851 = vpop.f32.mrf.mxu0
    %v852 = vpop.f32.mrf.mxu0
    %v853 = vpop.f32.mrf.mxu0
    %854 = vdwg.mxu0
    %v855 = vsel %vm520, %v850, -inf
    %856 = vmax.xlane.f32.xlu0 %v855
    %v857 = vpop.xlane.xlu0 %856
    %v858 = vsub.f32 %v850, %v857
    %v859 = vmul.f32 %v858, 1.442695
    %v860 = vpow.pop %v859
    %v861 = vsel %vm520, %v860, 0.0
    %862 = vadd.xlane.f32.xlu0 %v861
    %v863 = vpop.xlane.xlu0 %862
    %v864 = vrcp.pop %v863
    %v865 = vmul.f32 %v860, %v864
    %v866 = vpack.c.bf16 %v865, %v865
    %867 = vrot.lane.b32.xlu0 %v472, 64
    %v868 = vpop.permute.xlu0 %867
    %v870 = vsel %vm520, %v866, 0
    %v873 = vsel %vm536, %v868, 0
    %875 = vmatprep.subr.bf16.mxu0 0
    %876 = vmatpush1.bf16.msra.mxu0 0
    %877 = vmatprep.subr.bf16.mxu0 0
    %878 = vmatpush1.bf16.msra.mxu0 0
    %879 = vmatprep.subr.bf16.mxu0 0
    %880 = vmatpush1.bf16.msra.mxu0 0
    %881 = vmatprep.subr.bf16.mxu0 0
    %882 = vmatpush1.bf16.msra.mxu0 0
    %883 = vmatprep.subr.bf16.mxu0 0
    %884 = vmatpush1.bf16.msra.mxu0 0
    %885 = vmatprep.subr.bf16.mxu0 0
    %886 = vmatpush1.bf16.msra.mxu0 0
    %887 = vmatprep.subr.bf16.mxu0 0
    %888 = vmatpush1.bf16.msra.mxu0 0
    %889 = vmatprep.subr.bf16.mxu0 0
    %890 = vmatpush1.bf16.msra.mxu0 %v873
    %891 = vmatprep.subr.bf16.mxu0 0
    %892 = vmatpush2.bf16.msra.mxu0 0
    %893 = vmatprep.subr.bf16.mxu0 0
    %894 = vmatpush2.bf16.msra.mxu0 0
    %895 = vmatprep.subr.bf16.mxu0 0
    %896 = vmatpush2.bf16.msra.mxu0 0
    %897 = vmatprep.subr.bf16.mxu0 0
    %898 = vmatpush2.bf16.msra.mxu0 0
    %899 = vmatprep.subr.bf16.mxu0 0
    %900 = vmatpush2.bf16.msra.mxu0 0
    %901 = vmatprep.subr.bf16.mxu0 0
    %902 = vmatpush2.bf16.msra.mxu0 0
    %903 = vmatprep.subr.bf16.mxu0 0
    %904 = vmatpush2.bf16.msra.mxu0 0
    %905 = vmatprep.subr.bf16.mxu0 0
    %906 = vmatpush2.bf16.msra.mxu0 0
    %907 = vmatprep.mubr.bf16.mxu0 0
    %908 = vmatmul.mubr.bf16.gmra.mxu0 %v870
    %v909 = vpop.f32.mrf.mxu0
    %v910 = vadd.f32 0.0, %v909
    %v911 = vpop.f32.mrf.mxu0
    %v912 = vpop.f32.mrf.mxu0
    %v913 = vpop.f32.mrf.mxu0
    %914 = vdwg.mxu0
    %v915 = vpack.c.bf16 %v910, %v910
    %v920 = vunpack.c.l.b16 %v232
    %v921 = vunpack.c.l.b16 %v233
    %v922 = vunpack.c.l.b16 %v234
    %v923 = vunpack.c.l.b16 %v235
    %v924 = vpack.c.b16 %v921, %v920
    %v925 = vpack.c.b16 %v923, %v922
    %v929 = vsel %vm473, %v915, 0
    %931 = vmatprep.subr.bf16.mxu0 0
    %932 = vmatpush1.bf16.msra.mxu0 0
    %933 = vmatprep.subr.bf16.mxu0 0
    %934 = vmatpush1.bf16.msra.mxu0 0
    %935 = vmatprep.subr.bf16.mxu0 0
    %936 = vmatpush1.bf16.msra.mxu0 0
    %937 = vmatprep.subr.bf16.mxu0 0
    %938 = vmatpush1.bf16.msra.mxu0 0
    %939 = vmatprep.subr.bf16.mxu0 0
    %940 = vmatpush1.bf16.msra.mxu0 0
    %941 = vmatprep.subr.bf16.mxu0 0
    %942 = vmatpush1.bf16.msra.mxu0 0
    %943 = vmatprep.subr.bf16.mxu0 0
    %944 = vmatpush1.bf16.msra.mxu0 %v925
    %945 = vmatprep.subr.bf16.mxu0 0
    %946 = vmatpush1.bf16.msra.mxu0 %v924
    %947 = vmatprep.subr.bf16.mxu0 0
    %948 = vmatpush2.bf16.msra.mxu0 0
    %949 = vmatprep.subr.bf16.mxu0 0
    %950 = vmatpush2.bf16.msra.mxu0 0
    %951 = vmatprep.subr.bf16.mxu0 0
    %952 = vmatpush2.bf16.msra.mxu0 0
    %953 = vmatprep.subr.bf16.mxu0 0
    %954 = vmatpush2.bf16.msra.mxu0 0
    %955 = vmatprep.subr.bf16.mxu0 0
    %956 = vmatpush2.bf16.msra.mxu0 0
    %957 = vmatprep.subr.bf16.mxu0 0
    %958 = vmatpush2.bf16.msra.mxu0 0
    %959 = vmatprep.subr.bf16.mxu0 0
    %960 = vmatpush2.bf16.msra.mxu0 0
    %961 = vmatprep.subr.bf16.mxu0 0
    %962 = vmatpush2.bf16.msra.mxu0 0
    %963 = vmatprep.mubr.bf16.mxu0 0
    %964 = vmatmul.mubr.bf16.gmra.mxu0 %v929
    %v965 = vpop.f32.mrf.mxu0
    %v966 = vadd.f32 0.0, %v965
    %v967 = vpop.f32.mrf.mxu0
    %v968 = vpop.f32.mrf.mxu0
    %v969 = vpop.f32.mrf.mxu0
    %970 = vdwg.mxu0
    %v971 = vadd.f32 %v800, %v966
    %972 = vrot.lane.b32.xlu0 %v470, 32
    %v973 = vpop.permute.xlu0 %972
    %974 = vrot.lane.b32.xlu0 %v471, 32
    %v975 = vpop.permute.xlu0 %974
    %v977 = vsel %vm473, %v973, 0
    %v980 = vsel %vm473, %v975, 0
    %982 = vmatprep.subr.bf16.mxu0 0
    %983 = vmatpush1.bf16.xpose.msra.mxu0 0
    %984 = vmatprep.subr.bf16.mxu0 0
    %985 = vmatpush1.bf16.xpose.msra.mxu0 0
    %986 = vmatprep.subr.bf16.mxu0 0
    %987 = vmatpush1.bf16.xpose.msra.mxu0 0
    %988 = vmatprep.subr.bf16.mxu0 0
    %989 = vmatpush1.bf16.xpose.msra.mxu0 0
    %990 = vmatprep.subr.bf16.mxu0 0
    %991 = vmatpush1.bf16.xpose.msra.mxu0 0
    %992 = vmatprep.subr.bf16.mxu0 0
    %993 = vmatpush1.bf16.xpose.msra.mxu0 0
    %994 = vmatprep.subr.bf16.mxu0 0
    %995 = vmatpush1.bf16.xpose.msra.mxu0 0
    %996 = vmatprep.subr.bf16.mxu0 0
    %997 = vmatpush1.bf16.xpose.msra.mxu0 %v980
    %998 = vmatprep.subr.bf16.mxu0 0
    %999 = vmatpush2.bf16.xpose.msra.mxu0 0
    %1000 = vmatprep.subr.bf16.mxu0 0
    %1001 = vmatpush2.bf16.xpose.msra.mxu0 0
    %1002 = vmatprep.subr.bf16.mxu0 0
    %1003 = vmatpush2.bf16.xpose.msra.mxu0 0
    %1004 = vmatprep.subr.bf16.mxu0 0
    %1005 = vmatpush2.bf16.xpose.msra.mxu0 0
    %1006 = vmatprep.subr.bf16.mxu0 0
    %1007 = vmatpush2.bf16.xpose.msra.mxu0 0
    %1008 = vmatprep.subr.bf16.mxu0 0
    %1009 = vmatpush2.bf16.xpose.msra.mxu0 0
    %1010 = vmatprep.subr.bf16.mxu0 0
    %1011 = vmatpush2.bf16.xpose.msra.mxu0 0
    %1012 = vmatprep.subr.bf16.mxu0 0
    %1013 = vmatpush2.bf16.xpose.msra.mxu0 0
    %1014 = vmatprep.mubr.bf16.mxu0 0
    %1015 = vmatmul.mubr.bf16.gmra.mxu0 %v977
    %v1016 = vpop.f32.mrf.mxu0
    %v1017 = vadd.f32 0.0, %v1016
    %v1018 = vpop.f32.mrf.mxu0
    %v1019 = vpop.f32.mrf.mxu0
    %v1020 = vpop.f32.mrf.mxu0
    %1021 = vdwg.mxu0
    %v1022 = vsel %vm520, %v1017, -inf
    %1023 = vmax.xlane.f32.xlu0 %v1022
    %v1024 = vpop.xlane.xlu0 %1023
    %v1025 = vsub.f32 %v1017, %v1024
    %v1026 = vmul.f32 %v1025, 1.442695
    %v1027 = vpow.pop %v1026
    %v1028 = vsel %vm520, %v1027, 0.0
    %1029 = vadd.xlane.f32.xlu0 %v1028
    %v1030 = vpop.xlane.xlu0 %1029
    %v1031 = vrcp.pop %v1030
    %v1032 = vmul.f32 %v1027, %v1031
    %v1033 = vpack.c.bf16 %v1032, %v1032
    %1034 = vrot.lane.b32.xlu0 %v472, 32
    %v1035 = vpop.permute.xlu0 %1034
    %v1037 = vsel %vm520, %v1033, 0
    %v1040 = vsel %vm536, %v1035, 0
    %1042 = vmatprep.subr.bf16.mxu0 0
    %1043 = vmatpush1.bf16.msra.mxu0 0
    %1044 = vmatprep.subr.bf16.mxu0 0
    %1045 = vmatpush1.bf16.msra.mxu0 0
    %1046 = vmatprep.subr.bf16.mxu0 0
    %1047 = vmatpush1.bf16.msra.mxu0 0
    %1048 = vmatprep.subr.bf16.mxu0 0
    %1049 = vmatpush1.bf16.msra.mxu0 0
    %1050 = vmatprep.subr.bf16.mxu0 0
    %1051 = vmatpush1.bf16.msra.mxu0 0
    %1052 = vmatprep.subr.bf16.mxu0 0
    %1053 = vmatpush1.bf16.msra.mxu0 0
    %1054 = vmatprep.subr.bf16.mxu0 0
    %1055 = vmatpush1.bf16.msra.mxu0 0
    %1056 = vmatprep.subr.bf16.mxu0 0
    %1057 = vmatpush1.bf16.msra.mxu0 %v1040
    %1058 = vmatprep.subr.bf16.mxu0 0
    %1059 = vmatpush2.bf16.msra.mxu0 0
    %1060 = vmatprep.subr.bf16.mxu0 0
    %1061 = vmatpush2.bf16.msra.mxu0 0
    %1062 = vmatprep.subr.bf16.mxu0 0
    %1063 = vmatpush2.bf16.msra.mxu0 0
    %1064 = vmatprep.subr.bf16.mxu0 0
    %1065 = vmatpush2.bf16.msra.mxu0 0
    %1066 = vmatprep.subr.bf16.mxu0 0
    %1067 = vmatpush2.bf16.msra.mxu0 0
    %1068 = vmatprep.subr.bf16.mxu0 0
    %1069 = vmatpush2.bf16.msra.mxu0 0
    %1070 = vmatprep.subr.bf16.mxu0 0
    %1071 = vmatpush2.bf16.msra.mxu0 0
    %1072 = vmatprep.subr.bf16.mxu0 0
    %1073 = vmatpush2.bf16.msra.mxu0 0
    %1074 = vmatprep.mubr.bf16.mxu0 0
    %1075 = vmatmul.mubr.bf16.gmra.mxu0 %v1037
    %v1076 = vpop.f32.mrf.mxu0
    %v1077 = vadd.f32 0.0, %v1076
    %v1078 = vpop.f32.mrf.mxu0
    %v1079 = vpop.f32.mrf.mxu0
    %v1080 = vpop.f32.mrf.mxu0
    %1081 = vdwg.mxu0
    %v1082 = vpack.c.bf16 %v1077, %v1077
    %v1087 = vunpack.c.l.b16 %v236
    %v1088 = vunpack.c.l.b16 %v237
    %v1089 = vunpack.c.l.b16 %v238
    %v1090 = vunpack.c.l.b16 %v239
    %v1091 = vpack.c.b16 %v1088, %v1087
    %v1092 = vpack.c.b16 %v1090, %v1089
    %v1096 = vsel %vm473, %v1082, 0
    %1098 = vmatprep.subr.bf16.mxu0 0
    %1099 = vmatpush1.bf16.msra.mxu0 0
    %1100 = vmatprep.subr.bf16.mxu0 0
    %1101 = vmatpush1.bf16.msra.mxu0 0
    %1102 = vmatprep.subr.bf16.mxu0 0
    %1103 = vmatpush1.bf16.msra.mxu0 0
    %1104 = vmatprep.subr.bf16.mxu0 0
    %1105 = vmatpush1.bf16.msra.mxu0 0
    %1106 = vmatprep.subr.bf16.mxu0 0
    %1107 = vmatpush1.bf16.msra.mxu0 0
    %1108 = vmatprep.subr.bf16.mxu0 0
    %1109 = vmatpush1.bf16.msra.mxu0 0
    %1110 = vmatprep.subr.bf16.mxu0 0
    %1111 = vmatpush1.bf16.msra.mxu0 %v1092
    %1112 = vmatprep.subr.bf16.mxu0 0
    %1113 = vmatpush1.bf16.msra.mxu0 %v1091
    %1114 = vmatprep.subr.bf16.mxu0 0
    %1115 = vmatpush2.bf16.msra.mxu0 0
    %1116 = vmatprep.subr.bf16.mxu0 0
    %1117 = vmatpush2.bf16.msra.mxu0 0
    %1118 = vmatprep.subr.bf16.mxu0 0
    %1119 = vmatpush2.bf16.msra.mxu0 0
    %1120 = vmatprep.subr.bf16.mxu0 0
    %1121 = vmatpush2.bf16.msra.mxu0 0
    %1122 = vmatprep.subr.bf16.mxu0 0
    %1123 = vmatpush2.bf16.msra.mxu0 0
    %1124 = vmatprep.subr.bf16.mxu0 0
    %1125 = vmatpush2.bf16.msra.mxu0 0
    %1126 = vmatprep.subr.bf16.mxu0 0
    %1127 = vmatpush2.bf16.msra.mxu0 0
    %1128 = vmatprep.subr.bf16.mxu0 0
    %1129 = vmatpush2.bf16.msra.mxu0 0
    %1130 = vmatprep.mubr.bf16.mxu0 0
    %1131 = vmatmul.mubr.bf16.gmra.mxu0 %v1096
    %v1132 = vpop.f32.mrf.mxu0
    %v1133 = vadd.f32 0.0, %v1132
    %v1134 = vpop.f32.mrf.mxu0
    %v1135 = vpop.f32.mrf.mxu0
    %v1136 = vpop.f32.mrf.mxu0
    %1137 = vdwg.mxu0
    %v1138 = vadd.f32 %v971, %v1133
    %v1139 = vpack.c.bf16 %v425, %v425
    %v1140 = vpack.c.bf16 %v427, %v427
    %v1141 = vpack.c.bf16 %v467, %v467
    %v1143 = vsel %vm473, %v1139, 0
    %v1146 = vsel %vm473, %v1140, 0
    %1148 = vmatprep.subr.bf16.mxu0 0
    %1149 = vmatpush1.bf16.xpose.msra.mxu0 0
    %1150 = vmatprep.subr.bf16.mxu0 0
    %1151 = vmatpush1.bf16.xpose.msra.mxu0 0
    %1152 = vmatprep.subr.bf16.mxu0 0
    %1153 = vmatpush1.bf16.xpose.msra.mxu0 0
    %1154 = vmatprep.subr.bf16.mxu0 0
    %1155 = vmatpush1.bf16.xpose.msra.mxu0 0
    %1156 = vmatprep.subr.bf16.mxu0 0
    %1157 = vmatpush1.bf16.xpose.msra.mxu0 0
    %1158 = vmatprep.subr.bf16.mxu0 0
    %1159 = vmatpush1.bf16.xpose.msra.mxu0 0
    %1160 = vmatprep.subr.bf16.mxu0 0
    %1161 = vmatpush1.bf16.xpose.msra.mxu0 0
    %1162 = vmatprep.subr.bf16.mxu0 0
    %1163 = vmatpush1.bf16.xpose.msra.mxu0 %v1146
    %1164 = vmatprep.subr.bf16.mxu0 0
    %1165 = vmatpush2.bf16.xpose.msra.mxu0 0
    %1166 = vmatprep.subr.bf16.mxu0 0
    %1167 = vmatpush2.bf16.xpose.msra.mxu0 0
    %1168 = vmatprep.subr.bf16.mxu0 0
    %1169 = vmatpush2.bf16.xpose.msra.mxu0 0
    %1170 = vmatprep.subr.bf16.mxu0 0
    %1171 = vmatpush2.bf16.xpose.msra.mxu0 0
    %1172 = vmatprep.subr.bf16.mxu0 0
    %1173 = vmatpush2.bf16.xpose.msra.mxu0 0
    %1174 = vmatprep.subr.bf16.mxu0 0
    %1175 = vmatpush2.bf16.xpose.msra.mxu0 0
    %1176 = vmatprep.subr.bf16.mxu0 0
    %1177 = vmatpush2.bf16.xpose.msra.mxu0 0
    %1178 = vmatprep.subr.bf16.mxu0 0
    %1179 = vmatpush2.bf16.xpose.msra.mxu0 0
    %1180 = vmatprep.mubr.bf16.mxu0 0
    %1181 = vmatmul.mubr.bf16.gmra.mxu0 %v1143
    %v1182 = vpop.f32.mrf.mxu0
    %v1183 = vadd.f32 0.0, %v1182
    %v1184 = vpop.f32.mrf.mxu0
    %v1185 = vpop.f32.mrf.mxu0
    %v1186 = vpop.f32.mrf.mxu0
    %1187 = vdwg.mxu0
    %v1188 = vsel %vm520, %v1183, -inf
    %1189 = vmax.xlane.f32.xlu0 %v1188
    %v1190 = vpop.xlane.xlu0 %1189
    %v1191 = vsub.f32 %v1183, %v1190
    %v1192 = vmul.f32 %v1191, 1.442695
    %v1193 = vpow.pop %v1192
    %v1194 = vsel %vm520, %v1193, 0.0
    %1195 = vadd.xlane.f32.xlu0 %v1194
    %v1196 = vpop.xlane.xlu0 %1195
    %v1197 = vrcp.pop %v1196
    %v1198 = vmul.f32 %v1193, %v1197
    %v1199 = vpack.c.bf16 %v1198, %v1198
    %v1201 = vsel %vm520, %v1199, 0
    %v1204 = vsel %vm536, %v1141, 0
    %1206 = vmatprep.subr.bf16.mxu0 0
    %1207 = vmatpush1.bf16.msra.mxu0 0
    %1208 = vmatprep.subr.bf16.mxu0 0
    %1209 = vmatpush1.bf16.msra.mxu0 0
    %1210 = vmatprep.subr.bf16.mxu0 0
    %1211 = vmatpush1.bf16.msra.mxu0 0
    %1212 = vmatprep.subr.bf16.mxu0 0
    %1213 = vmatpush1.bf16.msra.mxu0 0
    %1214 = vmatprep.subr.bf16.mxu0 0
    %1215 = vmatpush1.bf16.msra.mxu0 0
    %1216 = vmatprep.subr.bf16.mxu0 0
    %1217 = vmatpush1.bf16.msra.mxu0 0
    %1218 = vmatprep.subr.bf16.mxu0 0
    %1219 = vmatpush1.bf16.msra.mxu0 0
    %1220 = vmatprep.subr.bf16.mxu0 0
    %1221 = vmatpush1.bf16.msra.mxu0 %v1204
    %1222 = vmatprep.subr.bf16.mxu0 0
    %1223 = vmatpush2.bf16.msra.mxu0 0
    %1224 = vmatprep.subr.bf16.mxu0 0
    %1225 = vmatpush2.bf16.msra.mxu0 0
    %1226 = vmatprep.subr.bf16.mxu0 0
    %1227 = vmatpush2.bf16.msra.mxu0 0
    %1228 = vmatprep.subr.bf16.mxu0 0
    %1229 = vmatpush2.bf16.msra.mxu0 0
    %1230 = vmatprep.subr.bf16.mxu0 0
    %1231 = vmatpush2.bf16.msra.mxu0 0
    %1232 = vmatprep.subr.bf16.mxu0 0
    %1233 = vmatpush2.bf16.msra.mxu0 0
    %1234 = vmatprep.subr.bf16.mxu0 0
    %1235 = vmatpush2.bf16.msra.mxu0 0
    %1236 = vmatprep.subr.bf16.mxu0 0
    %1237 = vmatpush2.bf16.msra.mxu0 0
    %1238 = vmatprep.mubr.bf16.mxu0 0
    %1239 = vmatmul.mubr.bf16.gmra.mxu0 %v1201
    %v1240 = vpop.f32.mrf.mxu0
    %v1241 = vadd.f32 0.0, %v1240
    %v1242 = vpop.f32.mrf.mxu0
    %v1243 = vpop.f32.mrf.mxu0
    %v1244 = vpop.f32.mrf.mxu0
    %1245 = vdwg.mxu0
    %v1246 = vpack.c.bf16 %v1241, %v1241
    %1248 = vrot.lane.b32.xlu0 %v1139, 96
    %v1249 = vpop.permute.xlu0 %1248
    %1251 = vrot.lane.b32.xlu0 %v1140, 96
    %v1252 = vpop.permute.xlu0 %1251
    %v1254 = vsel %vm473, %v1249, 0
    %v1257 = vsel %vm473, %v1252, 0
    %1259 = vmatprep.subr.bf16.mxu0 0
    %1260 = vmatpush1.bf16.xpose.msra.mxu0 0
    %1261 = vmatprep.subr.bf16.mxu0 0
    %1262 = vmatpush1.bf16.xpose.msra.mxu0 0
    %1263 = vmatprep.subr.bf16.mxu0 0
    %1264 = vmatpush1.bf16.xpose.msra.mxu0 0
    %1265 = vmatprep.subr.bf16.mxu0 0
    %1266 = vmatpush1.bf16.xpose.msra.mxu0 0
    %1267 = vmatprep.subr.bf16.mxu0 0
    %1268 = vmatpush1.bf16.xpose.msra.mxu0 0
    %1269 = vmatprep.subr.bf16.mxu0 0
    %1270 = vmatpush1.bf16.xpose.msra.mxu0 0
    %1271 = vmatprep.subr.bf16.mxu0 0
    %1272 = vmatpush1.bf16.xpose.msra.mxu0 0
    %1273 = vmatprep.subr.bf16.mxu0 0
    %1274 = vmatpush1.bf16.xpose.msra.mxu0 %v1257
    %1275 = vmatprep.subr.bf16.mxu0 0
    %1276 = vmatpush2.bf16.xpose.msra.mxu0 0
    %1277 = vmatprep.subr.bf16.mxu0 0
    %1278 = vmatpush2.bf16.xpose.msra.mxu0 0
    %1279 = vmatprep.subr.bf16.mxu0 0
    %1280 = vmatpush2.bf16.xpose.msra.mxu0 0
    %1281 = vmatprep.subr.bf16.mxu0 0
    %1282 = vmatpush2.bf16.xpose.msra.mxu0 0
    %1283 = vmatprep.subr.bf16.mxu0 0
    %1284 = vmatpush2.bf16.xpose.msra.mxu0 0
    %1285 = vmatprep.subr.bf16.mxu0 0
    %1286 = vmatpush2.bf16.xpose.msra.mxu0 0
    %1287 = vmatprep.subr.bf16.mxu0 0
    %1288 = vmatpush2.bf16.xpose.msra.mxu0 0
    %1289 = vmatprep.subr.bf16.mxu0 0
    %1290 = vmatpush2.bf16.xpose.msra.mxu0 0
    %1291 = vmatprep.mubr.bf16.mxu0 0
    %1292 = vmatmul.mubr.bf16.gmra.mxu0 %v1254
    %v1293 = vpop.f32.mrf.mxu0
    %v1294 = vadd.f32 0.0, %v1293
    %v1295 = vpop.f32.mrf.mxu0
    %v1296 = vpop.f32.mrf.mxu0
    %v1297 = vpop.f32.mrf.mxu0
    %1298 = vdwg.mxu0
    %v1299 = vsel %vm520, %v1294, -inf
    %1300 = vmax.xlane.f32.xlu0 %v1299
    %v1301 = vpop.xlane.xlu0 %1300
    %v1302 = vsub.f32 %v1294, %v1301
    %v1303 = vmul.f32 %v1302, 1.442695
    %v1304 = vpow.pop %v1303
    %v1305 = vsel %vm520, %v1304, 0.0
    %1306 = vadd.xlane.f32.xlu0 %v1305
    %v1307 = vpop.xlane.xlu0 %1306
    %v1308 = vrcp.pop %v1307
    %v1309 = vmul.f32 %v1304, %v1308
    %v1310 = vpack.c.bf16 %v1309, %v1309
    %1312 = vrot.lane.b32.xlu0 %v1141, 96
    %v1313 = vpop.permute.xlu0 %1312
    %v1315 = vsel %vm520, %v1310, 0
    %v1318 = vsel %vm536, %v1313, 0
    %1320 = vmatprep.subr.bf16.mxu0 0
    %1321 = vmatpush1.bf16.msra.mxu0 0
    %1322 = vmatprep.subr.bf16.mxu0 0
    %1323 = vmatpush1.bf16.msra.mxu0 0
    %1324 = vmatprep.subr.bf16.mxu0 0
    %1325 = vmatpush1.bf16.msra.mxu0 0
    %1326 = vmatprep.subr.bf16.mxu0 0
    %1327 = vmatpush1.bf16.msra.mxu0 0
    %1328 = vmatprep.subr.bf16.mxu0 0
    %1329 = vmatpush1.bf16.msra.mxu0 0
    %1330 = vmatprep.subr.bf16.mxu0 0
    %1331 = vmatpush1.bf16.msra.mxu0 0
    %1332 = vmatprep.subr.bf16.mxu0 0
    %1333 = vmatpush1.bf16.msra.mxu0 0
    %1334 = vmatprep.subr.bf16.mxu0 0
    %1335 = vmatpush1.bf16.msra.mxu0 %v1318
    %1336 = vmatprep.subr.bf16.mxu0 0
    %1337 = vmatpush2.bf16.msra.mxu0 0
    %1338 = vmatprep.subr.bf16.mxu0 0
    %1339 = vmatpush2.bf16.msra.mxu0 0
    %1340 = vmatprep.subr.bf16.mxu0 0
    %1341 = vmatpush2.bf16.msra.mxu0 0
    %1342 = vmatprep.subr.bf16.mxu0 0
    %1343 = vmatpush2.bf16.msra.mxu0 0
    %1344 = vmatprep.subr.bf16.mxu0 0
    %1345 = vmatpush2.bf16.msra.mxu0 0
    %1346 = vmatprep.subr.bf16.mxu0 0
    %1347 = vmatpush2.bf16.msra.mxu0 0
    %1348 = vmatprep.subr.bf16.mxu0 0
    %1349 = vmatpush2.bf16.msra.mxu0 0
    %1350 = vmatprep.subr.bf16.mxu0 0
    %1351 = vmatpush2.bf16.msra.mxu0 0
    %1352 = vmatprep.mubr.bf16.mxu0 0
    %1353 = vmatmul.mubr.bf16.gmra.mxu0 %v1315
    %v1354 = vpop.f32.mrf.mxu0
    %v1355 = vadd.f32 0.0, %v1354
    %v1356 = vpop.f32.mrf.mxu0
    %v1357 = vpop.f32.mrf.mxu0
    %v1358 = vpop.f32.mrf.mxu0
    %1359 = vdwg.mxu0
    %v1360 = vpack.c.bf16 %v1355, %v1355
    %v1362 = vsel %vm473, %v1360, 0
    %1364 = vmatprep.subr.bf16.mxu0 0
    %1365 = vmatpush1.bf16.msra.mxu0 0
    %1366 = vmatprep.subr.bf16.mxu0 0
    %1367 = vmatpush1.bf16.msra.mxu0 0
    %1368 = vmatprep.subr.bf16.mxu0 0
    %1369 = vmatpush1.bf16.msra.mxu0 0
    %1370 = vmatprep.subr.bf16.mxu0 0
    %1371 = vmatpush1.bf16.msra.mxu0 0
    %1372 = vmatprep.subr.bf16.mxu0 0
    %1373 = vmatpush1.bf16.msra.mxu0 0
    %1374 = vmatprep.subr.bf16.mxu0 0
    %1375 = vmatpush1.bf16.msra.mxu0 0
    %1376 = vmatprep.subr.bf16.mxu0 0
    %1377 = vmatpush1.bf16.msra.mxu0 %v704
    %1378 = vmatprep.subr.bf16.mxu0 0
    %1379 = vmatpush1.bf16.msra.mxu0 %v703
    %1380 = vmatprep.subr.bf16.mxu0 0
    %1381 = vmatpush2.bf16.msra.mxu0 0
    %1382 = vmatprep.subr.bf16.mxu0 0
    %1383 = vmatpush2.bf16.msra.mxu0 0
    %1384 = vmatprep.subr.bf16.mxu0 0
    %1385 = vmatpush2.bf16.msra.mxu0 0
    %1386 = vmatprep.subr.bf16.mxu0 0
    %1387 = vmatpush2.bf16.msra.mxu0 0
    %1388 = vmatprep.subr.bf16.mxu0 0
    %1389 = vmatpush2.bf16.msra.mxu0 0
    %1390 = vmatprep.subr.bf16.mxu0 0
    %1391 = vmatpush2.bf16.msra.mxu0 0
    %1392 = vmatprep.subr.bf16.mxu0 0
    %1393 = vmatpush2.bf16.msra.mxu0 0
    %1394 = vmatprep.subr.bf16.mxu0 0
    %1395 = vmatpush2.bf16.msra.mxu0 0
    %1396 = vmatprep.mubr.bf16.mxu0 0
    %1397 = vmatmul.mubr.bf16.gmra.mxu0 %v1362
    %v1398 = vpop.f32.mrf.mxu0
    %v1399 = vadd.f32 0.0, %v1398
    %v1400 = vpop.f32.mrf.mxu0
    %v1401 = vpop.f32.mrf.mxu0
    %v1402 = vpop.f32.mrf.mxu0
    %1403 = vdwg.mxu0
    %v1405 = vsel %vm473, %v1246, 0
    %1407 = vmatprep.subr.bf16.mxu0 0
    %1408 = vmatpush1.bf16.msra.mxu0 0
    %1409 = vmatprep.subr.bf16.mxu0 0
    %1410 = vmatpush1.bf16.msra.mxu0 0
    %1411 = vmatprep.subr.bf16.mxu0 0
    %1412 = vmatpush1.bf16.msra.mxu0 0
    %1413 = vmatprep.subr.bf16.mxu0 0
    %1414 = vmatpush1.bf16.msra.mxu0 0
    %1415 = vmatprep.subr.bf16.mxu0 0
    %1416 = vmatpush1.bf16.msra.mxu0 0
    %1417 = vmatprep.subr.bf16.mxu0 0
    %1418 = vmatpush1.bf16.msra.mxu0 0
    %1419 = vmatprep.subr.bf16.mxu0 0
    %1420 = vmatpush1.bf16.msra.mxu0 %v759
    %1421 = vmatprep.subr.bf16.mxu0 0
    %1422 = vmatpush1.bf16.msra.mxu0 %v758
    %1423 = vmatprep.subr.bf16.mxu0 0
    %1424 = vmatpush2.bf16.msra.mxu0 0
    %1425 = vmatprep.subr.bf16.mxu0 0
    %1426 = vmatpush2.bf16.msra.mxu0 0
    %1427 = vmatprep.subr.bf16.mxu0 0
    %1428 = vmatpush2.bf16.msra.mxu0 0
    %1429 = vmatprep.subr.bf16.mxu0 0
    %1430 = vmatpush2.bf16.msra.mxu0 0
    %1431 = vmatprep.subr.bf16.mxu0 0
    %1432 = vmatpush2.bf16.msra.mxu0 0
    %1433 = vmatprep.subr.bf16.mxu0 0
    %1434 = vmatpush2.bf16.msra.mxu0 0
    %1435 = vmatprep.subr.bf16.mxu0 0
    %1436 = vmatpush2.bf16.msra.mxu0 0
    %1437 = vmatprep.subr.bf16.mxu0 0
    %1438 = vmatpush2.bf16.msra.mxu0 0
    %1439 = vmatprep.mubr.bf16.mxu0 0
    %1440 = vmatmul.mubr.bf16.gmra.mxu0 %v1405
    %v1441 = vpop.f32.mrf.mxu0
    %v1442 = vadd.f32 %v1399, %v1441
    %v1443 = vpop.f32.mrf.mxu0
    %v1444 = vpop.f32.mrf.mxu0
    %v1445 = vpop.f32.mrf.mxu0
    %1446 = vdwg.mxu0
    %1447 = vrot.lane.b32.xlu0 %v1139, 64
    %v1448 = vpop.permute.xlu0 %1447
    %1449 = vrot.lane.b32.xlu0 %v1140, 64
    %v1450 = vpop.permute.xlu0 %1449
    %v1452 = vsel %vm473, %v1448, 0
    %v1455 = vsel %vm473, %v1450, 0
    %1457 = vmatprep.subr.bf16.mxu0 0
    %1458 = vmatpush1.bf16.xpose.msra.mxu0 0
    %1459 = vmatprep.subr.bf16.mxu0 0
    %1460 = vmatpush1.bf16.xpose.msra.mxu0 0
    %1461 = vmatprep.subr.bf16.mxu0 0
    %1462 = vmatpush1.bf16.xpose.msra.mxu0 0
    %1463 = vmatprep.subr.bf16.mxu0 0
    %1464 = vmatpush1.bf16.xpose.msra.mxu0 0
    %1465 = vmatprep.subr.bf16.mxu0 0
    %1466 = vmatpush1.bf16.xpose.msra.mxu0 0
    %1467 = vmatprep.subr.bf16.mxu0 0
    %1468 = vmatpush1.bf16.xpose.msra.mxu0 0
    %1469 = vmatprep.subr.bf16.mxu0 0
    %1470 = vmatpush1.bf16.xpose.msra.mxu0 0
    %1471 = vmatprep.subr.bf16.mxu0 0
    %1472 = vmatpush1.bf16.xpose.msra.mxu0 %v1455
    %1473 = vmatprep.subr.bf16.mxu0 0
    %1474 = vmatpush2.bf16.xpose.msra.mxu0 0
    %1475 = vmatprep.subr.bf16.mxu0 0
    %1476 = vmatpush2.bf16.xpose.msra.mxu0 0
    %1477 = vmatprep.subr.bf16.mxu0 0
    %1478 = vmatpush2.bf16.xpose.msra.mxu0 0
    %1479 = vmatprep.subr.bf16.mxu0 0
    %1480 = vmatpush2.bf16.xpose.msra.mxu0 0
    %1481 = vmatprep.subr.bf16.mxu0 0
    %1482 = vmatpush2.bf16.xpose.msra.mxu0 0
    %1483 = vmatprep.subr.bf16.mxu0 0
    %1484 = vmatpush2.bf16.xpose.msra.mxu0 0
    %1485 = vmatprep.subr.bf16.mxu0 0
    %1486 = vmatpush2.bf16.xpose.msra.mxu0 0
    %1487 = vmatprep.subr.bf16.mxu0 0
    %1488 = vmatpush2.bf16.xpose.msra.mxu0 0
    %1489 = vmatprep.mubr.bf16.mxu0 0
    %1490 = vmatmul.mubr.bf16.gmra.mxu0 %v1452
    %v1491 = vpop.f32.mrf.mxu0
    %v1492 = vadd.f32 0.0, %v1491
    %v1493 = vpop.f32.mrf.mxu0
    %v1494 = vpop.f32.mrf.mxu0
    %v1495 = vpop.f32.mrf.mxu0
    %1496 = vdwg.mxu0
    %v1497 = vsel %vm520, %v1492, -inf
    %1498 = vmax.xlane.f32.xlu0 %v1497
    %v1499 = vpop.xlane.xlu0 %1498
    %v1500 = vsub.f32 %v1492, %v1499
    %v1501 = vmul.f32 %v1500, 1.442695
    %v1502 = vpow.pop %v1501
    %v1503 = vsel %vm520, %v1502, 0.0
    %1504 = vadd.xlane.f32.xlu0 %v1503
    %v1505 = vpop.xlane.xlu0 %1504
    %v1506 = vrcp.pop %v1505
    %v1507 = vmul.f32 %v1502, %v1506
    %v1508 = vpack.c.bf16 %v1507, %v1507
    %1509 = vrot.lane.b32.xlu0 %v1141, 64
    %v1510 = vpop.permute.xlu0 %1509
    %v1512 = vsel %vm520, %v1508, 0
    %v1515 = vsel %vm536, %v1510, 0
    %1517 = vmatprep.subr.bf16.mxu0 0
    %1518 = vmatpush1.bf16.msra.mxu0 0
    %1519 = vmatprep.subr.bf16.mxu0 0
    %1520 = vmatpush1.bf16.msra.mxu0 0
    %1521 = vmatprep.subr.bf16.mxu0 0
    %1522 = vmatpush1.bf16.msra.mxu0 0
    %1523 = vmatprep.subr.bf16.mxu0 0
    %1524 = vmatpush1.bf16.msra.mxu0 0
    %1525 = vmatprep.subr.bf16.mxu0 0
    %1526 = vmatpush1.bf16.msra.mxu0 0
    %1527 = vmatprep.subr.bf16.mxu0 0
    %1528 = vmatpush1.bf16.msra.mxu0 0
    %1529 = vmatprep.subr.bf16.mxu0 0
    %1530 = vmatpush1.bf16.msra.mxu0 0
    %1531 = vmatprep.subr.bf16.mxu0 0
    %1532 = vmatpush1.bf16.msra.mxu0 %v1515
    %1533 = vmatprep.subr.bf16.mxu0 0
    %1534 = vmatpush2.bf16.msra.mxu0 0
    %1535 = vmatprep.subr.bf16.mxu0 0
    %1536 = vmatpush2.bf16.msra.mxu0 0
    %1537 = vmatprep.subr.bf16.mxu0 0
    %1538 = vmatpush2.bf16.msra.mxu0 0
    %1539 = vmatprep.subr.bf16.mxu0 0
    %1540 = vmatpush2.bf16.msra.mxu0 0
    %1541 = vmatprep.subr.bf16.mxu0 0
    %1542 = vmatpush2.bf16.msra.mxu0 0
    %1543 = vmatprep.subr.bf16.mxu0 0
    %1544 = vmatpush2.bf16.msra.mxu0 0
    %1545 = vmatprep.subr.bf16.mxu0 0
    %1546 = vmatpush2.bf16.msra.mxu0 0
    %1547 = vmatprep.subr.bf16.mxu0 0
    %1548 = vmatpush2.bf16.msra.mxu0 0
    %1549 = vmatprep.mubr.bf16.mxu0 0
    %1550 = vmatmul.mubr.bf16.gmra.mxu0 %v1512
    %v1551 = vpop.f32.mrf.mxu0
    %v1552 = vadd.f32 0.0, %v1551
    %v1553 = vpop.f32.mrf.mxu0
    %v1554 = vpop.f32.mrf.mxu0
    %v1555 = vpop.f32.mrf.mxu0
    %1556 = vdwg.mxu0
    %v1557 = vpack.c.bf16 %v1552, %v1552
    %v1559 = vsel %vm473, %v1557, 0
    %1561 = vmatprep.subr.bf16.mxu0 0
    %1562 = vmatpush1.bf16.msra.mxu0 0
    %1563 = vmatprep.subr.bf16.mxu0 0
    %1564 = vmatpush1.bf16.msra.mxu0 0
    %1565 = vmatprep.subr.bf16.mxu0 0
    %1566 = vmatpush1.bf16.msra.mxu0 0
    %1567 = vmatprep.subr.bf16.mxu0 0
    %1568 = vmatpush1.bf16.msra.mxu0 0
    %1569 = vmatprep.subr.bf16.mxu0 0
    %1570 = vmatpush1.bf16.msra.mxu0 0
    %1571 = vmatprep.subr.bf16.mxu0 0
    %1572 = vmatpush1.bf16.msra.mxu0 0
    %1573 = vmatprep.subr.bf16.mxu0 0
    %1574 = vmatpush1.bf16.msra.mxu0 %v925
    %1575 = vmatprep.subr.bf16.mxu0 0
    %1576 = vmatpush1.bf16.msra.mxu0 %v924
    %1577 = vmatprep.subr.bf16.mxu0 0
    %1578 = vmatpush2.bf16.msra.mxu0 0
    %1579 = vmatprep.subr.bf16.mxu0 0
    %1580 = vmatpush2.bf16.msra.mxu0 0
    %1581 = vmatprep.subr.bf16.mxu0 0
    %1582 = vmatpush2.bf16.msra.mxu0 0
    %1583 = vmatprep.subr.bf16.mxu0 0
    %1584 = vmatpush2.bf16.msra.mxu0 0
    %1585 = vmatprep.subr.bf16.mxu0 0
    %1586 = vmatpush2.bf16.msra.mxu0 0
    %1587 = vmatprep.subr.bf16.mxu0 0
    %1588 = vmatpush2.bf16.msra.mxu0 0
    %1589 = vmatprep.subr.bf16.mxu0 0
    %1590 = vmatpush2.bf16.msra.mxu0 0
    %1591 = vmatprep.subr.bf16.mxu0 0
    %1592 = vmatpush2.bf16.msra.mxu0 0
    %1593 = vmatprep.mubr.bf16.mxu0 0
    %1594 = vmatmul.mubr.bf16.gmra.mxu0 %v1559
    %v1595 = vpop.f32.mrf.mxu0
    %v1596 = vadd.f32 0.0, %v1595
    %v1597 = vpop.f32.mrf.mxu0
    %v1598 = vpop.f32.mrf.mxu0
    %v1599 = vpop.f32.mrf.mxu0
    %1600 = vdwg.mxu0
    %v1601 = vadd.f32 %v1442, %v1596
    %1602 = vrot.lane.b32.xlu0 %v1139, 32
    %v1603 = vpop.permute.xlu0 %1602
    %1604 = vrot.lane.b32.xlu0 %v1140, 32
    %v1605 = vpop.permute.xlu0 %1604
    %v1607 = vsel %vm473, %v1603, 0
    %v1610 = vsel %vm473, %v1605, 0
    %1612 = vmatprep.subr.bf16.mxu0 0
    %1613 = vmatpush1.bf16.xpose.msra.mxu0 0
    %1614 = vmatprep.subr.bf16.mxu0 0
    %1615 = vmatpush1.bf16.xpose.msra.mxu0 0
    %1616 = vmatprep.subr.bf16.mxu0 0
    %1617 = vmatpush1.bf16.xpose.msra.mxu0 0
    %1618 = vmatprep.subr.bf16.mxu0 0
    %1619 = vmatpush1.bf16.xpose.msra.mxu0 0
    %1620 = vmatprep.subr.bf16.mxu0 0
    %1621 = vmatpush1.bf16.xpose.msra.mxu0 0
    %1622 = vmatprep.subr.bf16.mxu0 0
    %1623 = vmatpush1.bf16.xpose.msra.mxu0 0
    %1624 = vmatprep.subr.bf16.mxu0 0
    %1625 = vmatpush1.bf16.xpose.msra.mxu0 0
    %1626 = vmatprep.subr.bf16.mxu0 0
    %1627 = vmatpush1.bf16.xpose.msra.mxu0 %v1610
    %1628 = vmatprep.subr.bf16.mxu0 0
    %1629 = vmatpush2.bf16.xpose.msra.mxu0 0
    %1630 = vmatprep.subr.bf16.mxu0 0
    %1631 = vmatpush2.bf16.xpose.msra.mxu0 0
    %1632 = vmatprep.subr.bf16.mxu0 0
    %1633 = vmatpush2.bf16.xpose.msra.mxu0 0
    %1634 = vmatprep.subr.bf16.mxu0 0
    %1635 = vmatpush2.bf16.xpose.msra.mxu0 0
    %1636 = vmatprep.subr.bf16.mxu0 0
    %1637 = vmatpush2.bf16.xpose.msra.mxu0 0
    %1638 = vmatprep.subr.bf16.mxu0 0
    %1639 = vmatpush2.bf16.xpose.msra.mxu0 0
    %1640 = vmatprep.subr.bf16.mxu0 0
    %1641 = vmatpush2.bf16.xpose.msra.mxu0 0
    %1642 = vmatprep.subr.bf16.mxu0 0
    %1643 = vmatpush2.bf16.xpose.msra.mxu0 0
    %1644 = vmatprep.mubr.bf16.mxu0 0
    %1645 = vmatmul.mubr.bf16.gmra.mxu0 %v1607
    %v1646 = vpop.f32.mrf.mxu0
    %v1647 = vadd.f32 0.0, %v1646
    %v1648 = vpop.f32.mrf.mxu0
    %v1649 = vpop.f32.mrf.mxu0
    %v1650 = vpop.f32.mrf.mxu0
    %1651 = vdwg.mxu0
    %v1652 = vsel %vm520, %v1647, -inf
    %1653 = vmax.xlane.f32.xlu0 %v1652
    %v1654 = vpop.xlane.xlu0 %1653
    %v1655 = vsub.f32 %v1647, %v1654
    %v1656 = vmul.f32 %v1655, 1.442695
    %v1657 = vpow.pop %v1656
    %v1658 = vsel %vm520, %v1657, 0.0
    %1659 = vadd.xlane.f32.xlu0 %v1658
    %v1660 = vpop.xlane.xlu0 %1659
    %v1661 = vrcp.pop %v1660
    %v1662 = vmul.f32 %v1657, %v1661
    %v1663 = vpack.c.bf16 %v1662, %v1662
    %1664 = vrot.lane.b32.xlu0 %v1141, 32
    %v1665 = vpop.permute.xlu0 %1664
    %v1667 = vsel %vm520, %v1663, 0
    %v1670 = vsel %vm536, %v1665, 0
    %1672 = vmatprep.subr.bf16.mxu0 0
    %1673 = vmatpush1.bf16.msra.mxu0 0
    %1674 = vmatprep.subr.bf16.mxu0 0
    %1675 = vmatpush1.bf16.msra.mxu0 0
    %1676 = vmatprep.subr.bf16.mxu0 0
    %1677 = vmatpush1.bf16.msra.mxu0 0
    %1678 = vmatprep.subr.bf16.mxu0 0
    %1679 = vmatpush1.bf16.msra.mxu0 0
    %1680 = vmatprep.subr.bf16.mxu0 0
    %1681 = vmatpush1.bf16.msra.mxu0 0
    %1682 = vmatprep.subr.bf16.mxu0 0
    %1683 = vmatpush1.bf16.msra.mxu0 0
    %1684 = vmatprep.subr.bf16.mxu0 0
    %1685 = vmatpush1.bf16.msra.mxu0 0
    %1686 = vmatprep.subr.bf16.mxu0 0
    %1687 = vmatpush1.bf16.msra.mxu0 %v1670
    %1688 = vmatprep.subr.bf16.mxu0 0
    %1689 = vmatpush2.bf16.msra.mxu0 0
    %1690 = vmatprep.subr.bf16.mxu0 0
    %1691 = vmatpush2.bf16.msra.mxu0 0
    %1692 = vmatprep.subr.bf16.mxu0 0
    %1693 = vmatpush2.bf16.msra.mxu0 0
    %1694 = vmatprep.subr.bf16.mxu0 0
    %1695 = vmatpush2.bf16.msra.mxu0 0
    %1696 = vmatprep.subr.bf16.mxu0 0
    %1697 = vmatpush2.bf16.msra.mxu0 0
    %1698 = vmatprep.subr.bf16.mxu0 0
    %1699 = vmatpush2.bf16.msra.mxu0 0
    %1700 = vmatprep.subr.bf16.mxu0 0
    %1701 = vmatpush2.bf16.msra.mxu0 0
    %1702 = vmatprep.subr.bf16.mxu0 0
    %1703 = vmatpush2.bf16.msra.mxu0 0
    %1704 = vmatprep.mubr.bf16.mxu0 0
    %1705 = vmatmul.mubr.bf16.gmra.mxu0 %v1667
    %v1706 = vpop.f32.mrf.mxu0
    %v1707 = vadd.f32 0.0, %v1706
    %v1708 = vpop.f32.mrf.mxu0
    %v1709 = vpop.f32.mrf.mxu0
    %v1710 = vpop.f32.mrf.mxu0
    %1711 = vdwg.mxu0
    %v1712 = vpack.c.bf16 %v1707, %v1707
    %v1714 = vsel %vm473, %v1712, 0
    %1716 = vmatprep.subr.bf16.mxu0 0
    %1717 = vmatpush1.bf16.msra.mxu0 0
    %1718 = vmatprep.subr.bf16.mxu0 0
    %1719 = vmatpush1.bf16.msra.mxu0 0
    %1720 = vmatprep.subr.bf16.mxu0 0
    %1721 = vmatpush1.bf16.msra.mxu0 0
    %1722 = vmatprep.subr.bf16.mxu0 0
    %1723 = vmatpush1.bf16.msra.mxu0 0
    %1724 = vmatprep.subr.bf16.mxu0 0
    %1725 = vmatpush1.bf16.msra.mxu0 0
    %1726 = vmatprep.subr.bf16.mxu0 0
    %1727 = vmatpush1.bf16.msra.mxu0 0
    %1728 = vmatprep.subr.bf16.mxu0 0
    %1729 = vmatpush1.bf16.msra.mxu0 %v1092
    %1730 = vmatprep.subr.bf16.mxu0 0
    %1731 = vmatpush1.bf16.msra.mxu0 %v1091
    %1732 = vmatprep.subr.bf16.mxu0 0
    %1733 = vmatpush2.bf16.msra.mxu0 0
    %1734 = vmatprep.subr.bf16.mxu0 0
    %1735 = vmatpush2.bf16.msra.mxu0 0
    %1736 = vmatprep.subr.bf16.mxu0 0
    %1737 = vmatpush2.bf16.msra.mxu0 0
    %1738 = vmatprep.subr.bf16.mxu0 0
    %1739 = vmatpush2.bf16.msra.mxu0 0
    %1740 = vmatprep.subr.bf16.mxu0 0
    %1741 = vmatpush2.bf16.msra.mxu0 0
    %1742 = vmatprep.subr.bf16.mxu0 0
    %1743 = vmatpush2.bf16.msra.mxu0 0
    %1744 = vmatprep.subr.bf16.mxu0 0
    %1745 = vmatpush2.bf16.msra.mxu0 0
    %1746 = vmatprep.subr.bf16.mxu0 0
    %1747 = vmatpush2.bf16.msra.mxu0 0
    %1748 = vmatprep.mubr.bf16.mxu0 0
    %1749 = vmatmul.mubr.bf16.gmra.mxu0 %v1714
    %v1750 = vpop.f32.mrf.mxu0
    %v1751 = vadd.f32 0.0, %v1750
    %v1752 = vpop.f32.mrf.mxu0
    %v1753 = vpop.f32.mrf.mxu0
    %v1754 = vpop.f32.mrf.mxu0
    %1755 = vdwg.mxu0
    %v1756 = vadd.f32 %v1601, %v1751
    %v1757 = vld [vmem:[%s6] sm:$0x1]
    %v1759 = vlaneseq
    %v1760 = vshrl.u32 %v1759, 7
    %v1761 = vsub.s32 0, %v1760
    %v1762 = vrot.slane %v1757, %v1761
    %v1764 = vadd.f32 %v1138, %v1762
    %v1765 = vadd.f32 %v1756, %v1762
    %v1766 = vadd.f32 %v190, %v1764
    %v1767 = vadd.f32 %v191, %v1765
    %v1768 = vld [vmem:[%s7] sm:$0x1]
    %v1769 = vld [vmem:[%s8] sm:$0x1]
    %1770 = vadd.xlane.f32.xlu0 %v1766
    %v1771 = vpop.xlane.xlu0 %1770
    %1772 = vadd.xlane.f32.xlu0 %v1767
    %v1773 = vpop.xlane.xlu0 %1772
    %v1774 = vmul.f32 %v1771, %v157
    %v1775 = vmul.f32 %v1773, %v157
    %v1776 = vsub.f32 %v1766, %v1774
    %v1777 = vsub.f32 %v1767, %v1775
    %v1778 = vmul.f32 %v1776, %v1776
    %v1779 = vmul.f32 %v1777, %v1777
    %1780 = vadd.xlane.f32.xlu0 %v1778
    %v1781 = vpop.xlane.xlu0 %1780
    %1782 = vadd.xlane.f32.xlu0 %v1779
    %v1783 = vpop.xlane.xlu0 %1782
    %v1784 = vmul.f32 %v1781, %v157
    %v1785 = vmul.f32 %v1783, %v157
    %v1786 = vadd.f32 %v1784, 1e-12
    %v1787 = vadd.f32 %v1785, 1e-12
    %v1788 = vrsqrt.pop %v1786
    %v1789 = vrsqrt.pop %v1787
    %v1790 = vmul.f32 %v1776, %v1788
    %v1791 = vmul.f32 %v1777, %v1789
    %v1793 = vlaneseq
    %v1794 = vshrl.u32 %v1793, 7
    %v1795 = vsub.s32 0, %v1794
    %v1796 = vrot.slane %v1768, %v1795
    %v1798 = vmul.f32 %v1790, %v1796
    %v1799 = vmul.f32 %v1791, %v1796
    %v1801 = vlaneseq
    %v1802 = vshrl.u32 %v1801, 7
    %v1803 = vsub.s32 0, %v1802
    %v1804 = vrot.slane %v1769, %v1803
    %v1806 = vadd.f32 %v1798, %v1804
    %v1807 = vadd.f32 %v1799, %v1804
    %v1808 = vpack.c.bf16 %v1807, %v1806
    %v1809 = vld [vmem:[#allocation5] sm:$0xff]
    %v1810 = vld [vmem:[#allocation5 + $0x8] sm:$0xff]
    %v1811 = vld [vmem:[#allocation5 + $0x10] sm:$0xff]
    %v1812 = vld [vmem:[#allocation5 + $0x18] sm:$0xff]
    %v1813 = vld [vmem:[#allocation5 + $0x20] sm:$0xff]
    %v1814 = vld [vmem:[#allocation5 + $0x28] sm:$0xff]
    %v1815 = vld [vmem:[#allocation5 + $0x30] sm:$0xff]
    %v1816 = vld [vmem:[#allocation5 + $0x38] sm:$0xff]
    %v1817 = vld [vmem:[#allocation5 + $0x40] sm:$0xff]
    %v1818 = vld [vmem:[#allocation5 + $0x48] sm:$0xff]
    %v1819 = vld [vmem:[#allocation5 + $0x50] sm:$0xff]
    %v1820 = vld [vmem:[#allocation5 + $0x58] sm:$0xff]
    %v1821 = vld [vmem:[#allocation5 + $0x60] sm:$0xff]
    %v1822 = vld [vmem:[#allocation5 + $0x68] sm:$0xff]
    %v1823 = vld [vmem:[#allocation5 + $0x70] sm:$0xff]
    %v1824 = vld [vmem:[#allocation5 + $0x78] sm:$0xff]
    %v1825 = vld [vmem:[#allocation5 + $0x80] sm:$0xff]
    %v1826 = vld [vmem:[#allocation5 + $0x88] sm:$0xff]
    %v1827 = vld [vmem:[#allocation5 + $0x90] sm:$0xff]
    %v1828 = vld [vmem:[#allocation5 + $0x98] sm:$0xff]
    %v1829 = vld [vmem:[#allocation5 + $0xa0] sm:$0xff]
    %v1830 = vld [vmem:[#allocation5 + $0xa8] sm:$0xff]
    %v1831 = vld [vmem:[#allocation5 + $0xb0] sm:$0xff]
    %v1832 = vld [vmem:[#allocation5 + $0xb8] sm:$0xff]
    %v1833 = vld [vmem:[#allocation5 + $0xc0] sm:$0xff]
    %v1834 = vld [vmem:[#allocation5 + $0xc8] sm:$0xff]
    %v1835 = vld [vmem:[#allocation5 + $0xd0] sm:$0xff]
    %v1836 = vld [vmem:[#allocation5 + $0xd8] sm:$0xff]
    %v1837 = vld [vmem:[#allocation5 + $0xe0] sm:$0xff]
    %v1838 = vld [vmem:[#allocation5 + $0xe8] sm:$0xff]
    %v1839 = vld [vmem:[#allocation5 + $0xf0] sm:$0xff]
    %v1840 = vld [vmem:[#allocation5 + $0xf8] sm:$0xff]
    %v1841 = vld [vmem:[%s10] sm:$0xf]
    %v1843 = vlaneseq
    %v1844 = vshrl.u32 %v1843, 7
    %v1845 = vsub.s32 0, %v1844
    %v1846 = vrot.slane %v1841, %v1845
    %v1847 = vlaneseq
    %v1848 = vshrl.u32 %v1847, 7
    %v1849 = vsub.s32 1, %v1848
    %v1850 = vrot.slane %v1841, %v1849
    %v1851 = vlaneseq
    %v1852 = vshrl.u32 %v1851, 7
    %v1853 = vsub.s32 2, %v1852
    %v1854 = vrot.slane %v1841, %v1853
    %v1855 = vlaneseq
    %v1856 = vshrl.u32 %v1855, 7
    %v1857 = vsub.s32 3, %v1856
    %v1858 = vrot.slane %v1841, %v1857
    %v1895 = vunpack.c.l.b16 %v1809
    %v1896 = vunpack.c.h.b16 %v1809
    %v1897 = vunpack.c.l.b16 %v1810
    %v1898 = vunpack.c.h.b16 %v1810
    %v1899 = vunpack.c.l.b16 %v1811
    %v1900 = vunpack.c.h.b16 %v1811
    %v1901 = vunpack.c.l.b16 %v1812
    %v1902 = vunpack.c.h.b16 %v1812
    %v1903 = vunpack.c.l.b16 %v1813
    %v1904 = vunpack.c.h.b16 %v1813
    %v1905 = vunpack.c.l.b16 %v1814
    %v1906 = vunpack.c.h.b16 %v1814
    %v1907 = vunpack.c.l.b16 %v1815
    %v1908 = vunpack.c.h.b16 %v1815
    %v1909 = vunpack.c.l.b16 %v1816
    %v1910 = vunpack.c.h.b16 %v1816
    %v1911 = vunpack.c.l.b16 %v1817
    %v1912 = vunpack.c.h.b16 %v1817
    %v1913 = vunpack.c.l.b16 %v1818
    %v1914 = vunpack.c.h.b16 %v1818
    %v1915 = vunpack.c.l.b16 %v1819
    %v1916 = vunpack.c.h.b16 %v1819
    %v1917 = vunpack.c.l.b16 %v1820
    %v1918 = vunpack.c.h.b16 %v1820
    %v1919 = vunpack.c.l.b16 %v1821
    %v1920 = vunpack.c.h.b16 %v1821
    %v1921 = vunpack.c.l.b16 %v1822
    %v1922 = vunpack.c.h.b16 %v1822
    %v1923 = vunpack.c.l.b16 %v1823
    %v1924 = vunpack.c.h.b16 %v1823
    %v1925 = vunpack.c.l.b16 %v1824
    %v1926 = vunpack.c.h.b16 %v1824
    %v1927 = vunpack.c.l.b16 %v1825
    %v1928 = vunpack.c.h.b16 %v1825
    %v1929 = vunpack.c.l.b16 %v1826
    %v1930 = vunpack.c.h.b16 %v1826
    %v1931 = vunpack.c.l.b16 %v1827
    %v1932 = vunpack.c.h.b16 %v1827
    %v1933 = vunpack.c.l.b16 %v1828
    %v1934 = vunpack.c.h.b16 %v1828
    %v1935 = vunpack.c.l.b16 %v1829
    %v1936 = vunpack.c.h.b16 %v1829
    %v1937 = vunpack.c.l.b16 %v1830
    %v1938 = vunpack.c.h.b16 %v1830
    %v1939 = vunpack.c.l.b16 %v1831
    %v1940 = vunpack.c.h.b16 %v1831
    %v1941 = vunpack.c.l.b16 %v1832
    %v1942 = vunpack.c.h.b16 %v1832
    %v1943 = vunpack.c.l.b16 %v1833
    %v1944 = vunpack.c.h.b16 %v1833
    %v1945 = vunpack.c.l.b16 %v1834
    %v1946 = vunpack.c.h.b16 %v1834
    %v1947 = vunpack.c.l.b16 %v1835
    %v1948 = vunpack.c.h.b16 %v1835
    %v1949 = vunpack.c.l.b16 %v1836
    %v1950 = vunpack.c.h.b16 %v1836
    %v1951 = vunpack.c.l.b16 %v1837
    %v1952 = vunpack.c.h.b16 %v1837
    %v1953 = vunpack.c.l.b16 %v1838
    %v1954 = vunpack.c.h.b16 %v1838
    %v1955 = vunpack.c.l.b16 %v1839
    %v1956 = vunpack.c.h.b16 %v1839
    %v1957 = vunpack.c.l.b16 %v1840
    %v1958 = vunpack.c.h.b16 %v1840
    %v1959 = vpack.c.b16 %v1899, %v1895
    %v1960 = vpack.c.b16 %v1900, %v1896
    %v1961 = vpack.c.b16 %v1901, %v1897
    %v1962 = vpack.c.b16 %v1902, %v1898
    %v1963 = vpack.c.b16 %v1907, %v1903
    %v1964 = vpack.c.b16 %v1908, %v1904
    %v1965 = vpack.c.b16 %v1909, %v1905
    %v1966 = vpack.c.b16 %v1910, %v1906
    %v1967 = vpack.c.b16 %v1915, %v1911
    %v1968 = vpack.c.b16 %v1916, %v1912
    %v1969 = vpack.c.b16 %v1917, %v1913
    %v1970 = vpack.c.b16 %v1918, %v1914
    %v1971 = vpack.c.b16 %v1923, %v1919
    %v1972 = vpack.c.b16 %v1924, %v1920
    %v1973 = vpack.c.b16 %v1925, %v1921
    %v1974 = vpack.c.b16 %v1926, %v1922
    %v1975 = vpack.c.b16 %v1931, %v1927
    %v1976 = vpack.c.b16 %v1932, %v1928
    %v1977 = vpack.c.b16 %v1933, %v1929
    %v1978 = vpack.c.b16 %v1934, %v1930
    %v1979 = vpack.c.b16 %v1939, %v1935
    %v1980 = vpack.c.b16 %v1940, %v1936
    %v1981 = vpack.c.b16 %v1941, %v1937
    %v1982 = vpack.c.b16 %v1942, %v1938
    %v1983 = vpack.c.b16 %v1947, %v1943
    %v1984 = vpack.c.b16 %v1948, %v1944
    %v1985 = vpack.c.b16 %v1949, %v1945
    %v1986 = vpack.c.b16 %v1950, %v1946
    %v1987 = vpack.c.b16 %v1955, %v1951
    %v1988 = vpack.c.b16 %v1956, %v1952
    %v1989 = vpack.c.b16 %v1957, %v1953
    %v1990 = vpack.c.b16 %v1958, %v1954
    %2023 = vmatprep.subr.bf16.mxu0 %v1988
    %2024 = vmatpush1.bf16.msra.mxu0 %v1987
    %2025 = vmatprep.subr.bf16.mxu0 %v1984
    %2026 = vmatpush1.bf16.msra.mxu0 %v1983
    %2027 = vmatprep.subr.bf16.mxu0 %v1980
    %2028 = vmatpush1.bf16.msra.mxu0 %v1979
    %2029 = vmatprep.subr.bf16.mxu0 %v1976
    %2030 = vmatpush1.bf16.msra.mxu0 %v1975
    %2031 = vmatprep.subr.bf16.mxu0 %v1972
    %2032 = vmatpush1.bf16.msra.mxu0 %v1971
    %2033 = vmatprep.subr.bf16.mxu0 %v1968
    %2034 = vmatpush1.bf16.msra.mxu0 %v1967
    %2035 = vmatprep.subr.bf16.mxu0 %v1964
    %2036 = vmatpush1.bf16.msra.mxu0 %v1963
    %2037 = vmatprep.subr.bf16.mxu0 %v1960
    %2038 = vmatpush1.bf16.msra.mxu0 %v1959
    %2039 = vmatprep.subr.bf16.mxu0 0
    %2040 = vmatpush2.bf16.msra.mxu0 0
    %2041 = vmatprep.subr.bf16.mxu0 0
    %2042 = vmatpush2.bf16.msra.mxu0 0
    %2043 = vmatprep.subr.bf16.mxu0 0
    %2044 = vmatpush2.bf16.msra.mxu0 0
    %2045 = vmatprep.subr.bf16.mxu0 0
    %2046 = vmatpush2.bf16.msra.mxu0 0
    %2047 = vmatprep.subr.bf16.mxu0 0
    %2048 = vmatpush2.bf16.msra.mxu0 0
    %2049 = vmatprep.subr.bf16.mxu0 0
    %2050 = vmatpush2.bf16.msra.mxu0 0
    %2051 = vmatprep.subr.bf16.mxu0 0
    %2052 = vmatpush2.bf16.msra.mxu0 0
    %2053 = vmatprep.subr.bf16.mxu0 0
    %2054 = vmatpush2.bf16.msra.mxu0 0
    %2055 = vmatprep.mubr.bf16.mxu0 0
    %2056 = vmatmul.mubr.bf16.gmra.mxu0 %v1808
    %v2057 = vpop.f32.mrf.mxu0
    %v2058 = vadd.f32 %v1846, %v2057
    %v2059 = vpop.f32.mrf.mxu0
    %v2060 = vadd.f32 %v1850, %v2059
    %v2061 = vpop.f32.mrf.mxu0
    %v2062 = vadd.f32 %v1846, %v2061
    %v2063 = vpop.f32.mrf.mxu0
    %v2064 = vadd.f32 %v1850, %v2063
    %2065 = vdwg.mxu0
    %2066 = vmatprep.subr.bf16.mxu0 %v1990
    %2067 = vmatpush1.bf16.msra.mxu0 %v1989
    %2068 = vmatprep.subr.bf16.mxu0 %v1986
    %2069 = vmatpush1.bf16.msra.mxu0 %v1985
    %2070 = vmatprep.subr.bf16.mxu0 %v1982
    %2071 = vmatpush1.bf16.msra.mxu0 %v1981
    %2072 = vmatprep.subr.bf16.mxu0 %v1978
    %2073 = vmatpush1.bf16.msra.mxu0 %v1977
    %2074 = vmatprep.subr.bf16.mxu0 %v1974
    %2075 = vmatpush1.bf16.msra.mxu0 %v1973
    %2076 = vmatprep.subr.bf16.mxu0 %v1970
    %2077 = vmatpush1.bf16.msra.mxu0 %v1969
    %2078 = vmatprep.subr.bf16.mxu0 %v1966
    %2079 = vmatpush1.bf16.msra.mxu0 %v1965
    %2080 = vmatprep.subr.bf16.mxu0 %v1962
    %2081 = vmatpush1.bf16.msra.mxu0 %v1961
    %2082 = vmatprep.subr.bf16.mxu0 0
    %2083 = vmatpush2.bf16.msra.mxu0 0
    %2084 = vmatprep.subr.bf16.mxu0 0
    %2085 = vmatpush2.bf16.msra.mxu0 0
    %2086 = vmatprep.subr.bf16.mxu0 0
    %2087 = vmatpush2.bf16.msra.mxu0 0
    %2088 = vmatprep.subr.bf16.mxu0 0
    %2089 = vmatpush2.bf16.msra.mxu0 0
    %2090 = vmatprep.subr.bf16.mxu0 0
    %2091 = vmatpush2.bf16.msra.mxu0 0
    %2092 = vmatprep.subr.bf16.mxu0 0
    %2093 = vmatpush2.bf16.msra.mxu0 0
    %2094 = vmatprep.subr.bf16.mxu0 0
    %2095 = vmatpush2.bf16.msra.mxu0 0
    %2096 = vmatprep.subr.bf16.mxu0 0
    %2097 = vmatpush2.bf16.msra.mxu0 0
    %2098 = vmatprep.mubr.bf16.mxu0 0
    %2099 = vmatmul.mubr.bf16.gmra.mxu0 %v1808
    %v2100 = vpop.f32.mrf.mxu0
    %v2101 = vadd.f32 %v1854, %v2100
    %v2102 = vpop.f32.mrf.mxu0
    %v2103 = vadd.f32 %v1858, %v2102
    %v2104 = vpop.f32.mrf.mxu0
    %v2105 = vadd.f32 %v1854, %v2104
    %v2106 = vpop.f32.mrf.mxu0
    %v2107 = vadd.f32 %v1858, %v2106
    %2108 = vdwg.mxu0
    %v2109 = vmul.f32 %v2058, 0.5
    %v2110 = vmul.f32 %v2060, 0.5
    %v2111 = vmul.f32 %v2101, 0.5
    %v2112 = vmul.f32 %v2103, 0.5
    %v2113 = vmul.f32 %v2062, 0.5
    %v2114 = vmul.f32 %v2064, 0.5
    %v2115 = vmul.f32 %v2105, 0.5
    %v2116 = vmul.f32 %v2107, 0.5
    %v2117 = vmul.f32 %v2058, 0.044715
    %v2118 = vmul.f32 %v2060, 0.044715
    %v2119 = vmul.f32 %v2101, 0.044715
    %v2120 = vmul.f32 %v2103, 0.044715
    %v2121 = vmul.f32 %v2062, 0.044715
    %v2122 = vmul.f32 %v2064, 0.044715
    %v2123 = vmul.f32 %v2105, 0.044715
    %v2124 = vmul.f32 %v2107, 0.044715
    %v2125 = vmul.f32 %v2117, %v2058
    %v2126 = vmul.f32 %v2118, %v2060
    %v2127 = vmul.f32 %v2119, %v2101
    %v2128 = vmul.f32 %v2120, %v2103
    %v2129 = vmul.f32 %v2121, %v2062
    %v2130 = vmul.f32 %v2122, %v2064
    %v2131 = vmul.f32 %v2123, %v2105
    %v2132 = vmul.f32 %v2124, %v2107
    %v2133 = vmul.f32 %v2125, %v2058
    %v2134 = vmul.f32 %v2126, %v2060
    %v2135 = vmul.f32 %v2127, %v2101
    %v2136 = vmul.f32 %v2128, %v2103
    %v2137 = vmul.f32 %v2129, %v2062
    %v2138 = vmul.f32 %v2130, %v2064
    %v2139 = vmul.f32 %v2131, %v2105
    %v2140 = vmul.f32 %v2132, %v2107
    %v2141 = vadd.f32 %v2058, %v2133
    %v2142 = vadd.f32 %v2060, %v2134
    %v2143 = vadd.f32 %v2101, %v2135
    %v2144 = vadd.f32 %v2103, %v2136
    %v2145 = vadd.f32 %v2062, %v2137
    %v2146 = vadd.f32 %v2064, %v2138
    %v2147 = vadd.f32 %v2105, %v2139
    %v2148 = vadd.f32 %v2107, %v2140
    %v2149 = vmul.f32 %v2141, 0.7978846
    %v2150 = vmul.f32 %v2142, 0.7978846
    %v2151 = vmul.f32 %v2143, 0.7978846
    %v2152 = vmul.f32 %v2144, 0.7978846
    %v2153 = vmul.f32 %v2145, 0.7978846
    %v2154 = vmul.f32 %v2146, 0.7978846
    %v2155 = vmul.f32 %v2147, 0.7978846
    %v2156 = vmul.f32 %v2148, 0.7978846
    %v2157 = vtanh.pop %v2149
    %v2158 = vtanh.pop %v2150
    %v2159 = vtanh.pop %v2151
    %v2160 = vtanh.pop %v2152
    %v2161 = vtanh.pop %v2153
    %v2162 = vtanh.pop %v2154
    %v2163 = vtanh.pop %v2155
    %v2164 = vtanh.pop %v2156
    %v2165 = vadd.f32 %v2157, 1.0
    %v2166 = vadd.f32 %v2158, 1.0
    %v2167 = vadd.f32 %v2159, 1.0
    %v2168 = vadd.f32 %v2160, 1.0
    %v2169 = vadd.f32 %v2161, 1.0
    %v2170 = vadd.f32 %v2162, 1.0
    %v2171 = vadd.f32 %v2163, 1.0
    %v2172 = vadd.f32 %v2164, 1.0
    %v2173 = vmul.f32 %v2109, %v2165
    %v2174 = vmul.f32 %v2110, %v2166
    %v2175 = vmul.f32 %v2111, %v2167
    %v2176 = vmul.f32 %v2112, %v2168
    %v2177 = vmul.f32 %v2113, %v2169
    %v2178 = vmul.f32 %v2114, %v2170
    %v2179 = vmul.f32 %v2115, %v2171
    %v2180 = vmul.f32 %v2116, %v2172
    %v2181 = vpack.c.bf16 %v2177, %v2173
    %v2182 = vpack.c.bf16 %v2178, %v2174
    %v2183 = vpack.c.bf16 %v2179, %v2175
    %v2184 = vpack.c.bf16 %v2180, %v2176
    %v2185 = vld [vmem:[#allocation7] sm:$0xf]
    %v2186 = vld [vmem:[#allocation7 + $0x4] sm:$0xf]
    %v2187 = vld [vmem:[#allocation7 + $0x8] sm:$0xf]
    %v2188 = vld [vmem:[#allocation7 + $0xc] sm:$0xf]
    %v2189 = vld [vmem:[#allocation7 + $0x10] sm:$0xf]
    %v2190 = vld [vmem:[#allocation7 + $0x14] sm:$0xf]
    %v2191 = vld [vmem:[#allocation7 + $0x18] sm:$0xf]
    %v2192 = vld [vmem:[#allocation7 + $0x1c] sm:$0xf]
    %v2193 = vld [vmem:[#allocation7 + $0x20] sm:$0xf]
    %v2194 = vld [vmem:[#allocation7 + $0x24] sm:$0xf]
    %v2195 = vld [vmem:[#allocation7 + $0x28] sm:$0xf]
    %v2196 = vld [vmem:[#allocation7 + $0x2c] sm:$0xf]
    %v2197 = vld [vmem:[#allocation7 + $0x30] sm:$0xf]
    %v2198 = vld [vmem:[#allocation7 + $0x34] sm:$0xf]
    %v2199 = vld [vmem:[#allocation7 + $0x38] sm:$0xf]
    %v2200 = vld [vmem:[#allocation7 + $0x3c] sm:$0xf]
    %v2201 = vld [vmem:[#allocation7 + $0x40] sm:$0xf]
    %v2202 = vld [vmem:[#allocation7 + $0x44] sm:$0xf]
    %v2203 = vld [vmem:[#allocation7 + $0x48] sm:$0xf]
    %v2204 = vld [vmem:[#allocation7 + $0x4c] sm:$0xf]
    %v2205 = vld [vmem:[#allocation7 + $0x50] sm:$0xf]
    %v2206 = vld [vmem:[#allocation7 + $0x54] sm:$0xf]
    %v2207 = vld [vmem:[#allocation7 + $0x58] sm:$0xf]
    %v2208 = vld [vmem:[#allocation7 + $0x5c] sm:$0xf]
    %v2209 = vld [vmem:[#allocation7 + $0x60] sm:$0xf]
    %v2210 = vld [vmem:[#allocation7 + $0x64] sm:$0xf]
    %v2211 = vld [vmem:[#allocation7 + $0x68] sm:$0xf]
    %v2212 = vld [vmem:[#allocation7 + $0x6c] sm:$0xf]
    %v2213 = vld [vmem:[#allocation7 + $0x70] sm:$0xf]
    %v2214 = vld [vmem:[#allocation7 + $0x74] sm:$0xf]
    %v2215 = vld [vmem:[#allocation7 + $0x78] sm:$0xf]
    %v2216 = vld [vmem:[#allocation7 + $0x7c] sm:$0xf]
    %v2217 = vld [vmem:[#allocation7 + $0x80] sm:$0xf]
    %v2218 = vld [vmem:[#allocation7 + $0x84] sm:$0xf]
    %v2219 = vld [vmem:[#allocation7 + $0x88] sm:$0xf]
    %v2220 = vld [vmem:[#allocation7 + $0x8c] sm:$0xf]
    %v2221 = vld [vmem:[#allocation7 + $0x90] sm:$0xf]
    %v2222 = vld [vmem:[#allocation7 + $0x94] sm:$0xf]
    %v2223 = vld [vmem:[#allocation7 + $0x98] sm:$0xf]
    %v2224 = vld [vmem:[#allocation7 + $0x9c] sm:$0xf]
    %v2225 = vld [vmem:[#allocation7 + $0xa0] sm:$0xf]
    %v2226 = vld [vmem:[#allocation7 + $0xa4] sm:$0xf]
    %v2227 = vld [vmem:[#allocation7 + $0xa8] sm:$0xf]
    %v2228 = vld [vmem:[#allocation7 + $0xac] sm:$0xf]
    %v2229 = vld [vmem:[#allocation7 + $0xb0] sm:$0xf]
    %v2230 = vld [vmem:[#allocation7 + $0xb4] sm:$0xf]
    %v2231 = vld [vmem:[#allocation7 + $0xb8] sm:$0xf]
    %v2232 = vld [vmem:[#allocation7 + $0xbc] sm:$0xf]
    %v2233 = vld [vmem:[#allocation7 + $0xc0] sm:$0xf]
    %v2234 = vld [vmem:[#allocation7 + $0xc4] sm:$0xf]
    %v2235 = vld [vmem:[#allocation7 + $0xc8] sm:$0xf]
    %v2236 = vld [vmem:[#allocation7 + $0xcc] sm:$0xf]
    %v2237 = vld [vmem:[#allocation7 + $0xd0] sm:$0xf]
    %v2238 = vld [vmem:[#allocation7 + $0xd4] sm:$0xf]
    %v2239 = vld [vmem:[#allocation7 + $0xd8] sm:$0xf]
    %v2240 = vld [vmem:[#allocation7 + $0xdc] sm:$0xf]
    %v2241 = vld [vmem:[#allocation7 + $0xe0] sm:$0xf]
    %v2242 = vld [vmem:[#allocation7 + $0xe4] sm:$0xf]
    %v2243 = vld [vmem:[#allocation7 + $0xe8] sm:$0xf]
    %v2244 = vld [vmem:[#allocation7 + $0xec] sm:$0xf]
    %v2245 = vld [vmem:[#allocation7 + $0xf0] sm:$0xf]
    %v2246 = vld [vmem:[#allocation7 + $0xf4] sm:$0xf]
    %v2247 = vld [vmem:[#allocation7 + $0xf8] sm:$0xf]
    %v2248 = vld [vmem:[#allocation7 + $0xfc] sm:$0xf]
    %v2249 = vld [vmem:[%s12] sm:$0x1]
    %v2251 = vlaneseq
    %v2252 = vshrl.u32 %v2251, 7
    %v2253 = vsub.s32 0, %v2252
    %v2254 = vrot.slane %v2249, %v2253
    %v2320 = vunpack.c.l.b16 %v2185
    %v2321 = vunpack.c.l.b16 %v2186
    %v2322 = vunpack.c.l.b16 %v2187
    %v2323 = vunpack.c.l.b16 %v2188
    %v2324 = vunpack.c.l.b16 %v2189
    %v2325 = vunpack.c.l.b16 %v2190
    %v2326 = vunpack.c.l.b16 %v2191
    %v2327 = vunpack.c.l.b16 %v2192
    %v2328 = vunpack.c.l.b16 %v2193
    %v2329 = vunpack.c.l.b16 %v2194
    %v2330 = vunpack.c.l.b16 %v2195
    %v2331 = vunpack.c.l.b16 %v2196
    %v2332 = vunpack.c.l.b16 %v2197
    %v2333 = vunpack.c.l.b16 %v2198
    %v2334 = vunpack.c.l.b16 %v2199
    %v2335 = vunpack.c.l.b16 %v2200
    %v2336 = vunpack.c.l.b16 %v2201
    %v2337 = vunpack.c.l.b16 %v2202
    %v2338 = vunpack.c.l.b16 %v2203
    %v2339 = vunpack.c.l.b16 %v2204
    %v2340 = vunpack.c.l.b16 %v2205
    %v2341 = vunpack.c.l.b16 %v2206
    %v2342 = vunpack.c.l.b16 %v2207
    %v2343 = vunpack.c.l.b16 %v2208
    %v2344 = vunpack.c.l.b16 %v2209
    %v2345 = vunpack.c.l.b16 %v2210
    %v2346 = vunpack.c.l.b16 %v2211
    %v2347 = vunpack.c.l.b16 %v2212
    %v2348 = vunpack.c.l.b16 %v2213
    %v2349 = vunpack.c.l.b16 %v2214
    %v2350 = vunpack.c.l.b16 %v2215
    %v2351 = vunpack.c.l.b16 %v2216
    %v2352 = vunpack.c.l.b16 %v2217
    %v2353 = vunpack.c.l.b16 %v2218
    %v2354 = vunpack.c.l.b16 %v2219
    %v2355 = vunpack.c.l.b16 %v2220
    %v2356 = vunpack.c.l.b16 %v2221
    %v2357 = vunpack.c.l.b16 %v2222
    %v2358 = vunpack.c.l.b16 %v2223
    %v2359 = vunpack.c.l.b16 %v2224
    %v2360 = vunpack.c.l.b16 %v2225
    %v2361 = vunpack.c.l.b16 %v2226
    %v2362 = vunpack.c.l.b16 %v2227
    %v2363 = vunpack.c.l.b16 %v2228
    %v2364 = vunpack.c.l.b16 %v2229
    %v2365 = vunpack.c.l.b16 %v2230
    %v2366 = vunpack.c.l.b16 %v2231
    %v2367 = vunpack.c.l.b16 %v2232
    %v2368 = vunpack.c.l.b16 %v2233
    %v2369 = vunpack.c.l.b16 %v2234
    %v2370 = vunpack.c.l.b16 %v2235
    %v2371 = vunpack.c.l.b16 %v2236
    %v2372 = vunpack.c.l.b16 %v2237
    %v2373 = vunpack.c.l.b16 %v2238
    %v2374 = vunpack.c.l.b16 %v2239
    %v2375 = vunpack.c.l.b16 %v2240
    %v2376 = vunpack.c.l.b16 %v2241
    %v2377 = vunpack.c.l.b16 %v2242
    %v2378 = vunpack.c.l.b16 %v2243
    %v2379 = vunpack.c.l.b16 %v2244
    %v2380 = vunpack.c.l.b16 %v2245
    %v2381 = vunpack.c.l.b16 %v2246
    %v2382 = vunpack.c.l.b16 %v2247
    %v2383 = vunpack.c.l.b16 %v2248
    %v2384 = vpack.c.b16 %v2321, %v2320
    %v2385 = vpack.c.b16 %v2323, %v2322
    %v2386 = vpack.c.b16 %v2325, %v2324
    %v2387 = vpack.c.b16 %v2327, %v2326
    %v2388 = vpack.c.b16 %v2329, %v2328
    %v2389 = vpack.c.b16 %v2331, %v2330
    %v2390 = vpack.c.b16 %v2333, %v2332
    %v2391 = vpack.c.b16 %v2335, %v2334
    %v2392 = vpack.c.b16 %v2337, %v2336
    %v2393 = vpack.c.b16 %v2339, %v2338
    %v2394 = vpack.c.b16 %v2341, %v2340
    %v2395 = vpack.c.b16 %v2343, %v2342
    %v2396 = vpack.c.b16 %v2345, %v2344
    %v2397 = vpack.c.b16 %v2347, %v2346
    %v2398 = vpack.c.b16 %v2349, %v2348
    %v2399 = vpack.c.b16 %v2351, %v2350
    %v2400 = vpack.c.b16 %v2353, %v2352
    %v2401 = vpack.c.b16 %v2355, %v2354
    %v2402 = vpack.c.b16 %v2357, %v2356
    %v2403 = vpack.c.b16 %v2359, %v2358
    %v2404 = vpack.c.b16 %v2361, %v2360
    %v2405 = vpack.c.b16 %v2363, %v2362
    %v2406 = vpack.c.b16 %v2365, %v2364
    %v2407 = vpack.c.b16 %v2367, %v2366
    %v2408 = vpack.c.b16 %v2369, %v2368
    %v2409 = vpack.c.b16 %v2371, %v2370
    %v2410 = vpack.c.b16 %v2373, %v2372
    %v2411 = vpack.c.b16 %v2375, %v2374
    %v2412 = vpack.c.b16 %v2377, %v2376
    %v2413 = vpack.c.b16 %v2379, %v2378
    %v2414 = vpack.c.b16 %v2381, %v2380
    %v2415 = vpack.c.b16 %v2383, %v2382
    %2448 = vmatprep.subr.bf16.mxu0 0
    %2449 = vmatpush1.bf16.msra.mxu0 %v2391
    %2450 = vmatprep.subr.bf16.mxu0 0
    %2451 = vmatpush1.bf16.msra.mxu0 %v2390
    %2452 = vmatprep.subr.bf16.mxu0 0
    %2453 = vmatpush1.bf16.msra.mxu0 %v2389
    %2454 = vmatprep.subr.bf16.mxu0 0
    %2455 = vmatpush1.bf16.msra.mxu0 %v2388
    %2456 = vmatprep.subr.bf16.mxu0 0
    %2457 = vmatpush1.bf16.msra.mxu0 %v2387
    %2458 = vmatprep.subr.bf16.mxu0 0
    %2459 = vmatpush1.bf16.msra.mxu0 %v2386
    %2460 = vmatprep.subr.bf16.mxu0 0
    %2461 = vmatpush1.bf16.msra.mxu0 %v2385
    %2462 = vmatprep.subr.bf16.mxu0 0
    %2463 = vmatpush1.bf16.msra.mxu0 %v2384
    %2464 = vmatprep.subr.bf16.mxu0 0
    %2465 = vmatpush2.bf16.msra.mxu0 %v2399
    %2466 = vmatprep.subr.bf16.mxu0 0
    %2467 = vmatpush2.bf16.msra.mxu0 %v2398
    %2468 = vmatprep.subr.bf16.mxu0 0
    %2469 = vmatpush2.bf16.msra.mxu0 %v2397
    %2470 = vmatprep.subr.bf16.mxu0 0
    %2471 = vmatpush2.bf16.msra.mxu0 %v2396
    %2472 = vmatprep.subr.bf16.mxu0 0
    %2473 = vmatpush2.bf16.msra.mxu0 %v2395
    %2474 = vmatprep.subr.bf16.mxu0 0
    %2475 = vmatpush2.bf16.msra.mxu0 %v2394
    %2476 = vmatprep.subr.bf16.mxu0 0
    %2477 = vmatpush2.bf16.msra.mxu0 %v2393
    %2478 = vmatprep.subr.bf16.mxu0 0
    %2479 = vmatpush2.bf16.msra.mxu0 %v2392
    %2480 = vmatprep.mubr.bf16.mxu0 %v2182
    %2481 = vmatmul.mubr.bf16.gmra.mxu0 %v2181
    %v2482 = vpop.f32.mrf.mxu0
    %v2483 = vadd.f32 %v2254, %v2482
    %v2484 = vpop.f32.mrf.mxu0
    %v2485 = vpop.f32.mrf.mxu0
    %v2486 = vadd.f32 %v2254, %v2485
    %v2487 = vpop.f32.mrf.mxu0
    %2488 = vdwg.mxu0
    %2489 = vmatprep.subr.bf16.mxu0 0
    %2490 = vmatpush1.bf16.msra.mxu0 %v2407
    %2491 = vmatprep.subr.bf16.mxu0 0
    %2492 = vmatpush1.bf16.msra.mxu0 %v2406
    %2493 = vmatprep.subr.bf16.mxu0 0
    %2494 = vmatpush1.bf16.msra.mxu0 %v2405
    %2495 = vmatprep.subr.bf16.mxu0 0
    %2496 = vmatpush1.bf16.msra.mxu0 %v2404
    %2497 = vmatprep.subr.bf16.mxu0 0
    %2498 = vmatpush1.bf16.msra.mxu0 %v2403
    %2499 = vmatprep.subr.bf16.mxu0 0
    %2500 = vmatpush1.bf16.msra.mxu0 %v2402
    %2501 = vmatprep.subr.bf16.mxu0 0
    %2502 = vmatpush1.bf16.msra.mxu0 %v2401
    %2503 = vmatprep.subr.bf16.mxu0 0
    %2504 = vmatpush1.bf16.msra.mxu0 %v2400
    %2505 = vmatprep.subr.bf16.mxu0 0
    %2506 = vmatpush2.bf16.msra.mxu0 %v2415
    %2507 = vmatprep.subr.bf16.mxu0 0
    %2508 = vmatpush2.bf16.msra.mxu0 %v2414
    %2509 = vmatprep.subr.bf16.mxu0 0
    %2510 = vmatpush2.bf16.msra.mxu0 %v2413
    %2511 = vmatprep.subr.bf16.mxu0 0
    %2512 = vmatpush2.bf16.msra.mxu0 %v2412
    %2513 = vmatprep.subr.bf16.mxu0 0
    %2514 = vmatpush2.bf16.msra.mxu0 %v2411
    %2515 = vmatprep.subr.bf16.mxu0 0
    %2516 = vmatpush2.bf16.msra.mxu0 %v2410
    %2517 = vmatprep.subr.bf16.mxu0 0
    %2518 = vmatpush2.bf16.msra.mxu0 %v2409
    %2519 = vmatprep.subr.bf16.mxu0 0
    %2520 = vmatpush2.bf16.msra.mxu0 %v2408
    %2521 = vmatprep.mubr.bf16.mxu0 %v2184
    %2522 = vmatmul.mubr.bf16.gmra.mxu0 %v2183
    %v2523 = vpop.f32.mrf.mxu0
    %v2524 = vadd.f32 %v2483, %v2523
    %v2525 = vpop.f32.mrf.mxu0
    %v2526 = vpop.f32.mrf.mxu0
    %v2527 = vadd.f32 %v2486, %v2526
    %v2528 = vpop.f32.mrf.mxu0
    %2529 = vdwg.mxu0
    %v2530 = vadd.f32 %v1806, %v2524
    %v2531 = vadd.f32 %v1807, %v2527
    %v2532 = vld [vmem:[%s13] sm:$0x1]
    %v2533 = vld [vmem:[%s14] sm:$0x1]
    %2534 = vadd.xlane.f32.xlu0 %v2530
    %v2535 = vpop.xlane.xlu0 %2534
    %2536 = vadd.xlane.f32.xlu0 %v2531
    %v2537 = vpop.xlane.xlu0 %2536
    %v2538 = vmul.f32 %v2535, %v157
    %v2539 = vmul.f32 %v2537, %v157
    %v2540 = vsub.f32 %v2530, %v2538
    %v2541 = vsub.f32 %v2531, %v2539
    %v2542 = vmul.f32 %v2540, %v2540
    %v2543 = vmul.f32 %v2541, %v2541
    %2544 = vadd.xlane.f32.xlu0 %v2542
    %v2545 = vpop.xlane.xlu0 %2544
    %2546 = vadd.xlane.f32.xlu0 %v2543
    %v2547 = vpop.xlane.xlu0 %2546
    %v2548 = vmul.f32 %v2545, %v157
    %v2549 = vmul.f32 %v2547, %v157
    %v2550 = vadd.f32 %v2548, 1e-12
    %v2551 = vadd.f32 %v2549, 1e-12
    %v2552 = vrsqrt.pop %v2550
    %v2553 = vrsqrt.pop %v2551
    %v2554 = vmul.f32 %v2540, %v2552
    %v2555 = vmul.f32 %v2541, %v2553
    %v2557 = vlaneseq
    %v2558 = vshrl.u32 %v2557, 7
    %v2559 = vsub.s32 0, %v2558
    %v2560 = vrot.slane %v2532, %v2559
    %v2562 = vmul.f32 %v2554, %v2560
    %v2563 = vmul.f32 %v2555, %v2560
    %v2565 = vlaneseq
    %v2566 = vshrl.u32 %v2565, 7
    %v2567 = vsub.s32 0, %v2566
    %v2568 = vrot.slane %v2533, %v2567
    %v2570 = vadd.f32 %v2562, %v2568
    %v2571 = vadd.f32 %v2563, %v2568
    %s2572 = scalar_lea.vmem [#allocation2], 192
    %v2573 = vld [vmem:[%s2572] sm:$0xff]
    %v2574 = vld [vmem:[%s2572 + $0x8] sm:$0xf]
    %v2575 = vld [vmem:[%s2572 + $0xc] sm:$0xff]
    %v2576 = vld [vmem:[%s2572 + $0x14] sm:$0xf]
    %v2577 = vld [vmem:[%s2572 + $0x18] sm:$0xff]
    %v2578 = vld [vmem:[%s2572 + $0x20] sm:$0xf]
    %v2579 = vld [vmem:[%s2572 + $0x24] sm:$0xff]
    %v2580 = vld [vmem:[%s2572 + $0x2c] sm:$0xf]
    %v2581 = vld [vmem:[%s2572 + $0x30] sm:$0xff]
    %v2582 = vld [vmem:[%s2572 + $0x38] sm:$0xf]
    %v2583 = vld [vmem:[%s2572 + $0x3c] sm:$0xff]
    %v2584 = vld [vmem:[%s2572 + $0x44] sm:$0xf]
    %v2585 = vld [vmem:[%s2572 + $0x48] sm:$0xff]
    %v2586 = vld [vmem:[%s2572 + $0x50] sm:$0xf]
    %v2587 = vld [vmem:[%s2572 + $0x54] sm:$0xff]
    %v2588 = vld [vmem:[%s2572 + $0x5c] sm:$0xf]
    %v2589 = vld [vmem:[%s2572 + $0x60] sm:$0xff]
    %v2590 = vld [vmem:[%s2572 + $0x68] sm:$0xf]
    %v2591 = vld [vmem:[%s2572 + $0x6c] sm:$0xff]
    %v2592 = vld [vmem:[%s2572 + $0x74] sm:$0xf]
    %v2593 = vld [vmem:[%s2572 + $0x78] sm:$0xff]
    %v2594 = vld [vmem:[%s2572 + $0x80] sm:$0xf]
    %v2595 = vld [vmem:[%s2572 + $0x84] sm:$0xff]
    %v2596 = vld [vmem:[%s2572 + $0x8c] sm:$0xf]
    %v2597 = vld [vmem:[%s2572 + $0x90] sm:$0xff]
    %v2598 = vld [vmem:[%s2572 + $0x98] sm:$0xf]
    %v2599 = vld [vmem:[%s2572 + $0x9c] sm:$0xff]
    %v2600 = vld [vmem:[%s2572 + $0xa4] sm:$0xf]
    %v2601 = vld [vmem:[%s2572 + $0xa8] sm:$0xff]
    %v2602 = vld [vmem:[%s2572 + $0xb0] sm:$0xf]
    %v2603 = vld [vmem:[%s2572 + $0xb4] sm:$0xff]
    %v2604 = vld [vmem:[%s2572 + $0xbc] sm:$0xf]
    %s2605 = scalar_lea.vmem %s5, 64
    %v2606 = vld [vmem:[%s2605] sm:$0xf]
    %v2607 = vld [vmem:[%s2605 + $0x4] sm:$0xf]
    %v2608 = vld [vmem:[%s2605 + $0x8] sm:$0xf]
    %v2609 = vld [vmem:[%s2605 + $0xc] sm:$0xf]
    %v2610 = vld [vmem:[%s2605 + $0x10] sm:$0xf]
    %v2611 = vld [vmem:[%s2605 + $0x14] sm:$0xf]
    %v2612 = vld [vmem:[%s2605 + $0x18] sm:$0xf]
    %v2613 = vld [vmem:[%s2605 + $0x1c] sm:$0xf]
    %v2614 = vld [vmem:[%s2605 + $0x20] sm:$0xf]
    %v2615 = vld [vmem:[%s2605 + $0x24] sm:$0xf]
    %v2616 = vld [vmem:[%s2605 + $0x28] sm:$0xf]
    %v2617 = vld [vmem:[%s2605 + $0x2c] sm:$0xf]
    %v2618 = vld [vmem:[%s2605 + $0x30] sm:$0xf]
    %v2619 = vld [vmem:[%s2605 + $0x34] sm:$0xf]
    %v2620 = vld [vmem:[%s2605 + $0x38] sm:$0xf]
    %v2621 = vld [vmem:[%s2605 + $0x3c] sm:$0xf]
    %v2622 = vpack.c.bf16 %v2571, %v2570
    %s2623 = scalar_lea.vmem %s4, 3
    %v2624 = vld [vmem:[%s2623] sm:$0x7]
    %v2626 = vlaneseq
    %v2627 = vshrl.u32 %v2626, 7
    %v2628 = vsub.s32 0, %v2627
    %v2629 = vrot.slane %v2624, %v2628
    %v2630 = vlaneseq
    %v2631 = vshrl.u32 %v2630, 7
    %v2632 = vsub.s32 1, %v2631
    %v2633 = vrot.slane %v2624, %v2632
    %v2634 = vlaneseq
    %v2635 = vshrl.u32 %v2634, 7
    %v2636 = vsub.s32 2, %v2635
    %v2637 = vrot.slane %v2624, %v2636
    %v2673 = vunpack.c.l.b16 %v2573
    %v2674 = vunpack.c.h.b16 %v2573
    %v2675 = vunpack.c.l.b16 %v2574
    %v2676 = vunpack.c.l.b16 %v2575
    %v2677 = vunpack.c.h.b16 %v2575
    %v2678 = vunpack.c.l.b16 %v2576
    %v2679 = vunpack.c.l.b16 %v2577
    %v2680 = vunpack.c.h.b16 %v2577
    %v2681 = vunpack.c.l.b16 %v2578
    %v2682 = vunpack.c.l.b16 %v2579
    %v2683 = vunpack.c.h.b16 %v2579
    %v2684 = vunpack.c.l.b16 %v2580
    %v2685 = vunpack.c.l.b16 %v2581
    %v2686 = vunpack.c.h.b16 %v2581
    %v2687 = vunpack.c.l.b16 %v2582
    %v2688 = vunpack.c.l.b16 %v2583
    %v2689 = vunpack.c.h.b16 %v2583
    %v2690 = vunpack.c.l.b16 %v2584
    %v2691 = vunpack.c.l.b16 %v2585
    %v2692 = vunpack.c.h.b16 %v2585
    %v2693 = vunpack.c.l.b16 %v2586
    %v2694 = vunpack.c.l.b16 %v2587
    %v2695 = vunpack.c.h.b16 %v2587
    %v2696 = vunpack.c.l.b16 %v2588
    %v2697 = vunpack.c.l.b16 %v2589
    %v2698 = vunpack.c.h.b16 %v2589
    %v2699 = vunpack.c.l.b16 %v2590
    %v2700 = vunpack.c.l.b16 %v2591
    %v2701 = vunpack.c.h.b16 %v2591
    %v2702 = vunpack.c.l.b16 %v2592
    %v2703 = vunpack.c.l.b16 %v2593
    %v2704 = vunpack.c.h.b16 %v2593
    %v2705 = vunpack.c.l.b16 %v2594
    %v2706 = vunpack.c.l.b16 %v2595
    %v2707 = vunpack.c.h.b16 %v2595
    %v2708 = vunpack.c.l.b16 %v2596
    %v2709 = vunpack.c.l.b16 %v2597
    %v2710 = vunpack.c.h.b16 %v2597
    %v2711 = vunpack.c.l.b16 %v2598
    %v2712 = vunpack.c.l.b16 %v2599
    %v2713 = vunpack.c.h.b16 %v2599
    %v2714 = vunpack.c.l.b16 %v2600
    %v2715 = vunpack.c.l.b16 %v2601
    %v2716 = vunpack.c.h.b16 %v2601
    %v2717 = vunpack.c.l.b16 %v2602
    %v2718 = vunpack.c.l.b16 %v2603
    %v2719 = vunpack.c.h.b16 %v2603
    %v2720 = vunpack.c.l.b16 %v2604
    %v2721 = vpack.c.b16 %v2676, %v2673
    %v2722 = vpack.c.b16 %v2677, %v2674
    %v2723 = vpack.c.b16 %v2678, %v2675
    %v2724 = vpack.c.b16 %v2682, %v2679
    %v2725 = vpack.c.b16 %v2683, %v2680
    %v2726 = vpack.c.b16 %v2684, %v2681
    %v2727 = vpack.c.b16 %v2688, %v2685
    %v2728 = vpack.c.b16 %v2689, %v2686
    %v2729 = vpack.c.b16 %v2690, %v2687
    %v2730 = vpack.c.b16 %v2694, %v2691
    %v2731 = vpack.c.b16 %v2695, %v2692
    %v2732 = vpack.c.b16 %v2696, %v2693
    %v2733 = vpack.c.b16 %v2700, %v2697
    %v2734 = vpack.c.b16 %v2701, %v2698
    %v2735 = vpack.c.b16 %v2702, %v2699
    %v2736 = vpack.c.b16 %v2706, %v2703
    %v2737 = vpack.c.b16 %v2707, %v2704
    %v2738 = vpack.c.b16 %v2708, %v2705
    %v2739 = vpack.c.b16 %v2712, %v2709
    %v2740 = vpack.c.b16 %v2713, %v2710
    %v2741 = vpack.c.b16 %v2714, %v2711
    %v2742 = vpack.c.b16 %v2718, %v2715
    %v2743 = vpack.c.b16 %v2719, %v2716
    %v2744 = vpack.c.b16 %v2720, %v2717
    %2769 = vmatprep.subr.bf16.mxu0 %v2743
    %2770 = vmatpush1.bf16.msra.mxu0 %v2742
    %2771 = vmatprep.subr.bf16.mxu0 %v2740
    %2772 = vmatpush1.bf16.msra.mxu0 %v2739
    %2773 = vmatprep.subr.bf16.mxu0 %v2737
    %2774 = vmatpush1.bf16.msra.mxu0 %v2736
    %2775 = vmatprep.subr.bf16.mxu0 %v2734
    %2776 = vmatpush1.bf16.msra.mxu0 %v2733
    %2777 = vmatprep.subr.bf16.mxu0 %v2731
    %2778 = vmatpush1.bf16.msra.mxu0 %v2730
    %2779 = vmatprep.subr.bf16.mxu0 %v2728
    %2780 = vmatpush1.bf16.msra.mxu0 %v2727
    %2781 = vmatprep.subr.bf16.mxu0 %v2725
    %2782 = vmatpush1.bf16.msra.mxu0 %v2724
    %2783 = vmatprep.subr.bf16.mxu0 %v2722
    %2784 = vmatpush1.bf16.msra.mxu0 %v2721
    %2785 = vmatprep.subr.bf16.mxu0 0
    %2786 = vmatpush2.bf16.msra.mxu0 0
    %2787 = vmatprep.subr.bf16.mxu0 0
    %2788 = vmatpush2.bf16.msra.mxu0 0
    %2789 = vmatprep.subr.bf16.mxu0 0
    %2790 = vmatpush2.bf16.msra.mxu0 0
    %2791 = vmatprep.subr.bf16.mxu0 0
    %2792 = vmatpush2.bf16.msra.mxu0 0
    %2793 = vmatprep.subr.bf16.mxu0 0
    %2794 = vmatpush2.bf16.msra.mxu0 0
    %2795 = vmatprep.subr.bf16.mxu0 0
    %2796 = vmatpush2.bf16.msra.mxu0 0
    %2797 = vmatprep.subr.bf16.mxu0 0
    %2798 = vmatpush2.bf16.msra.mxu0 0
    %2799 = vmatprep.subr.bf16.mxu0 0
    %2800 = vmatpush2.bf16.msra.mxu0 0
    %2801 = vmatprep.mubr.bf16.mxu0 0
    %2802 = vmatmul.mubr.bf16.gmra.mxu0 %v2622
    %v2803 = vpop.f32.mrf.mxu0
    %v2804 = vadd.f32 %v2629, %v2803
    %v2805 = vpop.f32.mrf.mxu0
    %v2806 = vadd.f32 %v2633, %v2805
    %v2807 = vpop.f32.mrf.mxu0
    %v2808 = vadd.f32 %v2629, %v2807
    %v2809 = vpop.f32.mrf.mxu0
    %v2810 = vadd.f32 %v2633, %v2809
    %2811 = vdwg.mxu0
    %2812 = vmatprep.subr.bf16.mxu0 0
    %2813 = vmatpush1.bf16.msra.mxu0 %v2744
    %2814 = vmatprep.subr.bf16.mxu0 0
    %2815 = vmatpush1.bf16.msra.mxu0 %v2741
    %2816 = vmatprep.subr.bf16.mxu0 0
    %2817 = vmatpush1.bf16.msra.mxu0 %v2738
    %2818 = vmatprep.subr.bf16.mxu0 0
    %2819 = vmatpush1.bf16.msra.mxu0 %v2735
    %2820 = vmatprep.subr.bf16.mxu0 0
    %2821 = vmatpush1.bf16.msra.mxu0 %v2732
    %2822 = vmatprep.subr.bf16.mxu0 0
    %2823 = vmatpush1.bf16.msra.mxu0 %v2729
    %2824 = vmatprep.subr.bf16.mxu0 0
    %2825 = vmatpush1.bf16.msra.mxu0 %v2726
    %2826 = vmatprep.subr.bf16.mxu0 0
    %2827 = vmatpush1.bf16.msra.mxu0 %v2723
    %2828 = vmatprep.subr.bf16.mxu0 0
    %2829 = vmatpush2.bf16.msra.mxu0 0
    %2830 = vmatprep.subr.bf16.mxu0 0
    %2831 = vmatpush2.bf16.msra.mxu0 0
    %2832 = vmatprep.subr.bf16.mxu0 0
    %2833 = vmatpush2.bf16.msra.mxu0 0
    %2834 = vmatprep.subr.bf16.mxu0 0
    %2835 = vmatpush2.bf16.msra.mxu0 0
    %2836 = vmatprep.subr.bf16.mxu0 0
    %2837 = vmatpush2.bf16.msra.mxu0 0
    %2838 = vmatprep.subr.bf16.mxu0 0
    %2839 = vmatpush2.bf16.msra.mxu0 0
    %2840 = vmatprep.subr.bf16.mxu0 0
    %2841 = vmatpush2.bf16.msra.mxu0 0
    %2842 = vmatprep.subr.bf16.mxu0 0
    %2843 = vmatpush2.bf16.msra.mxu0 0
    %2844 = vmatprep.mubr.bf16.mxu0 0
    %2845 = vmatmul.mubr.bf16.gmra.mxu0 %v2622
    %v2846 = vpop.f32.mrf.mxu0
    %v2847 = vadd.f32 %v2637, %v2846
    %v2848 = vpop.f32.mrf.mxu0
    %v2849 = vpop.f32.mrf.mxu0
    %v2850 = vadd.f32 %v2637, %v2849
    %v2851 = vpop.f32.mrf.mxu0
    %2852 = vdwg.mxu0
    %v2853 = vpack.c.bf16 %v2804, %v2804
    %v2854 = vpack.c.bf16 %v2806, %v2806
    %v2855 = vpack.c.bf16 %v2847, %v2847
    %v2857 = vsel %vm473, %v2853, 0
    %v2860 = vsel %vm473, %v2854, 0
    %2862 = vmatprep.subr.bf16.mxu0 0
    %2863 = vmatpush1.bf16.xpose.msra.mxu0 0
    %2864 = vmatprep.subr.bf16.mxu0 0
    %2865 = vmatpush1.bf16.xpose.msra.mxu0 0
    %2866 = vmatprep.subr.bf16.mxu0 0
    %2867 = vmatpush1.bf16.xpose.msra.mxu0 0
    %2868 = vmatprep.subr.bf16.mxu0 0
    %2869 = vmatpush1.bf16.xpose.msra.mxu0 0
    %2870 = vmatprep.subr.bf16.mxu0 0
    %2871 = vmatpush1.bf16.xpose.msra.mxu0 0
    %2872 = vmatprep.subr.bf16.mxu0 0
    %2873 = vmatpush1.bf16.xpose.msra.mxu0 0
    %2874 = vmatprep.subr.bf16.mxu0 0
    %2875 = vmatpush1.bf16.xpose.msra.mxu0 0
    %2876 = vmatprep.subr.bf16.mxu0 0
    %2877 = vmatpush1.bf16.xpose.msra.mxu0 %v2860
    %2878 = vmatprep.subr.bf16.mxu0 0
    %2879 = vmatpush2.bf16.xpose.msra.mxu0 0
    %2880 = vmatprep.subr.bf16.mxu0 0
    %2881 = vmatpush2.bf16.xpose.msra.mxu0 0
    %2882 = vmatprep.subr.bf16.mxu0 0
    %2883 = vmatpush2.bf16.xpose.msra.mxu0 0
    %2884 = vmatprep.subr.bf16.mxu0 0
    %2885 = vmatpush2.bf16.xpose.msra.mxu0 0
    %2886 = vmatprep.subr.bf16.mxu0 0
    %2887 = vmatpush2.bf16.xpose.msra.mxu0 0
    %2888 = vmatprep.subr.bf16.mxu0 0
    %2889 = vmatpush2.bf16.xpose.msra.mxu0 0
    %2890 = vmatprep.subr.bf16.mxu0 0
    %2891 = vmatpush2.bf16.xpose.msra.mxu0 0
    %2892 = vmatprep.subr.bf16.mxu0 0
    %2893 = vmatpush2.bf16.xpose.msra.mxu0 0
    %2894 = vmatprep.mubr.bf16.mxu0 0
    %2895 = vmatmul.mubr.bf16.gmra.mxu0 %v2857
    %v2896 = vpop.f32.mrf.mxu0
    %v2897 = vadd.f32 0.0, %v2896
    %v2898 = vpop.f32.mrf.mxu0
    %v2899 = vpop.f32.mrf.mxu0
    %v2900 = vpop.f32.mrf.mxu0
    %2901 = vdwg.mxu0
    %v2902 = vsel %vm520, %v2897, -inf
    %2903 = vmax.xlane.f32.xlu0 %v2902
    %v2904 = vpop.xlane.xlu0 %2903
    %v2905 = vsub.f32 %v2897, %v2904
    %v2906 = vmul.f32 %v2905, 1.442695
    %v2907 = vpow.pop %v2906
    %v2908 = vsel %vm520, %v2907, 0.0
    %2909 = vadd.xlane.f32.xlu0 %v2908
    %v2910 = vpop.xlane.xlu0 %2909
    %v2911 = vrcp.pop %v2910
    %v2912 = vmul.f32 %v2907, %v2911
    %v2913 = vpack.c.bf16 %v2912, %v2912
    %v2915 = vsel %vm520, %v2913, 0
    %v2918 = vsel %vm536, %v2855, 0
    %2920 = vmatprep.subr.bf16.mxu0 0
    %2921 = vmatpush1.bf16.msra.mxu0 0
    %2922 = vmatprep.subr.bf16.mxu0 0
    %2923 = vmatpush1.bf16.msra.mxu0 0
    %2924 = vmatprep.subr.bf16.mxu0 0
    %2925 = vmatpush1.bf16.msra.mxu0 0
    %2926 = vmatprep.subr.bf16.mxu0 0
    %2927 = vmatpush1.bf16.msra.mxu0 0
    %2928 = vmatprep.subr.bf16.mxu0 0
    %2929 = vmatpush1.bf16.msra.mxu0 0
    %2930 = vmatprep.subr.bf16.mxu0 0
    %2931 = vmatpush1.bf16.msra.mxu0 0
    %2932 = vmatprep.subr.bf16.mxu0 0
    %2933 = vmatpush1.bf16.msra.mxu0 0
    %2934 = vmatprep.subr.bf16.mxu0 0
    %2935 = vmatpush1.bf16.msra.mxu0 %v2918
    %2936 = vmatprep.subr.bf16.mxu0 0
    %2937 = vmatpush2.bf16.msra.mxu0 0
    %2938 = vmatprep.subr.bf16.mxu0 0
    %2939 = vmatpush2.bf16.msra.mxu0 0
    %2940 = vmatprep.subr.bf16.mxu0 0
    %2941 = vmatpush2.bf16.msra.mxu0 0
    %2942 = vmatprep.subr.bf16.mxu0 0
    %2943 = vmatpush2.bf16.msra.mxu0 0
    %2944 = vmatprep.subr.bf16.mxu0 0
    %2945 = vmatpush2.bf16.msra.mxu0 0
    %2946 = vmatprep.subr.bf16.mxu0 0
    %2947 = vmatpush2.bf16.msra.mxu0 0
    %2948 = vmatprep.subr.bf16.mxu0 0
    %2949 = vmatpush2.bf16.msra.mxu0 0
    %2950 = vmatprep.subr.bf16.mxu0 0
    %2951 = vmatpush2.bf16.msra.mxu0 0
    %2952 = vmatprep.mubr.bf16.mxu0 0
    %2953 = vmatmul.mubr.bf16.gmra.mxu0 %v2915
    %v2954 = vpop.f32.mrf.mxu0
    %v2955 = vadd.f32 0.0, %v2954
    %v2956 = vpop.f32.mrf.mxu0
    %v2957 = vpop.f32.mrf.mxu0
    %v2958 = vpop.f32.mrf.mxu0
    %2959 = vdwg.mxu0
    %v2960 = vpack.c.bf16 %v2955, %v2955
    %2962 = vrot.lane.b32.xlu0 %v2853, 96
    %v2963 = vpop.permute.xlu0 %2962
    %2965 = vrot.lane.b32.xlu0 %v2854, 96
    %v2966 = vpop.permute.xlu0 %2965
    %v2968 = vsel %vm473, %v2963, 0
    %v2971 = vsel %vm473, %v2966, 0
    %2973 = vmatprep.subr.bf16.mxu0 0
    %2974 = vmatpush1.bf16.xpose.msra.mxu0 0
    %2975 = vmatprep.subr.bf16.mxu0 0
    %2976 = vmatpush1.bf16.xpose.msra.mxu0 0
    %2977 = vmatprep.subr.bf16.mxu0 0
    %2978 = vmatpush1.bf16.xpose.msra.mxu0 0
    %2979 = vmatprep.subr.bf16.mxu0 0
    %2980 = vmatpush1.bf16.xpose.msra.mxu0 0
    %2981 = vmatprep.subr.bf16.mxu0 0
    %2982 = vmatpush1.bf16.xpose.msra.mxu0 0
    %2983 = vmatprep.subr.bf16.mxu0 0
    %2984 = vmatpush1.bf16.xpose.msra.mxu0 0
    %2985 = vmatprep.subr.bf16.mxu0 0
    %2986 = vmatpush1.bf16.xpose.msra.mxu0 0
    %2987 = vmatprep.subr.bf16.mxu0 0
    %2988 = vmatpush1.bf16.xpose.msra.mxu0 %v2971
    %2989 = vmatprep.subr.bf16.mxu0 0
    %2990 = vmatpush2.bf16.xpose.msra.mxu0 0
    %2991 = vmatprep.subr.bf16.mxu0 0
    %2992 = vmatpush2.bf16.xpose.msra.mxu0 0
    %2993 = vmatprep.subr.bf16.mxu0 0
    %2994 = vmatpush2.bf16.xpose.msra.mxu0 0
    %2995 = vmatprep.subr.bf16.mxu0 0
    %2996 = vmatpush2.bf16.xpose.msra.mxu0 0
    %2997 = vmatprep.subr.bf16.mxu0 0
    %2998 = vmatpush2.bf16.xpose.msra.mxu0 0
    %2999 = vmatprep.subr.bf16.mxu0 0
    %3000 = vmatpush2.bf16.xpose.msra.mxu0 0
    %3001 = vmatprep.subr.bf16.mxu0 0
    %3002 = vmatpush2.bf16.xpose.msra.mxu0 0
    %3003 = vmatprep.subr.bf16.mxu0 0
    %3004 = vmatpush2.bf16.xpose.msra.mxu0 0
    %3005 = vmatprep.mubr.bf16.mxu0 0
    %3006 = vmatmul.mubr.bf16.gmra.mxu0 %v2968
    %v3007 = vpop.f32.mrf.mxu0
    %v3008 = vadd.f32 0.0, %v3007
    %v3009 = vpop.f32.mrf.mxu0
    %v3010 = vpop.f32.mrf.mxu0
    %v3011 = vpop.f32.mrf.mxu0
    %3012 = vdwg.mxu0
    %v3013 = vsel %vm520, %v3008, -inf
    %3014 = vmax.xlane.f32.xlu0 %v3013
    %v3015 = vpop.xlane.xlu0 %3014
    %v3016 = vsub.f32 %v3008, %v3015
    %v3017 = vmul.f32 %v3016, 1.442695
    %v3018 = vpow.pop %v3017
    %v3019 = vsel %vm520, %v3018, 0.0
    %3020 = vadd.xlane.f32.xlu0 %v3019
    %v3021 = vpop.xlane.xlu0 %3020
    %v3022 = vrcp.pop %v3021
    %v3023 = vmul.f32 %v3018, %v3022
    %v3024 = vpack.c.bf16 %v3023, %v3023
    %3026 = vrot.lane.b32.xlu0 %v2855, 96
    %v3027 = vpop.permute.xlu0 %3026
    %v3029 = vsel %vm520, %v3024, 0
    %v3032 = vsel %vm536, %v3027, 0
    %3034 = vmatprep.subr.bf16.mxu0 0
    %3035 = vmatpush1.bf16.msra.mxu0 0
    %3036 = vmatprep.subr.bf16.mxu0 0
    %3037 = vmatpush1.bf16.msra.mxu0 0
    %3038 = vmatprep.subr.bf16.mxu0 0
    %3039 = vmatpush1.bf16.msra.mxu0 0
    %3040 = vmatprep.subr.bf16.mxu0 0
    %3041 = vmatpush1.bf16.msra.mxu0 0
    %3042 = vmatprep.subr.bf16.mxu0 0
    %3043 = vmatpush1.bf16.msra.mxu0 0
    %3044 = vmatprep.subr.bf16.mxu0 0
    %3045 = vmatpush1.bf16.msra.mxu0 0
    %3046 = vmatprep.subr.bf16.mxu0 0
    %3047 = vmatpush1.bf16.msra.mxu0 0
    %3048 = vmatprep.subr.bf16.mxu0 0
    %3049 = vmatpush1.bf16.msra.mxu0 %v3032
    %3050 = vmatprep.subr.bf16.mxu0 0
    %3051 = vmatpush2.bf16.msra.mxu0 0
    %3052 = vmatprep.subr.bf16.mxu0 0
    %3053 = vmatpush2.bf16.msra.mxu0 0
    %3054 = vmatprep.subr.bf16.mxu0 0
    %3055 = vmatpush2.bf16.msra.mxu0 0
    %3056 = vmatprep.subr.bf16.mxu0 0
    %3057 = vmatpush2.bf16.msra.mxu0 0
    %3058 = vmatprep.subr.bf16.mxu0 0
    %3059 = vmatpush2.bf16.msra.mxu0 0
    %3060 = vmatprep.subr.bf16.mxu0 0
    %3061 = vmatpush2.bf16.msra.mxu0 0
    %3062 = vmatprep.subr.bf16.mxu0 0
    %3063 = vmatpush2.bf16.msra.mxu0 0
    %3064 = vmatprep.subr.bf16.mxu0 0
    %3065 = vmatpush2.bf16.msra.mxu0 0
    %3066 = vmatprep.mubr.bf16.mxu0 0
    %3067 = vmatmul.mubr.bf16.gmra.mxu0 %v3029
    %v3068 = vpop.f32.mrf.mxu0
    %v3069 = vadd.f32 0.0, %v3068
    %v3070 = vpop.f32.mrf.mxu0
    %v3071 = vpop.f32.mrf.mxu0
    %v3072 = vpop.f32.mrf.mxu0
    %3073 = vdwg.mxu0
    %v3074 = vpack.c.bf16 %v3069, %v3069
    %v3079 = vunpack.c.l.b16 %v2610
    %v3080 = vunpack.c.l.b16 %v2611
    %v3081 = vunpack.c.l.b16 %v2612
    %v3082 = vunpack.c.l.b16 %v2613
    %v3083 = vpack.c.b16 %v3080, %v3079
    %v3084 = vpack.c.b16 %v3082, %v3081
    %v3088 = vsel %vm473, %v3074, 0
    %3090 = vmatprep.subr.bf16.mxu0 0
    %3091 = vmatpush1.bf16.msra.mxu0 0
    %3092 = vmatprep.subr.bf16.mxu0 0
    %3093 = vmatpush1.bf16.msra.mxu0 0
    %3094 = vmatprep.subr.bf16.mxu0 0
    %3095 = vmatpush1.bf16.msra.mxu0 0
    %3096 = vmatprep.subr.bf16.mxu0 0
    %3097 = vmatpush1.bf16.msra.mxu0 0
    %3098 = vmatprep.subr.bf16.mxu0 0
    %3099 = vmatpush1.bf16.msra.mxu0 0
    %3100 = vmatprep.subr.bf16.mxu0 0
    %3101 = vmatpush1.bf16.msra.mxu0 0
    %3102 = vmatprep.subr.bf16.mxu0 0
    %3103 = vmatpush1.bf16.msra.mxu0 %v3084
    %3104 = vmatprep.subr.bf16.mxu0 0
    %3105 = vmatpush1.bf16.msra.mxu0 %v3083
    %3106 = vmatprep.subr.bf16.mxu0 0
    %3107 = vmatpush2.bf16.msra.mxu0 0
    %3108 = vmatprep.subr.bf16.mxu0 0
    %3109 = vmatpush2.bf16.msra.mxu0 0
    %3110 = vmatprep.subr.bf16.mxu0 0
    %3111 = vmatpush2.bf16.msra.mxu0 0
    %3112 = vmatprep.subr.bf16.mxu0 0
    %3113 = vmatpush2.bf16.msra.mxu0 0
    %3114 = vmatprep.subr.bf16.mxu0 0
    %3115 = vmatpush2.bf16.msra.mxu0 0
    %3116 = vmatprep.subr.bf16.mxu0 0
    %3117 = vmatpush2.bf16.msra.mxu0 0
    %3118 = vmatprep.subr.bf16.mxu0 0
    %3119 = vmatpush2.bf16.msra.mxu0 0
    %3120 = vmatprep.subr.bf16.mxu0 0
    %3121 = vmatpush2.bf16.msra.mxu0 0
    %3122 = vmatprep.mubr.bf16.mxu0 0
    %3123 = vmatmul.mubr.bf16.gmra.mxu0 %v3088
    %v3124 = vpop.f32.mrf.mxu0
    %v3125 = vadd.f32 0.0, %v3124
    %v3126 = vpop.f32.mrf.mxu0
    %v3127 = vpop.f32.mrf.mxu0
    %v3128 = vpop.f32.mrf.mxu0
    %3129 = vdwg.mxu0
    %v3134 = vunpack.c.l.b16 %v2606
    %v3135 = vunpack.c.l.b16 %v2607
    %v3136 = vunpack.c.l.b16 %v2608
    %v3137 = vunpack.c.l.b16 %v2609
    %v3138 = vpack.c.b16 %v3135, %v3134
    %v3139 = vpack.c.b16 %v3137, %v3136
    %v3143 = vsel %vm473, %v2960, 0
    %3145 = vmatprep.subr.bf16.mxu0 0
    %3146 = vmatpush1.bf16.msra.mxu0 0
    %3147 = vmatprep.subr.bf16.mxu0 0
    %3148 = vmatpush1.bf16.msra.mxu0 0
    %3149 = vmatprep.subr.bf16.mxu0 0
    %3150 = vmatpush1.bf16.msra.mxu0 0
    %3151 = vmatprep.subr.bf16.mxu0 0
    %3152 = vmatpush1.bf16.msra.mxu0 0
    %3153 = vmatprep.subr.bf16.mxu0 0
    %3154 = vmatpush1.bf16.msra.mxu0 0
    %3155 = vmatprep.subr.bf16.mxu0 0
    %3156 = vmatpush1.bf16.msra.mxu0 0
    %3157 = vmatprep.subr.bf16.mxu0 0
    %3158 = vmatpush1.bf16.msra.mxu0 %v3139
    %3159 = vmatprep.subr.bf16.mxu0 0
    %3160 = vmatpush1.bf16.msra.mxu0 %v3138
    %3161 = vmatprep.subr.bf16.mxu0 0
    %3162 = vmatpush2.bf16.msra.mxu0 0
    %3163 = vmatprep.subr.bf16.mxu0 0
    %3164 = vmatpush2.bf16.msra.mxu0 0
    %3165 = vmatprep.subr.bf16.mxu0 0
    %3166 = vmatpush2.bf16.msra.mxu0 0
    %3167 = vmatprep.subr.bf16.mxu0 0
    %3168 = vmatpush2.bf16.msra.mxu0 0
    %3169 = vmatprep.subr.bf16.mxu0 0
    %3170 = vmatpush2.bf16.msra.mxu0 0
    %3171 = vmatprep.subr.bf16.mxu0 0
    %3172 = vmatpush2.bf16.msra.mxu0 0
    %3173 = vmatprep.subr.bf16.mxu0 0
    %3174 = vmatpush2.bf16.msra.mxu0 0
    %3175 = vmatprep.subr.bf16.mxu0 0
    %3176 = vmatpush2.bf16.msra.mxu0 0
    %3177 = vmatprep.mubr.bf16.mxu0 0
    %3178 = vmatmul.mubr.bf16.gmra.mxu0 %v3143
    %v3179 = vpop.f32.mrf.mxu0
    %v3180 = vadd.f32 %v3125, %v3179
    %v3181 = vpop.f32.mrf.mxu0
    %v3182 = vpop.f32.mrf.mxu0
    %v3183 = vpop.f32.mrf.mxu0
    %3184 = vdwg.mxu0
    %3185 = vrot.lane.b32.xlu0 %v2853, 64
    %v3186 = vpop.permute.xlu0 %3185
    %3187 = vrot.lane.b32.xlu0 %v2854, 64
    %v3188 = vpop.permute.xlu0 %3187
    %v3190 = vsel %vm473, %v3186, 0
    %v3193 = vsel %vm473, %v3188, 0
    %3195 = vmatprep.subr.bf16.mxu0 0
    %3196 = vmatpush1.bf16.xpose.msra.mxu0 0
    %3197 = vmatprep.subr.bf16.mxu0 0
    %3198 = vmatpush1.bf16.xpose.msra.mxu0 0
    %3199 = vmatprep.subr.bf16.mxu0 0
    %3200 = vmatpush1.bf16.xpose.msra.mxu0 0
    %3201 = vmatprep.subr.bf16.mxu0 0
    %3202 = vmatpush1.bf16.xpose.msra.mxu0 0
    %3203 = vmatprep.subr.bf16.mxu0 0
    %3204 = vmatpush1.bf16.xpose.msra.mxu0 0
    %3205 = vmatprep.subr.bf16.mxu0 0
    %3206 = vmatpush1.bf16.xpose.msra.mxu0 0
    %3207 = vmatprep.subr.bf16.mxu0 0
    %3208 = vmatpush1.bf16.xpose.msra.mxu0 0
    %3209 = vmatprep.subr.bf16.mxu0 0
    %3210 = vmatpush1.bf16.xpose.msra.mxu0 %v3193
    %3211 = vmatprep.subr.bf16.mxu0 0
    %3212 = vmatpush2.bf16.xpose.msra.mxu0 0
    %3213 = vmatprep.subr.bf16.mxu0 0
    %3214 = vmatpush2.bf16.xpose.msra.mxu0 0
    %3215 = vmatprep.subr.bf16.mxu0 0
    %3216 = vmatpush2.bf16.xpose.msra.mxu0 0
    %3217 = vmatprep.subr.bf16.mxu0 0
    %3218 = vmatpush2.bf16.xpose.msra.mxu0 0
    %3219 = vmatprep.subr.bf16.mxu0 0
    %3220 = vmatpush2.bf16.xpose.msra.mxu0 0
    %3221 = vmatprep.subr.bf16.mxu0 0
    %3222 = vmatpush2.bf16.xpose.msra.mxu0 0
    %3223 = vmatprep.subr.bf16.mxu0 0
    %3224 = vmatpush2.bf16.xpose.msra.mxu0 0
    %3225 = vmatprep.subr.bf16.mxu0 0
    %3226 = vmatpush2.bf16.xpose.msra.mxu0 0
    %3227 = vmatprep.mubr.bf16.mxu0 0
    %3228 = vmatmul.mubr.bf16.gmra.mxu0 %v3190
    %v3229 = vpop.f32.mrf.mxu0
    %v3230 = vadd.f32 0.0, %v3229
    %v3231 = vpop.f32.mrf.mxu0
    %v3232 = vpop.f32.mrf.mxu0
    %v3233 = vpop.f32.mrf.mxu0
    %3234 = vdwg.mxu0
    %v3235 = vsel %vm520, %v3230, -inf
    %3236 = vmax.xlane.f32.xlu0 %v3235
    %v3237 = vpop.xlane.xlu0 %3236
    %v3238 = vsub.f32 %v3230, %v3237
    %v3239 = vmul.f32 %v3238, 1.442695
    %v3240 = vpow.pop %v3239
    %v3241 = vsel %vm520, %v3240, 0.0
    %3242 = vadd.xlane.f32.xlu0 %v3241
    %v3243 = vpop.xlane.xlu0 %3242
    %v3244 = vrcp.pop %v3243
    %v3245 = vmul.f32 %v3240, %v3244
    %v3246 = vpack.c.bf16 %v3245, %v3245
    %3247 = vrot.lane.b32.xlu0 %v2855, 64
    %v3248 = vpop.permute.xlu0 %3247
    %v3250 = vsel %vm520, %v3246, 0
    %v3253 = vsel %vm536, %v3248, 0
    %3255 = vmatprep.subr.bf16.mxu0 0
    %3256 = vmatpush1.bf16.msra.mxu0 0
    %3257 = vmatprep.subr.bf16.mxu0 0
    %3258 = vmatpush1.bf16.msra.mxu0 0
    %3259 = vmatprep.subr.bf16.mxu0 0
    %3260 = vmatpush1.bf16.msra.mxu0 0
    %3261 = vmatprep.subr.bf16.mxu0 0
    %3262 = vmatpush1.bf16.msra.mxu0 0
    %3263 = vmatprep.subr.bf16.mxu0 0
    %3264 = vmatpush1.bf16.msra.mxu0 0
    %3265 = vmatprep.subr.bf16.mxu0 0
    %3266 = vmatpush1.bf16.msra.mxu0 0
    %3267 = vmatprep.subr.bf16.mxu0 0
    %3268 = vmatpush1.bf16.msra.mxu0 0
    %3269 = vmatprep.subr.bf16.mxu0 0
    %3270 = vmatpush1.bf16.msra.mxu0 %v3253
    %3271 = vmatprep.subr.bf16.mxu0 0
    %3272 = vmatpush2.bf16.msra.mxu0 0
    %3273 = vmatprep.subr.bf16.mxu0 0
    %3274 = vmatpush2.bf16.msra.mxu0 0
    %3275 = vmatprep.subr.bf16.mxu0 0
    %3276 = vmatpush2.bf16.msra.mxu0 0
    %3277 = vmatprep.subr.bf16.mxu0 0
    %3278 = vmatpush2.bf16.msra.mxu0 0
    %3279 = vmatprep.subr.bf16.mxu0 0
    %3280 = vmatpush2.bf16.msra.mxu0 0
    %3281 = vmatprep.subr.bf16.mxu0 0
    %3282 = vmatpush2.bf16.msra.mxu0 0
    %3283 = vmatprep.subr.bf16.mxu0 0
    %3284 = vmatpush2.bf16.msra.mxu0 0
    %3285 = vmatprep.subr.bf16.mxu0 0
    %3286 = vmatpush2.bf16.msra.mxu0 0
    %3287 = vmatprep.mubr.bf16.mxu0 0
    %3288 = vmatmul.mubr.bf16.gmra.mxu0 %v3250
    %v3289 = vpop.f32.mrf.mxu0
    %v3290 = vadd.f32 0.0, %v3289
    %v3291 = vpop.f32.mrf.mxu0
    %v3292 = vpop.f32.mrf.mxu0
    %v3293 = vpop.f32.mrf.mxu0
    %3294 = vdwg.mxu0
    %v3295 = vpack.c.bf16 %v3290, %v3290
    %v3300 = vunpack.c.l.b16 %v2614
    %v3301 = vunpack.c.l.b16 %v2615
    %v3302 = vunpack.c.l.b16 %v2616
    %v3303 = vunpack.c.l.b16 %v2617
    %v3304 = vpack.c.b16 %v3301, %v3300
    %v3305 = vpack.c.b16 %v3303, %v3302
    %v3309 = vsel %vm473, %v3295, 0
    %3311 = vmatprep.subr.bf16.mxu0 0
    %3312 = vmatpush1.bf16.msra.mxu0 0
    %3313 = vmatprep.subr.bf16.mxu0 0
    %3314 = vmatpush1.bf16.msra.mxu0 0
    %3315 = vmatprep.subr.bf16.mxu0 0
    %3316 = vmatpush1.bf16.msra.mxu0 0
    %3317 = vmatprep.subr.bf16.mxu0 0
    %3318 = vmatpush1.bf16.msra.mxu0 0
    %3319 = vmatprep.subr.bf16.mxu0 0
    %3320 = vmatpush1.bf16.msra.mxu0 0
    %3321 = vmatprep.subr.bf16.mxu0 0
    %3322 = vmatpush1.bf16.msra.mxu0 0
    %3323 = vmatprep.subr.bf16.mxu0 0
    %3324 = vmatpush1.bf16.msra.mxu0 %v3305
    %3325 = vmatprep.subr.bf16.mxu0 0
    %3326 = vmatpush1.bf16.msra.mxu0 %v3304
    %3327 = vmatprep.subr.bf16.mxu0 0
    %3328 = vmatpush2.bf16.msra.mxu0 0
    %3329 = vmatprep.subr.bf16.mxu0 0
    %3330 = vmatpush2.bf16.msra.mxu0 0
    %3331 = vmatprep.subr.bf16.mxu0 0
    %3332 = vmatpush2.bf16.msra.mxu0 0
    %3333 = vmatprep.subr.bf16.mxu0 0
    %3334 = vmatpush2.bf16.msra.mxu0 0
    %3335 = vmatprep.subr.bf16.mxu0 0
    %3336 = vmatpush2.bf16.msra.mxu0 0
    %3337 = vmatprep.subr.bf16.mxu0 0
    %3338 = vmatpush2.bf16.msra.mxu0 0
    %3339 = vmatprep.subr.bf16.mxu0 0
    %3340 = vmatpush2.bf16.msra.mxu0 0
    %3341 = vmatprep.subr.bf16.mxu0 0
    %3342 = vmatpush2.bf16.msra.mxu0 0
    %3343 = vmatprep.mubr.bf16.mxu0 0
    %3344 = vmatmul.mubr.bf16.gmra.mxu0 %v3309
    %v3345 = vpop.f32.mrf.mxu0
    %v3346 = vadd.f32 0.0, %v3345
    %v3347 = vpop.f32.mrf.mxu0
    %v3348 = vpop.f32.mrf.mxu0
    %v3349 = vpop.f32.mrf.mxu0
    %3350 = vdwg.mxu0
    %v3351 = vadd.f32 %v3180, %v3346
    %3352 = vrot.lane.b32.xlu0 %v2853, 32
    %v3353 = vpop.permute.xlu0 %3352
    %3354 = vrot.lane.b32.xlu0 %v2854, 32
    %v3355 = vpop.permute.xlu0 %3354
    %v3357 = vsel %vm473, %v3353, 0
    %v3360 = vsel %vm473, %v3355, 0
    %3362 = vmatprep.subr.bf16.mxu0 0
    %3363 = vmatpush1.bf16.xpose.msra.mxu0 0
    %3364 = vmatprep.subr.bf16.mxu0 0
    %3365 = vmatpush1.bf16.xpose.msra.mxu0 0
    %3366 = vmatprep.subr.bf16.mxu0 0
    %3367 = vmatpush1.bf16.xpose.msra.mxu0 0
    %3368 = vmatprep.subr.bf16.mxu0 0
    %3369 = vmatpush1.bf16.xpose.msra.mxu0 0
    %3370 = vmatprep.subr.bf16.mxu0 0
    %3371 = vmatpush1.bf16.xpose.msra.mxu0 0
    %3372 = vmatprep.subr.bf16.mxu0 0
    %3373 = vmatpush1.bf16.xpose.msra.mxu0 0
    %3374 = vmatprep.subr.bf16.mxu0 0
    %3375 = vmatpush1.bf16.xpose.msra.mxu0 0
    %3376 = vmatprep.subr.bf16.mxu0 0
    %3377 = vmatpush1.bf16.xpose.msra.mxu0 %v3360
    %3378 = vmatprep.subr.bf16.mxu0 0
    %3379 = vmatpush2.bf16.xpose.msra.mxu0 0
    %3380 = vmatprep.subr.bf16.mxu0 0
    %3381 = vmatpush2.bf16.xpose.msra.mxu0 0
    %3382 = vmatprep.subr.bf16.mxu0 0
    %3383 = vmatpush2.bf16.xpose.msra.mxu0 0
    %3384 = vmatprep.subr.bf16.mxu0 0
    %3385 = vmatpush2.bf16.xpose.msra.mxu0 0
    %3386 = vmatprep.subr.bf16.mxu0 0
    %3387 = vmatpush2.bf16.xpose.msra.mxu0 0
    %3388 = vmatprep.subr.bf16.mxu0 0
    %3389 = vmatpush2.bf16.xpose.msra.mxu0 0
    %3390 = vmatprep.subr.bf16.mxu0 0
    %3391 = vmatpush2.bf16.xpose.msra.mxu0 0
    %3392 = vmatprep.subr.bf16.mxu0 0
    %3393 = vmatpush2.bf16.xpose.msra.mxu0 0
    %3394 = vmatprep.mubr.bf16.mxu0 0
    %3395 = vmatmul.mubr.bf16.gmra.mxu0 %v3357
    %v3396 = vpop.f32.mrf.mxu0
    %v3397 = vadd.f32 0.0, %v3396
    %v3398 = vpop.f32.mrf.mxu0
    %v3399 = vpop.f32.mrf.mxu0
    %v3400 = vpop.f32.mrf.mxu0
    %3401 = vdwg.mxu0
    %v3402 = vsel %vm520, %v3397, -inf
    %3403 = vmax.xlane.f32.xlu0 %v3402
    %v3404 = vpop.xlane.xlu0 %3403
    %v3405 = vsub.f32 %v3397, %v3404
    %v3406 = vmul.f32 %v3405, 1.442695
    %v3407 = vpow.pop %v3406
    %v3408 = vsel %vm520, %v3407, 0.0
    %3409 = vadd.xlane.f32.xlu0 %v3408
    %v3410 = vpop.xlane.xlu0 %3409
    %v3411 = vrcp.pop %v3410
    %v3412 = vmul.f32 %v3407, %v3411
    %v3413 = vpack.c.bf16 %v3412, %v3412
    %3414 = vrot.lane.b32.xlu0 %v2855, 32
    %v3415 = vpop.permute.xlu0 %3414
    %v3417 = vsel %vm520, %v3413, 0
    %v3420 = vsel %vm536, %v3415, 0
    %3422 = vmatprep.subr.bf16.mxu0 0
    %3423 = vmatpush1.bf16.msra.mxu0 0
    %3424 = vmatprep.subr.bf16.mxu0 0
    %3425 = vmatpush1.bf16.msra.mxu0 0
    %3426 = vmatprep.subr.bf16.mxu0 0
    %3427 = vmatpush1.bf16.msra.mxu0 0
    %3428 = vmatprep.subr.bf16.mxu0 0
    %3429 = vmatpush1.bf16.msra.mxu0 0
    %3430 = vmatprep.subr.bf16.mxu0 0
    %3431 = vmatpush1.bf16.msra.mxu0 0
    %3432 = vmatprep.subr.bf16.mxu0 0
    %3433 = vmatpush1.bf16.msra.mxu0 0
    %3434 = vmatprep.subr.bf16.mxu0 0
    %3435 = vmatpush1.bf16.msra.mxu0 0
    %3436 = vmatprep.subr.bf16.mxu0 0
    %3437 = vmatpush1.bf16.msra.mxu0 %v3420
    %3438 = vmatprep.subr.bf16.mxu0 0
    %3439 = vmatpush2.bf16.msra.mxu0 0
    %3440 = vmatprep.subr.bf16.mxu0 0
    %3441 = vmatpush2.bf16.msra.mxu0 0
    %3442 = vmatprep.subr.bf16.mxu0 0
    %3443 = vmatpush2.bf16.msra.mxu0 0
    %3444 = vmatprep.subr.bf16.mxu0 0
    %3445 = vmatpush2.bf16.msra.mxu0 0
    %3446 = vmatprep.subr.bf16.mxu0 0
    %3447 = vmatpush2.bf16.msra.mxu0 0
    %3448 = vmatprep.subr.bf16.mxu0 0
    %3449 = vmatpush2.bf16.msra.mxu0 0
    %3450 = vmatprep.subr.bf16.mxu0 0
    %3451 = vmatpush2.bf16.msra.mxu0 0
    %3452 = vmatprep.subr.bf16.mxu0 0
    %3453 = vmatpush2.bf16.msra.mxu0 0
    %3454 = vmatprep.mubr.bf16.mxu0 0
    %3455 = vmatmul.mubr.bf16.gmra.mxu0 %v3417
    %v3456 = vpop.f32.mrf.mxu0
    %v3457 = vadd.f32 0.0, %v3456
    %v3458 = vpop.f32.mrf.mxu0
    %v3459 = vpop.f32.mrf.mxu0
    %v3460 = vpop.f32.mrf.mxu0
    %3461 = vdwg.mxu0
    %v3462 = vpack.c.bf16 %v3457, %v3457
    %v3467 = vunpack.c.l.b16 %v2618
    %v3468 = vunpack.c.l.b16 %v2619
    %v3469 = vunpack.c.l.b16 %v2620
    %v3470 = vunpack.c.l.b16 %v2621
    %v3471 = vpack.c.b16 %v3468, %v3467
    %v3472 = vpack.c.b16 %v3470, %v3469
    %v3476 = vsel %vm473, %v3462, 0
    %3478 = vmatprep.subr.bf16.mxu0 0
    %3479 = vmatpush1.bf16.msra.mxu0 0
    %3480 = vmatprep.subr.bf16.mxu0 0
    %3481 = vmatpush1.bf16.msra.mxu0 0
    %3482 = vmatprep.subr.bf16.mxu0 0
    %3483 = vmatpush1.bf16.msra.mxu0 0
    %3484 = vmatprep.subr.bf16.mxu0 0
    %3485 = vmatpush1.bf16.msra.mxu0 0
    %3486 = vmatprep.subr.bf16.mxu0 0
    %3487 = vmatpush1.bf16.msra.mxu0 0
    %3488 = vmatprep.subr.bf16.mxu0 0
    %3489 = vmatpush1.bf16.msra.mxu0 0
    %3490 = vmatprep.subr.bf16.mxu0 0
    %3491 = vmatpush1.bf16.msra.mxu0 %v3472
    %3492 = vmatprep.subr.bf16.mxu0 0
    %3493 = vmatpush1.bf16.msra.mxu0 %v3471
    %3494 = vmatprep.subr.bf16.mxu0 0
    %3495 = vmatpush2.bf16.msra.mxu0 0
    %3496 = vmatprep.subr.bf16.mxu0 0
    %3497 = vmatpush2.bf16.msra.mxu0 0
    %3498 = vmatprep.subr.bf16.mxu0 0
    %3499 = vmatpush2.bf16.msra.mxu0 0
    %3500 = vmatprep.subr.bf16.mxu0 0
    %3501 = vmatpush2.bf16.msra.mxu0 0
    %3502 = vmatprep.subr.bf16.mxu0 0
    %3503 = vmatpush2.bf16.msra.mxu0 0
    %3504 = vmatprep.subr.bf16.mxu0 0
    %3505 = vmatpush2.bf16.msra.mxu0 0
    %3506 = vmatprep.subr.bf16.mxu0 0
    %3507 = vmatpush2.bf16.msra.mxu0 0
    %3508 = vmatprep.subr.bf16.mxu0 0
    %3509 = vmatpush2.bf16.msra.mxu0 0
    %3510 = vmatprep.mubr.bf16.mxu0 0
    %3511 = vmatmul.mubr.bf16.gmra.mxu0 %v3476
    %v3512 = vpop.f32.mrf.mxu0
    %v3513 = vadd.f32 0.0, %v3512
    %v3514 = vpop.f32.mrf.mxu0
    %v3515 = vpop.f32.mrf.mxu0
    %v3516 = vpop.f32.mrf.mxu0
    %3517 = vdwg.mxu0
    %v3518 = vadd.f32 %v3351, %v3513
    %v3519 = vpack.c.bf16 %v2808, %v2808
    %v3520 = vpack.c.bf16 %v2810, %v2810
    %v3521 = vpack.c.bf16 %v2850, %v2850
    %v3523 = vsel %vm473, %v3519, 0
    %v3526 = vsel %vm473, %v3520, 0
    %3528 = vmatprep.subr.bf16.mxu0 0
    %3529 = vmatpush1.bf16.xpose.msra.mxu0 0
    %3530 = vmatprep.subr.bf16.mxu0 0
    %3531 = vmatpush1.bf16.xpose.msra.mxu0 0
    %3532 = vmatprep.subr.bf16.mxu0 0
    %3533 = vmatpush1.bf16.xpose.msra.mxu0 0
    %3534 = vmatprep.subr.bf16.mxu0 0
    %3535 = vmatpush1.bf16.xpose.msra.mxu0 0
    %3536 = vmatprep.subr.bf16.mxu0 0
    %3537 = vmatpush1.bf16.xpose.msra.mxu0 0
    %3538 = vmatprep.subr.bf16.mxu0 0
    %3539 = vmatpush1.bf16.xpose.msra.mxu0 0
    %3540 = vmatprep.subr.bf16.mxu0 0
    %3541 = vmatpush1.bf16.xpose.msra.mxu0 0
    %3542 = vmatprep.subr.bf16.mxu0 0
    %3543 = vmatpush1.bf16.xpose.msra.mxu0 %v3526
    %3544 = vmatprep.subr.bf16.mxu0 0
    %3545 = vmatpush2.bf16.xpose.msra.mxu0 0
    %3546 = vmatprep.subr.bf16.mxu0 0
    %3547 = vmatpush2.bf16.xpose.msra.mxu0 0
    %3548 = vmatprep.subr.bf16.mxu0 0
    %3549 = vmatpush2.bf16.xpose.msra.mxu0 0
    %3550 = vmatprep.subr.bf16.mxu0 0
    %3551 = vmatpush2.bf16.xpose.msra.mxu0 0
    %3552 = vmatprep.subr.bf16.mxu0 0
    %3553 = vmatpush2.bf16.xpose.msra.mxu0 0
    %3554 = vmatprep.subr.bf16.mxu0 0
    %3555 = vmatpush2.bf16.xpose.msra.mxu0 0
    %3556 = vmatprep.subr.bf16.mxu0 0
    %3557 = vmatpush2.bf16.xpose.msra.mxu0 0
    %3558 = vmatprep.subr.bf16.mxu0 0
    %3559 = vmatpush2.bf16.xpose.msra.mxu0 0
    %3560 = vmatprep.mubr.bf16.mxu0 0
    %3561 = vmatmul.mubr.bf16.gmra.mxu0 %v3523
    %v3562 = vpop.f32.mrf.mxu0
    %v3563 = vadd.f32 0.0, %v3562
    %v3564 = vpop.f32.mrf.mxu0
    %v3565 = vpop.f32.mrf.mxu0
    %v3566 = vpop.f32.mrf.mxu0
    %3567 = vdwg.mxu0
    %v3568 = vsel %vm520, %v3563, -inf
    %3569 = vmax.xlane.f32.xlu0 %v3568
    %v3570 = vpop.xlane.xlu0 %3569
    %v3571 = vsub.f32 %v3563, %v3570
    %v3572 = vmul.f32 %v3571, 1.442695
    %v3573 = vpow.pop %v3572
    %v3574 = vsel %vm520, %v3573, 0.0
    %3575 = vadd.xlane.f32.xlu0 %v3574
    %v3576 = vpop.xlane.xlu0 %3575
    %v3577 = vrcp.pop %v3576
    %v3578 = vmul.f32 %v3573, %v3577
    %v3579 = vpack.c.bf16 %v3578, %v3578
    %v3581 = vsel %vm520, %v3579, 0
    %v3584 = vsel %vm536, %v3521, 0
    %3586 = vmatprep.subr.bf16.mxu0 0
    %3587 = vmatpush1.bf16.msra.mxu0 0
    %3588 = vmatprep.subr.bf16.mxu0 0
    %3589 = vmatpush1.bf16.msra.mxu0 0
    %3590 = vmatprep.subr.bf16.mxu0 0
    %3591 = vmatpush1.bf16.msra.mxu0 0
    %3592 = vmatprep.subr.bf16.mxu0 0
    %3593 = vmatpush1.bf16.msra.mxu0 0
    %3594 = vmatprep.subr.bf16.mxu0 0
    %3595 = vmatpush1.bf16.msra.mxu0 0
    %3596 = vmatprep.subr.bf16.mxu0 0
    %3597 = vmatpush1.bf16.msra.mxu0 0
    %3598 = vmatprep.subr.bf16.mxu0 0
    %3599 = vmatpush1.bf16.msra.mxu0 0
    %3600 = vmatprep.subr.bf16.mxu0 0
    %3601 = vmatpush1.bf16.msra.mxu0 %v3584
    %3602 = vmatprep.subr.bf16.mxu0 0
    %3603 = vmatpush2.bf16.msra.mxu0 0
    %3604 = vmatprep.subr.bf16.mxu0 0
    %3605 = vmatpush2.bf16.msra.mxu0 0
    %3606 = vmatprep.subr.bf16.mxu0 0
    %3607 = vmatpush2.bf16.msra.mxu0 0
    %3608 = vmatprep.subr.bf16.mxu0 0
    %3609 = vmatpush2.bf16.msra.mxu0 0
    %3610 = vmatprep.subr.bf16.mxu0 0
    %3611 = vmatpush2.bf16.msra.mxu0 0
    %3612 = vmatprep.subr.bf16.mxu0 0
    %3613 = vmatpush2.bf16.msra.mxu0 0
    %3614 = vmatprep.subr.bf16.mxu0 0
    %3615 = vmatpush2.bf16.msra.mxu0 0
    %3616 = vmatprep.subr.bf16.mxu0 0
    %3617 = vmatpush2.bf16.msra.mxu0 0
    %3618 = vmatprep.mubr.bf16.mxu0 0
    %3619 = vmatmul.mubr.bf16.gmra.mxu0 %v3581
    %v3620 = vpop.f32.mrf.mxu0
    %v3621 = vadd.f32 0.0, %v3620
    %v3622 = vpop.f32.mrf.mxu0
    %v3623 = vpop.f32.mrf.mxu0
    %v3624 = vpop.f32.mrf.mxu0
    %3625 = vdwg.mxu0
    %v3626 = vpack.c.bf16 %v3621, %v3621
    %3628 = vrot.lane.b32.xlu0 %v3519, 96
    %v3629 = vpop.permute.xlu0 %3628
    %3631 = vrot.lane.b32.xlu0 %v3520, 96
    %v3632 = vpop.permute.xlu0 %3631
    %v3634 = vsel %vm473, %v3629, 0
    %v3637 = vsel %vm473, %v3632, 0
    %3639 = vmatprep.subr.bf16.mxu0 0
    %3640 = vmatpush1.bf16.xpose.msra.mxu0 0
    %3641 = vmatprep.subr.bf16.mxu0 0
    %3642 = vmatpush1.bf16.xpose.msra.mxu0 0
    %3643 = vmatprep.subr.bf16.mxu0 0
    %3644 = vmatpush1.bf16.xpose.msra.mxu0 0
    %3645 = vmatprep.subr.bf16.mxu0 0
    %3646 = vmatpush1.bf16.xpose.msra.mxu0 0
    %3647 = vmatprep.subr.bf16.mxu0 0
    %3648 = vmatpush1.bf16.xpose.msra.mxu0 0
    %3649 = vmatprep.subr.bf16.mxu0 0
    %3650 = vmatpush1.bf16.xpose.msra.mxu0 0
    %3651 = vmatprep.subr.bf16.mxu0 0
    %3652 = vmatpush1.bf16.xpose.msra.mxu0 0
    %3653 = vmatprep.subr.bf16.mxu0 0
    %3654 = vmatpush1.bf16.xpose.msra.mxu0 %v3637
    %3655 = vmatprep.subr.bf16.mxu0 0
    %3656 = vmatpush2.bf16.xpose.msra.mxu0 0
    %3657 = vmatprep.subr.bf16.mxu0 0
    %3658 = vmatpush2.bf16.xpose.msra.mxu0 0
    %3659 = vmatprep.subr.bf16.mxu0 0
    %3660 = vmatpush2.bf16.xpose.msra.mxu0 0
    %3661 = vmatprep.subr.bf16.mxu0 0
    %3662 = vmatpush2.bf16.xpose.msra.mxu0 0
    %3663 = vmatprep.subr.bf16.mxu0 0
    %3664 = vmatpush2.bf16.xpose.msra.mxu0 0
    %3665 = vmatprep.subr.bf16.mxu0 0
    %3666 = vmatpush2.bf16.xpose.msra.mxu0 0
    %3667 = vmatprep.subr.bf16.mxu0 0
    %3668 = vmatpush2.bf16.xpose.msra.mxu0 0
    %3669 = vmatprep.subr.bf16.mxu0 0
    %3670 = vmatpush2.bf16.xpose.msra.mxu0 0
    %3671 = vmatprep.mubr.bf16.mxu0 0
    %3672 = vmatmul.mubr.bf16.gmra.mxu0 %v3634
    %v3673 = vpop.f32.mrf.mxu0
    %v3674 = vadd.f32 0.0, %v3673
    %v3675 = vpop.f32.mrf.mxu0
    %v3676 = vpop.f32.mrf.mxu0
    %v3677 = vpop.f32.mrf.mxu0
    %3678 = vdwg.mxu0
    %v3679 = vsel %vm520, %v3674, -inf
    %3680 = vmax.xlane.f32.xlu0 %v3679
    %v3681 = vpop.xlane.xlu0 %3680
    %v3682 = vsub.f32 %v3674, %v3681
    %v3683 = vmul.f32 %v3682, 1.442695
    %v3684 = vpow.pop %v3683
    %v3685 = vsel %vm520, %v3684, 0.0
    %3686 = vadd.xlane.f32.xlu0 %v3685
    %v3687 = vpop.xlane.xlu0 %3686
    %v3688 = vrcp.pop %v3687
    %v3689 = vmul.f32 %v3684, %v3688
    %v3690 = vpack.c.bf16 %v3689, %v3689
    %3692 = vrot.lane.b32.xlu0 %v3521, 96
    %v3693 = vpop.permute.xlu0 %3692
    %v3695 = vsel %vm520, %v3690, 0
    %v3698 = vsel %vm536, %v3693, 0
    %3700 = vmatprep.subr.bf16.mxu0 0
    %3701 = vmatpush1.bf16.msra.mxu0 0
    %3702 = vmatprep.subr.bf16.mxu0 0
    %3703 = vmatpush1.bf16.msra.mxu0 0
    %3704 = vmatprep.subr.bf16.mxu0 0
    %3705 = vmatpush1.bf16.msra.mxu0 0
    %3706 = vmatprep.subr.bf16.mxu0 0
    %3707 = vmatpush1.bf16.msra.mxu0 0
    %3708 = vmatprep.subr.bf16.mxu0 0
    %3709 = vmatpush1.bf16.msra.mxu0 0
    %3710 = vmatprep.subr.bf16.mxu0 0
    %3711 = vmatpush1.bf16.msra.mxu0 0
    %3712 = vmatprep.subr.bf16.mxu0 0
    %3713 = vmatpush1.bf16.msra.mxu0 0
    %3714 = vmatprep.subr.bf16.mxu0 0
    %3715 = vmatpush1.bf16.msra.mxu0 %v3698
    %3716 = vmatprep.subr.bf16.mxu0 0
    %3717 = vmatpush2.bf16.msra.mxu0 0
    %3718 = vmatprep.subr.bf16.mxu0 0
    %3719 = vmatpush2.bf16.msra.mxu0 0
    %3720 = vmatprep.subr.bf16.mxu0 0
    %3721 = vmatpush2.bf16.msra.mxu0 0
    %3722 = vmatprep.subr.bf16.mxu0 0
    %3723 = vmatpush2.bf16.msra.mxu0 0
    %3724 = vmatprep.subr.bf16.mxu0 0
    %3725 = vmatpush2.bf16.msra.mxu0 0
    %3726 = vmatprep.subr.bf16.mxu0 0
    %3727 = vmatpush2.bf16.msra.mxu0 0
    %3728 = vmatprep.subr.bf16.mxu0 0
    %3729 = vmatpush2.bf16.msra.mxu0 0
    %3730 = vmatprep.subr.bf16.mxu0 0
    %3731 = vmatpush2.bf16.msra.mxu0 0
    %3732 = vmatprep.mubr.bf16.mxu0 0
    %3733 = vmatmul.mubr.bf16.gmra.mxu0 %v3695
    %v3734 = vpop.f32.mrf.mxu0
    %v3735 = vadd.f32 0.0, %v3734
    %v3736 = vpop.f32.mrf.mxu0
    %v3737 = vpop.f32.mrf.mxu0
    %v3738 = vpop.f32.mrf.mxu0
    %3739 = vdwg.mxu0
    %v3740 = vpack.c.bf16 %v3735, %v3735
    %v3742 = vsel %vm473, %v3740, 0
    %3744 = vmatprep.subr.bf16.mxu0 0
    %3745 = vmatpush1.bf16.msra.mxu0 0
    %3746 = vmatprep.subr.bf16.mxu0 0
    %3747 = vmatpush1.bf16.msra.mxu0 0
    %3748 = vmatprep.subr.bf16.mxu0 0
    %3749 = vmatpush1.bf16.msra.mxu0 0
    %3750 = vmatprep.subr.bf16.mxu0 0
    %3751 = vmatpush1.bf16.msra.mxu0 0
    %3752 = vmatprep.subr.bf16.mxu0 0
    %3753 = vmatpush1.bf16.msra.mxu0 0
    %3754 = vmatprep.subr.bf16.mxu0 0
    %3755 = vmatpush1.bf16.msra.mxu0 0
    %3756 = vmatprep.subr.bf16.mxu0 0
    %3757 = vmatpush1.bf16.msra.mxu0 %v3084
    %3758 = vmatprep.subr.bf16.mxu0 0
    %3759 = vmatpush1.bf16.msra.mxu0 %v3083
    %3760 = vmatprep.subr.bf16.mxu0 0
    %3761 = vmatpush2.bf16.msra.mxu0 0
    %3762 = vmatprep.subr.bf16.mxu0 0
    %3763 = vmatpush2.bf16.msra.mxu0 0
    %3764 = vmatprep.subr.bf16.mxu0 0
    %3765 = vmatpush2.bf16.msra.mxu0 0
    %3766 = vmatprep.subr.bf16.mxu0 0
    %3767 = vmatpush2.bf16.msra.mxu0 0
    %3768 = vmatprep.subr.bf16.mxu0 0
    %3769 = vmatpush2.bf16.msra.mxu0 0
    %3770 = vmatprep.subr.bf16.mxu0 0
    %3771 = vmatpush2.bf16.msra.mxu0 0
    %3772 = vmatprep.subr.bf16.mxu0 0
    %3773 = vmatpush2.bf16.msra.mxu0 0
    %3774 = vmatprep.subr.bf16.mxu0 0
    %3775 = vmatpush2.bf16.msra.mxu0 0
    %3776 = vmatprep.mubr.bf16.mxu0 0
    %3777 = vmatmul.mubr.bf16.gmra.mxu0 %v3742
    %v3778 = vpop.f32.mrf.mxu0
    %v3779 = vadd.f32 0.0, %v3778
    %v3780 = vpop.f32.mrf.mxu0
    %v3781 = vpop.f32.mrf.mxu0
    %v3782 = vpop.f32.mrf.mxu0
    %3783 = vdwg.mxu0
    %v3785 = vsel %vm473, %v3626, 0
    %3787 = vmatprep.subr.bf16.mxu0 0
    %3788 = vmatpush1.bf16.msra.mxu0 0
    %3789 = vmatprep.subr.bf16.mxu0 0
    %3790 = vmatpush1.bf16.msra.mxu0 0
    %3791 = vmatprep.subr.bf16.mxu0 0
    %3792 = vmatpush1.bf16.msra.mxu0 0
    %3793 = vmatprep.subr.bf16.mxu0 0
    %3794 = vmatpush1.bf16.msra.mxu0 0
    %3795 = vmatprep.subr.bf16.mxu0 0
    %3796 = vmatpush1.bf16.msra.mxu0 0
    %3797 = vmatprep.subr.bf16.mxu0 0
    %3798 = vmatpush1.bf16.msra.mxu0 0
    %3799 = vmatprep.subr.bf16.mxu0 0
    %3800 = vmatpush1.bf16.msra.mxu0 %v3139
    %3801 = vmatprep.subr.bf16.mxu0 0
    %3802 = vmatpush1.bf16.msra.mxu0 %v3138
    %3803 = vmatprep.subr.bf16.mxu0 0
    %3804 = vmatpush2.bf16.msra.mxu0 0
    %3805 = vmatprep.subr.bf16.mxu0 0
    %3806 = vmatpush2.bf16.msra.mxu0 0
    %3807 = vmatprep.subr.bf16.mxu0 0
    %3808 = vmatpush2.bf16.msra.mxu0 0
    %3809 = vmatprep.subr.bf16.mxu0 0
    %3810 = vmatpush2.bf16.msra.mxu0 0
    %3811 = vmatprep.subr.bf16.mxu0 0
    %3812 = vmatpush2.bf16.msra.mxu0 0
    %3813 = vmatprep.subr.bf16.mxu0 0
    %3814 = vmatpush2.bf16.msra.mxu0 0
    %3815 = vmatprep.subr.bf16.mxu0 0
    %3816 = vmatpush2.bf16.msra.mxu0 0
    %3817 = vmatprep.subr.bf16.mxu0 0
    %3818 = vmatpush2.bf16.msra.mxu0 0
    %3819 = vmatprep.mubr.bf16.mxu0 0
    %3820 = vmatmul.mubr.bf16.gmra.mxu0 %v3785
    %v3821 = vpop.f32.mrf.mxu0
    %v3822 = vadd.f32 %v3779, %v3821
    %v3823 = vpop.f32.mrf.mxu0
    %v3824 = vpop.f32.mrf.mxu0
    %v3825 = vpop.f32.mrf.mxu0
    %3826 = vdwg.mxu0
    %3827 = vrot.lane.b32.xlu0 %v3519, 64
    %v3828 = vpop.permute.xlu0 %3827
    %3829 = vrot.lane.b32.xlu0 %v3520, 64
    %v3830 = vpop.permute.xlu0 %3829
    %v3832 = vsel %vm473, %v3828, 0
    %v3835 = vsel %vm473, %v3830, 0
    %3837 = vmatprep.subr.bf16.mxu0 0
    %3838 = vmatpush1.bf16.xpose.msra.mxu0 0
    %3839 = vmatprep.subr.bf16.mxu0 0
    %3840 = vmatpush1.bf16.xpose.msra.mxu0 0
    %3841 = vmatprep.subr.bf16.mxu0 0
    %3842 = vmatpush1.bf16.xpose.msra.mxu0 0
    %3843 = vmatprep.subr.bf16.mxu0 0
    %3844 = vmatpush1.bf16.xpose.msra.mxu0 0
    %3845 = vmatprep.subr.bf16.mxu0 0
    %3846 = vmatpush1.bf16.xpose.msra.mxu0 0
    %3847 = vmatprep.subr.bf16.mxu0 0
    %3848 = vmatpush1.bf16.xpose.msra.mxu0 0
    %3849 = vmatprep.subr.bf16.mxu0 0
    %3850 = vmatpush1.bf16.xpose.msra.mxu0 0
    %3851 = vmatprep.subr.bf16.mxu0 0
    %3852 = vmatpush1.bf16.xpose.msra.mxu0 %v3835
    %3853 = vmatprep.subr.bf16.mxu0 0
    %3854 = vmatpush2.bf16.xpose.msra.mxu0 0
    %3855 = vmatprep.subr.bf16.mxu0 0
    %3856 = vmatpush2.bf16.xpose.msra.mxu0 0
    %3857 = vmatprep.subr.bf16.mxu0 0
    %3858 = vmatpush2.bf16.xpose.msra.mxu0 0
    %3859 = vmatprep.subr.bf16.mxu0 0
    %3860 = vmatpush2.bf16.xpose.msra.mxu0 0
    %3861 = vmatprep.subr.bf16.mxu0 0
    %3862 = vmatpush2.bf16.xpose.msra.mxu0 0
    %3863 = vmatprep.subr.bf16.mxu0 0
    %3864 = vmatpush2.bf16.xpose.msra.mxu0 0
    %3865 = vmatprep.subr.bf16.mxu0 0
    %3866 = vmatpush2.bf16.xpose.msra.mxu0 0
    %3867 = vmatprep.subr.bf16.mxu0 0
    %3868 = vmatpush2.bf16.xpose.msra.mxu0 0
    %3869 = vmatprep.mubr.bf16.mxu0 0
    %3870 = vmatmul.mubr.bf16.gmra.mxu0 %v3832
    %v3871 = vpop.f32.mrf.mxu0
    %v3872 = vadd.f32 0.0, %v3871
    %v3873 = vpop.f32.mrf.mxu0
    %v3874 = vpop.f32.mrf.mxu0
    %v3875 = vpop.f32.mrf.mxu0
    %3876 = vdwg.mxu0
    %v3877 = vsel %vm520, %v3872, -inf
    %3878 = vmax.xlane.f32.xlu0 %v3877
    %v3879 = vpop.xlane.xlu0 %3878
    %v3880 = vsub.f32 %v3872, %v3879
    %v3881 = vmul.f32 %v3880, 1.442695
    %v3882 = vpow.pop %v3881
    %v3883 = vsel %vm520, %v3882, 0.0
    %3884 = vadd.xlane.f32.xlu0 %v3883
    %v3885 = vpop.xlane.xlu0 %3884
    %v3886 = vrcp.pop %v3885
    %v3887 = vmul.f32 %v3882, %v3886
    %v3888 = vpack.c.bf16 %v3887, %v3887
    %3889 = vrot.lane.b32.xlu0 %v3521, 64
    %v3890 = vpop.permute.xlu0 %3889
    %v3892 = vsel %vm520, %v3888, 0
    %v3895 = vsel %vm536, %v3890, 0
    %3897 = vmatprep.subr.bf16.mxu0 0
    %3898 = vmatpush1.bf16.msra.mxu0 0
    %3899 = vmatprep.subr.bf16.mxu0 0
    %3900 = vmatpush1.bf16.msra.mxu0 0
    %3901 = vmatprep.subr.bf16.mxu0 0
    %3902 = vmatpush1.bf16.msra.mxu0 0
    %3903 = vmatprep.subr.bf16.mxu0 0
    %3904 = vmatpush1.bf16.msra.mxu0 0
    %3905 = vmatprep.subr.bf16.mxu0 0
    %3906 = vmatpush1.bf16.msra.mxu0 0
    %3907 = vmatprep.subr.bf16.mxu0 0
    %3908 = vmatpush1.bf16.msra.mxu0 0
    %3909 = vmatprep.subr.bf16.mxu0 0
    %3910 = vmatpush1.bf16.msra.mxu0 0
    %3911 = vmatprep.subr.bf16.mxu0 0
    %3912 = vmatpush1.bf16.msra.mxu0 %v3895
    %3913 = vmatprep.subr.bf16.mxu0 0
    %3914 = vmatpush2.bf16.msra.mxu0 0
    %3915 = vmatprep.subr.bf16.mxu0 0
    %3916 = vmatpush2.bf16.msra.mxu0 0
    %3917 = vmatprep.subr.bf16.mxu0 0
    %3918 = vmatpush2.bf16.msra.mxu0 0
    %3919 = vmatprep.subr.bf16.mxu0 0
    %3920 = vmatpush2.bf16.msra.mxu0 0
    %3921 = vmatprep.subr.bf16.mxu0 0
    %3922 = vmatpush2.bf16.msra.mxu0 0
    %3923 = vmatprep.subr.bf16.mxu0 0
    %3924 = vmatpush2.bf16.msra.mxu0 0
    %3925 = vmatprep.subr.bf16.mxu0 0
    %3926 = vmatpush2.bf16.msra.mxu0 0
    %3927 = vmatprep.subr.bf16.mxu0 0
    %3928 = vmatpush2.bf16.msra.mxu0 0
    %3929 = vmatprep.mubr.bf16.mxu0 0
    %3930 = vmatmul.mubr.bf16.gmra.mxu0 %v3892
    %v3931 = vpop.f32.mrf.mxu0
    %v3932 = vadd.f32 0.0, %v3931
    %v3933 = vpop.f32.mrf.mxu0
    %v3934 = vpop.f32.mrf.mxu0
    %v3935 = vpop.f32.mrf.mxu0
    %3936 = vdwg.mxu0
    %v3937 = vpack.c.bf16 %v3932, %v3932
    %v3939 = vsel %vm473, %v3937, 0
    %3941 = vmatprep.subr.bf16.mxu0 0
    %3942 = vmatpush1.bf16.msra.mxu0 0
    %3943 = vmatprep.subr.bf16.mxu0 0
    %3944 = vmatpush1.bf16.msra.mxu0 0
    %3945 = vmatprep.subr.bf16.mxu0 0
    %3946 = vmatpush1.bf16.msra.mxu0 0
    %3947 = vmatprep.subr.bf16.mxu0 0
    %3948 = vmatpush1.bf16.msra.mxu0 0
    %3949 = vmatprep.subr.bf16.mxu0 0
    %3950 = vmatpush1.bf16.msra.mxu0 0
    %3951 = vmatprep.subr.bf16.mxu0 0
    %3952 = vmatpush1.bf16.msra.mxu0 0
    %3953 = vmatprep.subr.bf16.mxu0 0
    %3954 = vmatpush1.bf16.msra.mxu0 %v3305
    %3955 = vmatprep.subr.bf16.mxu0 0
    %3956 = vmatpush1.bf16.msra.mxu0 %v3304
    %3957 = vmatprep.subr.bf16.mxu0 0
    %3958 = vmatpush2.bf16.msra.mxu0 0
    %3959 = vmatprep.subr.bf16.mxu0 0
    %3960 = vmatpush2.bf16.msra.mxu0 0
    %3961 = vmatprep.subr.bf16.mxu0 0
    %3962 = vmatpush2.bf16.msra.mxu0 0
    %3963 = vmatprep.subr.bf16.mxu0 0
    %3964 = vmatpush2.bf16.msra.mxu0 0
    %3965 = vmatprep.subr.bf16.mxu0 0
    %3966 = vmatpush2.bf16.msra.mxu0 0
    %3967 = vmatprep.subr.bf16.mxu0 0
    %3968 = vmatpush2.bf16.msra.mxu0 0
    %3969 = vmatprep.subr.bf16.mxu0 0
    %3970 = vmatpush2.bf16.msra.mxu0 0
    %3971 = vmatprep.subr.bf16.mxu0 0
    %3972 = vmatpush2.bf16.msra.mxu0 0
    %3973 = vmatprep.mubr.bf16.mxu0 0
    %3974 = vmatmul.mubr.bf16.gmra.mxu0 %v3939
    %v3975 = vpop.f32.mrf.mxu0
    %v3976 = vadd.f32 0.0, %v3975
    %v3977 = vpop.f32.mrf.mxu0
    %v3978 = vpop.f32.mrf.mxu0
    %v3979 = vpop.f32.mrf.mxu0
    %3980 = vdwg.mxu0
    %v3981 = vadd.f32 %v3822, %v3976
    %3982 = vrot.lane.b32.xlu0 %v3519, 32
    %v3983 = vpop.permute.xlu0 %3982
    %3984 = vrot.lane.b32.xlu0 %v3520, 32
    %v3985 = vpop.permute.xlu0 %3984
    %v3987 = vsel %vm473, %v3983, 0
    %v3990 = vsel %vm473, %v3985, 0
    %3992 = vmatprep.subr.bf16.mxu0 0
    %3993 = vmatpush1.bf16.xpose.msra.mxu0 0
    %3994 = vmatprep.subr.bf16.mxu0 0
    %3995 = vmatpush1.bf16.xpose.msra.mxu0 0
    %3996 = vmatprep.subr.bf16.mxu0 0
    %3997 = vmatpush1.bf16.xpose.msra.mxu0 0
    %3998 = vmatprep.subr.bf16.mxu0 0
    %3999 = vmatpush1.bf16.xpose.msra.mxu0 0
    %4000 = vmatprep.subr.bf16.mxu0 0
    %4001 = vmatpush1.bf16.xpose.msra.mxu0 0
    %4002 = vmatprep.subr.bf16.mxu0 0
    %4003 = vmatpush1.bf16.xpose.msra.mxu0 0
    %4004 = vmatprep.subr.bf16.mxu0 0
    %4005 = vmatpush1.bf16.xpose.msra.mxu0 0
    %4006 = vmatprep.subr.bf16.mxu0 0
    %4007 = vmatpush1.bf16.xpose.msra.mxu0 %v3990
    %4008 = vmatprep.subr.bf16.mxu0 0
    %4009 = vmatpush2.bf16.xpose.msra.mxu0 0
    %4010 = vmatprep.subr.bf16.mxu0 0
    %4011 = vmatpush2.bf16.xpose.msra.mxu0 0
    %4012 = vmatprep.subr.bf16.mxu0 0
    %4013 = vmatpush2.bf16.xpose.msra.mxu0 0
    %4014 = vmatprep.subr.bf16.mxu0 0
    %4015 = vmatpush2.bf16.xpose.msra.mxu0 0
    %4016 = vmatprep.subr.bf16.mxu0 0
    %4017 = vmatpush2.bf16.xpose.msra.mxu0 0
    %4018 = vmatprep.subr.bf16.mxu0 0
    %4019 = vmatpush2.bf16.xpose.msra.mxu0 0
    %4020 = vmatprep.subr.bf16.mxu0 0
    %4021 = vmatpush2.bf16.xpose.msra.mxu0 0
    %4022 = vmatprep.subr.bf16.mxu0 0
    %4023 = vmatpush2.bf16.xpose.msra.mxu0 0
    %4024 = vmatprep.mubr.bf16.mxu0 0
    %4025 = vmatmul.mubr.bf16.gmra.mxu0 %v3987
    %v4026 = vpop.f32.mrf.mxu0
    %v4027 = vadd.f32 0.0, %v4026
    %v4028 = vpop.f32.mrf.mxu0
    %v4029 = vpop.f32.mrf.mxu0
    %v4030 = vpop.f32.mrf.mxu0
    %4031 = vdwg.mxu0
    %v4032 = vsel %vm520, %v4027, -inf
    %4033 = vmax.xlane.f32.xlu0 %v4032
    %v4034 = vpop.xlane.xlu0 %4033
    %v4035 = vsub.f32 %v4027, %v4034
    %v4036 = vmul.f32 %v4035, 1.442695
    %v4037 = vpow.pop %v4036
    %v4038 = vsel %vm520, %v4037, 0.0
    %4039 = vadd.xlane.f32.xlu0 %v4038
    %v4040 = vpop.xlane.xlu0 %4039
    %v4041 = vrcp.pop %v4040
    %v4042 = vmul.f32 %v4037, %v4041
    %v4043 = vpack.c.bf16 %v4042, %v4042
    %4044 = vrot.lane.b32.xlu0 %v3521, 32
    %v4045 = vpop.permute.xlu0 %4044
    %v4047 = vsel %vm520, %v4043, 0
    %v4050 = vsel %vm536, %v4045, 0
    %4052 = vmatprep.subr.bf16.mxu0 0
    %4053 = vmatpush1.bf16.msra.mxu0 0
    %4054 = vmatprep.subr.bf16.mxu0 0
    %4055 = vmatpush1.bf16.msra.mxu0 0
    %4056 = vmatprep.subr.bf16.mxu0 0
    %4057 = vmatpush1.bf16.msra.mxu0 0
    %4058 = vmatprep.subr.bf16.mxu0 0
    %4059 = vmatpush1.bf16.msra.mxu0 0
    %4060 = vmatprep.subr.bf16.mxu0 0
    %4061 = vmatpush1.bf16.msra.mxu0 0
    %4062 = vmatprep.subr.bf16.mxu0 0
    %4063 = vmatpush1.bf16.msra.mxu0 0
    %4064 = vmatprep.subr.bf16.mxu0 0
    %4065 = vmatpush1.bf16.msra.mxu0 0
    %4066 = vmatprep.subr.bf16.mxu0 0
    %4067 = vmatpush1.bf16.msra.mxu0 %v4050
    %4068 = vmatprep.subr.bf16.mxu0 0
    %4069 = vmatpush2.bf16.msra.mxu0 0
    %4070 = vmatprep.subr.bf16.mxu0 0
    %4071 = vmatpush2.bf16.msra.mxu0 0
    %4072 = vmatprep.subr.bf16.mxu0 0
    %4073 = vmatpush2.bf16.msra.mxu0 0
    %4074 = vmatprep.subr.bf16.mxu0 0
    %4075 = vmatpush2.bf16.msra.mxu0 0
    %4076 = vmatprep.subr.bf16.mxu0 0
    %4077 = vmatpush2.bf16.msra.mxu0 0
    %4078 = vmatprep.subr.bf16.mxu0 0
    %4079 = vmatpush2.bf16.msra.mxu0 0
    %4080 = vmatprep.subr.bf16.mxu0 0
    %4081 = vmatpush2.bf16.msra.mxu0 0
    %4082 = vmatprep.subr.bf16.mxu0 0
    %4083 = vmatpush2.bf16.msra.mxu0 0
    %4084 = vmatprep.mubr.bf16.mxu0 0
    %4085 = vmatmul.mubr.bf16.gmra.mxu0 %v4047
    %v4086 = vpop.f32.mrf.mxu0
    %v4087 = vadd.f32 0.0, %v4086
    %v4088 = vpop.f32.mrf.mxu0
    %v4089 = vpop.f32.mrf.mxu0
    %v4090 = vpop.f32.mrf.mxu0
    %4091 = vdwg.mxu0
    %v4092 = vpack.c.bf16 %v4087, %v4087
    %v4094 = vsel %vm473, %v4092, 0
    %4096 = vmatprep.subr.bf16.mxu0 0
    %4097 = vmatpush1.bf16.msra.mxu0 0
    %4098 = vmatprep.subr.bf16.mxu0 0
    %4099 = vmatpush1.bf16.msra.mxu0 0
    %4100 = vmatprep.subr.bf16.mxu0 0
    %4101 = vmatpush1.bf16.msra.mxu0 0
    %4102 = vmatprep.subr.bf16.mxu0 0
    %4103 = vmatpush1.bf16.msra.mxu0 0
    %4104 = vmatprep.subr.bf16.mxu0 0
    %4105 = vmatpush1.bf16.msra.mxu0 0
    %4106 = vmatprep.subr.bf16.mxu0 0
    %4107 = vmatpush1.bf16.msra.mxu0 0
    %4108 = vmatprep.subr.bf16.mxu0 0
    %4109 = vmatpush1.bf16.msra.mxu0 %v3472
    %4110 = vmatprep.subr.bf16.mxu0 0
    %4111 = vmatpush1.bf16.msra.mxu0 %v3471
    %4112 = vmatprep.subr.bf16.mxu0 0
    %4113 = vmatpush2.bf16.msra.mxu0 0
    %4114 = vmatprep.subr.bf16.mxu0 0
    %4115 = vmatpush2.bf16.msra.mxu0 0
    %4116 = vmatprep.subr.bf16.mxu0 0
    %4117 = vmatpush2.bf16.msra.mxu0 0
    %4118 = vmatprep.subr.bf16.mxu0 0
    %4119 = vmatpush2.bf16.msra.mxu0 0
    %4120 = vmatprep.subr.bf16.mxu0 0
    %4121 = vmatpush2.bf16.msra.mxu0 0
    %4122 = vmatprep.subr.bf16.mxu0 0
    %4123 = vmatpush2.bf16.msra.mxu0 0
    %4124 = vmatprep.subr.bf16.mxu0 0
    %4125 = vmatpush2.bf16.msra.mxu0 0
    %4126 = vmatprep.subr.bf16.mxu0 0
    %4127 = vmatpush2.bf16.msra.mxu0 0
    %4128 = vmatprep.mubr.bf16.mxu0 0
    %4129 = vmatmul.mubr.bf16.gmra.mxu0 %v4094
    %v4130 = vpop.f32.mrf.mxu0
    %v4131 = vadd.f32 0.0, %v4130
    %v4132 = vpop.f32.mrf.mxu0
    %v4133 = vpop.f32.mrf.mxu0
    %v4134 = vpop.f32.mrf.mxu0
    %4135 = vdwg.mxu0
    %v4136 = vadd.f32 %v3981, %v4131
    %s4137 = scalar_lea.vmem %s6, 1
    %v4138 = vld [vmem:[%s4137] sm:$0x1]
    %v4140 = vlaneseq
    %v4141 = vshrl.u32 %v4140, 7
    %v4142 = vsub.s32 0, %v4141
    %v4143 = vrot.slane %v4138, %v4142
    %v4145 = vadd.f32 %v3518, %v4143
    %v4146 = vadd.f32 %v4136, %v4143
    %v4147 = vadd.f32 %v2570, %v4145
    %v4148 = vadd.f32 %v2571, %v4146
    %s4149 = scalar_lea.vmem %s7, 1
    %v4150 = vld [vmem:[%s4149] sm:$0x1]
    %s4151 = scalar_lea.vmem %s8, 1
    %v4152 = vld [vmem:[%s4151] sm:$0x1]
    %4153 = vadd.xlane.f32.xlu0 %v4147
    %v4154 = vpop.xlane.xlu0 %4153
    %4155 = vadd.xlane.f32.xlu0 %v4148
    %v4156 = vpop.xlane.xlu0 %4155
    %v4157 = vmul.f32 %v4154, %v157
    %v4158 = vmul.f32 %v4156, %v157
    %v4159 = vsub.f32 %v4147, %v4157
    %v4160 = vsub.f32 %v4148, %v4158
    %v4161 = vmul.f32 %v4159, %v4159
    %v4162 = vmul.f32 %v4160, %v4160
    %4163 = vadd.xlane.f32.xlu0 %v4161
    %v4164 = vpop.xlane.xlu0 %4163
    %4165 = vadd.xlane.f32.xlu0 %v4162
    %v4166 = vpop.xlane.xlu0 %4165
    %v4167 = vmul.f32 %v4164, %v157
    %v4168 = vmul.f32 %v4166, %v157
    %v4169 = vadd.f32 %v4167, 1e-12
    %v4170 = vadd.f32 %v4168, 1e-12
    %v4171 = vrsqrt.pop %v4169
    %v4172 = vrsqrt.pop %v4170
    %v4173 = vmul.f32 %v4159, %v4171
    %v4174 = vmul.f32 %v4160, %v4172
    %v4176 = vlaneseq
    %v4177 = vshrl.u32 %v4176, 7
    %v4178 = vsub.s32 0, %v4177
    %v4179 = vrot.slane %v4150, %v4178
    %v4181 = vmul.f32 %v4173, %v4179
    %v4182 = vmul.f32 %v4174, %v4179
    %v4184 = vlaneseq
    %v4185 = vshrl.u32 %v4184, 7
    %v4186 = vsub.s32 0, %v4185
    %v4187 = vrot.slane %v4152, %v4186
    %v4189 = vadd.f32 %v4181, %v4187
    %v4190 = vadd.f32 %v4182, %v4187
    %v4191 = vpack.c.bf16 %v4190, %v4189
    %s4192 = scalar_lea.vmem [#allocation5], 256
    %v4193 = vld [vmem:[%s4192] sm:$0xff]
    %v4194 = vld [vmem:[%s4192 + $0x8] sm:$0xff]
    %v4195 = vld [vmem:[%s4192 + $0x10] sm:$0xff]
    %v4196 = vld [vmem:[%s4192 + $0x18] sm:$0xff]
    %v4197 = vld [vmem:[%s4192 + $0x20] sm:$0xff]
    %v4198 = vld [vmem:[%s4192 + $0x28] sm:$0xff]
    %v4199 = vld [vmem:[%s4192 + $0x30] sm:$0xff]
    %v4200 = vld [vmem:[%s4192 + $0x38] sm:$0xff]
    %v4201 = vld [vmem:[%s4192 + $0x40] sm:$0xff]
    %v4202 = vld [vmem:[%s4192 + $0x48] sm:$0xff]
    %v4203 = vld [vmem:[%s4192 + $0x50] sm:$0xff]
    %v4204 = vld [vmem:[%s4192 + $0x58] sm:$0xff]
    %v4205 = vld [vmem:[%s4192 + $0x60] sm:$0xff]
    %v4206 = vld [vmem:[%s4192 + $0x68] sm:$0xff]
    %v4207 = vld [vmem:[%s4192 + $0x70] sm:$0xff]
    %v4208 = vld [vmem:[%s4192 + $0x78] sm:$0xff]
    %v4209 = vld [vmem:[%s4192 + $0x80] sm:$0xff]
    %v4210 = vld [vmem:[%s4192 + $0x88] sm:$0xff]
    %v4211 = vld [vmem:[%s4192 + $0x90] sm:$0xff]
    %v4212 = vld [vmem:[%s4192 + $0x98] sm:$0xff]
    %v4213 = vld [vmem:[%s4192 + $0xa0] sm:$0xff]
    %v4214 = vld [vmem:[%s4192 + $0xa8] sm:$0xff]
    %v4215 = vld [vmem:[%s4192 + $0xb0] sm:$0xff]
    %v4216 = vld [vmem:[%s4192 + $0xb8] sm:$0xff]
    %v4217 = vld [vmem:[%s4192 + $0xc0] sm:$0xff]
    %v4218 = vld [vmem:[%s4192 + $0xc8] sm:$0xff]
    %v4219 = vld [vmem:[%s4192 + $0xd0] sm:$0xff]
    %v4220 = vld [vmem:[%s4192 + $0xd8] sm:$0xff]
    %v4221 = vld [vmem:[%s4192 + $0xe0] sm:$0xff]
    %v4222 = vld [vmem:[%s4192 + $0xe8] sm:$0xff]
    %v4223 = vld [vmem:[%s4192 + $0xf0] sm:$0xff]
    %v4224 = vld [vmem:[%s4192 + $0xf8] sm:$0xff]
    %s4225 = scalar_lea.vmem %s10, 4
    %v4226 = vld [vmem:[%s4225] sm:$0xf]
    %v4228 = vlaneseq
    %v4229 = vshrl.u32 %v4228, 7
    %v4230 = vsub.s32 0, %v4229
    %v4231 = vrot.slane %v4226, %v4230
    %v4232 = vlaneseq
    %v4233 = vshrl.u32 %v4232, 7
    %v4234 = vsub.s32 1, %v4233
    %v4235 = vrot.slane %v4226, %v4234
    %v4236 = vlaneseq
    %v4237 = vshrl.u32 %v4236, 7
    %v4238 = vsub.s32 2, %v4237
    %v4239 = vrot.slane %v4226, %v4238
    %v4240 = vlaneseq
    %v4241 = vshrl.u32 %v4240, 7
    %v4242 = vsub.s32 3, %v4241
    %v4243 = vrot.slane %v4226, %v4242
    %v4280 = vunpack.c.l.b16 %v4193
    %v4281 = vunpack.c.h.b16 %v4193
    %v4282 = vunpack.c.l.b16 %v4194
    %v4283 = vunpack.c.h.b16 %v4194
    %v4284 = vunpack.c.l.b16 %v4195
    %v4285 = vunpack.c.h.b16 %v4195
    %v4286 = vunpack.c.l.b16 %v4196
    %v4287 = vunpack.c.h.b16 %v4196
    %v4288 = vunpack.c.l.b16 %v4197
    %v4289 = vunpack.c.h.b16 %v4197
    %v4290 = vunpack.c.l.b16 %v4198
    %v4291 = vunpack.c.h.b16 %v4198
    %v4292 = vunpack.c.l.b16 %v4199
    %v4293 = vunpack.c.h.b16 %v4199
    %v4294 = vunpack.c.l.b16 %v4200
    %v4295 = vunpack.c.h.b16 %v4200
    %v4296 = vunpack.c.l.b16 %v4201
    %v4297 = vunpack.c.h.b16 %v4201
    %v4298 = vunpack.c.l.b16 %v4202
    %v4299 = vunpack.c.h.b16 %v4202
    %v4300 = vunpack.c.l.b16 %v4203
    %v4301 = vunpack.c.h.b16 %v4203
    %v4302 = vunpack.c.l.b16 %v4204
    %v4303 = vunpack.c.h.b16 %v4204
    %v4304 = vunpack.c.l.b16 %v4205
    %v4305 = vunpack.c.h.b16 %v4205
    %v4306 = vunpack.c.l.b16 %v4206
    %v4307 = vunpack.c.h.b16 %v4206
    %v4308 = vunpack.c.l.b16 %v4207
    %v4309 = vunpack.c.h.b16 %v4207
    %v4310 = vunpack.c.l.b16 %v4208
    %v4311 = vunpack.c.h.b16 %v4208
    %v4312 = vunpack.c.l.b16 %v4209
    %v4313 = vunpack.c.h.b16 %v4209
    %v4314 = vunpack.c.l.b16 %v4210
    %v4315 = vunpack.c.h.b16 %v4210
    %v4316 = vunpack.c.l.b16 %v4211
    %v4317 = vunpack.c.h.b16 %v4211
    %v4318 = vunpack.c.l.b16 %v4212
    %v4319 = vunpack.c.h.b16 %v4212
    %v4320 = vunpack.c.l.b16 %v4213
    %v4321 = vunpack.c.h.b16 %v4213
    %v4322 = vunpack.c.l.b16 %v4214
    %v4323 = vunpack.c.h.b16 %v4214
    %v4324 = vunpack.c.l.b16 %v4215
    %v4325 = vunpack.c.h.b16 %v4215
    %v4326 = vunpack.c.l.b16 %v4216
    %v4327 = vunpack.c.h.b16 %v4216
    %v4328 = vunpack.c.l.b16 %v4217
    %v4329 = vunpack.c.h.b16 %v4217
    %v4330 = vunpack.c.l.b16 %v4218
    %v4331 = vunpack.c.h.b16 %v4218
    %v4332 = vunpack.c.l.b16 %v4219
    %v4333 = vunpack.c.h.b16 %v4219
    %v4334 = vunpack.c.l.b16 %v4220
    %v4335 = vunpack.c.h.b16 %v4220
    %v4336 = vunpack.c.l.b16 %v4221
    %v4337 = vunpack.c.h.b16 %v4221
    %v4338 = vunpack.c.l.b16 %v4222
    %v4339 = vunpack.c.h.b16 %v4222
    %v4340 = vunpack.c.l.b16 %v4223
    %v4341 = vunpack.c.h.b16 %v4223
    %v4342 = vunpack.c.l.b16 %v4224
    %v4343 = vunpack.c.h.b16 %v4224
    %v4344 = vpack.c.b16 %v4284, %v4280
    %v4345 = vpack.c.b16 %v4285, %v4281
    %v4346 = vpack.c.b16 %v4286, %v4282
    %v4347 = vpack.c.b16 %v4287, %v4283
    %v4348 = vpack.c.b16 %v4292, %v4288
    %v4349 = vpack.c.b16 %v4293, %v4289
    %v4350 = vpack.c.b16 %v4294, %v4290
    %v4351 = vpack.c.b16 %v4295, %v4291
    %v4352 = vpack.c.b16 %v4300, %v4296
    %v4353 = vpack.c.b16 %v4301, %v4297
    %v4354 = vpack.c.b16 %v4302, %v4298
    %v4355 = vpack.c.b16 %v4303, %v4299
    %v4356 = vpack.c.b16 %v4308, %v4304
    %v4357 = vpack.c.b16 %v4309, %v4305
    %v4358 = vpack.c.b16 %v4310, %v4306
    %v4359 = vpack.c.b16 %v4311, %v4307
    %v4360 = vpack.c.b16 %v4316, %v4312
    %v4361 = vpack.c.b16 %v4317, %v4313
    %v4362 = vpack.c.b16 %v4318, %v4314
    %v4363 = vpack.c.b16 %v4319, %v4315
    %v4364 = vpack.c.b16 %v4324, %v4320
    %v4365 = vpack.c.b16 %v4325, %v4321
    %v4366 = vpack.c.b16 %v4326, %v4322
    %v4367 = vpack.c.b16 %v4327, %v4323
    %v4368 = vpack.c.b16 %v4332, %v4328
    %v4369 = vpack.c.b16 %v4333, %v4329
    %v4370 = vpack.c.b16 %v4334, %v4330
    %v4371 = vpack.c.b16 %v4335, %v4331
    %v4372 = vpack.c.b16 %v4340, %v4336
    %v4373 = vpack.c.b16 %v4341, %v4337
    %v4374 = vpack.c.b16 %v4342, %v4338
    %v4375 = vpack.c.b16 %v4343, %v4339
    %4408 = vmatprep.subr.bf16.mxu0 %v4373
    %4409 = vmatpush1.bf16.msra.mxu0 %v4372
    %4410 = vmatprep.subr.bf16.mxu0 %v4369
    %4411 = vmatpush1.bf16.msra.mxu0 %v4368
    %4412 = vmatprep.subr.bf16.mxu0 %v4365
    %4413 = vmatpush1.bf16.msra.mxu0 %v4364
    %4414 = vmatprep.subr.bf16.mxu0 %v4361
    %4415 = vmatpush1.bf16.msra.mxu0 %v4360
    %4416 = vmatprep.subr.bf16.mxu0 %v4357
    %4417 = vmatpush1.bf16.msra.mxu0 %v4356
    %4418 = vmatprep.subr.bf16.mxu0 %v4353
    %4419 = vmatpush1.bf16.msra.mxu0 %v4352
    %4420 = vmatprep.subr.bf16.mxu0 %v4349
    %4421 = vmatpush1.bf16.msra.mxu0 %v4348
    %4422 = vmatprep.subr.bf16.mxu0 %v4345
    %4423 = vmatpush1.bf16.msra.mxu0 %v4344
    %4424 = vmatprep.subr.bf16.mxu0 0
    %4425 = vmatpush2.bf16.msra.mxu0 0
    %4426 = vmatprep.subr.bf16.mxu0 0
    %4427 = vmatpush2.bf16.msra.mxu0 0
    %4428 = vmatprep.subr.bf16.mxu0 0
    %4429 = vmatpush2.bf16.msra.mxu0 0
    %4430 = vmatprep.subr.bf16.mxu0 0
    %4431 = vmatpush2.bf16.msra.mxu0 0
    %4432 = vmatprep.subr.bf16.mxu0 0
    %4433 = vmatpush2.bf16.msra.mxu0 0
    %4434 = vmatprep.subr.bf16.mxu0 0
    %4435 = vmatpush2.bf16.msra.mxu0 0
    %4436 = vmatprep.subr.bf16.mxu0 0
    %4437 = vmatpush2.bf16.msra.mxu0 0
    %4438 = vmatprep.subr.bf16.mxu0 0
    %4439 = vmatpush2.bf16.msra.mxu0 0
    %4440 = vmatprep.mubr.bf16.mxu0 0
    %4441 = vmatmul.mubr.bf16.gmra.mxu0 %v4191
    %v4442 = vpop.f32.mrf.mxu0
    %v4443 = vadd.f32 %v4231, %v4442
    %v4444 = vpop.f32.mrf.mxu0
    %v4445 = vadd.f32 %v4235, %v4444
    %v4446 = vpop.f32.mrf.mxu0
    %v4447 = vadd.f32 %v4231, %v4446
    %v4448 = vpop.f32.mrf.mxu0
    %v4449 = vadd.f32 %v4235, %v4448
    %4450 = vdwg.mxu0
    %4451 = vmatprep.subr.bf16.mxu0 %v4375
    %4452 = vmatpush1.bf16.msra.mxu0 %v4374
    %4453 = vmatprep.subr.bf16.mxu0 %v4371
    %4454 = vmatpush1.bf16.msra.mxu0 %v4370
    %4455 = vmatprep.subr.bf16.mxu0 %v4367
    %4456 = vmatpush1.bf16.msra.mxu0 %v4366
    %4457 = vmatprep.subr.bf16.mxu0 %v4363
    %4458 = vmatpush1.bf16.msra.mxu0 %v4362
    %4459 = vmatprep.subr.bf16.mxu0 %v4359
    %4460 = vmatpush1.bf16.msra.mxu0 %v4358
    %4461 = vmatprep.subr.bf16.mxu0 %v4355
    %4462 = vmatpush1.bf16.msra.mxu0 %v4354
    %4463 = vmatprep.subr.bf16.mxu0 %v4351
    %4464 = vmatpush1.bf16.msra.mxu0 %v4350
    %4465 = vmatprep.subr.bf16.mxu0 %v4347
    %4466 = vmatpush1.bf16.msra.mxu0 %v4346
    %4467 = vmatprep.subr.bf16.mxu0 0
    %4468 = vmatpush2.bf16.msra.mxu0 0
    %4469 = vmatprep.subr.bf16.mxu0 0
    %4470 = vmatpush2.bf16.msra.mxu0 0
    %4471 = vmatprep.subr.bf16.mxu0 0
    %4472 = vmatpush2.bf16.msra.mxu0 0
    %4473 = vmatprep.subr.bf16.mxu0 0
    %4474 = vmatpush2.bf16.msra.mxu0 0
    %4475 = vmatprep.subr.bf16.mxu0 0
    %4476 = vmatpush2.bf16.msra.mxu0 0
    %4477 = vmatprep.subr.bf16.mxu0 0
    %4478 = vmatpush2.bf16.msra.mxu0 0
    %4479 = vmatprep.subr.bf16.mxu0 0
    %4480 = vmatpush2.bf16.msra.mxu0 0
    %4481 = vmatprep.subr.bf16.mxu0 0
    %4482 = vmatpush2.bf16.msra.mxu0 0
    %4483 = vmatprep.mubr.bf16.mxu0 0
    %4484 = vmatmul.mubr.bf16.gmra.mxu0 %v4191
    %v4485 = vpop.f32.mrf.mxu0
    %v4486 = vadd.f32 %v4239, %v4485
    %v4487 = vpop.f32.mrf.mxu0
    %v4488 = vadd.f32 %v4243, %v4487
    %v4489 = vpop.f32.mrf.mxu0
    %v4490 = vadd.f32 %v4239, %v4489
    %v4491 = vpop.f32.mrf.mxu0
    %v4492 = vadd.f32 %v4243, %v4491
    %4493 = vdwg.mxu0
    %v4494 = vmul.f32 %v4443, 0.5
    %v4495 = vmul.f32 %v4445, 0.5
    %v4496 = vmul.f32 %v4486, 0.5
    %v4497 = vmul.f32 %v4488, 0.5
    %v4498 = vmul.f32 %v4447, 0.5
    %v4499 = vmul.f32 %v4449, 0.5
    %v4500 = vmul.f32 %v4490, 0.5
    %v4501 = vmul.f32 %v4492, 0.5
    %v4502 = vmul.f32 %v4443, 0.044715
    %v4503 = vmul.f32 %v4445, 0.044715
    %v4504 = vmul.f32 %v4486, 0.044715
    %v4505 = vmul.f32 %v4488, 0.044715
    %v4506 = vmul.f32 %v4447, 0.044715
    %v4507 = vmul.f32 %v4449, 0.044715
    %v4508 = vmul.f32 %v4490, 0.044715
    %v4509 = vmul.f32 %v4492, 0.044715
    %v4510 = vmul.f32 %v4502, %v4443
    %v4511 = vmul.f32 %v4503, %v4445
    %v4512 = vmul.f32 %v4504, %v4486
    %v4513 = vmul.f32 %v4505, %v4488
    %v4514 = vmul.f32 %v4506, %v4447
    %v4515 = vmul.f32 %v4507, %v4449
    %v4516 = vmul.f32 %v4508, %v4490
    %v4517 = vmul.f32 %v4509, %v4492
    %v4518 = vmul.f32 %v4510, %v4443
    %v4519 = vmul.f32 %v4511, %v4445
    %v4520 = vmul.f32 %v4512, %v4486
    %v4521 = vmul.f32 %v4513, %v4488
    %v4522 = vmul.f32 %v4514, %v4447
    %v4523 = vmul.f32 %v4515, %v4449
    %v4524 = vmul.f32 %v4516, %v4490
    %v4525 = vmul.f32 %v4517, %v4492
    %v4526 = vadd.f32 %v4443, %v4518
    %v4527 = vadd.f32 %v4445, %v4519
    %v4528 = vadd.f32 %v4486, %v4520
    %v4529 = vadd.f32 %v4488, %v4521
    %v4530 = vadd.f32 %v4447, %v4522
    %v4531 = vadd.f32 %v4449, %v4523
    %v4532 = vadd.f32 %v4490, %v4524
    %v4533 = vadd.f32 %v4492, %v4525
    %v4534 = vmul.f32 %v4526, 0.7978846
    %v4535 = vmul.f32 %v4527, 0.7978846
    %v4536 = vmul.f32 %v4528, 0.7978846
    %v4537 = vmul.f32 %v4529, 0.7978846
    %v4538 = vmul.f32 %v4530, 0.7978846
    %v4539 = vmul.f32 %v4531, 0.7978846
    %v4540 = vmul.f32 %v4532, 0.7978846
    %v4541 = vmul.f32 %v4533, 0.7978846
    %v4542 = vtanh.pop %v4534
    %v4543 = vtanh.pop %v4535
    %v4544 = vtanh.pop %v4536
    %v4545 = vtanh.pop %v4537
    %v4546 = vtanh.pop %v4538
    %v4547 = vtanh.pop %v4539
    %v4548 = vtanh.pop %v4540
    %v4549 = vtanh.pop %v4541
    %v4550 = vadd.f32 %v4542, 1.0
    %v4551 = vadd.f32 %v4543, 1.0
    %v4552 = vadd.f32 %v4544, 1.0
    %v4553 = vadd.f32 %v4545, 1.0
    %v4554 = vadd.f32 %v4546, 1.0
    %v4555 = vadd.f32 %v4547, 1.0
    %v4556 = vadd.f32 %v4548, 1.0
    %v4557 = vadd.f32 %v4549, 1.0
    %v4558 = vmul.f32 %v4494, %v4550
    %v4559 = vmul.f32 %v4495, %v4551
    %v4560 = vmul.f32 %v4496, %v4552
    %v4561 = vmul.f32 %v4497, %v4553
    %v4562 = vmul.f32 %v4498, %v4554
    %v4563 = vmul.f32 %v4499, %v4555
    %v4564 = vmul.f32 %v4500, %v4556
    %v4565 = vmul.f32 %v4501, %v4557
    %v4566 = vpack.c.bf16 %v4562, %v4558
    %v4567 = vpack.c.bf16 %v4563, %v4559
    %v4568 = vpack.c.bf16 %v4564, %v4560
    %v4569 = vpack.c.bf16 %v4565, %v4561
    %s4570 = scalar_lea.vmem [#allocation7], 256
    %v4571 = vld [vmem:[%s4570] sm:$0xf]
    %v4572 = vld [vmem:[%s4570 + $0x4] sm:$0xf]
    %v4573 = vld [vmem:[%s4570 + $0x8] sm:$0xf]
    %v4574 = vld [vmem:[%s4570 + $0xc] sm:$0xf]
    %v4575 = vld [vmem:[%s4570 + $0x10] sm:$0xf]
    %v4576 = vld [vmem:[%s4570 + $0x14] sm:$0xf]
    %v4577 = vld [vmem:[%s4570 + $0x18] sm:$0xf]
    %v4578 = vld [vmem:[%s4570 + $0x1c] sm:$0xf]
    %v4579 = vld [vmem:[%s4570 + $0x20] sm:$0xf]
    %v4580 = vld [vmem:[%s4570 + $0x24] sm:$0xf]
    %v4581 = vld [vmem:[%s4570 + $0x28] sm:$0xf]
    %v4582 = vld [vmem:[%s4570 + $0x2c] sm:$0xf]
    %v4583 = vld [vmem:[%s4570 + $0x30] sm:$0xf]
    %v4584 = vld [vmem:[%s4570 + $0x34] sm:$0xf]
    %v4585 = vld [vmem:[%s4570 + $0x38] sm:$0xf]
    %v4586 = vld [vmem:[%s4570 + $0x3c] sm:$0xf]
    %v4587 = vld [vmem:[%s4570 + $0x40] sm:$0xf]
    %v4588 = vld [vmem:[%s4570 + $0x44] sm:$0xf]
    %v4589 = vld [vmem:[%s4570 + $0x48] sm:$0xf]
    %v4590 = vld [vmem:[%s4570 + $0x4c] sm:$0xf]
    %v4591 = vld [vmem:[%s4570 + $0x50] sm:$0xf]
    %v4592 = vld [vmem:[%s4570 + $0x54] sm:$0xf]
    %v4593 = vld [vmem:[%s4570 + $0x58] sm:$0xf]
    %v4594 = vld [vmem:[%s4570 + $0x5c] sm:$0xf]
    %v4595 = vld [vmem:[%s4570 + $0x60] sm:$0xf]
    %v4596 = vld [vmem:[%s4570 + $0x64] sm:$0xf]
    %v4597 = vld [vmem:[%s4570 + $0x68] sm:$0xf]
    %v4598 = vld [vmem:[%s4570 + $0x6c] sm:$0xf]
    %v4599 = vld [vmem:[%s4570 + $0x70] sm:$0xf]
    %v4600 = vld [vmem:[%s4570 + $0x74] sm:$0xf]
    %v4601 = vld [vmem:[%s4570 + $0x78] sm:$0xf]
    %v4602 = vld [vmem:[%s4570 + $0x7c] sm:$0xf]
    %v4603 = vld [vmem:[%s4570 + $0x80] sm:$0xf]
    %v4604 = vld [vmem:[%s4570 + $0x84] sm:$0xf]
    %v4605 = vld [vmem:[%s4570 + $0x88] sm:$0xf]
    %v4606 = vld [vmem:[%s4570 + $0x8c] sm:$0xf]
    %v4607 = vld [vmem:[%s4570 + $0x90] sm:$0xf]
    %v4608 = vld [vmem:[%s4570 + $0x94] sm:$0xf]
    %v4609 = vld [vmem:[%s4570 + $0x98] sm:$0xf]
    %v4610 = vld [vmem:[%s4570 + $0x9c] sm:$0xf]
    %v4611 = vld [vmem:[%s4570 + $0xa0] sm:$0xf]
    %v4612 = vld [vmem:[%s4570 + $0xa4] sm:$0xf]
    %v4613 = vld [vmem:[%s4570 + $0xa8] sm:$0xf]
    %v4614 = vld [vmem:[%s4570 + $0xac] sm:$0xf]
    %v4615 = vld [vmem:[%s4570 + $0xb0] sm:$0xf]
    %v4616 = vld [vmem:[%s4570 + $0xb4] sm:$0xf]
    %v4617 = vld [vmem:[%s4570 + $0xb8] sm:$0xf]
    %v4618 = vld [vmem:[%s4570 + $0xbc] sm:$0xf]
    %v4619 = vld [vmem:[%s4570 + $0xc0] sm:$0xf]
    %v4620 = vld [vmem:[%s4570 + $0xc4] sm:$0xf]
    %v4621 = vld [vmem:[%s4570 + $0xc8] sm:$0xf]
    %v4622 = vld [vmem:[%s4570 + $0xcc] sm:$0xf]
    %v4623 = vld [vmem:[%s4570 + $0xd0] sm:$0xf]
    %v4624 = vld [vmem:[%s4570 + $0xd4] sm:$0xf]
    %v4625 = vld [vmem:[%s4570 + $0xd8] sm:$0xf]
    %v4626 = vld [vmem:[%s4570 + $0xdc] sm:$0xf]
    %v4627 = vld [vmem:[%s4570 + $0xe0] sm:$0xf]
    %v4628 = vld [vmem:[%s4570 + $0xe4] sm:$0xf]
    %v4629 = vld [vmem:[%s4570 + $0xe8] sm:$0xf]
    %v4630 = vld [vmem:[%s4570 + $0xec] sm:$0xf]
    %v4631 = vld [vmem:[%s4570 + $0xf0] sm:$0xf]
    %v4632 = vld [vmem:[%s4570 + $0xf4] sm:$0xf]
    %v4633 = vld [vmem:[%s4570 + $0xf8] sm:$0xf]
    %v4634 = vld [vmem:[%s4570 + $0xfc] sm:$0xf]
    %s4635 = scalar_lea.vmem %s12, 1
    %v4636 = vld [vmem:[%s4635] sm:$0x1]
    %v4638 = vlaneseq
    %v4639 = vshrl.u32 %v4638, 7
    %v4640 = vsub.s32 0, %v4639
    %v4641 = vrot.slane %v4636, %v4640
    %v4707 = vunpack.c.l.b16 %v4571
    %v4708 = vunpack.c.l.b16 %v4572
    %v4709 = vunpack.c.l.b16 %v4573
    %v4710 = vunpack.c.l.b16 %v4574
    %v4711 = vunpack.c.l.b16 %v4575
    %v4712 = vunpack.c.l.b16 %v4576
    %v4713 = vunpack.c.l.b16 %v4577
    %v4714 = vunpack.c.l.b16 %v4578
    %v4715 = vunpack.c.l.b16 %v4579
    %v4716 = vunpack.c.l.b16 %v4580
    %v4717 = vunpack.c.l.b16 %v4581
    %v4718 = vunpack.c.l.b16 %v4582
    %v4719 = vunpack.c.l.b16 %v4583
    %v4720 = vunpack.c.l.b16 %v4584
    %v4721 = vunpack.c.l.b16 %v4585
    %v4722 = vunpack.c.l.b16 %v4586
    %v4723 = vunpack.c.l.b16 %v4587
    %v4724 = vunpack.c.l.b16 %v4588
    %v4725 = vunpack.c.l.b16 %v4589
    %v4726 = vunpack.c.l.b16 %v4590
    %v4727 = vunpack.c.l.b16 %v4591
    %v4728 = vunpack.c.l.b16 %v4592
    %v4729 = vunpack.c.l.b16 %v4593
    %v4730 = vunpack.c.l.b16 %v4594
    %v4731 = vunpack.c.l.b16 %v4595
    %v4732 = vunpack.c.l.b16 %v4596
    %v4733 = vunpack.c.l.b16 %v4597
    %v4734 = vunpack.c.l.b16 %v4598
    %v4735 = vunpack.c.l.b16 %v4599
    %v4736 = vunpack.c.l.b16 %v4600
    %v4737 = vunpack.c.l.b16 %v4601
    %v4738 = vunpack.c.l.b16 %v4602
    %v4739 = vunpack.c.l.b16 %v4603
    %v4740 = vunpack.c.l.b16 %v4604
    %v4741 = vunpack.c.l.b16 %v4605
    %v4742 = vunpack.c.l.b16 %v4606
    %v4743 = vunpack.c.l.b16 %v4607
    %v4744 = vunpack.c.l.b16 %v4608
    %v4745 = vunpack.c.l.b16 %v4609
    %v4746 = vunpack.c.l.b16 %v4610
    %v4747 = vunpack.c.l.b16 %v4611
    %v4748 = vunpack.c.l.b16 %v4612
    %v4749 = vunpack.c.l.b16 %v4613
    %v4750 = vunpack.c.l.b16 %v4614
    %v4751 = vunpack.c.l.b16 %v4615
    %v4752 = vunpack.c.l.b16 %v4616
    %v4753 = vunpack.c.l.b16 %v4617
    %v4754 = vunpack.c.l.b16 %v4618
    %v4755 = vunpack.c.l.b16 %v4619
    %v4756 = vunpack.c.l.b16 %v4620
    %v4757 = vunpack.c.l.b16 %v4621
    %v4758 = vunpack.c.l.b16 %v4622
    %v4759 = vunpack.c.l.b16 %v4623
    %v4760 = vunpack.c.l.b16 %v4624
    %v4761 = vunpack.c.l.b16 %v4625
    %v4762 = vunpack.c.l.b16 %v4626
    %v4763 = vunpack.c.l.b16 %v4627
    %v4764 = vunpack.c.l.b16 %v4628
    %v4765 = vunpack.c.l.b16 %v4629
    %v4766 = vunpack.c.l.b16 %v4630
    %v4767 = vunpack.c.l.b16 %v4631
    %v4768 = vunpack.c.l.b16 %v4632
    %v4769 = vunpack.c.l.b16 %v4633
    %v4770 = vunpack.c.l.b16 %v4634
    %v4771 = vpack.c.b16 %v4708, %v4707
    %v4772 = vpack.c.b16 %v4710, %v4709
    %v4773 = vpack.c.b16 %v4712, %v4711
    %v4774 = vpack.c.b16 %v4714, %v4713
    %v4775 = vpack.c.b16 %v4716, %v4715
    %v4776 = vpack.c.b16 %v4718, %v4717
    %v4777 = vpack.c.b16 %v4720, %v4719
    %v4778 = vpack.c.b16 %v4722, %v4721
    %v4779 = vpack.c.b16 %v4724, %v4723
    %v4780 = vpack.c.b16 %v4726, %v4725
    %v4781 = vpack.c.b16 %v4728, %v4727
    %v4782 = vpack.c.b16 %v4730, %v4729
    %v4783 = vpack.c.b16 %v4732, %v4731
    %v4784 = vpack.c.b16 %v4734, %v4733
    %v4785 = vpack.c.b16 %v4736, %v4735
    %v4786 = vpack.c.b16 %v4738, %v4737
    %v4787 = vpack.c.b16 %v4740, %v4739
    %v4788 = vpack.c.b16 %v4742, %v4741
    %v4789 = vpack.c.b16 %v4744, %v4743
    %v4790 = vpack.c.b16 %v4746, %v4745
    %v4791 = vpack.c.b16 %v4748, %v4747
    %v4792 = vpack.c.b16 %v4750, %v4749
    %v4793 = vpack.c.b16 %v4752, %v4751
    %v4794 = vpack.c.b16 %v4754, %v4753
    %v4795 = vpack.c.b16 %v4756, %v4755
    %v4796 = vpack.c.b16 %v4758, %v4757
    %v4797 = vpack.c.b16 %v4760, %v4759
    %v4798 = vpack.c.b16 %v4762, %v4761
    %v4799 = vpack.c.b16 %v4764, %v4763
    %v4800 = vpack.c.b16 %v4766, %v4765
    %v4801 = vpack.c.b16 %v4768, %v4767
    %v4802 = vpack.c.b16 %v4770, %v4769
    %4835 = vmatprep.subr.bf16.mxu0 0
    %4836 = vmatpush1.bf16.msra.mxu0 %v4778
    %4837 = vmatprep.subr.bf16.mxu0 0
    %4838 = vmatpush1.bf16.msra.mxu0 %v4777
    %4839 = vmatprep.subr.bf16.mxu0 0
    %4840 = vmatpush1.bf16.msra.mxu0 %v4776
    %4841 = vmatprep.subr.bf16.mxu0 0
    %4842 = vmatpush1.bf16.msra.mxu0 %v4775
    %4843 = vmatprep.subr.bf16.mxu0 0
    %4844 = vmatpush1.bf16.msra.mxu0 %v4774
    %4845 = vmatprep.subr.bf16.mxu0 0
    %4846 = vmatpush1.bf16.msra.mxu0 %v4773
    %4847 = vmatprep.subr.bf16.mxu0 0
    %4848 = vmatpush1.bf16.msra.mxu0 %v4772
    %4849 = vmatprep.subr.bf16.mxu0 0
    %4850 = vmatpush1.bf16.msra.mxu0 %v4771
    %4851 = vmatprep.subr.bf16.mxu0 0
    %4852 = vmatpush2.bf16.msra.mxu0 %v4786
    %4853 = vmatprep.subr.bf16.mxu0 0
    %4854 = vmatpush2.bf16.msra.mxu0 %v4785
    %4855 = vmatprep.subr.bf16.mxu0 0
    %4856 = vmatpush2.bf16.msra.mxu0 %v4784
    %4857 = vmatprep.subr.bf16.mxu0 0
    %4858 = vmatpush2.bf16.msra.mxu0 %v4783
    %4859 = vmatprep.subr.bf16.mxu0 0
    %4860 = vmatpush2.bf16.msra.mxu0 %v4782
    %4861 = vmatprep.subr.bf16.mxu0 0
    %4862 = vmatpush2.bf16.msra.mxu0 %v4781
    %4863 = vmatprep.subr.bf16.mxu0 0
    %4864 = vmatpush2.bf16.msra.mxu0 %v4780
    %4865 = vmatprep.subr.bf16.mxu0 0
    %4866 = vmatpush2.bf16.msra.mxu0 %v4779
    %4867 = vmatprep.mubr.bf16.mxu0 %v4567
    %4868 = vmatmul.mubr.bf16.gmra.mxu0 %v4566
    %v4869 = vpop.f32.mrf.mxu0
    %v4870 = vadd.f32 %v4641, %v4869
    %v4871 = vpop.f32.mrf.mxu0
    %v4872 = vpop.f32.mrf.mxu0
    %v4873 = vadd.f32 %v4641, %v4872
    %v4874 = vpop.f32.mrf.mxu0
    %4875 = vdwg.mxu0
    %4876 = vmatprep.subr.bf16.mxu0 0
    %4877 = vmatpush1.bf16.msra.mxu0 %v4794
    %4878 = vmatprep.subr.bf16.mxu0 0
    %4879 = vmatpush1.bf16.msra.mxu0 %v4793
    %4880 = vmatprep.subr.bf16.mxu0 0
    %4881 = vmatpush1.bf16.msra.mxu0 %v4792
    %4882 = vmatprep.subr.bf16.mxu0 0
    %4883 = vmatpush1.bf16.msra.mxu0 %v4791
    %4884 = vmatprep.subr.bf16.mxu0 0
    %4885 = vmatpush1.bf16.msra.mxu0 %v4790
    %4886 = vmatprep.subr.bf16.mxu0 0
    %4887 = vmatpush1.bf16.msra.mxu0 %v4789
    %4888 = vmatprep.subr.bf16.mxu0 0
    %4889 = vmatpush1.bf16.msra.mxu0 %v4788
    %4890 = vmatprep.subr.bf16.mxu0 0
    %4891 = vmatpush1.bf16.msra.mxu0 %v4787
    %4892 = vmatprep.subr.bf16.mxu0 0
    %4893 = vmatpush2.bf16.msra.mxu0 %v4802
    %4894 = vmatprep.subr.bf16.mxu0 0
    %4895 = vmatpush2.bf16.msra.mxu0 %v4801
    %4896 = vmatprep.subr.bf16.mxu0 0
    %4897 = vmatpush2.bf16.msra.mxu0 %v4800
    %4898 = vmatprep.subr.bf16.mxu0 0
    %4899 = vmatpush2.bf16.msra.mxu0 %v4799
    %4900 = vmatprep.subr.bf16.mxu0 0
    %4901 = vmatpush2.bf16.msra.mxu0 %v4798
    %4902 = vmatprep.subr.bf16.mxu0 0
    %4903 = vmatpush2.bf16.msra.mxu0 %v4797
    %4904 = vmatprep.subr.bf16.mxu0 0
    %4905 = vmatpush2.bf16.msra.mxu0 %v4796
    %4906 = vmatprep.subr.bf16.mxu0 0
    %4907 = vmatpush2.bf16.msra.mxu0 %v4795
    %4908 = vmatprep.mubr.bf16.mxu0 %v4569
    %4909 = vmatmul.mubr.bf16.gmra.mxu0 %v4568
    %v4910 = vpop.f32.mrf.mxu0
    %v4911 = vadd.f32 %v4870, %v4910
    %v4912 = vpop.f32.mrf.mxu0
    %v4913 = vpop.f32.mrf.mxu0
    %v4914 = vadd.f32 %v4873, %v4913
    %v4915 = vpop.f32.mrf.mxu0
    %4916 = vdwg.mxu0
    %v4917 = vadd.f32 %v4189, %v4911
    %v4918 = vadd.f32 %v4190, %v4914
    %s4919 = scalar_lea.vmem %s13, 1
    %v4920 = vld [vmem:[%s4919] sm:$0x1]
    %s4921 = scalar_lea.vmem %s14, 1
    %v4922 = vld [vmem:[%s4921] sm:$0x1]
    %4923 = vadd.xlane.f32.xlu0 %v4917
    %v4924 = vpop.xlane.xlu0 %4923
    %4925 = vadd.xlane.f32.xlu0 %v4918
    %v4926 = vpop.xlane.xlu0 %4925
    %v4927 = vmul.f32 %v4924, %v157
    %v4928 = vmul.f32 %v4926, %v157
    %v4929 = vsub.f32 %v4917, %v4927
    %v4930 = vsub.f32 %v4918, %v4928
    %v4931 = vmul.f32 %v4929, %v4929
    %v4932 = vmul.f32 %v4930, %v4930
    %4933 = vadd.xlane.f32.xlu0 %v4931
    %v4934 = vpop.xlane.xlu0 %4933
    %4935 = vadd.xlane.f32.xlu0 %v4932
    %v4936 = vpop.xlane.xlu0 %4935
    %v4937 = vmul.f32 %v4934, %v157
    %v4938 = vmul.f32 %v4936, %v157
    %v4939 = vadd.f32 %v4937, 1e-12
    %v4940 = vadd.f32 %v4938, 1e-12
    %v4941 = vrsqrt.pop %v4939
    %v4942 = vrsqrt.pop %v4940
    %v4943 = vmul.f32 %v4929, %v4941
    %v4944 = vmul.f32 %v4930, %v4942
    %v4946 = vlaneseq
    %v4947 = vshrl.u32 %v4946, 7
    %v4948 = vsub.s32 0, %v4947
    %v4949 = vrot.slane %v4920, %v4948
    %v4951 = vmul.f32 %v4943, %v4949
    %v4952 = vmul.f32 %v4944, %v4949
    %v4954 = vlaneseq
    %v4955 = vshrl.u32 %v4954, 7
    %v4956 = vsub.s32 0, %v4955
    %v4957 = vrot.slane %v4922, %v4956
    %v4959 = vadd.f32 %v4951, %v4957
    %v4960 = vadd.f32 %v4952, %v4957
    %v4961 = vpack.c.bf16 %v4960, %v4959
    %v4962 = vld [vmem:[#allocation8] sm:$0xff]
    %v4963 = vld [vmem:[#allocation8 + $0x8] sm:$0xff]
    %v4964 = vld [vmem:[#allocation8 + $0x10] sm:$0xff]
    %v4965 = vld [vmem:[#allocation8 + $0x18] sm:$0xff]
    %v4966 = vld [vmem:[#allocation8 + $0x20] sm:$0xff]
    %v4967 = vld [vmem:[#allocation8 + $0x28] sm:$0xff]
    %v4968 = vld [vmem:[#allocation8 + $0x30] sm:$0xff]
    %v4969 = vld [vmem:[#allocation8 + $0x38] sm:$0xff]
    %v4970 = vld [vmem:[#allocation8 + $0x40] sm:$0xff]
    %v4971 = vld [vmem:[#allocation8 + $0x48] sm:$0xff]
    %v4972 = vld [vmem:[#allocation8 + $0x50] sm:$0xff]
    %v4973 = vld [vmem:[#allocation8 + $0x58] sm:$0xff]
    %v4974 = vld [vmem:[#allocation8 + $0x60] sm:$0xff]
    %v4975 = vld [vmem:[#allocation8 + $0x68] sm:$0xff]
    %v4976 = vld [vmem:[#allocation8 + $0x70] sm:$0xff]
    %v4977 = vld [vmem:[#allocation8 + $0x78] sm:$0xff]
    %v4978 = vld [vmem:[#allocation8 + $0x80] sm:$0xff]
    %v4979 = vld [vmem:[#allocation8 + $0x88] sm:$0xff]
    %v4980 = vld [vmem:[#allocation8 + $0x90] sm:$0xff]
    %v4981 = vld [vmem:[#allocation8 + $0x98] sm:$0xff]
    %v4982 = vld [vmem:[#allocation8 + $0xa0] sm:$0xff]
    %v4983 = vld [vmem:[#allocation8 + $0xa8] sm:$0xff]
    %v4984 = vld [vmem:[#allocation8 + $0xb0] sm:$0xff]
    %v4985 = vld [vmem:[#allocation8 + $0xb8] sm:$0xff]
    %v4986 = vld [vmem:[#allocation8 + $0xc0] sm:$0xff]
    %v4987 = vld [vmem:[#allocation8 + $0xc8] sm:$0xff]
    %v4988 = vld [vmem:[#allocation8 + $0xd0] sm:$0xff]
    %v4989 = vld [vmem:[#allocation8 + $0xd8] sm:$0xff]
    %v4990 = vld [vmem:[#allocation8 + $0xe0] sm:$0xff]
    %v4991 = vld [vmem:[#allocation8 + $0xe8] sm:$0xff]
    %v4992 = vld [vmem:[#allocation8 + $0xf0] sm:$0xff]
    %v4993 = vld [vmem:[#allocation8 + $0xf8] sm:$0xff]
    %v4994 = vld [vmem:[%s17] sm:$0xf]
    %v4996 = vlaneseq
    %v4997 = vshrl.u32 %v4996, 7
    %v4998 = vsub.s32 0, %v4997
    %v4999 = vrot.slane %v4994, %v4998
    %v5000 = vlaneseq
    %v5001 = vshrl.u32 %v5000, 7
    %v5002 = vsub.s32 1, %v5001
    %v5003 = vrot.slane %v4994, %v5002
    %v5004 = vlaneseq
    %v5005 = vshrl.u32 %v5004, 7
    %v5006 = vsub.s32 2, %v5005
    %v5007 = vrot.slane %v4994, %v5006
    %v5008 = vlaneseq
    %v5009 = vshrl.u32 %v5008, 7
    %v5010 = vsub.s32 3, %v5009
    %v5011 = vrot.slane %v4994, %v5010
    %v5048 = vunpack.c.l.b16 %v4962
    %v5049 = vunpack.c.h.b16 %v4962
    %v5050 = vunpack.c.l.b16 %v4963
    %v5051 = vunpack.c.h.b16 %v4963
    %v5052 = vunpack.c.l.b16 %v4964
    %v5053 = vunpack.c.h.b16 %v4964
    %v5054 = vunpack.c.l.b16 %v4965
    %v5055 = vunpack.c.h.b16 %v4965
    %v5056 = vunpack.c.l.b16 %v4966
    %v5057 = vunpack.c.h.b16 %v4966
    %v5058 = vunpack.c.l.b16 %v4967
    %v5059 = vunpack.c.h.b16 %v4967
    %v5060 = vunpack.c.l.b16 %v4968
    %v5061 = vunpack.c.h.b16 %v4968
    %v5062 = vunpack.c.l.b16 %v4969
    %v5063 = vunpack.c.h.b16 %v4969
    %v5064 = vunpack.c.l.b16 %v4970
    %v5065 = vunpack.c.h.b16 %v4970
    %v5066 = vunpack.c.l.b16 %v4971
    %v5067 = vunpack.c.h.b16 %v4971
    %v5068 = vunpack.c.l.b16 %v4972
    %v5069 = vunpack.c.h.b16 %v4972
    %v5070 = vunpack.c.l.b16 %v4973
    %v5071 = vunpack.c.h.b16 %v4973
    %v5072 = vunpack.c.l.b16 %v4974
    %v5073 = vunpack.c.h.b16 %v4974
    %v5074 = vunpack.c.l.b16 %v4975
    %v5075 = vunpack.c.h.b16 %v4975
    %v5076 = vunpack.c.l.b16 %v4976
    %v5077 = vunpack.c.h.b16 %v4976
    %v5078 = vunpack.c.l.b16 %v4977
    %v5079 = vunpack.c.h.b16 %v4977
    %v5080 = vunpack.c.l.b16 %v4978
    %v5081 = vunpack.c.h.b16 %v4978
    %v5082 = vunpack.c.l.b16 %v4979
    %v5083 = vunpack.c.h.b16 %v4979
    %v5084 = vunpack.c.l.b16 %v4980
    %v5085 = vunpack.c.h.b16 %v4980
    %v5086 = vunpack.c.l.b16 %v4981
    %v5087 = vunpack.c.h.b16 %v4981
    %v5088 = vunpack.c.l.b16 %v4982
    %v5089 = vunpack.c.h.b16 %v4982
    %v5090 = vunpack.c.l.b16 %v4983
    %v5091 = vunpack.c.h.b16 %v4983
    %v5092 = vunpack.c.l.b16 %v4984
    %v5093 = vunpack.c.h.b16 %v4984
    %v5094 = vunpack.c.l.b16 %v4985
    %v5095 = vunpack.c.h.b16 %v4985
    %v5096 = vunpack.c.l.b16 %v4986
    %v5097 = vunpack.c.h.b16 %v4986
    %v5098 = vunpack.c.l.b16 %v4987
    %v5099 = vunpack.c.h.b16 %v4987
    %v5100 = vunpack.c.l.b16 %v4988
    %v5101 = vunpack.c.h.b16 %v4988
    %v5102 = vunpack.c.l.b16 %v4989
    %v5103 = vunpack.c.h.b16 %v4989
    %v5104 = vunpack.c.l.b16 %v4990
    %v5105 = vunpack.c.h.b16 %v4990
    %v5106 = vunpack.c.l.b16 %v4991
    %v5107 = vunpack.c.h.b16 %v4991
    %v5108 = vunpack.c.l.b16 %v4992
    %v5109 = vunpack.c.h.b16 %v4992
    %v5110 = vunpack.c.l.b16 %v4993
    %v5111 = vunpack.c.h.b16 %v4993
    %v5112 = vpack.c.b16 %v5052, %v5048
    %v5113 = vpack.c.b16 %v5053, %v5049
    %v5114 = vpack.c.b16 %v5054, %v5050
    %v5115 = vpack.c.b16 %v5055, %v5051
    %v5116 = vpack.c.b16 %v5060, %v5056
    %v5117 = vpack.c.b16 %v5061, %v5057
    %v5118 = vpack.c.b16 %v5062, %v5058
    %v5119 = vpack.c.b16 %v5063, %v5059
    %v5120 = vpack.c.b16 %v5068, %v5064
    %v5121 = vpack.c.b16 %v5069, %v5065
    %v5122 = vpack.c.b16 %v5070, %v5066
    %v5123 = vpack.c.b16 %v5071, %v5067
    %v5124 = vpack.c.b16 %v5076, %v5072
    %v5125 = vpack.c.b16 %v5077, %v5073
    %v5126 = vpack.c.b16 %v5078, %v5074
    %v5127 = vpack.c.b16 %v5079, %v5075
    %v5128 = vpack.c.b16 %v5084, %v5080
    %v5129 = vpack.c.b16 %v5085, %v5081
    %v5130 = vpack.c.b16 %v5086, %v5082
    %v5131 = vpack.c.b16 %v5087, %v5083
    %v5132 = vpack.c.b16 %v5092, %v5088
    %v5133 = vpack.c.b16 %v5093, %v5089
    %v5134 = vpack.c.b16 %v5094, %v5090
    %v5135 = vpack.c.b16 %v5095, %v5091
    %v5136 = vpack.c.b16 %v5100, %v5096
    %v5137 = vpack.c.b16 %v5101, %v5097
    %v5138 = vpack.c.b16 %v5102, %v5098
    %v5139 = vpack.c.b16 %v5103, %v5099
    %v5140 = vpack.c.b16 %v5108, %v5104
    %v5141 = vpack.c.b16 %v5109, %v5105
    %v5142 = vpack.c.b16 %v5110, %v5106
    %v5143 = vpack.c.b16 %v5111, %v5107
    %5176 = vmatprep.subr.bf16.mxu0 %v5141
    %5177 = vmatpush1.bf16.msra.mxu0 %v5140
    %5178 = vmatprep.subr.bf16.mxu0 %v5137
    %5179 = vmatpush1.bf16.msra.mxu0 %v5136
    %5180 = vmatprep.subr.bf16.mxu0 %v5133
    %5181 = vmatpush1.bf16.msra.mxu0 %v5132
    %5182 = vmatprep.subr.bf16.mxu0 %v5129
    %5183 = vmatpush1.bf16.msra.mxu0 %v5128
    %5184 = vmatprep.subr.bf16.mxu0 %v5125
    %5185 = vmatpush1.bf16.msra.mxu0 %v5124
    %5186 = vmatprep.subr.bf16.mxu0 %v5121
    %5187 = vmatpush1.bf16.msra.mxu0 %v5120
    %5188 = vmatprep.subr.bf16.mxu0 %v5117
    %5189 = vmatpush1.bf16.msra.mxu0 %v5116
    %5190 = vmatprep.subr.bf16.mxu0 %v5113
    %5191 = vmatpush1.bf16.msra.mxu0 %v5112
    %5192 = vmatprep.subr.bf16.mxu0 0
    %5193 = vmatpush2.bf16.msra.mxu0 0
    %5194 = vmatprep.subr.bf16.mxu0 0
    %5195 = vmatpush2.bf16.msra.mxu0 0
    %5196 = vmatprep.subr.bf16.mxu0 0
    %5197 = vmatpush2.bf16.msra.mxu0 0
    %5198 = vmatprep.subr.bf16.mxu0 0
    %5199 = vmatpush2.bf16.msra.mxu0 0
    %5200 = vmatprep.subr.bf16.mxu0 0
    %5201 = vmatpush2.bf16.msra.mxu0 0
    %5202 = vmatprep.subr.bf16.mxu0 0
    %5203 = vmatpush2.bf16.msra.mxu0 0
    %5204 = vmatprep.subr.bf16.mxu0 0
    %5205 = vmatpush2.bf16.msra.mxu0 0
    %5206 = vmatprep.subr.bf16.mxu0 0
    %5207 = vmatpush2.bf16.msra.mxu0 0
    %5208 = vmatprep.mubr.bf16.mxu0 0
    %5209 = vmatmul.mubr.bf16.gmra.mxu0 %v4961
    %v5210 = vpop.f32.mrf.mxu0
    %v5211 = vadd.f32 %v4999, %v5210
    %v5212 = vpop.f32.mrf.mxu0
    %v5213 = vadd.f32 %v5003, %v5212
    %v5214 = vpop.f32.mrf.mxu0
    %v5215 = vadd.f32 %v4999, %v5214
    %v5216 = vpop.f32.mrf.mxu0
    %v5217 = vadd.f32 %v5003, %v5216
    %5218 = vdwg.mxu0
    %5219 = vmatprep.subr.bf16.mxu0 %v5143
    %5220 = vmatpush1.bf16.msra.mxu0 %v5142
    %5221 = vmatprep.subr.bf16.mxu0 %v5139
    %5222 = vmatpush1.bf16.msra.mxu0 %v5138
    %5223 = vmatprep.subr.bf16.mxu0 %v5135
    %5224 = vmatpush1.bf16.msra.mxu0 %v5134
    %5225 = vmatprep.subr.bf16.mxu0 %v5131
    %5226 = vmatpush1.bf16.msra.mxu0 %v5130
    %5227 = vmatprep.subr.bf16.mxu0 %v5127
    %5228 = vmatpush1.bf16.msra.mxu0 %v5126
    %5229 = vmatprep.subr.bf16.mxu0 %v5123
    %5230 = vmatpush1.bf16.msra.mxu0 %v5122
    %5231 = vmatprep.subr.bf16.mxu0 %v5119
    %5232 = vmatpush1.bf16.msra.mxu0 %v5118
    %5233 = vmatprep.subr.bf16.mxu0 %v5115
    %5234 = vmatpush1.bf16.msra.mxu0 %v5114
    %5235 = vmatprep.subr.bf16.mxu0 0
    %5236 = vmatpush2.bf16.msra.mxu0 0
    %5237 = vmatprep.subr.bf16.mxu0 0
    %5238 = vmatpush2.bf16.msra.mxu0 0
    %5239 = vmatprep.subr.bf16.mxu0 0
    %5240 = vmatpush2.bf16.msra.mxu0 0
    %5241 = vmatprep.subr.bf16.mxu0 0
    %5242 = vmatpush2.bf16.msra.mxu0 0
    %5243 = vmatprep.subr.bf16.mxu0 0
    %5244 = vmatpush2.bf16.msra.mxu0 0
    %5245 = vmatprep.subr.bf16.mxu0 0
    %5246 = vmatpush2.bf16.msra.mxu0 0
    %5247 = vmatprep.subr.bf16.mxu0 0
    %5248 = vmatpush2.bf16.msra.mxu0 0
    %5249 = vmatprep.subr.bf16.mxu0 0
    %5250 = vmatpush2.bf16.msra.mxu0 0
    %5251 = vmatprep.mubr.bf16.mxu0 0
    %5252 = vmatmul.mubr.bf16.gmra.mxu0 %v4961
    %v5253 = vpop.f32.mrf.mxu0
    %v5254 = vadd.f32 %v5007, %v5253
    %v5255 = vpop.f32.mrf.mxu0
    %v5256 = vadd.f32 %v5011, %v5255
    %v5257 = vpop.f32.mrf.mxu0
    %v5258 = vadd.f32 %v5007, %v5257
    %v5259 = vpop.f32.mrf.mxu0
    %v5260 = vadd.f32 %v5011, %v5259
    %5261 = vdwg.mxu0
    %v5262 = vld [vmem:[#allocation10] sm:$0xff]
    %v5263 = vld [vmem:[#allocation10 + $0x8] sm:$0xff]
    %v5264 = vld [vmem:[#allocation10 + $0x10] sm:$0xff]
    %v5265 = vld [vmem:[#allocation10 + $0x18] sm:$0xff]
    %v5266 = vld [vmem:[#allocation10 + $0x20] sm:$0xff]
    %v5267 = vld [vmem:[#allocation10 + $0x28] sm:$0xff]
    %v5268 = vld [vmem:[#allocation10 + $0x30] sm:$0xff]
    %v5269 = vld [vmem:[#allocation10 + $0x38] sm:$0xff]
    %v5270 = vld [vmem:[#allocation10 + $0x40] sm:$0xff]
    %v5271 = vld [vmem:[#allocation10 + $0x48] sm:$0xff]
    %v5272 = vld [vmem:[#allocation10 + $0x50] sm:$0xff]
    %v5273 = vld [vmem:[#allocation10 + $0x58] sm:$0xff]
    %v5274 = vld [vmem:[#allocation10 + $0x60] sm:$0xff]
    %v5275 = vld [vmem:[#allocation10 + $0x68] sm:$0xff]
    %v5276 = vld [vmem:[#allocation10 + $0x70] sm:$0xff]
    %v5277 = vld [vmem:[#allocation10 + $0x78] sm:$0xff]
    %v5278 = vld [vmem:[#allocation10 + $0x80] sm:$0xff]
    %v5279 = vld [vmem:[#allocation10 + $0x88] sm:$0xff]
    %v5280 = vld [vmem:[#allocation10 + $0x90] sm:$0xff]
    %v5281 = vld [vmem:[#allocation10 + $0x98] sm:$0xff]
    %v5282 = vld [vmem:[#allocation10 + $0xa0] sm:$0xff]
    %v5283 = vld [vmem:[#allocation10 + $0xa8] sm:$0xff]
    %v5284 = vld [vmem:[#allocation10 + $0xb0] sm:$0xff]
    %v5285 = vld [vmem:[#allocation10 + $0xb8] sm:$0xff]
    %v5286 = vld [vmem:[#allocation10 + $0xc0] sm:$0xff]
    %v5287 = vld [vmem:[#allocation10 + $0xc8] sm:$0xff]
    %v5288 = vld [vmem:[#allocation10 + $0xd0] sm:$0xff]
    %v5289 = vld [vmem:[#allocation10 + $0xd8] sm:$0xff]
    %v5290 = vld [vmem:[#allocation10 + $0xe0] sm:$0xff]
    %v5291 = vld [vmem:[#allocation10 + $0xe8] sm:$0xff]
    %v5292 = vld [vmem:[#allocation10 + $0xf0] sm:$0xff]
    %v5293 = vld [vmem:[#allocation10 + $0xf8] sm:$0xff]
    %v5326 = vunpack.c.l.b16 %v5262
    %v5327 = vunpack.c.h.b16 %v5262
    %v5328 = vunpack.c.l.b16 %v5263
    %v5329 = vunpack.c.h.b16 %v5263
    %v5330 = vunpack.c.l.b16 %v5264
    %v5331 = vunpack.c.h.b16 %v5264
    %v5332 = vunpack.c.l.b16 %v5265
    %v5333 = vunpack.c.h.b16 %v5265
    %v5334 = vunpack.c.l.b16 %v5266
    %v5335 = vunpack.c.h.b16 %v5266
    %v5336 = vunpack.c.l.b16 %v5267
    %v5337 = vunpack.c.h.b16 %v5267
    %v5338 = vunpack.c.l.b16 %v5268
    %v5339 = vunpack.c.h.b16 %v5268
    %v5340 = vunpack.c.l.b16 %v5269
    %v5341 = vunpack.c.h.b16 %v5269
    %v5342 = vunpack.c.l.b16 %v5270
    %v5343 = vunpack.c.h.b16 %v5270
    %v5344 = vunpack.c.l.b16 %v5271
    %v5345 = vunpack.c.h.b16 %v5271
    %v5346 = vunpack.c.l.b16 %v5272
    %v5347 = vunpack.c.h.b16 %v5272
    %v5348 = vunpack.c.l.b16 %v5273
    %v5349 = vunpack.c.h.b16 %v5273
    %v5350 = vunpack.c.l.b16 %v5274
    %v5351 = vunpack.c.h.b16 %v5274
    %v5352 = vunpack.c.l.b16 %v5275
    %v5353 = vunpack.c.h.b16 %v5275
    %v5354 = vunpack.c.l.b16 %v5276
    %v5355 = vunpack.c.h.b16 %v5276
    %v5356 = vunpack.c.l.b16 %v5277
    %v5357 = vunpack.c.h.b16 %v5277
    %v5358 = vunpack.c.l.b16 %v5278
    %v5359 = vunpack.c.h.b16 %v5278
    %v5360 = vunpack.c.l.b16 %v5279
    %v5361 = vunpack.c.h.b16 %v5279
    %v5362 = vunpack.c.l.b16 %v5280
    %v5363 = vunpack.c.h.b16 %v5280
    %v5364 = vunpack.c.l.b16 %v5281
    %v5365 = vunpack.c.h.b16 %v5281
    %v5366 = vunpack.c.l.b16 %v5282
    %v5367 = vunpack.c.h.b16 %v5282
    %v5368 = vunpack.c.l.b16 %v5283
    %v5369 = vunpack.c.h.b16 %v5283
    %v5370 = vunpack.c.l.b16 %v5284
    %v5371 = vunpack.c.h.b16 %v5284
    %v5372 = vunpack.c.l.b16 %v5285
    %v5373 = vunpack.c.h.b16 %v5285
    %v5374 = vunpack.c.l.b16 %v5286
    %v5375 = vunpack.c.h.b16 %v5286
    %v5376 = vunpack.c.l.b16 %v5287
    %v5377 = vunpack.c.h.b16 %v5287
    %v5378 = vunpack.c.l.b16 %v5288
    %v5379 = vunpack.c.h.b16 %v5288
    %v5380 = vunpack.c.l.b16 %v5289
    %v5381 = vunpack.c.h.b16 %v5289
    %v5382 = vunpack.c.l.b16 %v5290
    %v5383 = vunpack.c.h.b16 %v5290
    %v5384 = vunpack.c.l.b16 %v5291
    %v5385 = vunpack.c.h.b16 %v5291
    %v5386 = vunpack.c.l.b16 %v5292
    %v5387 = vunpack.c.h.b16 %v5292
    %v5388 = vunpack.c.l.b16 %v5293
    %v5389 = vunpack.c.h.b16 %v5293
    %v5390 = vpack.c.b16 %v5330, %v5326
    %v5391 = vpack.c.b16 %v5331, %v5327
    %v5392 = vpack.c.b16 %v5332, %v5328
    %v5393 = vpack.c.b16 %v5333, %v5329
    %v5394 = vpack.c.b16 %v5338, %v5334
    %v5395 = vpack.c.b16 %v5339, %v5335
    %v5396 = vpack.c.b16 %v5340, %v5336
    %v5397 = vpack.c.b16 %v5341, %v5337
    %v5398 = vpack.c.b16 %v5346, %v5342
    %v5399 = vpack.c.b16 %v5347, %v5343
    %v5400 = vpack.c.b16 %v5348, %v5344
    %v5401 = vpack.c.b16 %v5349, %v5345
    %v5402 = vpack.c.b16 %v5354, %v5350
    %v5403 = vpack.c.b16 %v5355, %v5351
    %v5404 = vpack.c.b16 %v5356, %v5352
    %v5405 = vpack.c.b16 %v5357, %v5353
    %v5406 = vpack.c.b16 %v5362, %v5358
    %v5407 = vpack.c.b16 %v5363, %v5359
    %v5408 = vpack.c.b16 %v5364, %v5360
    %v5409 = vpack.c.b16 %v5365, %v5361
    %v5410 = vpack.c.b16 %v5370, %v5366
    %v5411 = vpack.c.b16 %v5371, %v5367
    %v5412 = vpack.c.b16 %v5372, %v5368
    %v5413 = vpack.c.b16 %v5373, %v5369
    %v5414 = vpack.c.b16 %v5378, %v5374
    %v5415 = vpack.c.b16 %v5379, %v5375
    %v5416 = vpack.c.b16 %v5380, %v5376
    %v5417 = vpack.c.b16 %v5381, %v5377
    %v5418 = vpack.c.b16 %v5386, %v5382
    %v5419 = vpack.c.b16 %v5387, %v5383
    %v5420 = vpack.c.b16 %v5388, %v5384
    %v5421 = vpack.c.b16 %v5389, %v5385
    %5454 = vmatprep.subr.bf16.mxu0 %v5419
    %5455 = vmatpush1.bf16.msra.mxu0 %v5418
    %5456 = vmatprep.subr.bf16.mxu0 %v5415
    %5457 = vmatpush1.bf16.msra.mxu0 %v5414
    %5458 = vmatprep.subr.bf16.mxu0 %v5411
    %5459 = vmatpush1.bf16.msra.mxu0 %v5410
    %5460 = vmatprep.subr.bf16.mxu0 %v5407
    %5461 = vmatpush1.bf16.msra.mxu0 %v5406
    %5462 = vmatprep.subr.bf16.mxu0 %v5403
    %5463 = vmatpush1.bf16.msra.mxu0 %v5402
    %5464 = vmatprep.subr.bf16.mxu0 %v5399
    %5465 = vmatpush1.bf16.msra.mxu0 %v5398
    %5466 = vmatprep.subr.bf16.mxu0 %v5395
    %5467 = vmatpush1.bf16.msra.mxu0 %v5394
    %5468 = vmatprep.subr.bf16.mxu0 %v5391
    %5469 = vmatpush1.bf16.msra.mxu0 %v5390
    %5470 = vmatprep.subr.bf16.mxu0 0
    %5471 = vmatpush2.bf16.msra.mxu0 0
    %5472 = vmatprep.subr.bf16.mxu0 0
    %5473 = vmatpush2.bf16.msra.mxu0 0
    %5474 = vmatprep.subr.bf16.mxu0 0
    %5475 = vmatpush2.bf16.msra.mxu0 0
    %5476 = vmatprep.subr.bf16.mxu0 0
    %5477 = vmatpush2.bf16.msra.mxu0 0
    %5478 = vmatprep.subr.bf16.mxu0 0
    %5479 = vmatpush2.bf16.msra.mxu0 0
    %5480 = vmatprep.subr.bf16.mxu0 0
    %5481 = vmatpush2.bf16.msra.mxu0 0
    %5482 = vmatprep.subr.bf16.mxu0 0
    %5483 = vmatpush2.bf16.msra.mxu0 0
    %5484 = vmatprep.subr.bf16.mxu0 0
    %5485 = vmatpush2.bf16.msra.mxu0 0
    %5486 = vmatprep.mubr.bf16.mxu0 0
    %5487 = vmatmul.mubr.bf16.gmra.mxu0 0
    %v5488 = vpop.f32.mrf.mxu0
    %v5489 = vadd.f32 0.0, %v5488
    %v5490 = vpop.f32.mrf.mxu0
    %v5491 = vadd.f32 0.0, %v5490
    %v5492 = vpop.f32.mrf.mxu0
    %v5493 = vpop.f32.mrf.mxu0
    %5494 = vdwg.mxu0
    %5495 = vmatprep.subr.bf16.mxu0 %v5421
    %5496 = vmatpush1.bf16.msra.mxu0 %v5420
    %5497 = vmatprep.subr.bf16.mxu0 %v5417
    %5498 = vmatpush1.bf16.msra.mxu0 %v5416
    %5499 = vmatprep.subr.bf16.mxu0 %v5413
    %5500 = vmatpush1.bf16.msra.mxu0 %v5412
    %5501 = vmatprep.subr.bf16.mxu0 %v5409
    %5502 = vmatpush1.bf16.msra.mxu0 %v5408
    %5503 = vmatprep.subr.bf16.mxu0 %v5405
    %5504 = vmatpush1.bf16.msra.mxu0 %v5404
    %5505 = vmatprep.subr.bf16.mxu0 %v5401
    %5506 = vmatpush1.bf16.msra.mxu0 %v5400
    %5507 = vmatprep.subr.bf16.mxu0 %v5397
    %5508 = vmatpush1.bf16.msra.mxu0 %v5396
    %5509 = vmatprep.subr.bf16.mxu0 %v5393
    %5510 = vmatpush1.bf16.msra.mxu0 %v5392
    %5511 = vmatprep.subr.bf16.mxu0 0
    %5512 = vmatpush2.bf16.msra.mxu0 0
    %5513 = vmatprep.subr.bf16.mxu0 0
    %5514 = vmatpush2.bf16.msra.mxu0 0
    %5515 = vmatprep.subr.bf16.mxu0 0
    %5516 = vmatpush2.bf16.msra.mxu0 0
    %5517 = vmatprep.subr.bf16.mxu0 0
    %5518 = vmatpush2.bf16.msra.mxu0 0
    %5519 = vmatprep.subr.bf16.mxu0 0
    %5520 = vmatpush2.bf16.msra.mxu0 0
    %5521 = vmatprep.subr.bf16.mxu0 0
    %5522 = vmatpush2.bf16.msra.mxu0 0
    %5523 = vmatprep.subr.bf16.mxu0 0
    %5524 = vmatpush2.bf16.msra.mxu0 0
    %5525 = vmatprep.subr.bf16.mxu0 0
    %5526 = vmatpush2.bf16.msra.mxu0 0
    %5527 = vmatprep.mubr.bf16.mxu0 0
    %5528 = vmatmul.mubr.bf16.gmra.mxu0 0
    %v5529 = vpop.f32.mrf.mxu0
    %v5530 = vadd.f32 0.0, %v5529
    %v5531 = vpop.f32.mrf.mxu0
    %v5532 = vadd.f32 0.0, %v5531
    %v5533 = vpop.f32.mrf.mxu0
    %v5534 = vpop.f32.mrf.mxu0
    %5535 = vdwg.mxu0
    %v5536 = vadd.f32 %v5211, %v5489
    %v5537 = vadd.f32 %v5213, %v5491
    %v5538 = vadd.f32 %v5254, %v5530
    %v5539 = vadd.f32 %v5256, %v5532
    %v5540 = vxor.u32 %v5536, 2147483648
    %v5541 = vmul.f32 %v5540, 1.442695
    %v5542 = vpow.pop %v5541
    %v5543 = vadd.f32 %v5542, 1.0
    %v5544 = vrcp.pop %v5543
    %v5545 = vmul.f32 1.0, %v5544
    %v5546 = vxor.u32 %v5537, 2147483648
    %v5547 = vmul.f32 %v5546, 1.442695
    %v5548 = vpow.pop %v5547
    %v5549 = vadd.f32 %v5548, 1.0
    %v5550 = vrcp.pop %v5549
    %v5551 = vmul.f32 1.0, %v5550
    %v5552 = vtanh.pop %v5538
    %v5553 = vxor.u32 %v5539, 2147483648
    %v5554 = vmul.f32 %v5553, 1.442695
    %v5555 = vpow.pop %v5554
    %v5556 = vadd.f32 %v5555, 1.0
    %v5557 = vrcp.pop %v5556
    %v5558 = vmul.f32 1.0, %v5557
    %v5559 = vmul.f32 %v5551, 0.0
    %v5560 = vmul.f32 %v5545, %v5552
    %v5561 = vadd.f32 %v5559, %v5560
    %v5562 = vtanh.pop %v5561
    %v5563 = vmul.f32 %v5558, %v5562
    %v5564 = vpack.c.bf16 %v5563, %v5563
    %5565 = vmatprep.subr.bf16.mxu0 %v5419
    %5566 = vmatpush1.bf16.msra.mxu0 %v5418
    %5567 = vmatprep.subr.bf16.mxu0 %v5415
    %5568 = vmatpush1.bf16.msra.mxu0 %v5414
    %5569 = vmatprep.subr.bf16.mxu0 %v5411
    %5570 = vmatpush1.bf16.msra.mxu0 %v5410
    %5571 = vmatprep.subr.bf16.mxu0 %v5407
    %5572 = vmatpush1.bf16.msra.mxu0 %v5406
    %5573 = vmatprep.subr.bf16.mxu0 %v5403
    %5574 = vmatpush1.bf16.msra.mxu0 %v5402
    %5575 = vmatprep.subr.bf16.mxu0 %v5399
    %5576 = vmatpush1.bf16.msra.mxu0 %v5398
    %5577 = vmatprep.subr.bf16.mxu0 %v5395
    %5578 = vmatpush1.bf16.msra.mxu0 %v5394
    %5579 = vmatprep.subr.bf16.mxu0 %v5391
    %5580 = vmatpush1.bf16.msra.mxu0 %v5390
    %5581 = vmatprep.subr.bf16.mxu0 0
    %5582 = vmatpush2.bf16.msra.mxu0 0
    %5583 = vmatprep.subr.bf16.mxu0 0
    %5584 = vmatpush2.bf16.msra.mxu0 0
    %5585 = vmatprep.subr.bf16.mxu0 0
    %5586 = vmatpush2.bf16.msra.mxu0 0
    %5587 = vmatprep.subr.bf16.mxu0 0
    %5588 = vmatpush2.bf16.msra.mxu0 0
    %5589 = vmatprep.subr.bf16.mxu0 0
    %5590 = vmatpush2.bf16.msra.mxu0 0
    %5591 = vmatprep.subr.bf16.mxu0 0
    %5592 = vmatpush2.bf16.msra.mxu0 0
    %5593 = vmatprep.subr.bf16.mxu0 0
    %5594 = vmatpush2.bf16.msra.mxu0 0
    %5595 = vmatprep.subr.bf16.mxu0 0
    %5596 = vmatpush2.bf16.msra.mxu0 0
    %5597 = vmatprep.mubr.bf16.mxu0 0
    %5598 = vmatmul.mubr.bf16.gmra.mxu0 %v5564
    %v5599 = vpop.f32.mrf.mxu0
    %v5600 = vadd.f32 0.0, %v5599
    %v5601 = vpop.f32.mrf.mxu0
    %v5602 = vadd.f32 0.0, %v5601
    %v5603 = vpop.f32.mrf.mxu0
    %v5604 = vpop.f32.mrf.mxu0
    %5605 = vdwg.mxu0
    %5606 = vmatprep.subr.bf16.mxu0 %v5421
    %5607 = vmatpush1.bf16.msra.mxu0 %v5420
    %5608 = vmatprep.subr.bf16.mxu0 %v5417
    %5609 = vmatpush1.bf16.msra.mxu0 %v5416
    %5610 = vmatprep.subr.bf16.mxu0 %v5413
    %5611 = vmatpush1.bf16.msra.mxu0 %v5412
    %5612 = vmatprep.subr.bf16.mxu0 %v5409
    %5613 = vmatpush1.bf16.msra.mxu0 %v5408
    %5614 = vmatprep.subr.bf16.mxu0 %v5405
    %5615 = vmatpush1.bf16.msra.mxu0 %v5404
    %5616 = vmatprep.subr.bf16.mxu0 %v5401
    %5617 = vmatpush1.bf16.msra.mxu0 %v5400
    %5618 = vmatprep.subr.bf16.mxu0 %v5397
    %5619 = vmatpush1.bf16.msra.mxu0 %v5396
    %5620 = vmatprep.subr.bf16.mxu0 %v5393
    %5621 = vmatpush1.bf16.msra.mxu0 %v5392
    %5622 = vmatprep.subr.bf16.mxu0 0
    %5623 = vmatpush2.bf16.msra.mxu0 0
    %5624 = vmatprep.subr.bf16.mxu0 0
    %5625 = vmatpush2.bf16.msra.mxu0 0
    %5626 = vmatprep.subr.bf16.mxu0 0
    %5627 = vmatpush2.bf16.msra.mxu0 0
    %5628 = vmatprep.subr.bf16.mxu0 0
    %5629 = vmatpush2.bf16.msra.mxu0 0
    %5630 = vmatprep.subr.bf16.mxu0 0
    %5631 = vmatpush2.bf16.msra.mxu0 0
    %5632 = vmatprep.subr.bf16.mxu0 0
    %5633 = vmatpush2.bf16.msra.mxu0 0
    %5634 = vmatprep.subr.bf16.mxu0 0
    %5635 = vmatpush2.bf16.msra.mxu0 0
    %5636 = vmatprep.subr.bf16.mxu0 0
    %5637 = vmatpush2.bf16.msra.mxu0 0
    %5638 = vmatprep.mubr.bf16.mxu0 0
    %5639 = vmatmul.mubr.bf16.gmra.mxu0 %v5564
    %v5640 = vpop.f32.mrf.mxu0
    %v5641 = vadd.f32 0.0, %v5640
    %v5642 = vpop.f32.mrf.mxu0
    %v5643 = vadd.f32 0.0, %v5642
    %v5644 = vpop.f32.mrf.mxu0
    %v5645 = vpop.f32.mrf.mxu0
    %5646 = vdwg.mxu0
    %v5651 = vrot.slane %v5600, 7
    %v5652 = vrot.slane %v5602, 7
    %v5653 = vrot.slane %v5641, 7
    %v5654 = vrot.slane %v5643, 7
    %v5659 = vadd.f32 %v5211, %v5651
    %v5660 = vadd.f32 %v5213, %v5652
    %v5661 = vadd.f32 %v5254, %v5653
    %v5662 = vadd.f32 %v5256, %v5654
    %v5663 = vxor.u32 %v5659, 2147483648
    %v5664 = vmul.f32 %v5663, 1.442695
    %v5665 = vpow.pop %v5664
    %v5666 = vadd.f32 %v5665, 1.0
    %v5667 = vrcp.pop %v5666
    %v5668 = vmul.f32 1.0, %v5667
    %v5669 = vxor.u32 %v5660, 2147483648
    %v5670 = vmul.f32 %v5669, 1.442695
    %v5671 = vpow.pop %v5670
    %v5672 = vadd.f32 %v5671, 1.0
    %v5673 = vrcp.pop %v5672
    %v5674 = vmul.f32 1.0, %v5673
    %v5675 = vtanh.pop %v5661
    %v5676 = vxor.u32 %v5662, 2147483648
    %v5677 = vmul.f32 %v5676, 1.442695
    %v5678 = vpow.pop %v5677
    %v5679 = vadd.f32 %v5678, 1.0
    %v5680 = vrcp.pop %v5679
    %v5681 = vmul.f32 1.0, %v5680
    %v5683 = vrot.slane %v5561, 7
    %v5685 = vmul.f32 %v5674, %v5683
    %v5686 = vmul.f32 %v5668, %v5675
    %v5687 = vadd.f32 %v5685, %v5686
    %v5688 = vtanh.pop %v5687
    %v5689 = vmul.f32 %v5681, %v5688
    %v5690 = vpack.c.bf16 %v5689, %v5689
    %v5692 = vshrl.u32 %v5690, 16
    %5695 = vmatprep.subr.bf16.mxu0 %v5419
    %5696 = vmatpush1.bf16.msra.mxu0 %v5418
    %5697 = vmatprep.subr.bf16.mxu0 %v5415
    %5698 = vmatpush1.bf16.msra.mxu0 %v5414
    %5699 = vmatprep.subr.bf16.mxu0 %v5411
    %5700 = vmatpush1.bf16.msra.mxu0 %v5410
    %5701 = vmatprep.subr.bf16.mxu0 %v5407
    %5702 = vmatpush1.bf16.msra.mxu0 %v5406
    %5703 = vmatprep.subr.bf16.mxu0 %v5403
    %5704 = vmatpush1.bf16.msra.mxu0 %v5402
    %5705 = vmatprep.subr.bf16.mxu0 %v5399
    %5706 = vmatpush1.bf16.msra.mxu0 %v5398
    %5707 = vmatprep.subr.bf16.mxu0 %v5395
    %5708 = vmatpush1.bf16.msra.mxu0 %v5394
    %5709 = vmatprep.subr.bf16.mxu0 %v5391
    %5710 = vmatpush1.bf16.msra.mxu0 %v5390
    %5711 = vmatprep.subr.bf16.mxu0 0
    %5712 = vmatpush2.bf16.msra.mxu0 0
    %5713 = vmatprep.subr.bf16.mxu0 0
    %5714 = vmatpush2.bf16.msra.mxu0 0
    %5715 = vmatprep.subr.bf16.mxu0 0
    %5716 = vmatpush2.bf16.msra.mxu0 0
    %5717 = vmatprep.subr.bf16.mxu0 0
    %5718 = vmatpush2.bf16.msra.mxu0 0
    %5719 = vmatprep.subr.bf16.mxu0 0
    %5720 = vmatpush2.bf16.msra.mxu0 0
    %5721 = vmatprep.subr.bf16.mxu0 0
    %5722 = vmatpush2.bf16.msra.mxu0 0
    %5723 = vmatprep.subr.bf16.mxu0 0
    %5724 = vmatpush2.bf16.msra.mxu0 0
    %5725 = vmatprep.subr.bf16.mxu0 0
    %5726 = vmatpush2.bf16.msra.mxu0 0
    %5727 = vmatprep.mubr.bf16.mxu0 0
    %5728 = vmatmul.mubr.bf16.gmra.mxu0 %v5692
    %v5729 = vpop.f32.mrf.mxu0
    %v5730 = vadd.f32 0.0, %v5729
    %v5731 = vpop.f32.mrf.mxu0
    %v5732 = vadd.f32 0.0, %v5731
    %v5733 = vpop.f32.mrf.mxu0
    %v5734 = vpop.f32.mrf.mxu0
    %5735 = vdwg.mxu0
    %5736 = vmatprep.subr.bf16.mxu0 %v5421
    %5737 = vmatpush1.bf16.msra.mxu0 %v5420
    %5738 = vmatprep.subr.bf16.mxu0 %v5417
    %5739 = vmatpush1.bf16.msra.mxu0 %v5416
    %5740 = vmatprep.subr.bf16.mxu0 %v5413
    %5741 = vmatpush1.bf16.msra.mxu0 %v5412
    %5742 = vmatprep.subr.bf16.mxu0 %v5409
    %5743 = vmatpush1.bf16.msra.mxu0 %v5408
    %5744 = vmatprep.subr.bf16.mxu0 %v5405
    %5745 = vmatpush1.bf16.msra.mxu0 %v5404
    %5746 = vmatprep.subr.bf16.mxu0 %v5401
    %5747 = vmatpush1.bf16.msra.mxu0 %v5400
    %5748 = vmatprep.subr.bf16.mxu0 %v5397
    %5749 = vmatpush1.bf16.msra.mxu0 %v5396
    %5750 = vmatprep.subr.bf16.mxu0 %v5393
    %5751 = vmatpush1.bf16.msra.mxu0 %v5392
    %5752 = vmatprep.subr.bf16.mxu0 0
    %5753 = vmatpush2.bf16.msra.mxu0 0
    %5754 = vmatprep.subr.bf16.mxu0 0
    %5755 = vmatpush2.bf16.msra.mxu0 0
    %5756 = vmatprep.subr.bf16.mxu0 0
    %5757 = vmatpush2.bf16.msra.mxu0 0
    %5758 = vmatprep.subr.bf16.mxu0 0
    %5759 = vmatpush2.bf16.msra.mxu0 0
    %5760 = vmatprep.subr.bf16.mxu0 0
    %5761 = vmatpush2.bf16.msra.mxu0 0
    %5762 = vmatprep.subr.bf16.mxu0 0
    %5763 = vmatpush2.bf16.msra.mxu0 0
    %5764 = vmatprep.subr.bf16.mxu0 0
    %5765 = vmatpush2.bf16.msra.mxu0 0
    %5766 = vmatprep.subr.bf16.mxu0 0
    %5767 = vmatpush2.bf16.msra.mxu0 0
    %5768 = vmatprep.mubr.bf16.mxu0 0
    %5769 = vmatmul.mubr.bf16.gmra.mxu0 %v5692
    %v5770 = vpop.f32.mrf.mxu0
    %v5771 = vadd.f32 0.0, %v5770
    %v5772 = vpop.f32.mrf.mxu0
    %v5773 = vadd.f32 0.0, %v5772
    %v5774 = vpop.f32.mrf.mxu0
    %v5775 = vpop.f32.mrf.mxu0
    %5776 = vdwg.mxu0
    %v5781 = vrot.slane %v5730, 6
    %v5782 = vrot.slane %v5732, 6
    %v5783 = vrot.slane %v5771, 6
    %v5784 = vrot.slane %v5773, 6
    %v5789 = vadd.f32 %v5211, %v5781
    %v5790 = vadd.f32 %v5213, %v5782
    %v5791 = vadd.f32 %v5254, %v5783
    %v5792 = vadd.f32 %v5256, %v5784
    %v5793 = vxor.u32 %v5789, 2147483648
    %v5794 = vmul.f32 %v5793, 1.442695
    %v5795 = vpow.pop %v5794
    %v5796 = vadd.f32 %v5795, 1.0
    %v5797 = vrcp.pop %v5796
    %v5798 = vmul.f32 1.0, %v5797
    %v5799 = vxor.u32 %v5790, 2147483648
    %v5800 = vmul.f32 %v5799, 1.442695
    %v5801 = vpow.pop %v5800
    %v5802 = vadd.f32 %v5801, 1.0
    %v5803 = vrcp.pop %v5802
    %v5804 = vmul.f32 1.0, %v5803
    %v5805 = vtanh.pop %v5791
    %v5806 = vxor.u32 %v5792, 2147483648
    %v5807 = vmul.f32 %v5806, 1.442695
    %v5808 = vpow.pop %v5807
    %v5809 = vadd.f32 %v5808, 1.0
    %v5810 = vrcp.pop %v5809
    %v5811 = vmul.f32 1.0, %v5810
    %v5813 = vrot.slane %v5687, 7
    %v5815 = vmul.f32 %v5804, %v5813
    %v5816 = vmul.f32 %v5798, %v5805
    %v5817 = vadd.f32 %v5815, %v5816
    %v5818 = vtanh.pop %v5817
    %v5819 = vmul.f32 %v5811, %v5818
    %v5820 = vpack.c.bf16 %v5819, %v5819
    %v5822 = vrot.slane %v5820, 1
    %5824 = vmatprep.subr.bf16.mxu0 %v5419
    %5825 = vmatpush1.bf16.msra.mxu0 %v5418
    %5826 = vmatprep.subr.bf16.mxu0 %v5415
    %5827 = vmatpush1.bf16.msra.mxu0 %v5414
    %5828 = vmatprep.subr.bf16.mxu0 %v5411
    %5829 = vmatpush1.bf16.msra.mxu0 %v5410
    %5830 = vmatprep.subr.bf16.mxu0 %v5407
    %5831 = vmatpush1.bf16.msra.mxu0 %v5406
    %5832 = vmatprep.subr.bf16.mxu0 %v5403
    %5833 = vmatpush1.bf16.msra.mxu0 %v5402
    %5834 = vmatprep.subr.bf16.mxu0 %v5399
    %5835 = vmatpush1.bf16.msra.mxu0 %v5398
    %5836 = vmatprep.subr.bf16.mxu0 %v5395
    %5837 = vmatpush1.bf16.msra.mxu0 %v5394
    %5838 = vmatprep.subr.bf16.mxu0 %v5391
    %5839 = vmatpush1.bf16.msra.mxu0 %v5390
    %5840 = vmatprep.subr.bf16.mxu0 0
    %5841 = vmatpush2.bf16.msra.mxu0 0
    %5842 = vmatprep.subr.bf16.mxu0 0
    %5843 = vmatpush2.bf16.msra.mxu0 0
    %5844 = vmatprep.subr.bf16.mxu0 0
    %5845 = vmatpush2.bf16.msra.mxu0 0
    %5846 = vmatprep.subr.bf16.mxu0 0
    %5847 = vmatpush2.bf16.msra.mxu0 0
    %5848 = vmatprep.subr.bf16.mxu0 0
    %5849 = vmatpush2.bf16.msra.mxu0 0
    %5850 = vmatprep.subr.bf16.mxu0 0
    %5851 = vmatpush2.bf16.msra.mxu0 0
    %5852 = vmatprep.subr.bf16.mxu0 0
    %5853 = vmatpush2.bf16.msra.mxu0 0
    %5854 = vmatprep.subr.bf16.mxu0 0
    %5855 = vmatpush2.bf16.msra.mxu0 0
    %5856 = vmatprep.mubr.bf16.mxu0 0
    %5857 = vmatmul.mubr.bf16.gmra.mxu0 %v5822
    %v5858 = vpop.f32.mrf.mxu0
    %v5859 = vadd.f32 0.0, %v5858
    %v5860 = vpop.f32.mrf.mxu0
    %v5861 = vadd.f32 0.0, %v5860
    %v5862 = vpop.f32.mrf.mxu0
    %v5863 = vpop.f32.mrf.mxu0
    %5864 = vdwg.mxu0
    %5865 = vmatprep.subr.bf16.mxu0 %v5421
    %5866 = vmatpush1.bf16.msra.mxu0 %v5420
    %5867 = vmatprep.subr.bf16.mxu0 %v5417
    %5868 = vmatpush1.bf16.msra.mxu0 %v5416
    %5869 = vmatprep.subr.bf16.mxu0 %v5413
    %5870 = vmatpush1.bf16.msra.mxu0 %v5412
    %5871 = vmatprep.subr.bf16.mxu0 %v5409
    %5872 = vmatpush1.bf16.msra.mxu0 %v5408
    %5873 = vmatprep.subr.bf16.mxu0 %v5405
    %5874 = vmatpush1.bf16.msra.mxu0 %v5404
    %5875 = vmatprep.subr.bf16.mxu0 %v5401
    %5876 = vmatpush1.bf16.msra.mxu0 %v5400
    %5877 = vmatprep.subr.bf16.mxu0 %v5397
    %5878 = vmatpush1.bf16.msra.mxu0 %v5396
    %5879 = vmatprep.subr.bf16.mxu0 %v5393
    %5880 = vmatpush1.bf16.msra.mxu0 %v5392
    %5881 = vmatprep.subr.bf16.mxu0 0
    %5882 = vmatpush2.bf16.msra.mxu0 0
    %5883 = vmatprep.subr.bf16.mxu0 0
    %5884 = vmatpush2.bf16.msra.mxu0 0
    %5885 = vmatprep.subr.bf16.mxu0 0
    %5886 = vmatpush2.bf16.msra.mxu0 0
    %5887 = vmatprep.subr.bf16.mxu0 0
    %5888 = vmatpush2.bf16.msra.mxu0 0
    %5889 = vmatprep.subr.bf16.mxu0 0
    %5890 = vmatpush2.bf16.msra.mxu0 0
    %5891 = vmatprep.subr.bf16.mxu0 0
    %5892 = vmatpush2.bf16.msra.mxu0 0
    %5893 = vmatprep.subr.bf16.mxu0 0
    %5894 = vmatpush2.bf16.msra.mxu0 0
    %5895 = vmatprep.subr.bf16.mxu0 0
    %5896 = vmatpush2.bf16.msra.mxu0 0
    %5897 = vmatprep.mubr.bf16.mxu0 0
    %5898 = vmatmul.mubr.bf16.gmra.mxu0 %v5822
    %v5899 = vpop.f32.mrf.mxu0
    %v5900 = vadd.f32 0.0, %v5899
    %v5901 = vpop.f32.mrf.mxu0
    %v5902 = vadd.f32 0.0, %v5901
    %v5903 = vpop.f32.mrf.mxu0
    %v5904 = vpop.f32.mrf.mxu0
    %5905 = vdwg.mxu0
    %v5910 = vrot.slane %v5859, 5
    %v5911 = vrot.slane %v5861, 5
    %v5912 = vrot.slane %v5900, 5
    %v5913 = vrot.slane %v5902, 5
    %v5918 = vadd.f32 %v5211, %v5910
    %v5919 = vadd.f32 %v5213, %v5911
    %v5920 = vadd.f32 %v5254, %v5912
    %v5921 = vadd.f32 %v5256, %v5913
    %v5922 = vxor.u32 %v5918, 2147483648
    %v5923 = vmul.f32 %v5922, 1.442695
    %v5924 = vpow.pop %v5923
    %v5925 = vadd.f32 %v5924, 1.0
    %v5926 = vrcp.pop %v5925
    %v5927 = vmul.f32 1.0, %v5926
    %v5928 = vxor.u32 %v5919, 2147483648
    %v5929 = vmul.f32 %v5928, 1.442695
    %v5930 = vpow.pop %v5929
    %v5931 = vadd.f32 %v5930, 1.0
    %v5932 = vrcp.pop %v5931
    %v5933 = vmul.f32 1.0, %v5932
    %v5934 = vtanh.pop %v5920
    %v5935 = vxor.u32 %v5921, 2147483648
    %v5936 = vmul.f32 %v5935, 1.442695
    %v5937 = vpow.pop %v5936
    %v5938 = vadd.f32 %v5937, 1.0
    %v5939 = vrcp.pop %v5938
    %v5940 = vmul.f32 1.0, %v5939
    %v5942 = vrot.slane %v5817, 7
    %v5944 = vmul.f32 %v5933, %v5942
    %v5945 = vmul.f32 %v5927, %v5934
    %v5946 = vadd.f32 %v5944, %v5945
    %v5947 = vtanh.pop %v5946
    %v5948 = vmul.f32 %v5940, %v5947
    %v5949 = vpack.c.bf16 %v5948, %v5948
    %v5951 = vshrl.u32 %v5949, 16
    %v5953 = vrot.slane %v5951, 1
    %5955 = vmatprep.subr.bf16.mxu0 %v5419
    %5956 = vmatpush1.bf16.msra.mxu0 %v5418
    %5957 = vmatprep.subr.bf16.mxu0 %v5415
    %5958 = vmatpush1.bf16.msra.mxu0 %v5414
    %5959 = vmatprep.subr.bf16.mxu0 %v5411
    %5960 = vmatpush1.bf16.msra.mxu0 %v5410
    %5961 = vmatprep.subr.bf16.mxu0 %v5407
    %5962 = vmatpush1.bf16.msra.mxu0 %v5406
    %5963 = vmatprep.subr.bf16.mxu0 %v5403
    %5964 = vmatpush1.bf16.msra.mxu0 %v5402
    %5965 = vmatprep.subr.bf16.mxu0 %v5399
    %5966 = vmatpush1.bf16.msra.mxu0 %v5398
    %5967 = vmatprep.subr.bf16.mxu0 %v5395
    %5968 = vmatpush1.bf16.msra.mxu0 %v5394
    %5969 = vmatprep.subr.bf16.mxu0 %v5391
    %5970 = vmatpush1.bf16.msra.mxu0 %v5390
    %5971 = vmatprep.subr.bf16.mxu0 0
    %5972 = vmatpush2.bf16.msra.mxu0 0
    %5973 = vmatprep.subr.bf16.mxu0 0
    %5974 = vmatpush2.bf16.msra.mxu0 0
    %5975 = vmatprep.subr.bf16.mxu0 0
    %5976 = vmatpush2.bf16.msra.mxu0 0
    %5977 = vmatprep.subr.bf16.mxu0 0
    %5978 = vmatpush2.bf16.msra.mxu0 0
    %5979 = vmatprep.subr.bf16.mxu0 0
    %5980 = vmatpush2.bf16.msra.mxu0 0
    %5981 = vmatprep.subr.bf16.mxu0 0
    %5982 = vmatpush2.bf16.msra.mxu0 0
    %5983 = vmatprep.subr.bf16.mxu0 0
    %5984 = vmatpush2.bf16.msra.mxu0 0
    %5985 = vmatprep.subr.bf16.mxu0 0
    %5986 = vmatpush2.bf16.msra.mxu0 0
    %5987 = vmatprep.mubr.bf16.mxu0 0
    %5988 = vmatmul.mubr.bf16.gmra.mxu0 %v5953
    %v5989 = vpop.f32.mrf.mxu0
    %v5990 = vadd.f32 0.0, %v5989
    %v5991 = vpop.f32.mrf.mxu0
    %v5992 = vadd.f32 0.0, %v5991
    %v5993 = vpop.f32.mrf.mxu0
    %v5994 = vpop.f32.mrf.mxu0
    %5995 = vdwg.mxu0
    %5996 = vmatprep.subr.bf16.mxu0 %v5421
    %5997 = vmatpush1.bf16.msra.mxu0 %v5420
    %5998 = vmatprep.subr.bf16.mxu0 %v5417
    %5999 = vmatpush1.bf16.msra.mxu0 %v5416
    %6000 = vmatprep.subr.bf16.mxu0 %v5413
    %6001 = vmatpush1.bf16.msra.mxu0 %v5412
    %6002 = vmatprep.subr.bf16.mxu0 %v5409
    %6003 = vmatpush1.bf16.msra.mxu0 %v5408
    %6004 = vmatprep.subr.bf16.mxu0 %v5405
    %6005 = vmatpush1.bf16.msra.mxu0 %v5404
    %6006 = vmatprep.subr.bf16.mxu0 %v5401
    %6007 = vmatpush1.bf16.msra.mxu0 %v5400
    %6008 = vmatprep.subr.bf16.mxu0 %v5397
    %6009 = vmatpush1.bf16.msra.mxu0 %v5396
    %6010 = vmatprep.subr.bf16.mxu0 %v5393
    %6011 = vmatpush1.bf16.msra.mxu0 %v5392
    %6012 = vmatprep.subr.bf16.mxu0 0
    %6013 = vmatpush2.bf16.msra.mxu0 0
    %6014 = vmatprep.subr.bf16.mxu0 0
    %6015 = vmatpush2.bf16.msra.mxu0 0
    %6016 = vmatprep.subr.bf16.mxu0 0
    %6017 = vmatpush2.bf16.msra.mxu0 0
    %6018 = vmatprep.subr.bf16.mxu0 0
    %6019 = vmatpush2.bf16.msra.mxu0 0
    %6020 = vmatprep.subr.bf16.mxu0 0
    %6021 = vmatpush2.bf16.msra.mxu0 0
    %6022 = vmatprep.subr.bf16.mxu0 0
    %6023 = vmatpush2.bf16.msra.mxu0 0
    %6024 = vmatprep.subr.bf16.mxu0 0
    %6025 = vmatpush2.bf16.msra.mxu0 0
    %6026 = vmatprep.subr.bf16.mxu0 0
    %6027 = vmatpush2.bf16.msra.mxu0 0
    %6028 = vmatprep.mubr.bf16.mxu0 0
    %6029 = vmatmul.mubr.bf16.gmra.mxu0 %v5953
    %v6030 = vpop.f32.mrf.mxu0
    %v6031 = vadd.f32 0.0, %v6030
    %v6032 = vpop.f32.mrf.mxu0
    %v6033 = vadd.f32 0.0, %v6032
    %v6034 = vpop.f32.mrf.mxu0
    %v6035 = vpop.f32.mrf.mxu0
    %6036 = vdwg.mxu0
    %v6041 = vrot.slane %v5990, 4
    %v6042 = vrot.slane %v5992, 4
    %v6043 = vrot.slane %v6031, 4
    %v6044 = vrot.slane %v6033, 4
    %v6049 = vadd.f32 %v5211, %v6041
    %v6050 = vadd.f32 %v5213, %v6042
    %v6051 = vadd.f32 %v5254, %v6043
    %v6052 = vadd.f32 %v5256, %v6044
    %v6053 = vxor.u32 %v6049, 2147483648
    %v6054 = vmul.f32 %v6053, 1.442695
    %v6055 = vpow.pop %v6054
    %v6056 = vadd.f32 %v6055, 1.0
    %v6057 = vrcp.pop %v6056
    %v6058 = vmul.f32 1.0, %v6057
    %v6059 = vxor.u32 %v6050, 2147483648
    %v6060 = vmul.f32 %v6059, 1.442695
    %v6061 = vpow.pop %v6060
    %v6062 = vadd.f32 %v6061, 1.0
    %v6063 = vrcp.pop %v6062
    %v6064 = vmul.f32 1.0, %v6063
    %v6065 = vtanh.pop %v6051
    %v6066 = vxor.u32 %v6052, 2147483648
    %v6067 = vmul.f32 %v6066, 1.442695
    %v6068 = vpow.pop %v6067
    %v6069 = vadd.f32 %v6068, 1.0
    %v6070 = vrcp.pop %v6069
    %v6071 = vmul.f32 1.0, %v6070
    %v6073 = vrot.slane %v5946, 7
    %v6075 = vmul.f32 %v6064, %v6073
    %v6076 = vmul.f32 %v6058, %v6065
    %v6077 = vadd.f32 %v6075, %v6076
    %v6078 = vtanh.pop %v6077
    %v6079 = vmul.f32 %v6071, %v6078
    %v6080 = vpack.c.bf16 %v6079, %v6079
    %v6082 = vrot.slane %v6080, 2
    %6084 = vmatprep.subr.bf16.mxu0 %v5419
    %6085 = vmatpush1.bf16.msra.mxu0 %v5418
    %6086 = vmatprep.subr.bf16.mxu0 %v5415
    %6087 = vmatpush1.bf16.msra.mxu0 %v5414
    %6088 = vmatprep.subr.bf16.mxu0 %v5411
    %6089 = vmatpush1.bf16.msra.mxu0 %v5410
    %6090 = vmatprep.subr.bf16.mxu0 %v5407
    %6091 = vmatpush1.bf16.msra.mxu0 %v5406
    %6092 = vmatprep.subr.bf16.mxu0 %v5403
    %6093 = vmatpush1.bf16.msra.mxu0 %v5402
    %6094 = vmatprep.subr.bf16.mxu0 %v5399
    %6095 = vmatpush1.bf16.msra.mxu0 %v5398
    %6096 = vmatprep.subr.bf16.mxu0 %v5395
    %6097 = vmatpush1.bf16.msra.mxu0 %v5394
    %6098 = vmatprep.subr.bf16.mxu0 %v5391
    %6099 = vmatpush1.bf16.msra.mxu0 %v5390
    %6100 = vmatprep.subr.bf16.mxu0 0
    %6101 = vmatpush2.bf16.msra.mxu0 0
    %6102 = vmatprep.subr.bf16.mxu0 0
    %6103 = vmatpush2.bf16.msra.mxu0 0
    %6104 = vmatprep.subr.bf16.mxu0 0
    %6105 = vmatpush2.bf16.msra.mxu0 0
    %6106 = vmatprep.subr.bf16.mxu0 0
    %6107 = vmatpush2.bf16.msra.mxu0 0
    %6108 = vmatprep.subr.bf16.mxu0 0
    %6109 = vmatpush2.bf16.msra.mxu0 0
    %6110 = vmatprep.subr.bf16.mxu0 0
    %6111 = vmatpush2.bf16.msra.mxu0 0
    %6112 = vmatprep.subr.bf16.mxu0 0
    %6113 = vmatpush2.bf16.msra.mxu0 0
    %6114 = vmatprep.subr.bf16.mxu0 0
    %6115 = vmatpush2.bf16.msra.mxu0 0
    %6116 = vmatprep.mubr.bf16.mxu0 0
    %6117 = vmatmul.mubr.bf16.gmra.mxu0 %v6082
    %v6118 = vpop.f32.mrf.mxu0
    %v6119 = vadd.f32 0.0, %v6118
    %v6120 = vpop.f32.mrf.mxu0
    %v6121 = vadd.f32 0.0, %v6120
    %v6122 = vpop.f32.mrf.mxu0
    %v6123 = vpop.f32.mrf.mxu0
    %6124 = vdwg.mxu0
    %6125 = vmatprep.subr.bf16.mxu0 %v5421
    %6126 = vmatpush1.bf16.msra.mxu0 %v5420
    %6127 = vmatprep.subr.bf16.mxu0 %v5417
    %6128 = vmatpush1.bf16.msra.mxu0 %v5416
    %6129 = vmatprep.subr.bf16.mxu0 %v5413
    %6130 = vmatpush1.bf16.msra.mxu0 %v5412
    %6131 = vmatprep.subr.bf16.mxu0 %v5409
    %6132 = vmatpush1.bf16.msra.mxu0 %v5408
    %6133 = vmatprep.subr.bf16.mxu0 %v5405
    %6134 = vmatpush1.bf16.msra.mxu0 %v5404
    %6135 = vmatprep.subr.bf16.mxu0 %v5401
    %6136 = vmatpush1.bf16.msra.mxu0 %v5400
    %6137 = vmatprep.subr.bf16.mxu0 %v5397
    %6138 = vmatpush1.bf16.msra.mxu0 %v5396
    %6139 = vmatprep.subr.bf16.mxu0 %v5393
    %6140 = vmatpush1.bf16.msra.mxu0 %v5392
    %6141 = vmatprep.subr.bf16.mxu0 0
    %6142 = vmatpush2.bf16.msra.mxu0 0
    %6143 = vmatprep.subr.bf16.mxu0 0
    %6144 = vmatpush2.bf16.msra.mxu0 0
    %6145 = vmatprep.subr.bf16.mxu0 0
    %6146 = vmatpush2.bf16.msra.mxu0 0
    %6147 = vmatprep.subr.bf16.mxu0 0
    %6148 = vmatpush2.bf16.msra.mxu0 0
    %6149 = vmatprep.subr.bf16.mxu0 0
    %6150 = vmatpush2.bf16.msra.mxu0 0
    %6151 = vmatprep.subr.bf16.mxu0 0
    %6152 = vmatpush2.bf16.msra.mxu0 0
    %6153 = vmatprep.subr.bf16.mxu0 0
    %6154 = vmatpush2.bf16.msra.mxu0 0
    %6155 = vmatprep.subr.bf16.mxu0 0
    %6156 = vmatpush2.bf16.msra.mxu0 0
    %6157 = vmatprep.mubr.bf16.mxu0 0
    %6158 = vmatmul.mubr.bf16.gmra.mxu0 %v6082
    %v6159 = vpop.f32.mrf.mxu0
    %v6160 = vadd.f32 0.0, %v6159
    %v6161 = vpop.f32.mrf.mxu0
    %v6162 = vadd.f32 0.0, %v6161
    %v6163 = vpop.f32.mrf.mxu0
    %v6164 = vpop.f32.mrf.mxu0
    %6165 = vdwg.mxu0
    %v6170 = vrot.slane %v6119, 3
    %v6171 = vrot.slane %v6121, 3
    %v6172 = vrot.slane %v6160, 3
    %v6173 = vrot.slane %v6162, 3
    %v6178 = vadd.f32 %v5211, %v6170
    %v6179 = vadd.f32 %v5213, %v6171
    %v6180 = vadd.f32 %v5254, %v6172
    %v6181 = vadd.f32 %v5256, %v6173
    %v6182 = vxor.u32 %v6178, 2147483648
    %v6183 = vmul.f32 %v6182, 1.442695
    %v6184 = vpow.pop %v6183
    %v6185 = vadd.f32 %v6184, 1.0
    %v6186 = vrcp.pop %v6185
    %v6187 = vmul.f32 1.0, %v6186
    %v6188 = vxor.u32 %v6179, 2147483648
    %v6189 = vmul.f32 %v6188, 1.442695
    %v6190 = vpow.pop %v6189
    %v6191 = vadd.f32 %v6190, 1.0
    %v6192 = vrcp.pop %v6191
    %v6193 = vmul.f32 1.0, %v6192
    %v6194 = vtanh.pop %v6180
    %v6195 = vxor.u32 %v6181, 2147483648
    %v6196 = vmul.f32 %v6195, 1.442695
    %v6197 = vpow.pop %v6196
    %v6198 = vadd.f32 %v6197, 1.0
    %v6199 = vrcp.pop %v6198
    %v6200 = vmul.f32 1.0, %v6199
    %v6202 = vrot.slane %v6077, 7
    %v6204 = vmul.f32 %v6193, %v6202
    %v6205 = vmul.f32 %v6187, %v6194
    %v6206 = vadd.f32 %v6204, %v6205
    %v6207 = vtanh.pop %v6206
    %v6208 = vmul.f32 %v6200, %v6207
    %v6209 = vpack.c.bf16 %v6208, %v6208
    %v6211 = vshrl.u32 %v6209, 16
    %v6213 = vrot.slane %v6211, 2
    %6215 = vmatprep.subr.bf16.mxu0 %v5419
    %6216 = vmatpush1.bf16.msra.mxu0 %v5418
    %6217 = vmatprep.subr.bf16.mxu0 %v5415
    %6218 = vmatpush1.bf16.msra.mxu0 %v5414
    %6219 = vmatprep.subr.bf16.mxu0 %v5411
    %6220 = vmatpush1.bf16.msra.mxu0 %v5410
    %6221 = vmatprep.subr.bf16.mxu0 %v5407
    %6222 = vmatpush1.bf16.msra.mxu0 %v5406
    %6223 = vmatprep.subr.bf16.mxu0 %v5403
    %6224 = vmatpush1.bf16.msra.mxu0 %v5402
    %6225 = vmatprep.subr.bf16.mxu0 %v5399
    %6226 = vmatpush1.bf16.msra.mxu0 %v5398
    %6227 = vmatprep.subr.bf16.mxu0 %v5395
    %6228 = vmatpush1.bf16.msra.mxu0 %v5394
    %6229 = vmatprep.subr.bf16.mxu0 %v5391
    %6230 = vmatpush1.bf16.msra.mxu0 %v5390
    %6231 = vmatprep.subr.bf16.mxu0 0
    %6232 = vmatpush2.bf16.msra.mxu0 0
    %6233 = vmatprep.subr.bf16.mxu0 0
    %6234 = vmatpush2.bf16.msra.mxu0 0
    %6235 = vmatprep.subr.bf16.mxu0 0
    %6236 = vmatpush2.bf16.msra.mxu0 0
    %6237 = vmatprep.subr.bf16.mxu0 0
    %6238 = vmatpush2.bf16.msra.mxu0 0
    %6239 = vmatprep.subr.bf16.mxu0 0
    %6240 = vmatpush2.bf16.msra.mxu0 0
    %6241 = vmatprep.subr.bf16.mxu0 0
    %6242 = vmatpush2.bf16.msra.mxu0 0
    %6243 = vmatprep.subr.bf16.mxu0 0
    %6244 = vmatpush2.bf16.msra.mxu0 0
    %6245 = vmatprep.subr.bf16.mxu0 0
    %6246 = vmatpush2.bf16.msra.mxu0 0
    %6247 = vmatprep.mubr.bf16.mxu0 0
    %6248 = vmatmul.mubr.bf16.gmra.mxu0 %v6213
    %v6249 = vpop.f32.mrf.mxu0
    %v6250 = vadd.f32 0.0, %v6249
    %v6251 = vpop.f32.mrf.mxu0
    %v6252 = vadd.f32 0.0, %v6251
    %v6253 = vpop.f32.mrf.mxu0
    %v6254 = vpop.f32.mrf.mxu0
    %6255 = vdwg.mxu0
    %6256 = vmatprep.subr.bf16.mxu0 %v5421
    %6257 = vmatpush1.bf16.msra.mxu0 %v5420
    %6258 = vmatprep.subr.bf16.mxu0 %v5417
    %6259 = vmatpush1.bf16.msra.mxu0 %v5416
    %6260 = vmatprep.subr.bf16.mxu0 %v5413
    %6261 = vmatpush1.bf16.msra.mxu0 %v5412
    %6262 = vmatprep.subr.bf16.mxu0 %v5409
    %6263 = vmatpush1.bf16.msra.mxu0 %v5408
    %6264 = vmatprep.subr.bf16.mxu0 %v5405
    %6265 = vmatpush1.bf16.msra.mxu0 %v5404
    %6266 = vmatprep.subr.bf16.mxu0 %v5401
    %6267 = vmatpush1.bf16.msra.mxu0 %v5400
    %6268 = vmatprep.subr.bf16.mxu0 %v5397
    %6269 = vmatpush1.bf16.msra.mxu0 %v5396
    %6270 = vmatprep.subr.bf16.mxu0 %v5393
    %6271 = vmatpush1.bf16.msra.mxu0 %v5392
    %6272 = vmatprep.subr.bf16.mxu0 0
    %6273 = vmatpush2.bf16.msra.mxu0 0
    %6274 = vmatprep.subr.bf16.mxu0 0
    %6275 = vmatpush2.bf16.msra.mxu0 0
    %6276 = vmatprep.subr.bf16.mxu0 0
    %6277 = vmatpush2.bf16.msra.mxu0 0
    %6278 = vmatprep.subr.bf16.mxu0 0
    %6279 = vmatpush2.bf16.msra.mxu0 0
    %6280 = vmatprep.subr.bf16.mxu0 0
    %6281 = vmatpush2.bf16.msra.mxu0 0
    %6282 = vmatprep.subr.bf16.mxu0 0
    %6283 = vmatpush2.bf16.msra.mxu0 0
    %6284 = vmatprep.subr.bf16.mxu0 0
    %6285 = vmatpush2.bf16.msra.mxu0 0
    %6286 = vmatprep.subr.bf16.mxu0 0
    %6287 = vmatpush2.bf16.msra.mxu0 0
    %6288 = vmatprep.mubr.bf16.mxu0 0
    %6289 = vmatmul.mubr.bf16.gmra.mxu0 %v6213
    %v6290 = vpop.f32.mrf.mxu0
    %v6291 = vadd.f32 0.0, %v6290
    %v6292 = vpop.f32.mrf.mxu0
    %v6293 = vadd.f32 0.0, %v6292
    %v6294 = vpop.f32.mrf.mxu0
    %v6295 = vpop.f32.mrf.mxu0
    %6296 = vdwg.mxu0
    %v6301 = vrot.slane %v6250, 2
    %v6302 = vrot.slane %v6252, 2
    %v6303 = vrot.slane %v6291, 2
    %v6304 = vrot.slane %v6293, 2
    %v6309 = vadd.f32 %v5211, %v6301
    %v6310 = vadd.f32 %v5213, %v6302
    %v6311 = vadd.f32 %v5254, %v6303
    %v6312 = vadd.f32 %v5256, %v6304
    %v6313 = vxor.u32 %v6309, 2147483648
    %v6314 = vmul.f32 %v6313, 1.442695
    %v6315 = vpow.pop %v6314
    %v6316 = vadd.f32 %v6315, 1.0
    %v6317 = vrcp.pop %v6316
    %v6318 = vmul.f32 1.0, %v6317
    %v6319 = vxor.u32 %v6310, 2147483648
    %v6320 = vmul.f32 %v6319, 1.442695
    %v6321 = vpow.pop %v6320
    %v6322 = vadd.f32 %v6321, 1.0
    %v6323 = vrcp.pop %v6322
    %v6324 = vmul.f32 1.0, %v6323
    %v6325 = vtanh.pop %v6311
    %v6326 = vxor.u32 %v6312, 2147483648
    %v6327 = vmul.f32 %v6326, 1.442695
    %v6328 = vpow.pop %v6327
    %v6329 = vadd.f32 %v6328, 1.0
    %v6330 = vrcp.pop %v6329
    %v6331 = vmul.f32 1.0, %v6330
    %v6333 = vrot.slane %v6206, 7
    %v6335 = vmul.f32 %v6324, %v6333
    %v6336 = vmul.f32 %v6318, %v6325
    %v6337 = vadd.f32 %v6335, %v6336
    %v6338 = vtanh.pop %v6337
    %v6339 = vmul.f32 %v6331, %v6338
    %v6340 = vpack.c.bf16 %v6339, %v6339
    %v6342 = vrot.slane %v6340, 3
    %6344 = vmatprep.subr.bf16.mxu0 %v5419
    %6345 = vmatpush1.bf16.msra.mxu0 %v5418
    %6346 = vmatprep.subr.bf16.mxu0 %v5415
    %6347 = vmatpush1.bf16.msra.mxu0 %v5414
    %6348 = vmatprep.subr.bf16.mxu0 %v5411
    %6349 = vmatpush1.bf16.msra.mxu0 %v5410
    %6350 = vmatprep.subr.bf16.mxu0 %v5407
    %6351 = vmatpush1.bf16.msra.mxu0 %v5406
    %6352 = vmatprep.subr.bf16.mxu0 %v5403
    %6353 = vmatpush1.bf16.msra.mxu0 %v5402
    %6354 = vmatprep.subr.bf16.mxu0 %v5399
    %6355 = vmatpush1.bf16.msra.mxu0 %v5398
    %6356 = vmatprep.subr.bf16.mxu0 %v5395
    %6357 = vmatpush1.bf16.msra.mxu0 %v5394
    %6358 = vmatprep.subr.bf16.mxu0 %v5391
    %6359 = vmatpush1.bf16.msra.mxu0 %v5390
    %6360 = vmatprep.subr.bf16.mxu0 0
    %6361 = vmatpush2.bf16.msra.mxu0 0
    %6362 = vmatprep.subr.bf16.mxu0 0
    %6363 = vmatpush2.bf16.msra.mxu0 0
    %6364 = vmatprep.subr.bf16.mxu0 0
    %6365 = vmatpush2.bf16.msra.mxu0 0
    %6366 = vmatprep.subr.bf16.mxu0 0
    %6367 = vmatpush2.bf16.msra.mxu0 0
    %6368 = vmatprep.subr.bf16.mxu0 0
    %6369 = vmatpush2.bf16.msra.mxu0 0
    %6370 = vmatprep.subr.bf16.mxu0 0
    %6371 = vmatpush2.bf16.msra.mxu0 0
    %6372 = vmatprep.subr.bf16.mxu0 0
    %6373 = vmatpush2.bf16.msra.mxu0 0
    %6374 = vmatprep.subr.bf16.mxu0 0
    %6375 = vmatpush2.bf16.msra.mxu0 0
    %6376 = vmatprep.mubr.bf16.mxu0 0
    %6377 = vmatmul.mubr.bf16.gmra.mxu0 %v6342
    %v6378 = vpop.f32.mrf.mxu0
    %v6379 = vadd.f32 0.0, %v6378
    %v6380 = vpop.f32.mrf.mxu0
    %v6381 = vadd.f32 0.0, %v6380
    %v6382 = vpop.f32.mrf.mxu0
    %v6383 = vpop.f32.mrf.mxu0
    %6384 = vdwg.mxu0
    %6385 = vmatprep.subr.bf16.mxu0 %v5421
    %6386 = vmatpush1.bf16.msra.mxu0 %v5420
    %6387 = vmatprep.subr.bf16.mxu0 %v5417
    %6388 = vmatpush1.bf16.msra.mxu0 %v5416
    %6389 = vmatprep.subr.bf16.mxu0 %v5413
    %6390 = vmatpush1.bf16.msra.mxu0 %v5412
    %6391 = vmatprep.subr.bf16.mxu0 %v5409
    %6392 = vmatpush1.bf16.msra.mxu0 %v5408
    %6393 = vmatprep.subr.bf16.mxu0 %v5405
    %6394 = vmatpush1.bf16.msra.mxu0 %v5404
    %6395 = vmatprep.subr.bf16.mxu0 %v5401
    %6396 = vmatpush1.bf16.msra.mxu0 %v5400
    %6397 = vmatprep.subr.bf16.mxu0 %v5397
    %6398 = vmatpush1.bf16.msra.mxu0 %v5396
    %6399 = vmatprep.subr.bf16.mxu0 %v5393
    %6400 = vmatpush1.bf16.msra.mxu0 %v5392
    %6401 = vmatprep.subr.bf16.mxu0 0
    %6402 = vmatpush2.bf16.msra.mxu0 0
    %6403 = vmatprep.subr.bf16.mxu0 0
    %6404 = vmatpush2.bf16.msra.mxu0 0
    %6405 = vmatprep.subr.bf16.mxu0 0
    %6406 = vmatpush2.bf16.msra.mxu0 0
    %6407 = vmatprep.subr.bf16.mxu0 0
    %6408 = vmatpush2.bf16.msra.mxu0 0
    %6409 = vmatprep.subr.bf16.mxu0 0
    %6410 = vmatpush2.bf16.msra.mxu0 0
    %6411 = vmatprep.subr.bf16.mxu0 0
    %6412 = vmatpush2.bf16.msra.mxu0 0
    %6413 = vmatprep.subr.bf16.mxu0 0
    %6414 = vmatpush2.bf16.msra.mxu0 0
    %6415 = vmatprep.subr.bf16.mxu0 0
    %6416 = vmatpush2.bf16.msra.mxu0 0
    %6417 = vmatprep.mubr.bf16.mxu0 0
    %6418 = vmatmul.mubr.bf16.gmra.mxu0 %v6342
    %v6419 = vpop.f32.mrf.mxu0
    %v6420 = vadd.f32 0.0, %v6419
    %v6421 = vpop.f32.mrf.mxu0
    %v6422 = vadd.f32 0.0, %v6421
    %v6423 = vpop.f32.mrf.mxu0
    %v6424 = vpop.f32.mrf.mxu0
    %6425 = vdwg.mxu0
    %v6430 = vrot.slane %v6379, 1
    %v6431 = vrot.slane %v6381, 1
    %v6432 = vrot.slane %v6420, 1
    %v6433 = vrot.slane %v6422, 1
    %v6438 = vadd.f32 %v5211, %v6430
    %v6439 = vadd.f32 %v5213, %v6431
    %v6440 = vadd.f32 %v5254, %v6432
    %v6441 = vadd.f32 %v5256, %v6433
    %v6442 = vxor.u32 %v6438, 2147483648
    %v6443 = vmul.f32 %v6442, 1.442695
    %v6444 = vpow.pop %v6443
    %v6445 = vadd.f32 %v6444, 1.0
    %v6446 = vrcp.pop %v6445
    %v6447 = vmul.f32 1.0, %v6446
    %v6448 = vxor.u32 %v6439, 2147483648
    %v6449 = vmul.f32 %v6448, 1.442695
    %v6450 = vpow.pop %v6449
    %v6451 = vadd.f32 %v6450, 1.0
    %v6452 = vrcp.pop %v6451
    %v6453 = vmul.f32 1.0, %v6452
    %v6454 = vtanh.pop %v6440
    %v6455 = vxor.u32 %v6441, 2147483648
    %v6456 = vmul.f32 %v6455, 1.442695
    %v6457 = vpow.pop %v6456
    %v6458 = vadd.f32 %v6457, 1.0
    %v6459 = vrcp.pop %v6458
    %v6460 = vmul.f32 1.0, %v6459
    %v6462 = vrot.slane %v6337, 7
    %v6464 = vmul.f32 %v6453, %v6462
    %v6465 = vmul.f32 %v6447, %v6454
    %v6466 = vadd.f32 %v6464, %v6465
    %v6467 = vtanh.pop %v6466
    %v6468 = vmul.f32 %v6460, %v6467
    %vm6469 = vcmask 1040384
    %v6470 = vsel %vm6469, %v5563, %v5689
    %vm6471 = vcmask 1041408
    %v6472 = vsel %vm6471, %v6470, %v5819
    %vm6473 = vcmask 1042432
    %v6474 = vsel %vm6473, %v6472, %v5948
    %v6475 = vsel %vm536, %v6474, %v6079
    %vm6476 = vcmask 1044480
    %v6477 = vsel %vm6476, %v6475, %v6208
    %vm6478 = vcmask 1045504
    %v6479 = vsel %vm6478, %v6477, %v6339
    %vm6480 = vcmask 1046528
    %v6481 = vsel %vm6480, %v6479, %v6468
    %v6482 = vadd.f32 %v5215, %v5489
    %v6483 = vadd.f32 %v5217, %v5491
    %v6484 = vadd.f32 %v5258, %v5530
    %v6485 = vadd.f32 %v5260, %v5532
    %v6486 = vxor.u32 %v6482, 2147483648
    %v6487 = vmul.f32 %v6486, 1.442695
    %v6488 = vpow.pop %v6487
    %v6489 = vadd.f32 %v6488, 1.0
    %v6490 = vrcp.pop %v6489
    %v6491 = vmul.f32 1.0, %v6490
    %v6492 = vxor.u32 %v6483, 2147483648
    %v6493 = vmul.f32 %v6492, 1.442695
    %v6494 = vpow.pop %v6493
    %v6495 = vadd.f32 %v6494, 1.0
    %v6496 = vrcp.pop %v6495
    %v6497 = vmul.f32 1.0, %v6496
    %v6498 = vtanh.pop %v6484
    %v6499 = vxor.u32 %v6485, 2147483648
    %v6500 = vmul.f32 %v6499, 1.442695
    %v6501 = vpow.pop %v6500
    %v6502 = vadd.f32 %v6501, 1.0
    %v6503 = vrcp.pop %v6502
    %v6504 = vmul.f32 1.0, %v6503
    %v6505 = vmul.f32 %v6497, 0.0
    %v6506 = vmul.f32 %v6491, %v6498
    %v6507 = vadd.f32 %v6505, %v6506
    %v6508 = vtanh.pop %v6507
    %v6509 = vmul.f32 %v6504, %v6508
    %v6510 = vpack.c.bf16 %v6509, %v6509
    %6511 = vmatprep.subr.bf16.mxu0 %v5419
    %6512 = vmatpush1.bf16.msra.mxu0 %v5418
    %6513 = vmatprep.subr.bf16.mxu0 %v5415
    %6514 = vmatpush1.bf16.msra.mxu0 %v5414
    %6515 = vmatprep.subr.bf16.mxu0 %v5411
    %6516 = vmatpush1.bf16.msra.mxu0 %v5410
    %6517 = vmatprep.subr.bf16.mxu0 %v5407
    %6518 = vmatpush1.bf16.msra.mxu0 %v5406
    %6519 = vmatprep.subr.bf16.mxu0 %v5403
    %6520 = vmatpush1.bf16.msra.mxu0 %v5402
    %6521 = vmatprep.subr.bf16.mxu0 %v5399
    %6522 = vmatpush1.bf16.msra.mxu0 %v5398
    %6523 = vmatprep.subr.bf16.mxu0 %v5395
    %6524 = vmatpush1.bf16.msra.mxu0 %v5394
    %6525 = vmatprep.subr.bf16.mxu0 %v5391
    %6526 = vmatpush1.bf16.msra.mxu0 %v5390
    %6527 = vmatprep.subr.bf16.mxu0 0
    %6528 = vmatpush2.bf16.msra.mxu0 0
    %6529 = vmatprep.subr.bf16.mxu0 0
    %6530 = vmatpush2.bf16.msra.mxu0 0
    %6531 = vmatprep.subr.bf16.mxu0 0
    %6532 = vmatpush2.bf16.msra.mxu0 0
    %6533 = vmatprep.subr.bf16.mxu0 0
    %6534 = vmatpush2.bf16.msra.mxu0 0
    %6535 = vmatprep.subr.bf16.mxu0 0
    %6536 = vmatpush2.bf16.msra.mxu0 0
    %6537 = vmatprep.subr.bf16.mxu0 0
    %6538 = vmatpush2.bf16.msra.mxu0 0
    %6539 = vmatprep.subr.bf16.mxu0 0
    %6540 = vmatpush2.bf16.msra.mxu0 0
    %6541 = vmatprep.subr.bf16.mxu0 0
    %6542 = vmatpush2.bf16.msra.mxu0 0
    %6543 = vmatprep.mubr.bf16.mxu0 0
    %6544 = vmatmul.mubr.bf16.gmra.mxu0 %v6510
    %v6545 = vpop.f32.mrf.mxu0
    %v6546 = vadd.f32 0.0, %v6545
    %v6547 = vpop.f32.mrf.mxu0
    %v6548 = vadd.f32 0.0, %v6547
    %v6549 = vpop.f32.mrf.mxu0
    %v6550 = vpop.f32.mrf.mxu0
    %6551 = vdwg.mxu0
    %6552 = vmatprep.subr.bf16.mxu0 %v5421
    %6553 = vmatpush1.bf16.msra.mxu0 %v5420
    %6554 = vmatprep.subr.bf16.mxu0 %v5417
    %6555 = vmatpush1.bf16.msra.mxu0 %v5416
    %6556 = vmatprep.subr.bf16.mxu0 %v5413
    %6557 = vmatpush1.bf16.msra.mxu0 %v5412
    %6558 = vmatprep.subr.bf16.mxu0 %v5409
    %6559 = vmatpush1.bf16.msra.mxu0 %v5408
    %6560 = vmatprep.subr.bf16.mxu0 %v5405
    %6561 = vmatpush1.bf16.msra.mxu0 %v5404
    %6562 = vmatprep.subr.bf16.mxu0 %v5401
    %6563 = vmatpush1.bf16.msra.mxu0 %v5400
    %6564 = vmatprep.subr.bf16.mxu0 %v5397
    %6565 = vmatpush1.bf16.msra.mxu0 %v5396
    %6566 = vmatprep.subr.bf16.mxu0 %v5393
    %6567 = vmatpush1.bf16.msra.mxu0 %v5392
    %6568 = vmatprep.subr.bf16.mxu0 0
    %6569 = vmatpush2.bf16.msra.mxu0 0
    %6570 = vmatprep.subr.bf16.mxu0 0
    %6571 = vmatpush2.bf16.msra.mxu0 0
    %6572 = vmatprep.subr.bf16.mxu0 0
    %6573 = vmatpush2.bf16.msra.mxu0 0
    %6574 = vmatprep.subr.bf16.mxu0 0
    %6575 = vmatpush2.bf16.msra.mxu0 0
    %6576 = vmatprep.subr.bf16.mxu0 0
    %6577 = vmatpush2.bf16.msra.mxu0 0
    %6578 = vmatprep.subr.bf16.mxu0 0
    %6579 = vmatpush2.bf16.msra.mxu0 0
    %6580 = vmatprep.subr.bf16.mxu0 0
    %6581 = vmatpush2.bf16.msra.mxu0 0
    %6582 = vmatprep.subr.bf16.mxu0 0
    %6583 = vmatpush2.bf16.msra.mxu0 0
    %6584 = vmatprep.mubr.bf16.mxu0 0
    %6585 = vmatmul.mubr.bf16.gmra.mxu0 %v6510
    %v6586 = vpop.f32.mrf.mxu0
    %v6587 = vadd.f32 0.0, %v6586
    %v6588 = vpop.f32.mrf.mxu0
    %v6589 = vadd.f32 0.0, %v6588
    %v6590 = vpop.f32.mrf.mxu0
    %v6591 = vpop.f32.mrf.mxu0
    %6592 = vdwg.mxu0
    %v6597 = vrot.slane %v6546, 7
    %v6598 = vrot.slane %v6548, 7
    %v6599 = vrot.slane %v6587, 7
    %v6600 = vrot.slane %v6589, 7
    %v6605 = vadd.f32 %v5215, %v6597
    %v6606 = vadd.f32 %v5217, %v6598
    %v6607 = vadd.f32 %v5258, %v6599
    %v6608 = vadd.f32 %v5260, %v6600
    %v6609 = vxor.u32 %v6605, 2147483648
    %v6610 = vmul.f32 %v6609, 1.442695
    %v6611 = vpow.pop %v6610
    %v6612 = vadd.f32 %v6611, 1.0
    %v6613 = vrcp.pop %v6612
    %v6614 = vmul.f32 1.0, %v6613
    %v6615 = vxor.u32 %v6606, 2147483648
    %v6616 = vmul.f32 %v6615, 1.442695
    %v6617 = vpow.pop %v6616
    %v6618 = vadd.f32 %v6617, 1.0
    %v6619 = vrcp.pop %v6618
    %v6620 = vmul.f32 1.0, %v6619
    %v6621 = vtanh.pop %v6607
    %v6622 = vxor.u32 %v6608, 2147483648
    %v6623 = vmul.f32 %v6622, 1.442695
    %v6624 = vpow.pop %v6623
    %v6625 = vadd.f32 %v6624, 1.0
    %v6626 = vrcp.pop %v6625
    %v6627 = vmul.f32 1.0, %v6626
    %v6629 = vrot.slane %v6507, 7
    %v6631 = vmul.f32 %v6620, %v6629
    %v6632 = vmul.f32 %v6614, %v6621
    %v6633 = vadd.f32 %v6631, %v6632
    %v6634 = vtanh.pop %v6633
    %v6635 = vmul.f32 %v6627, %v6634
    %v6636 = vpack.c.bf16 %v6635, %v6635
    %v6638 = vshrl.u32 %v6636, 16
    %6641 = vmatprep.subr.bf16.mxu0 %v5419
    %6642 = vmatpush1.bf16.msra.mxu0 %v5418
    %6643 = vmatprep.subr.bf16.mxu0 %v5415
    %6644 = vmatpush1.bf16.msra.mxu0 %v5414
    %6645 = vmatprep.subr.bf16.mxu0 %v5411
    %6646 = vmatpush1.bf16.msra.mxu0 %v5410
    %6647 = vmatprep.subr.bf16.mxu0 %v5407
    %6648 = vmatpush1.bf16.msra.mxu0 %v5406
    %6649 = vmatprep.subr.bf16.mxu0 %v5403
    %6650 = vmatpush1.bf16.msra.mxu0 %v5402
    %6651 = vmatprep.subr.bf16.mxu0 %v5399
    %6652 = vmatpush1.bf16.msra.mxu0 %v5398
    %6653 = vmatprep.subr.bf16.mxu0 %v5395
    %6654 = vmatpush1.bf16.msra.mxu0 %v5394
    %6655 = vmatprep.subr.bf16.mxu0 %v5391
    %6656 = vmatpush1.bf16.msra.mxu0 %v5390
    %6657 = vmatprep.subr.bf16.mxu0 0
    %6658 = vmatpush2.bf16.msra.mxu0 0
    %6659 = vmatprep.subr.bf16.mxu0 0
    %6660 = vmatpush2.bf16.msra.mxu0 0
    %6661 = vmatprep.subr.bf16.mxu0 0
    %6662 = vmatpush2.bf16.msra.mxu0 0
    %6663 = vmatprep.subr.bf16.mxu0 0
    %6664 = vmatpush2.bf16.msra.mxu0 0
    %6665 = vmatprep.subr.bf16.mxu0 0
    %6666 = vmatpush2.bf16.msra.mxu0 0
    %6667 = vmatprep.subr.bf16.mxu0 0
    %6668 = vmatpush2.bf16.msra.mxu0 0
    %6669 = vmatprep.subr.bf16.mxu0 0
    %6670 = vmatpush2.bf16.msra.mxu0 0
    %6671 = vmatprep.subr.bf16.mxu0 0
    %6672 = vmatpush2.bf16.msra.mxu0 0
    %6673 = vmatprep.mubr.bf16.mxu0 0
    %6674 = vmatmul.mubr.bf16.gmra.mxu0 %v6638
    %v6675 = vpop.f32.mrf.mxu0
    %v6676 = vadd.f32 0.0, %v6675
    %v6677 = vpop.f32.mrf.mxu0
    %v6678 = vadd.f32 0.0, %v6677
    %v6679 = vpop.f32.mrf.mxu0
    %v6680 = vpop.f32.mrf.mxu0
    %6681 = vdwg.mxu0
    %6682 = vmatprep.subr.bf16.mxu0 %v5421
    %6683 = vmatpush1.bf16.msra.mxu0 %v5420
    %6684 = vmatprep.subr.bf16.mxu0 %v5417
    %6685 = vmatpush1.bf16.msra.mxu0 %v5416
    %6686 = vmatprep.subr.bf16.mxu0 %v5413
    %6687 = vmatpush1.bf16.msra.mxu0 %v5412
    %6688 = vmatprep.subr.bf16.mxu0 %v5409
    %6689 = vmatpush1.bf16.msra.mxu0 %v5408
    %6690 = vmatprep.subr.bf16.mxu0 %v5405
    %6691 = vmatpush1.bf16.msra.mxu0 %v5404
    %6692 = vmatprep.subr.bf16.mxu0 %v5401
    %6693 = vmatpush1.bf16.msra.mxu0 %v5400
    %6694 = vmatprep.subr.bf16.mxu0 %v5397
    %6695 = vmatpush1.bf16.msra.mxu0 %v5396
    %6696 = vmatprep.subr.bf16.mxu0 %v5393
    %6697 = vmatpush1.bf16.msra.mxu0 %v5392
    %6698 = vmatprep.subr.bf16.mxu0 0
    %6699 = vmatpush2.bf16.msra.mxu0 0
    %6700 = vmatprep.subr.bf16.mxu0 0
    %6701 = vmatpush2.bf16.msra.mxu0 0
    %6702 = vmatprep.subr.bf16.mxu0 0
    %6703 = vmatpush2.bf16.msra.mxu0 0
    %6704 = vmatprep.subr.bf16.mxu0 0
    %6705 = vmatpush2.bf16.msra.mxu0 0
    %6706 = vmatprep.subr.bf16.mxu0 0
    %6707 = vmatpush2.bf16.msra.mxu0 0
    %6708 = vmatprep.subr.bf16.mxu0 0
    %6709 = vmatpush2.bf16.msra.mxu0 0
    %6710 = vmatprep.subr.bf16.mxu0 0
    %6711 = vmatpush2.bf16.msra.mxu0 0
    %6712 = vmatprep.subr.bf16.mxu0 0
    %6713 = vmatpush2.bf16.msra.mxu0 0
    %6714 = vmatprep.mubr.bf16.mxu0 0
    %6715 = vmatmul.mubr.bf16.gmra.mxu0 %v6638
    %v6716 = vpop.f32.mrf.mxu0
    %v6717 = vadd.f32 0.0, %v6716
    %v6718 = vpop.f32.mrf.mxu0
    %v6719 = vadd.f32 0.0, %v6718
    %v6720 = vpop.f32.mrf.mxu0
    %v6721 = vpop.f32.mrf.mxu0
    %6722 = vdwg.mxu0
    %v6727 = vrot.slane %v6676, 6
    %v6728 = vrot.slane %v6678, 6
    %v6729 = vrot.slane %v6717, 6
    %v6730 = vrot.slane %v6719, 6
    %v6735 = vadd.f32 %v5215, %v6727
    %v6736 = vadd.f32 %v5217, %v6728
    %v6737 = vadd.f32 %v5258, %v6729
    %v6738 = vadd.f32 %v5260, %v6730
    %v6739 = vxor.u32 %v6735, 2147483648
    %v6740 = vmul.f32 %v6739, 1.442695
    %v6741 = vpow.pop %v6740
    %v6742 = vadd.f32 %v6741, 1.0
    %v6743 = vrcp.pop %v6742
    %v6744 = vmul.f32 1.0, %v6743
    %v6745 = vxor.u32 %v6736, 2147483648
    %v6746 = vmul.f32 %v6745, 1.442695
    %v6747 = vpow.pop %v6746
    %v6748 = vadd.f32 %v6747, 1.0
    %v6749 = vrcp.pop %v6748
    %v6750 = vmul.f32 1.0, %v6749
    %v6751 = vtanh.pop %v6737
    %v6752 = vxor.u32 %v6738, 2147483648
    %v6753 = vmul.f32 %v6752, 1.442695
    %v6754 = vpow.pop %v6753
    %v6755 = vadd.f32 %v6754, 1.0
    %v6756 = vrcp.pop %v6755
    %v6757 = vmul.f32 1.0, %v6756
    %v6759 = vrot.slane %v6633, 7
    %v6761 = vmul.f32 %v6750, %v6759
    %v6762 = vmul.f32 %v6744, %v6751
    %v6763 = vadd.f32 %v6761, %v6762
    %v6764 = vtanh.pop %v6763
    %v6765 = vmul.f32 %v6757, %v6764
    %v6766 = vpack.c.bf16 %v6765, %v6765
    %v6768 = vrot.slane %v6766, 1
    %6770 = vmatprep.subr.bf16.mxu0 %v5419
    %6771 = vmatpush1.bf16.msra.mxu0 %v5418
    %6772 = vmatprep.subr.bf16.mxu0 %v5415
    %6773 = vmatpush1.bf16.msra.mxu0 %v5414
    %6774 = vmatprep.subr.bf16.mxu0 %v5411
    %6775 = vmatpush1.bf16.msra.mxu0 %v5410
    %6776 = vmatprep.subr.bf16.mxu0 %v5407
    %6777 = vmatpush1.bf16.msra.mxu0 %v5406
    %6778 = vmatprep.subr.bf16.mxu0 %v5403
    %6779 = vmatpush1.bf16.msra.mxu0 %v5402
    %6780 = vmatprep.subr.bf16.mxu0 %v5399
    %6781 = vmatpush1.bf16.msra.mxu0 %v5398
    %6782 = vmatprep.subr.bf16.mxu0 %v5395
    %6783 = vmatpush1.bf16.msra.mxu0 %v5394
    %6784 = vmatprep.subr.bf16.mxu0 %v5391
    %6785 = vmatpush1.bf16.msra.mxu0 %v5390
    %6786 = vmatprep.subr.bf16.mxu0 0
    %6787 = vmatpush2.bf16.msra.mxu0 0
    %6788 = vmatprep.subr.bf16.mxu0 0
    %6789 = vmatpush2.bf16.msra.mxu0 0
    %6790 = vmatprep.subr.bf16.mxu0 0
    %6791 = vmatpush2.bf16.msra.mxu0 0
    %6792 = vmatprep.subr.bf16.mxu0 0
    %6793 = vmatpush2.bf16.msra.mxu0 0
    %6794 = vmatprep.subr.bf16.mxu0 0
    %6795 = vmatpush2.bf16.msra.mxu0 0
    %6796 = vmatprep.subr.bf16.mxu0 0
    %6797 = vmatpush2.bf16.msra.mxu0 0
    %6798 = vmatprep.subr.bf16.mxu0 0
    %6799 = vmatpush2.bf16.msra.mxu0 0
    %6800 = vmatprep.subr.bf16.mxu0 0
    %6801 = vmatpush2.bf16.msra.mxu0 0
    %6802 = vmatprep.mubr.bf16.mxu0 0
    %6803 = vmatmul.mubr.bf16.gmra.mxu0 %v6768
    %v6804 = vpop.f32.mrf.mxu0
    %v6805 = vadd.f32 0.0, %v6804
    %v6806 = vpop.f32.mrf.mxu0
    %v6807 = vadd.f32 0.0, %v6806
    %v6808 = vpop.f32.mrf.mxu0
    %v6809 = vpop.f32.mrf.mxu0
    %6810 = vdwg.mxu0
    %6811 = vmatprep.subr.bf16.mxu0 %v5421
    %6812 = vmatpush1.bf16.msra.mxu0 %v5420
    %6813 = vmatprep.subr.bf16.mxu0 %v5417
    %6814 = vmatpush1.bf16.msra.mxu0 %v5416
    %6815 = vmatprep.subr.bf16.mxu0 %v5413
    %6816 = vmatpush1.bf16.msra.mxu0 %v5412
    %6817 = vmatprep.subr.bf16.mxu0 %v5409
    %6818 = vmatpush1.bf16.msra.mxu0 %v5408
    %6819 = vmatprep.subr.bf16.mxu0 %v5405
    %6820 = vmatpush1.bf16.msra.mxu0 %v5404
    %6821 = vmatprep.subr.bf16.mxu0 %v5401
    %6822 = vmatpush1.bf16.msra.mxu0 %v5400
    %6823 = vmatprep.subr.bf16.mxu0 %v5397
    %6824 = vmatpush1.bf16.msra.mxu0 %v5396
    %6825 = vmatprep.subr.bf16.mxu0 %v5393
    %6826 = vmatpush1.bf16.msra.mxu0 %v5392
    %6827 = vmatprep.subr.bf16.mxu0 0
    %6828 = vmatpush2.bf16.msra.mxu0 0
    %6829 = vmatprep.subr.bf16.mxu0 0
    %6830 = vmatpush2.bf16.msra.mxu0 0
    %6831 = vmatprep.subr.bf16.mxu0 0
    %6832 = vmatpush2.bf16.msra.mxu0 0
    %6833 = vmatprep.subr.bf16.mxu0 0
    %6834 = vmatpush2.bf16.msra.mxu0 0
    %6835 = vmatprep.subr.bf16.mxu0 0
    %6836 = vmatpush2.bf16.msra.mxu0 0
    %6837 = vmatprep.subr.bf16.mxu0 0
    %6838 = vmatpush2.bf16.msra.mxu0 0
    %6839 = vmatprep.subr.bf16.mxu0 0
    %6840 = vmatpush2.bf16.msra.mxu0 0
    %6841 = vmatprep.subr.bf16.mxu0 0
    %6842 = vmatpush2.bf16.msra.mxu0 0
    %6843 = vmatprep.mubr.bf16.mxu0 0
    %6844 = vmatmul.mubr.bf16.gmra.mxu0 %v6768
    %v6845 = vpop.f32.mrf.mxu0
    %v6846 = vadd.f32 0.0, %v6845
    %v6847 = vpop.f32.mrf.mxu0
    %v6848 = vadd.f32 0.0, %v6847
    %v6849 = vpop.f32.mrf.mxu0
    %v6850 = vpop.f32.mrf.mxu0
    %6851 = vdwg.mxu0
    %v6856 = vrot.slane %v6805, 5
    %v6857 = vrot.slane %v6807, 5
    %v6858 = vrot.slane %v6846, 5
    %v6859 = vrot.slane %v6848, 5
    %v6864 = vadd.f32 %v5215, %v6856
    %v6865 = vadd.f32 %v5217, %v6857
    %v6866 = vadd.f32 %v5258, %v6858
    %v6867 = vadd.f32 %v5260, %v6859
    %v6868 = vxor.u32 %v6864, 2147483648
    %v6869 = vmul.f32 %v6868, 1.442695
    %v6870 = vpow.pop %v6869
    %v6871 = vadd.f32 %v6870, 1.0
    %v6872 = vrcp.pop %v6871
    %v6873 = vmul.f32 1.0, %v6872
    %v6874 = vxor.u32 %v6865, 2147483648
    %v6875 = vmul.f32 %v6874, 1.442695
    %v6876 = vpow.pop %v6875
    %v6877 = vadd.f32 %v6876, 1.0
    %v6878 = vrcp.pop %v6877
    %v6879 = vmul.f32 1.0, %v6878
    %v6880 = vtanh.pop %v6866
    %v6881 = vxor.u32 %v6867, 2147483648
    %v6882 = vmul.f32 %v6881, 1.442695
    %v6883 = vpow.pop %v6882
    %v6884 = vadd.f32 %v6883, 1.0
    %v6885 = vrcp.pop %v6884
    %v6886 = vmul.f32 1.0, %v6885
    %v6888 = vrot.slane %v6763, 7
    %v6890 = vmul.f32 %v6879, %v6888
    %v6891 = vmul.f32 %v6873, %v6880
    %v6892 = vadd.f32 %v6890, %v6891
    %v6893 = vtanh.pop %v6892
    %v6894 = vmul.f32 %v6886, %v6893
    %v6895 = vpack.c.bf16 %v6894, %v6894
    %v6897 = vshrl.u32 %v6895, 16
    %v6899 = vrot.slane %v6897, 1
    %6901 = vmatprep.subr.bf16.mxu0 %v5419
    %6902 = vmatpush1.bf16.msra.mxu0 %v5418
    %6903 = vmatprep.subr.bf16.mxu0 %v5415
    %6904 = vmatpush1.bf16.msra.mxu0 %v5414
    %6905 = vmatprep.subr.bf16.mxu0 %v5411
    %6906 = vmatpush1.bf16.msra.mxu0 %v5410
    %6907 = vmatprep.subr.bf16.mxu0 %v5407
    %6908 = vmatpush1.bf16.msra.mxu0 %v5406
    %6909 = vmatprep.subr.bf16.mxu0 %v5403
    %6910 = vmatpush1.bf16.msra.mxu0 %v5402
    %6911 = vmatprep.subr.bf16.mxu0 %v5399
    %6912 = vmatpush1.bf16.msra.mxu0 %v5398
    %6913 = vmatprep.subr.bf16.mxu0 %v5395
    %6914 = vmatpush1.bf16.msra.mxu0 %v5394
    %6915 = vmatprep.subr.bf16.mxu0 %v5391
    %6916 = vmatpush1.bf16.msra.mxu0 %v5390
    %6917 = vmatprep.subr.bf16.mxu0 0
    %6918 = vmatpush2.bf16.msra.mxu0 0
    %6919 = vmatprep.subr.bf16.mxu0 0
    %6920 = vmatpush2.bf16.msra.mxu0 0
    %6921 = vmatprep.subr.bf16.mxu0 0
    %6922 = vmatpush2.bf16.msra.mxu0 0
    %6923 = vmatprep.subr.bf16.mxu0 0
    %6924 = vmatpush2.bf16.msra.mxu0 0
    %6925 = vmatprep.subr.bf16.mxu0 0
    %6926 = vmatpush2.bf16.msra.mxu0 0
    %6927 = vmatprep.subr.bf16.mxu0 0
    %6928 = vmatpush2.bf16.msra.mxu0 0
    %6929 = vmatprep.subr.bf16.mxu0 0
    %6930 = vmatpush2.bf16.msra.mxu0 0
    %6931 = vmatprep.subr.bf16.mxu0 0
    %6932 = vmatpush2.bf16.msra.mxu0 0
    %6933 = vmatprep.mubr.bf16.mxu0 0
    %6934 = vmatmul.mubr.bf16.gmra.mxu0 %v6899
    %v6935 = vpop.f32.mrf.mxu0
    %v6936 = vadd.f32 0.0, %v6935
    %v6937 = vpop.f32.mrf.mxu0
    %v6938 = vadd.f32 0.0, %v6937
    %v6939 = vpop.f32.mrf.mxu0
    %v6940 = vpop.f32.mrf.mxu0
    %6941 = vdwg.mxu0
    %6942 = vmatprep.subr.bf16.mxu0 %v5421
    %6943 = vmatpush1.bf16.msra.mxu0 %v5420
    %6944 = vmatprep.subr.bf16.mxu0 %v5417
    %6945 = vmatpush1.bf16.msra.mxu0 %v5416
    %6946 = vmatprep.subr.bf16.mxu0 %v5413
    %6947 = vmatpush1.bf16.msra.mxu0 %v5412
    %6948 = vmatprep.subr.bf16.mxu0 %v5409
    %6949 = vmatpush1.bf16.msra.mxu0 %v5408
    %6950 = vmatprep.subr.bf16.mxu0 %v5405
    %6951 = vmatpush1.bf16.msra.mxu0 %v5404
    %6952 = vmatprep.subr.bf16.mxu0 %v5401
    %6953 = vmatpush1.bf16.msra.mxu0 %v5400
    %6954 = vmatprep.subr.bf16.mxu0 %v5397
    %6955 = vmatpush1.bf16.msra.mxu0 %v5396
    %6956 = vmatprep.subr.bf16.mxu0 %v5393
    %6957 = vmatpush1.bf16.msra.mxu0 %v5392
    %6958 = vmatprep.subr.bf16.mxu0 0
    %6959 = vmatpush2.bf16.msra.mxu0 0
    %6960 = vmatprep.subr.bf16.mxu0 0
    %6961 = vmatpush2.bf16.msra.mxu0 0
    %6962 = vmatprep.subr.bf16.mxu0 0
    %6963 = vmatpush2.bf16.msra.mxu0 0
    %6964 = vmatprep.subr.bf16.mxu0 0
    %6965 = vmatpush2.bf16.msra.mxu0 0
    %6966 = vmatprep.subr.bf16.mxu0 0
    %6967 = vmatpush2.bf16.msra.mxu0 0
    %6968 = vmatprep.subr.bf16.mxu0 0
    %6969 = vmatpush2.bf16.msra.mxu0 0
    %6970 = vmatprep.subr.bf16.mxu0 0
    %6971 = vmatpush2.bf16.msra.mxu0 0
    %6972 = vmatprep.subr.bf16.mxu0 0
    %6973 = vmatpush2.bf16.msra.mxu0 0
    %6974 = vmatprep.mubr.bf16.mxu0 0
    %6975 = vmatmul.mubr.bf16.gmra.mxu0 %v6899
    %v6976 = vpop.f32.mrf.mxu0
    %v6977 = vadd.f32 0.0, %v6976
    %v6978 = vpop.f32.mrf.mxu0
    %v6979 = vadd.f32 0.0, %v6978
    %v6980 = vpop.f32.mrf.mxu0
    %v6981 = vpop.f32.mrf.mxu0
    %6982 = vdwg.mxu0
    %v6987 = vrot.slane %v6936, 4
    %v6988 = vrot.slane %v6938, 4
    %v6989 = vrot.slane %v6977, 4
    %v6990 = vrot.slane %v6979, 4
    %v6995 = vadd.f32 %v5215, %v6987
    %v6996 = vadd.f32 %v5217, %v6988
    %v6997 = vadd.f32 %v5258, %v6989
    %v6998 = vadd.f32 %v5260, %v6990
    %v6999 = vxor.u32 %v6995, 2147483648
    %v7000 = vmul.f32 %v6999, 1.442695
    %v7001 = vpow.pop %v7000
    %v7002 = vadd.f32 %v7001, 1.0
    %v7003 = vrcp.pop %v7002
    %v7004 = vmul.f32 1.0, %v7003
    %v7005 = vxor.u32 %v6996, 2147483648
    %v7006 = vmul.f32 %v7005, 1.442695
    %v7007 = vpow.pop %v7006
    %v7008 = vadd.f32 %v7007, 1.0
    %v7009 = vrcp.pop %v7008
    %v7010 = vmul.f32 1.0, %v7009
    %v7011 = vtanh.pop %v6997
    %v7012 = vxor.u32 %v6998, 2147483648
    %v7013 = vmul.f32 %v7012, 1.442695
    %v7014 = vpow.pop %v7013
    %v7015 = vadd.f32 %v7014, 1.0
    %v7016 = vrcp.pop %v7015
    %v7017 = vmul.f32 1.0, %v7016
    %v7019 = vrot.slane %v6892, 7
    %v7021 = vmul.f32 %v7010, %v7019
    %v7022 = vmul.f32 %v7004, %v7011
    %v7023 = vadd.f32 %v7021, %v7022
    %v7024 = vtanh.pop %v7023
    %v7025 = vmul.f32 %v7017, %v7024
    %v7026 = vpack.c.bf16 %v7025, %v7025
    %v7028 = vrot.slane %v7026, 2
    %7030 = vmatprep.subr.bf16.mxu0 %v5419
    %7031 = vmatpush1.bf16.msra.mxu0 %v5418
    %7032 = vmatprep.subr.bf16.mxu0 %v5415
    %7033 = vmatpush1.bf16.msra.mxu0 %v5414
    %7034 = vmatprep.subr.bf16.mxu0 %v5411
    %7035 = vmatpush1.bf16.msra.mxu0 %v5410
    %7036 = vmatprep.subr.bf16.mxu0 %v5407
    %7037 = vmatpush1.bf16.msra.mxu0 %v5406
    %7038 = vmatprep.subr.bf16.mxu0 %v5403
    %7039 = vmatpush1.bf16.msra.mxu0 %v5402
    %7040 = vmatprep.subr.bf16.mxu0 %v5399
    %7041 = vmatpush1.bf16.msra.mxu0 %v5398
    %7042 = vmatprep.subr.bf16.mxu0 %v5395
    %7043 = vmatpush1.bf16.msra.mxu0 %v5394
    %7044 = vmatprep.subr.bf16.mxu0 %v5391
    %7045 = vmatpush1.bf16.msra.mxu0 %v5390
    %7046 = vmatprep.subr.bf16.mxu0 0
    %7047 = vmatpush2.bf16.msra.mxu0 0
    %7048 = vmatprep.subr.bf16.mxu0 0
    %7049 = vmatpush2.bf16.msra.mxu0 0
    %7050 = vmatprep.subr.bf16.mxu0 0
    %7051 = vmatpush2.bf16.msra.mxu0 0
    %7052 = vmatprep.subr.bf16.mxu0 0
    %7053 = vmatpush2.bf16.msra.mxu0 0
    %7054 = vmatprep.subr.bf16.mxu0 0
    %7055 = vmatpush2.bf16.msra.mxu0 0
    %7056 = vmatprep.subr.bf16.mxu0 0
    %7057 = vmatpush2.bf16.msra.mxu0 0
    %7058 = vmatprep.subr.bf16.mxu0 0
    %7059 = vmatpush2.bf16.msra.mxu0 0
    %7060 = vmatprep.subr.bf16.mxu0 0
    %7061 = vmatpush2.bf16.msra.mxu0 0
    %7062 = vmatprep.mubr.bf16.mxu0 0
    %7063 = vmatmul.mubr.bf16.gmra.mxu0 %v7028
    %v7064 = vpop.f32.mrf.mxu0
    %v7065 = vadd.f32 0.0, %v7064
    %v7066 = vpop.f32.mrf.mxu0
    %v7067 = vadd.f32 0.0, %v7066
    %v7068 = vpop.f32.mrf.mxu0
    %v7069 = vpop.f32.mrf.mxu0
    %7070 = vdwg.mxu0
    %7071 = vmatprep.subr.bf16.mxu0 %v5421
    %7072 = vmatpush1.bf16.msra.mxu0 %v5420
    %7073 = vmatprep.subr.bf16.mxu0 %v5417
    %7074 = vmatpush1.bf16.msra.mxu0 %v5416
    %7075 = vmatprep.subr.bf16.mxu0 %v5413
    %7076 = vmatpush1.bf16.msra.mxu0 %v5412
    %7077 = vmatprep.subr.bf16.mxu0 %v5409
    %7078 = vmatpush1.bf16.msra.mxu0 %v5408
    %7079 = vmatprep.subr.bf16.mxu0 %v5405
    %7080 = vmatpush1.bf16.msra.mxu0 %v5404
    %7081 = vmatprep.subr.bf16.mxu0 %v5401
    %7082 = vmatpush1.bf16.msra.mxu0 %v5400
    %7083 = vmatprep.subr.bf16.mxu0 %v5397
    %7084 = vmatpush1.bf16.msra.mxu0 %v5396
    %7085 = vmatprep.subr.bf16.mxu0 %v5393
    %7086 = vmatpush1.bf16.msra.mxu0 %v5392
    %7087 = vmatprep.subr.bf16.mxu0 0
    %7088 = vmatpush2.bf16.msra.mxu0 0
    %7089 = vmatprep.subr.bf16.mxu0 0
    %7090 = vmatpush2.bf16.msra.mxu0 0
    %7091 = vmatprep.subr.bf16.mxu0 0
    %7092 = vmatpush2.bf16.msra.mxu0 0
    %7093 = vmatprep.subr.bf16.mxu0 0
    %7094 = vmatpush2.bf16.msra.mxu0 0
    %7095 = vmatprep.subr.bf16.mxu0 0
    %7096 = vmatpush2.bf16.msra.mxu0 0
    %7097 = vmatprep.subr.bf16.mxu0 0
    %7098 = vmatpush2.bf16.msra.mxu0 0
    %7099 = vmatprep.subr.bf16.mxu0 0
    %7100 = vmatpush2.bf16.msra.mxu0 0
    %7101 = vmatprep.subr.bf16.mxu0 0
    %7102 = vmatpush2.bf16.msra.mxu0 0
    %7103 = vmatprep.mubr.bf16.mxu0 0
    %7104 = vmatmul.mubr.bf16.gmra.mxu0 %v7028
    %v7105 = vpop.f32.mrf.mxu0
    %v7106 = vadd.f32 0.0, %v7105
    %v7107 = vpop.f32.mrf.mxu0
    %v7108 = vadd.f32 0.0, %v7107
    %v7109 = vpop.f32.mrf.mxu0
    %v7110 = vpop.f32.mrf.mxu0
    %7111 = vdwg.mxu0
    %v7116 = vrot.slane %v7065, 3
    %v7117 = vrot.slane %v7067, 3
    %v7118 = vrot.slane %v7106, 3
    %v7119 = vrot.slane %v7108, 3
    %v7124 = vadd.f32 %v5215, %v7116
    %v7125 = vadd.f32 %v5217, %v7117
    %v7126 = vadd.f32 %v5258, %v7118
    %v7127 = vadd.f32 %v5260, %v7119
    %v7128 = vxor.u32 %v7124, 2147483648
    %v7129 = vmul.f32 %v7128, 1.442695
    %v7130 = vpow.pop %v7129
    %v7131 = vadd.f32 %v7130, 1.0
    %v7132 = vrcp.pop %v7131
    %v7133 = vmul.f32 1.0, %v7132
    %v7134 = vxor.u32 %v7125, 2147483648
    %v7135 = vmul.f32 %v7134, 1.442695
    %v7136 = vpow.pop %v7135
    %v7137 = vadd.f32 %v7136, 1.0
    %v7138 = vrcp.pop %v7137
    %v7139 = vmul.f32 1.0, %v7138
    %v7140 = vtanh.pop %v7126
    %v7141 = vxor.u32 %v7127, 2147483648
    %v7142 = vmul.f32 %v7141, 1.442695
    %v7143 = vpow.pop %v7142
    %v7144 = vadd.f32 %v7143, 1.0
    %v7145 = vrcp.pop %v7144
    %v7146 = vmul.f32 1.0, %v7145
    %v7148 = vrot.slane %v7023, 7
    %v7150 = vmul.f32 %v7139, %v7148
    %v7151 = vmul.f32 %v7133, %v7140
    %v7152 = vadd.f32 %v7150, %v7151
    %v7153 = vtanh.pop %v7152
    %v7154 = vmul.f32 %v7146, %v7153
    %v7155 = vpack.c.bf16 %v7154, %v7154
    %v7157 = vshrl.u32 %v7155, 16
    %v7159 = vrot.slane %v7157, 2
    %7161 = vmatprep.subr.bf16.mxu0 %v5419
    %7162 = vmatpush1.bf16.msra.mxu0 %v5418
    %7163 = vmatprep.subr.bf16.mxu0 %v5415
    %7164 = vmatpush1.bf16.msra.mxu0 %v5414
    %7165 = vmatprep.subr.bf16.mxu0 %v5411
    %7166 = vmatpush1.bf16.msra.mxu0 %v5410
    %7167 = vmatprep.subr.bf16.mxu0 %v5407
    %7168 = vmatpush1.bf16.msra.mxu0 %v5406
    %7169 = vmatprep.subr.bf16.mxu0 %v5403
    %7170 = vmatpush1.bf16.msra.mxu0 %v5402
    %7171 = vmatprep.subr.bf16.mxu0 %v5399
    %7172 = vmatpush1.bf16.msra.mxu0 %v5398
    %7173 = vmatprep.subr.bf16.mxu0 %v5395
    %7174 = vmatpush1.bf16.msra.mxu0 %v5394
    %7175 = vmatprep.subr.bf16.mxu0 %v5391
    %7176 = vmatpush1.bf16.msra.mxu0 %v5390
    %7177 = vmatprep.subr.bf16.mxu0 0
    %7178 = vmatpush2.bf16.msra.mxu0 0
    %7179 = vmatprep.subr.bf16.mxu0 0
    %7180 = vmatpush2.bf16.msra.mxu0 0
    %7181 = vmatprep.subr.bf16.mxu0 0
    %7182 = vmatpush2.bf16.msra.mxu0 0
    %7183 = vmatprep.subr.bf16.mxu0 0
    %7184 = vmatpush2.bf16.msra.mxu0 0
    %7185 = vmatprep.subr.bf16.mxu0 0
    %7186 = vmatpush2.bf16.msra.mxu0 0
    %7187 = vmatprep.subr.bf16.mxu0 0
    %7188 = vmatpush2.bf16.msra.mxu0 0
    %7189 = vmatprep.subr.bf16.mxu0 0
    %7190 = vmatpush2.bf16.msra.mxu0 0
    %7191 = vmatprep.subr.bf16.mxu0 0
    %7192 = vmatpush2.bf16.msra.mxu0 0
    %7193 = vmatprep.mubr.bf16.mxu0 0
    %7194 = vmatmul.mubr.bf16.gmra.mxu0 %v7159
    %v7195 = vpop.f32.mrf.mxu0
    %v7196 = vadd.f32 0.0, %v7195
    %v7197 = vpop.f32.mrf.mxu0
    %v7198 = vadd.f32 0.0, %v7197
    %v7199 = vpop.f32.mrf.mxu0
    %v7200 = vpop.f32.mrf.mxu0
    %7201 = vdwg.mxu0
    %7202 = vmatprep.subr.bf16.mxu0 %v5421
    %7203 = vmatpush1.bf16.msra.mxu0 %v5420
    %7204 = vmatprep.subr.bf16.mxu0 %v5417
    %7205 = vmatpush1.bf16.msra.mxu0 %v5416
    %7206 = vmatprep.subr.bf16.mxu0 %v5413
    %7207 = vmatpush1.bf16.msra.mxu0 %v5412
    %7208 = vmatprep.subr.bf16.mxu0 %v5409
    %7209 = vmatpush1.bf16.msra.mxu0 %v5408
    %7210 = vmatprep.subr.bf16.mxu0 %v5405
    %7211 = vmatpush1.bf16.msra.mxu0 %v5404
    %7212 = vmatprep.subr.bf16.mxu0 %v5401
    %7213 = vmatpush1.bf16.msra.mxu0 %v5400
    %7214 = vmatprep.subr.bf16.mxu0 %v5397
    %7215 = vmatpush1.bf16.msra.mxu0 %v5396
    %7216 = vmatprep.subr.bf16.mxu0 %v5393
    %7217 = vmatpush1.bf16.msra.mxu0 %v5392
    %7218 = vmatprep.subr.bf16.mxu0 0
    %7219 = vmatpush2.bf16.msra.mxu0 0
    %7220 = vmatprep.subr.bf16.mxu0 0
    %7221 = vmatpush2.bf16.msra.mxu0 0
    %7222 = vmatprep.subr.bf16.mxu0 0
    %7223 = vmatpush2.bf16.msra.mxu0 0
    %7224 = vmatprep.subr.bf16.mxu0 0
    %7225 = vmatpush2.bf16.msra.mxu0 0
    %7226 = vmatprep.subr.bf16.mxu0 0
    %7227 = vmatpush2.bf16.msra.mxu0 0
    %7228 = vmatprep.subr.bf16.mxu0 0
    %7229 = vmatpush2.bf16.msra.mxu0 0
    %7230 = vmatprep.subr.bf16.mxu0 0
    %7231 = vmatpush2.bf16.msra.mxu0 0
    %7232 = vmatprep.subr.bf16.mxu0 0
    %7233 = vmatpush2.bf16.msra.mxu0 0
    %7234 = vmatprep.mubr.bf16.mxu0 0
    %7235 = vmatmul.mubr.bf16.gmra.mxu0 %v7159
    %v7236 = vpop.f32.mrf.mxu0
    %v7237 = vadd.f32 0.0, %v7236
    %v7238 = vpop.f32.mrf.mxu0
    %v7239 = vadd.f32 0.0, %v7238
    %v7240 = vpop.f32.mrf.mxu0
    %v7241 = vpop.f32.mrf.mxu0
    %7242 = vdwg.mxu0
    %v7247 = vrot.slane %v7196, 2
    %v7248 = vrot.slane %v7198, 2
    %v7249 = vrot.slane %v7237, 2
    %v7250 = vrot.slane %v7239, 2
    %v7255 = vadd.f32 %v5215, %v7247
    %v7256 = vadd.f32 %v5217, %v7248
    %v7257 = vadd.f32 %v5258, %v7249
    %v7258 = vadd.f32 %v5260, %v7250
    %v7259 = vxor.u32 %v7255, 2147483648
    %v7260 = vmul.f32 %v7259, 1.442695
    %v7261 = vpow.pop %v7260
    %v7262 = vadd.f32 %v7261, 1.0
    %v7263 = vrcp.pop %v7262
    %v7264 = vmul.f32 1.0, %v7263
    %v7265 = vxor.u32 %v7256, 2147483648
    %v7266 = vmul.f32 %v7265, 1.442695
    %v7267 = vpow.pop %v7266
    %v7268 = vadd.f32 %v7267, 1.0
    %v7269 = vrcp.pop %v7268
    %v7270 = vmul.f32 1.0, %v7269
    %v7271 = vtanh.pop %v7257
    %v7272 = vxor.u32 %v7258, 2147483648
    %v7273 = vmul.f32 %v7272, 1.442695
    %v7274 = vpow.pop %v7273
    %v7275 = vadd.f32 %v7274, 1.0
    %v7276 = vrcp.pop %v7275
    %v7277 = vmul.f32 1.0, %v7276
    %v7279 = vrot.slane %v7152, 7
    %v7281 = vmul.f32 %v7270, %v7279
    %v7282 = vmul.f32 %v7264, %v7271
    %v7283 = vadd.f32 %v7281, %v7282
    %v7284 = vtanh.pop %v7283
    %v7285 = vmul.f32 %v7277, %v7284
    %v7286 = vpack.c.bf16 %v7285, %v7285
    %v7288 = vrot.slane %v7286, 3
    %7290 = vmatprep.subr.bf16.mxu0 %v5419
    %7291 = vmatpush1.bf16.msra.mxu0 %v5418
    %7292 = vmatprep.subr.bf16.mxu0 %v5415
    %7293 = vmatpush1.bf16.msra.mxu0 %v5414
    %7294 = vmatprep.subr.bf16.mxu0 %v5411
    %7295 = vmatpush1.bf16.msra.mxu0 %v5410
    %7296 = vmatprep.subr.bf16.mxu0 %v5407
    %7297 = vmatpush1.bf16.msra.mxu0 %v5406
    %7298 = vmatprep.subr.bf16.mxu0 %v5403
    %7299 = vmatpush1.bf16.msra.mxu0 %v5402
    %7300 = vmatprep.subr.bf16.mxu0 %v5399
    %7301 = vmatpush1.bf16.msra.mxu0 %v5398
    %7302 = vmatprep.subr.bf16.mxu0 %v5395
    %7303 = vmatpush1.bf16.msra.mxu0 %v5394
    %7304 = vmatprep.subr.bf16.mxu0 %v5391
    %7305 = vmatpush1.bf16.msra.mxu0 %v5390
    %7306 = vmatprep.subr.bf16.mxu0 0
    %7307 = vmatpush2.bf16.msra.mxu0 0
    %7308 = vmatprep.subr.bf16.mxu0 0
    %7309 = vmatpush2.bf16.msra.mxu0 0
    %7310 = vmatprep.subr.bf16.mxu0 0
    %7311 = vmatpush2.bf16.msra.mxu0 0
    %7312 = vmatprep.subr.bf16.mxu0 0
    %7313 = vmatpush2.bf16.msra.mxu0 0
    %7314 = vmatprep.subr.bf16.mxu0 0
    %7315 = vmatpush2.bf16.msra.mxu0 0
    %7316 = vmatprep.subr.bf16.mxu0 0
    %7317 = vmatpush2.bf16.msra.mxu0 0
    %7318 = vmatprep.subr.bf16.mxu0 0
    %7319 = vmatpush2.bf16.msra.mxu0 0
    %7320 = vmatprep.subr.bf16.mxu0 0
    %7321 = vmatpush2.bf16.msra.mxu0 0
    %7322 = vmatprep.mubr.bf16.mxu0 0
    %7323 = vmatmul.mubr.bf16.gmra.mxu0 %v7288
    %v7324 = vpop.f32.mrf.mxu0
    %v7325 = vadd.f32 0.0, %v7324
    %v7326 = vpop.f32.mrf.mxu0
    %v7327 = vadd.f32 0.0, %v7326
    %v7328 = vpop.f32.mrf.mxu0
    %v7329 = vpop.f32.mrf.mxu0
    %7330 = vdwg.mxu0
    %7331 = vmatprep.subr.bf16.mxu0 %v5421
    %7332 = vmatpush1.bf16.msra.mxu0 %v5420
    %7333 = vmatprep.subr.bf16.mxu0 %v5417
    %7334 = vmatpush1.bf16.msra.mxu0 %v5416
    %7335 = vmatprep.subr.bf16.mxu0 %v5413
    %7336 = vmatpush1.bf16.msra.mxu0 %v5412
    %7337 = vmatprep.subr.bf16.mxu0 %v5409
    %7338 = vmatpush1.bf16.msra.mxu0 %v5408
    %7339 = vmatprep.subr.bf16.mxu0 %v5405
    %7340 = vmatpush1.bf16.msra.mxu0 %v5404
    %7341 = vmatprep.subr.bf16.mxu0 %v5401
    %7342 = vmatpush1.bf16.msra.mxu0 %v5400
    %7343 = vmatprep.subr.bf16.mxu0 %v5397
    %7344 = vmatpush1.bf16.msra.mxu0 %v5396
    %7345 = vmatprep.subr.bf16.mxu0 %v5393
    %7346 = vmatpush1.bf16.msra.mxu0 %v5392
    %7347 = vmatprep.subr.bf16.mxu0 0
    %7348 = vmatpush2.bf16.msra.mxu0 0
    %7349 = vmatprep.subr.bf16.mxu0 0
    %7350 = vmatpush2.bf16.msra.mxu0 0
    %7351 = vmatprep.subr.bf16.mxu0 0
    %7352 = vmatpush2.bf16.msra.mxu0 0
    %7353 = vmatprep.subr.bf16.mxu0 0
    %7354 = vmatpush2.bf16.msra.mxu0 0
    %7355 = vmatprep.subr.bf16.mxu0 0
    %7356 = vmatpush2.bf16.msra.mxu0 0
    %7357 = vmatprep.subr.bf16.mxu0 0
    %7358 = vmatpush2.bf16.msra.mxu0 0
    %7359 = vmatprep.subr.bf16.mxu0 0
    %7360 = vmatpush2.bf16.msra.mxu0 0
    %7361 = vmatprep.subr.bf16.mxu0 0
    %7362 = vmatpush2.bf16.msra.mxu0 0
    %7363 = vmatprep.mubr.bf16.mxu0 0
    %7364 = vmatmul.mubr.bf16.gmra.mxu0 %v7288
    %v7365 = vpop.f32.mrf.mxu0
    %v7366 = vadd.f32 0.0, %v7365
    %v7367 = vpop.f32.mrf.mxu0
    %v7368 = vadd.f32 0.0, %v7367
    %v7369 = vpop.f32.mrf.mxu0
    %v7370 = vpop.f32.mrf.mxu0
    %7371 = vdwg.mxu0
    %v7376 = vrot.slane %v7325, 1
    %v7377 = vrot.slane %v7327, 1
    %v7378 = vrot.slane %v7366, 1
    %v7379 = vrot.slane %v7368, 1
    %v7384 = vadd.f32 %v5215, %v7376
    %v7385 = vadd.f32 %v5217, %v7377
    %v7386 = vadd.f32 %v5258, %v7378
    %v7387 = vadd.f32 %v5260, %v7379
    %v7388 = vxor.u32 %v7384, 2147483648
    %v7389 = vmul.f32 %v7388, 1.442695
    %v7390 = vpow.pop %v7389
    %v7391 = vadd.f32 %v7390, 1.0
    %v7392 = vrcp.pop %v7391
    %v7393 = vmul.f32 1.0, %v7392
    %v7394 = vxor.u32 %v7385, 2147483648
    %v7395 = vmul.f32 %v7394, 1.442695
    %v7396 = vpow.pop %v7395
    %v7397 = vadd.f32 %v7396, 1.0
    %v7398 = vrcp.pop %v7397
    %v7399 = vmul.f32 1.0, %v7398
    %v7400 = vtanh.pop %v7386
    %v7401 = vxor.u32 %v7387, 2147483648
    %v7402 = vmul.f32 %v7401, 1.442695
    %v7403 = vpow.pop %v7402
    %v7404 = vadd.f32 %v7403, 1.0
    %v7405 = vrcp.pop %v7404
    %v7406 = vmul.f32 1.0, %v7405
    %v7408 = vrot.slane %v7283, 7
    %v7410 = vmul.f32 %v7399, %v7408
    %v7411 = vmul.f32 %v7393, %v7400
    %v7412 = vadd.f32 %v7410, %v7411
    %v7413 = vtanh.pop %v7412
    %v7414 = vmul.f32 %v7406, %v7413
    %v7415 = vsel %vm6469, %v6509, %v6635
    %v7416 = vsel %vm6471, %v7415, %v6765
    %v7417 = vsel %vm6473, %v7416, %v6894
    %v7418 = vsel %vm536, %v7417, %v7025
    %v7419 = vsel %vm6476, %v7418, %v7154
    %v7420 = vsel %vm6478, %v7419, %v7285
    %v7421 = vsel %vm6480, %v7420, %v7414
    %v7422 = vpack.c.bf16 %v7421, %v6481
    %v7423 = vld [vmem:[#allocation11] sm:$0xff]
    %v7424 = vld [vmem:[#allocation11 + $0x8] sm:$0xff]
    %v7425 = vld [vmem:[#allocation11 + $0x10] sm:$0xff]
    %v7426 = vld [vmem:[#allocation11 + $0x18] sm:$0xff]
    %v7427 = vld [vmem:[#allocation11 + $0x20] sm:$0xff]
    %v7428 = vld [vmem:[#allocation11 + $0x28] sm:$0xff]
    %v7429 = vld [vmem:[#allocation11 + $0x30] sm:$0xff]
    %v7430 = vld [vmem:[#allocation11 + $0x38] sm:$0xff]
    %v7431 = vld [vmem:[#allocation11 + $0x40] sm:$0xff]
    %v7432 = vld [vmem:[#allocation11 + $0x48] sm:$0xff]
    %v7433 = vld [vmem:[#allocation11 + $0x50] sm:$0xff]
    %v7434 = vld [vmem:[#allocation11 + $0x58] sm:$0xff]
    %v7435 = vld [vmem:[#allocation11 + $0x60] sm:$0xff]
    %v7436 = vld [vmem:[#allocation11 + $0x68] sm:$0xff]
    %v7437 = vld [vmem:[#allocation11 + $0x70] sm:$0xff]
    %v7438 = vld [vmem:[#allocation11 + $0x78] sm:$0xff]
    %v7439 = vld [vmem:[#allocation11 + $0x80] sm:$0xff]
    %v7440 = vld [vmem:[#allocation11 + $0x88] sm:$0xff]
    %v7441 = vld [vmem:[#allocation11 + $0x90] sm:$0xff]
    %v7442 = vld [vmem:[#allocation11 + $0x98] sm:$0xff]
    %v7443 = vld [vmem:[#allocation11 + $0xa0] sm:$0xff]
    %v7444 = vld [vmem:[#allocation11 + $0xa8] sm:$0xff]
    %v7445 = vld [vmem:[#allocation11 + $0xb0] sm:$0xff]
    %v7446 = vld [vmem:[#allocation11 + $0xb8] sm:$0xff]
    %v7447 = vld [vmem:[#allocation11 + $0xc0] sm:$0xff]
    %v7448 = vld [vmem:[#allocation11 + $0xc8] sm:$0xff]
    %v7449 = vld [vmem:[#allocation11 + $0xd0] sm:$0xff]
    %v7450 = vld [vmem:[#allocation11 + $0xd8] sm:$0xff]
    %v7451 = vld [vmem:[#allocation11 + $0xe0] sm:$0xff]
    %v7452 = vld [vmem:[#allocation11 + $0xe8] sm:$0xff]
    %v7453 = vld [vmem:[#allocation11 + $0xf0] sm:$0xff]
    %v7454 = vld [vmem:[#allocation11 + $0xf8] sm:$0xff]
    %v7455 = vld [vmem:[%s19] sm:$0xf]
    %v7457 = vlaneseq
    %v7458 = vshrl.u32 %v7457, 7
    %v7459 = vsub.s32 0, %v7458
    %v7460 = vrot.slane %v7455, %v7459
    %v7461 = vlaneseq
    %v7462 = vshrl.u32 %v7461, 7
    %v7463 = vsub.s32 1, %v7462
    %v7464 = vrot.slane %v7455, %v7463
    %v7465 = vlaneseq
    %v7466 = vshrl.u32 %v7465, 7
    %v7467 = vsub.s32 2, %v7466
    %v7468 = vrot.slane %v7455, %v7467
    %v7469 = vlaneseq
    %v7470 = vshrl.u32 %v7469, 7
    %v7471 = vsub.s32 3, %v7470
    %v7472 = vrot.slane %v7455, %v7471
    %v7509 = vunpack.c.l.b16 %v7423
    %v7510 = vunpack.c.h.b16 %v7423
    %v7511 = vunpack.c.l.b16 %v7424
    %v7512 = vunpack.c.h.b16 %v7424
    %v7513 = vunpack.c.l.b16 %v7425
    %v7514 = vunpack.c.h.b16 %v7425
    %v7515 = vunpack.c.l.b16 %v7426
    %v7516 = vunpack.c.h.b16 %v7426
    %v7517 = vunpack.c.l.b16 %v7427
    %v7518 = vunpack.c.h.b16 %v7427
    %v7519 = vunpack.c.l.b16 %v7428
    %v7520 = vunpack.c.h.b16 %v7428
    %v7521 = vunpack.c.l.b16 %v7429
    %v7522 = vunpack.c.h.b16 %v7429
    %v7523 = vunpack.c.l.b16 %v7430
    %v7524 = vunpack.c.h.b16 %v7430
    %v7525 = vunpack.c.l.b16 %v7431
    %v7526 = vunpack.c.h.b16 %v7431
    %v7527 = vunpack.c.l.b16 %v7432
    %v7528 = vunpack.c.h.b16 %v7432
    %v7529 = vunpack.c.l.b16 %v7433
    %v7530 = vunpack.c.h.b16 %v7433
    %v7531 = vunpack.c.l.b16 %v7434
    %v7532 = vunpack.c.h.b16 %v7434
    %v7533 = vunpack.c.l.b16 %v7435
    %v7534 = vunpack.c.h.b16 %v7435
    %v7535 = vunpack.c.l.b16 %v7436
    %v7536 = vunpack.c.h.b16 %v7436
    %v7537 = vunpack.c.l.b16 %v7437
    %v7538 = vunpack.c.h.b16 %v7437
    %v7539 = vunpack.c.l.b16 %v7438
    %v7540 = vunpack.c.h.b16 %v7438
    %v7541 = vunpack.c.l.b16 %v7439
    %v7542 = vunpack.c.h.b16 %v7439
    %v7543 = vunpack.c.l.b16 %v7440
    %v7544 = vunpack.c.h.b16 %v7440
    %v7545 = vunpack.c.l.b16 %v7441
    %v7546 = vunpack.c.h.b16 %v7441
    %v7547 = vunpack.c.l.b16 %v7442
    %v7548 = vunpack.c.h.b16 %v7442
    %v7549 = vunpack.c.l.b16 %v7443
    %v7550 = vunpack.c.h.b16 %v7443
    %v7551 = vunpack.c.l.b16 %v7444
    %v7552 = vunpack.c.h.b16 %v7444
    %v7553 = vunpack.c.l.b16 %v7445
    %v7554 = vunpack.c.h.b16 %v7445
    %v7555 = vunpack.c.l.b16 %v7446
    %v7556 = vunpack.c.h.b16 %v7446
    %v7557 = vunpack.c.l.b16 %v7447
    %v7558 = vunpack.c.h.b16 %v7447
    %v7559 = vunpack.c.l.b16 %v7448
    %v7560 = vunpack.c.h.b16 %v7448
    %v7561 = vunpack.c.l.b16 %v7449
    %v7562 = vunpack.c.h.b16 %v7449
    %v7563 = vunpack.c.l.b16 %v7450
    %v7564 = vunpack.c.h.b16 %v7450
    %v7565 = vunpack.c.l.b16 %v7451
    %v7566 = vunpack.c.h.b16 %v7451
    %v7567 = vunpack.c.l.b16 %v7452
    %v7568 = vunpack.c.h.b16 %v7452
    %v7569 = vunpack.c.l.b16 %v7453
    %v7570 = vunpack.c.h.b16 %v7453
    %v7571 = vunpack.c.l.b16 %v7454
    %v7572 = vunpack.c.h.b16 %v7454
    %v7573 = vpack.c.b16 %v7513, %v7509
    %v7574 = vpack.c.b16 %v7514, %v7510
    %v7575 = vpack.c.b16 %v7515, %v7511
    %v7576 = vpack.c.b16 %v7516, %v7512
    %v7577 = vpack.c.b16 %v7521, %v7517
    %v7578 = vpack.c.b16 %v7522, %v7518
    %v7579 = vpack.c.b16 %v7523, %v7519
    %v7580 = vpack.c.b16 %v7524, %v7520
    %v7581 = vpack.c.b16 %v7529, %v7525
    %v7582 = vpack.c.b16 %v7530, %v7526
    %v7583 = vpack.c.b16 %v7531, %v7527
    %v7584 = vpack.c.b16 %v7532, %v7528
    %v7585 = vpack.c.b16 %v7537, %v7533
    %v7586 = vpack.c.b16 %v7538, %v7534
    %v7587 = vpack.c.b16 %v7539, %v7535
    %v7588 = vpack.c.b16 %v7540, %v7536
    %v7589 = vpack.c.b16 %v7545, %v7541
    %v7590 = vpack.c.b16 %v7546, %v7542
    %v7591 = vpack.c.b16 %v7547, %v7543
    %v7592 = vpack.c.b16 %v7548, %v7544
    %v7593 = vpack.c.b16 %v7553, %v7549
    %v7594 = vpack.c.b16 %v7554, %v7550
    %v7595 = vpack.c.b16 %v7555, %v7551
    %v7596 = vpack.c.b16 %v7556, %v7552
    %v7597 = vpack.c.b16 %v7561, %v7557
    %v7598 = vpack.c.b16 %v7562, %v7558
    %v7599 = vpack.c.b16 %v7563, %v7559
    %v7600 = vpack.c.b16 %v7564, %v7560
    %v7601 = vpack.c.b16 %v7569, %v7565
    %v7602 = vpack.c.b16 %v7570, %v7566
    %v7603 = vpack.c.b16 %v7571, %v7567
    %v7604 = vpack.c.b16 %v7572, %v7568
    %7637 = vmatprep.subr.bf16.mxu0 %v7602
    %7638 = vmatpush1.bf16.msra.mxu0 %v7601
    %7639 = vmatprep.subr.bf16.mxu0 %v7598
    %7640 = vmatpush1.bf16.msra.mxu0 %v7597
    %7641 = vmatprep.subr.bf16.mxu0 %v7594
    %7642 = vmatpush1.bf16.msra.mxu0 %v7593
    %7643 = vmatprep.subr.bf16.mxu0 %v7590
    %7644 = vmatpush1.bf16.msra.mxu0 %v7589
    %7645 = vmatprep.subr.bf16.mxu0 %v7586
    %7646 = vmatpush1.bf16.msra.mxu0 %v7585
    %7647 = vmatprep.subr.bf16.mxu0 %v7582
    %7648 = vmatpush1.bf16.msra.mxu0 %v7581
    %7649 = vmatprep.subr.bf16.mxu0 %v7578
    %7650 = vmatpush1.bf16.msra.mxu0 %v7577
    %7651 = vmatprep.subr.bf16.mxu0 %v7574
    %7652 = vmatpush1.bf16.msra.mxu0 %v7573
    %7653 = vmatprep.subr.bf16.mxu0 0
    %7654 = vmatpush2.bf16.msra.mxu0 0
    %7655 = vmatprep.subr.bf16.mxu0 0
    %7656 = vmatpush2.bf16.msra.mxu0 0
    %7657 = vmatprep.subr.bf16.mxu0 0
    %7658 = vmatpush2.bf16.msra.mxu0 0
    %7659 = vmatprep.subr.bf16.mxu0 0
    %7660 = vmatpush2.bf16.msra.mxu0 0
    %7661 = vmatprep.subr.bf16.mxu0 0
    %7662 = vmatpush2.bf16.msra.mxu0 0
    %7663 = vmatprep.subr.bf16.mxu0 0
    %7664 = vmatpush2.bf16.msra.mxu0 0
    %7665 = vmatprep.subr.bf16.mxu0 0
    %7666 = vmatpush2.bf16.msra.mxu0 0
    %7667 = vmatprep.subr.bf16.mxu0 0
    %7668 = vmatpush2.bf16.msra.mxu0 0
    %7669 = vmatprep.mubr.bf16.mxu0 0
    %7670 = vmatmul.mubr.bf16.gmra.mxu0 %v7422
    %v7671 = vpop.f32.mrf.mxu0
    %v7672 = vadd.f32 %v7460, %v7671
    %v7673 = vpop.f32.mrf.mxu0
    %v7674 = vadd.f32 %v7464, %v7673
    %v7675 = vpop.f32.mrf.mxu0
    %v7676 = vadd.f32 %v7460, %v7675
    %v7677 = vpop.f32.mrf.mxu0
    %v7678 = vadd.f32 %v7464, %v7677
    %7679 = vdwg.mxu0
    %7680 = vmatprep.subr.bf16.mxu0 %v7604
    %7681 = vmatpush1.bf16.msra.mxu0 %v7603
    %7682 = vmatprep.subr.bf16.mxu0 %v7600
    %7683 = vmatpush1.bf16.msra.mxu0 %v7599
    %7684 = vmatprep.subr.bf16.mxu0 %v7596
    %7685 = vmatpush1.bf16.msra.mxu0 %v7595
    %7686 = vmatprep.subr.bf16.mxu0 %v7592
    %7687 = vmatpush1.bf16.msra.mxu0 %v7591
    %7688 = vmatprep.subr.bf16.mxu0 %v7588
    %7689 = vmatpush1.bf16.msra.mxu0 %v7587
    %7690 = vmatprep.subr.bf16.mxu0 %v7584
    %7691 = vmatpush1.bf16.msra.mxu0 %v7583
    %7692 = vmatprep.subr.bf16.mxu0 %v7580
    %7693 = vmatpush1.bf16.msra.mxu0 %v7579
    %7694 = vmatprep.subr.bf16.mxu0 %v7576
    %7695 = vmatpush1.bf16.msra.mxu0 %v7575
    %7696 = vmatprep.subr.bf16.mxu0 0
    %7697 = vmatpush2.bf16.msra.mxu0 0
    %7698 = vmatprep.subr.bf16.mxu0 0
    %7699 = vmatpush2.bf16.msra.mxu0 0
    %7700 = vmatprep.subr.bf16.mxu0 0
    %7701 = vmatpush2.bf16.msra.mxu0 0
    %7702 = vmatprep.subr.bf16.mxu0 0
    %7703 = vmatpush2.bf16.msra.mxu0 0
    %7704 = vmatprep.subr.bf16.mxu0 0
    %7705 = vmatpush2.bf16.msra.mxu0 0
    %7706 = vmatprep.subr.bf16.mxu0 0
    %7707 = vmatpush2.bf16.msra.mxu0 0
    %7708 = vmatprep.subr.bf16.mxu0 0
    %7709 = vmatpush2.bf16.msra.mxu0 0
    %7710 = vmatprep.subr.bf16.mxu0 0
    %7711 = vmatpush2.bf16.msra.mxu0 0
    %7712 = vmatprep.mubr.bf16.mxu0 0
    %7713 = vmatmul.mubr.bf16.gmra.mxu0 %v7422
    %v7714 = vpop.f32.mrf.mxu0
    %v7715 = vadd.f32 %v7468, %v7714
    %v7716 = vpop.f32.mrf.mxu0
    %v7717 = vadd.f32 %v7472, %v7716
    %v7718 = vpop.f32.mrf.mxu0
    %v7719 = vadd.f32 %v7468, %v7718
    %v7720 = vpop.f32.mrf.mxu0
    %v7721 = vadd.f32 %v7472, %v7720
    %7722 = vdwg.mxu0
    %7723 = vst [vmem:[#allocation13] sm:$0xff] %v7672
    %7724 = vst [vmem:[#allocation13 + $0x8] sm:$0xff] %v7674
    %7725 = vst [vmem:[#allocation13 + $0x10] sm:$0xff] %v7715
    %7726 = vst [vmem:[#allocation13 + $0x18] sm:$0xff] %v7717
    %7727 = vst [vmem:[#allocation13 + $0x20] sm:$0xff] %v7676
    %7728 = vst [vmem:[#allocation13 + $0x28] sm:$0xff] %v7678
    %7729 = vst [vmem:[#allocation13 + $0x30] sm:$0xff] %v7719
    %7730 = vst [vmem:[#allocation13 + $0x38] sm:$0xff] %v7721
    // Predicated region
    $region106: #{seq2seq_forward.1} parent=1 // pred_check
      _
    $region107: #{seq2seq_forward.1} parent=1 // pred_check_branch
      %7732 = sbr.rel (0) target = $region109
    $region108: #{seq2seq_forward.1} parent=1 // pred_region
      %s7734 = ssub.s32 1024, 1024
      %7735 = vsyncadd [#allocation4], %s7734
      %s7736 = sshll.u32 [#allocation13], 4
      %s7737 = int_to_ptr.vmem [resolvable:$true] %s7736
      %7742 = dma.vmem_to_hbm [thread:$0]  %s7737, 1024, %s20, [#allocation4], 512, 512, 32
    $region109: #{seq2seq_forward.1} parent=1 // pred_fallthru
      _
    // Predicated region
    $region110: #{seq2seq_forward.1} parent=1 // pred_check
      _
    $region111: #{seq2seq_forward.1} parent=1 // pred_check_branch
      %7744 = sbr.rel (0) target = $region113
    $region112: #{seq2seq_forward.1} parent=1 // pred_region
      %7745 = dma.done [#allocation4], 1024
    $region113: #{seq2seq_forward.1} parent=1 // pred_fallthru
      _
    %7746 = vsyncpa [#allocation3], 1
    %7747 = vsyncpa [#allocation6], 1
    %7748 = vsyncpa [#allocation9], 1
    %7749 = vsyncpa [#allocation12], 1
    %7750 = vsyncpa [#allocation4], 1

</llo_original>
